<compile_context>
chip_gen: v7x
topology: tpu7x:2x2x1
jax: 0.10.0
libtpu: 0.0.40
codegen_flags: <defaults>
</compile_context>

<pallas_src>
import jax
import jax.numpy as jnp
from jax.experimental import pallas as pl
from jax.experimental.pallas import tpu as pltpu

LEAK = 0.2


# --------------------------------------------------------------------------
# Fused Pallas kernel: (grouped lbp3 + lbp5 + concat + 1x1 fusion) as 25
# folded tap-matmuls, then LeakyReLU, AdaptiveAvgPool2d(1) and 1x1 projection.
# --------------------------------------------------------------------------
def _lbp_fused_kernel(xp_ref, wt_ref, bc_ref, wps_ref, bp_ref, o_ref):
    """
    xp_ref  : (B, H+4, W+4, C)  bf16  input, zero-padded by 2 on H and W
    wt_ref  : (25, C, Cmid)     bf16  folded per-tap weights
    bc_ref  : (1, Cmid)         f32   folded bias (lbp biases through fusion + fusion bias)
    wps_ref : (1, Cmid)         f32   projection weight pre-scaled by 1/(H*W)
    bp_ref  : (1, 1)            f32   projection bias
    o_ref   : (B, 1)            f32   output
    """
    B, Hp, Wp, C = xp_ref.shape
    H, W = Hp - 4, Wp - 4
    Cmid = wt_ref.shape[-1]
    M = B * H * W

    x = xp_ref[...]                                   # whole padded image resident in VMEM (bf16)

    # In-kernel patch gather: 25 shifted views of the padded input, each
    # contracted on the MXU against its folded (C, Cmid) tap weight; the
    # 3x3 conv taps were folded into the centre of the 5x5 window offline.
    acc = jnp.zeros((M, Cmid), jnp.float32)
    for dh in range(5):
        row = x[:, dh:dh + H]                         # (B, H, W+4, C) row slab, reused across dw
        for dw in range(5):
            xs = row[:, :, dw:dw + W, :].reshape(M, C)
            acc = acc + jnp.dot(xs, wt_ref[dh * 5 + dw],
                                preferred_element_type=jnp.float32)

    pre = acc + bc_ref[...]                           # (M, Cmid), f32 epilogue
    fused = jnp.where(pre > 0.0, pre, LEAK * pre)     # LeakyReLU(0.2)

    # AdaptiveAvgPool2d(1) + Conv2d(Cmid, 1, k=1): the 1/(H*W) mean factor is
    # already folded into wps, so this is a spatial sum + a tiny dot.
    pooled = jnp.sum(fused.reshape(B, H * W, Cmid), axis=1)           # (B, Cmid)
    o_ref[...] = jnp.sum(pooled * wps_ref[...], axis=-1, keepdims=True) + bp_ref[...]


# --------------------------------------------------------------------------
# Wrapper: one-time weight folding + single pallas_call
# --------------------------------------------------------------------------
def lbp_forward(params, x_nchw):
    """x_nchw: (B, C, H, W) like PyTorch.  Returns (B, 1)."""
    p = params
    B, C, H, W = x_nchw.shape
    G = C // 4                  # groups
    cout_g = (C // 2) // G      # output channels per group (= 2)
    cin_g = C // G              # input channels per group  (= 4)
    Cmid = C // 2

    # NCHW -> NHWC, cast to bf16 once (MXU operand dtype; halves HBM traffic
    # and removes per-tap casts from the kernel), zero-pad by 2 for the 5x5
    # halo (the 3x3 taps live in its centre).
    x = jnp.transpose(x_nchw, (0, 2, 3, 1)).astype(jnp.bfloat16)
    xp = jnp.pad(x, ((0, 0), (2, 2), (2, 2), (0, 0)))

    # ---- one-time weight folding (layout plumbing, not per-pixel work) ----
    # grouped convs + concat + dense 1x1 fusion are all linear, so:
    #   pre[m, n] = sum_{dh,dw} x_shift(dh,dw)[m, :] @ w_taps[dh*5+dw] + b_comb[n]
    wf = p["fus_w"].reshape(Cmid, C).astype(jnp.float32)    # fusion 1x1 weight (n, cat-channel)
    wf3 = wf[:, :Cmid].reshape(Cmid, G, cout_g)             # acts on lbp3 channels (g, j)
    wf5 = wf[:, Cmid:].reshape(Cmid, G, cout_g)             # acts on lbp5 channels
    w3 = p["lbp3_w"].reshape(G, cout_g, cin_g, 3, 3).astype(jnp.float32)
    w5 = p["lbp5_w"].reshape(G, cout_g, cin_g, 5, 5).astype(jnp.float32)
    taps3 = jnp.einsum("gjihw,ngj->hwgin", w3, wf3).reshape(3, 3, C, Cmid)
    taps5 = jnp.einsum("gjihw,ngj->hwgin", w5, wf5).reshape(5, 5, C, Cmid)
    w_taps = taps5.at[1:4, 1:4].add(taps3).reshape(25, C, Cmid)
    b_comb = (wf[:, :Cmid] @ p["lbp3_b"] + wf[:, Cmid:] @ p["lbp5_b"]
              + p["fus_b"]).reshape(1, Cmid)

    # Fold the AdaptiveAvgPool2d(1) mean into the projection weight.
    wp_scaled = (p["proj_w"].reshape(1, Cmid) / float(H * W)).astype(jnp.float32)
    bp = p["proj_b"].reshape(1, 1).astype(jnp.float32)

    vmem = pl.BlockSpec(memory_space=pltpu.MemorySpace.VMEM)   # whole-array, resident in VMEM
    return pl.pallas_call(
        _lbp_fused_kernel,
        out_shape=jax.ShapeDtypeStruct((B, 1), jnp.float32),
        in_specs=[vmem, vmem, vmem, vmem, vmem],
        out_specs=vmem,
    )(xp,
      w_taps.astype(jnp.bfloat16),
      b_comb.astype(jnp.float32),
      wp_scaled,
      bp)


# --------------------------------------------------------------------------
# Deterministic parameter init (mirrors the module's layer shapes)
# --------------------------------------------------------------------------
def init_params(key, in_channels):
    C = in_channels
    Cmid = C // 2
    G = C // 4
    cin_g = C // G
    ks = jax.random.split(key, 8)
    nrm = lambda k, shape, std=0.1: std * jax.random.normal(k, shape, jnp.float32)
    return {
        "lbp3_w": nrm(ks[0], (Cmid, cin_g, 3, 3)),
        "lbp3_b": nrm(ks[1], (Cmid,)),
        "lbp5_w": nrm(ks[2], (Cmid, cin_g, 5, 5)),
        "lbp5_b": nrm(ks[3], (Cmid,)),
        "fus_w": nrm(ks[4], (Cmid, C, 1, 1)),
        "fus_b": nrm(ks[5], (Cmid,)),
        "proj_w": nrm(ks[6], (1, Cmid, 1, 1)),
        "proj_b": nrm(ks[7], (1,)),
    }


# --------------------------------------------------------------------------
# Plain-JAX reference (uses real grouped convs) for a correctness check
# --------------------------------------------------------------------------
def reference_forward(params, x_nchw):
    p = params
    x = x_nchw.astype(jnp.float32)
    C = x.shape[1]
    G = C // 4
    dn = ("NCHW", "OIHW", "NCHW")
    l3 = jax.lax.conv_general_dilated(x, p["lbp3_w"], (1, 1), ((1, 1), (1, 1)),
                                      dimension_numbers=dn, feature_group_count=G)
    l3 = l3 + p["lbp3_b"][None, :, None, None]
    l5 = jax.lax.conv_general_dilated(x, p["lbp5_w"], (1, 1), ((2, 2), (2, 2)),
                                      dimension_numbers=dn, feature_group_count=G)
    l5 = l5 + p["lbp5_b"][None, :, None, None]
    lbp = jnp.concatenate([l3, l5], axis=1)
    fus = jax.lax.conv_general_dilated(lbp, p["fus_w"], (1, 1), ((0, 0), (0, 0)),
                                       dimension_numbers=dn)
    fus = fus + p["fus_b"][None, :, None, None]
    fus = jnp.where(fus > 0, fus, LEAK * fus)
    pooled = jnp.mean(fus, axis=(2, 3))                              # (B, C//2)
    return pooled @ p["proj_w"].reshape(1, -1).T + p["proj_b"][None, :]


# --------------------------------------------------------------------------
if __name__ == "__main__":
    IN_CHANNELS = 32            # must be a multiple of 4 (groups = in_channels // 4)
    key = jax.random.PRNGKey(0)
    k_p, k_x = jax.random.split(key)
    params = init_params(k_p, IN_CHANNELS)
    x = jax.random.normal(k_x, (2, IN_CHANNELS, 16, 16), jnp.float32)   # NCHW like PyTorch

    out = jax.jit(lbp_forward)(params, x)
    jax.block_until_ready(out)
    assert out.shape == (2, 1)

    ref = reference_forward(params, x)
    assert jnp.allclose(out, ref, rtol=5e-2, atol=5e-3), (out, ref)
    print("KERNEL_OK")
</pallas_src>

<mosaic_0001>
module attributes {stable_mosaic.version = 11 : i64} {
  func.func @_lbp_fused_kernel(%arg0: memref<2x20x20x32xbf16, #tpu.memory_space<vmem>>, %arg1: memref<25x32x16xbf16, #tpu.memory_space<vmem>>, %arg2: memref<1x16xf32, #tpu.memory_space<vmem>>, %arg3: memref<1x16xf32, #tpu.memory_space<vmem>>, %arg4: memref<1x1xf32, #tpu.memory_space<vmem>>, %arg5: memref<2x1xf32, #tpu.memory_space<vmem>>) attributes {dimension_semantics = [], scalar_prefetch = 0 : i64, scratch_operands = 0 : i64, tpu.core_type = #tpu.core_type<tc>} {
    %c0 = arith.constant 0 : index
    %c0_0 = arith.constant 0 : index
    %c0_1 = arith.constant 0 : index
    %c0_2 = arith.constant 0 : index
    %0 = vector.load %arg0[%c0, %c0_0, %c0_1, %c0_2] : memref<2x20x20x32xbf16, #tpu.memory_space<vmem>>, vector<2x20x20x32xbf16>
    %cst = arith.constant 0.000000e+00 : f32
    %1 = vector.broadcast %cst : f32 to vector<512x16xf32>
    %2 = vector.extract_strided_slice %0 {offsets = [0, 0, 0, 0], sizes = [2, 16, 20, 32], strides = [1, 1, 1, 1]} : vector<2x20x20x32xbf16> to vector<2x16x20x32xbf16>
    %3 = vector.extract_strided_slice %2 {offsets = [0, 0, 0, 0], sizes = [2, 16, 16, 32], strides = [1, 1, 1, 1]} : vector<2x16x20x32xbf16> to vector<2x16x16x32xbf16>
    %4 = vector.shape_cast %3 : vector<2x16x16x32xbf16> to vector<512x32xbf16>
    %c0_3 = arith.constant 0 : index
    %c0_4 = arith.constant 0 : index
    %c0_5 = arith.constant 0 : index
    %5 = vector.load %arg1[%c0_3, %c0_4, %c0_5] : memref<25x32x16xbf16, #tpu.memory_space<vmem>>, vector<1x32x16xbf16>
    %6 = vector.shape_cast %5 : vector<1x32x16xbf16> to vector<32x16xbf16>
    %cst_6 = arith.constant dense<0.000000e+00> : vector<512x16xf32>
    %7 = tpu.matmul %4, %6, %cst_6 {dimension_numbers = #tpu.dot_dimension_numbers<[1], [0], [0], [1], [0, 0, 1, 1], [], []>} : vector<512x32xbf16>, vector<32x16xbf16>, vector<512x16xf32> -> vector<512x16xf32>
    %8 = arith.addf %1, %7 : vector<512x16xf32>
    %9 = vector.extract_strided_slice %2 {offsets = [0, 0, 1, 0], sizes = [2, 16, 16, 32], strides = [1, 1, 1, 1]} : vector<2x16x20x32xbf16> to vector<2x16x16x32xbf16>
    %10 = vector.shape_cast %9 : vector<2x16x16x32xbf16> to vector<512x32xbf16>
    %c1 = arith.constant 1 : index
    %c0_7 = arith.constant 0 : index
    %c0_8 = arith.constant 0 : index
    %11 = vector.load %arg1[%c1, %c0_7, %c0_8] : memref<25x32x16xbf16, #tpu.memory_space<vmem>>, vector<1x32x16xbf16>
    %12 = vector.shape_cast %11 : vector<1x32x16xbf16> to vector<32x16xbf16>
    %cst_9 = arith.constant dense<0.000000e+00> : vector<512x16xf32>
    %13 = tpu.matmul %10, %12, %cst_9 {dimension_numbers = #tpu.dot_dimension_numbers<[1], [0], [0], [1], [0, 0, 1, 1], [], []>} : vector<512x32xbf16>, vector<32x16xbf16>, vector<512x16xf32> -> vector<512x16xf32>
    %14 = arith.addf %8, %13 : vector<512x16xf32>
    %15 = vector.extract_strided_slice %2 {offsets = [0, 0, 2, 0], sizes = [2, 16, 16, 32], strides = [1, 1, 1, 1]} : vector<2x16x20x32xbf16> to vector<2x16x16x32xbf16>
    %16 = vector.shape_cast %15 : vector<2x16x16x32xbf16> to vector<512x32xbf16>
    %c2 = arith.constant 2 : index
    %c0_10 = arith.constant 0 : index
    %c0_11 = arith.constant 0 : index
    %17 = vector.load %arg1[%c2, %c0_10, %c0_11] : memref<25x32x16xbf16, #tpu.memory_space<vmem>>, vector<1x32x16xbf16>
    %18 = vector.shape_cast %17 : vector<1x32x16xbf16> to vector<32x16xbf16>
    %cst_12 = arith.constant dense<0.000000e+00> : vector<512x16xf32>
    %19 = tpu.matmul %16, %18, %cst_12 {dimension_numbers = #tpu.dot_dimension_numbers<[1], [0], [0], [1], [0, 0, 1, 1], [], []>} : vector<512x32xbf16>, vector<32x16xbf16>, vector<512x16xf32> -> vector<512x16xf32>
    %20 = arith.addf %14, %19 : vector<512x16xf32>
    %21 = vector.extract_strided_slice %2 {offsets = [0, 0, 3, 0], sizes = [2, 16, 16, 32], strides = [1, 1, 1, 1]} : vector<2x16x20x32xbf16> to vector<2x16x16x32xbf16>
    %22 = vector.shape_cast %21 : vector<2x16x16x32xbf16> to vector<512x32xbf16>
    %c3 = arith.constant 3 : index
    %c0_13 = arith.constant 0 : index
    %c0_14 = arith.constant 0 : index
    %23 = vector.load %arg1[%c3, %c0_13, %c0_14] : memref<25x32x16xbf16, #tpu.memory_space<vmem>>, vector<1x32x16xbf16>
    %24 = vector.shape_cast %23 : vector<1x32x16xbf16> to vector<32x16xbf16>
    %cst_15 = arith.constant dense<0.000000e+00> : vector<512x16xf32>
    %25 = tpu.matmul %22, %24, %cst_15 {dimension_numbers = #tpu.dot_dimension_numbers<[1], [0], [0], [1], [0, 0, 1, 1], [], []>} : vector<512x32xbf16>, vector<32x16xbf16>, vector<512x16xf32> -> vector<512x16xf32>
    %26 = arith.addf %20, %25 : vector<512x16xf32>
    %27 = vector.extract_strided_slice %2 {offsets = [0, 0, 4, 0], sizes = [2, 16, 16, 32], strides = [1, 1, 1, 1]} : vector<2x16x20x32xbf16> to vector<2x16x16x32xbf16>
    %28 = vector.shape_cast %27 : vector<2x16x16x32xbf16> to vector<512x32xbf16>
    %c4 = arith.constant 4 : index
    %c0_16 = arith.constant 0 : index
    %c0_17 = arith.constant 0 : index
    %29 = vector.load %arg1[%c4, %c0_16, %c0_17] : memref<25x32x16xbf16, #tpu.memory_space<vmem>>, vector<1x32x16xbf16>
    %30 = vector.shape_cast %29 : vector<1x32x16xbf16> to vector<32x16xbf16>
    %cst_18 = arith.constant dense<0.000000e+00> : vector<512x16xf32>
    %31 = tpu.matmul %28, %30, %cst_18 {dimension_numbers = #tpu.dot_dimension_numbers<[1], [0], [0], [1], [0, 0, 1, 1], [], []>} : vector<512x32xbf16>, vector<32x16xbf16>, vector<512x16xf32> -> vector<512x16xf32>
    %32 = arith.addf %26, %31 : vector<512x16xf32>
    %33 = vector.extract_strided_slice %0 {offsets = [0, 1, 0, 0], sizes = [2, 16, 20, 32], strides = [1, 1, 1, 1]} : vector<2x20x20x32xbf16> to vector<2x16x20x32xbf16>
    %34 = vector.extract_strided_slice %33 {offsets = [0, 0, 0, 0], sizes = [2, 16, 16, 32], strides = [1, 1, 1, 1]} : vector<2x16x20x32xbf16> to vector<2x16x16x32xbf16>
    %35 = vector.shape_cast %34 : vector<2x16x16x32xbf16> to vector<512x32xbf16>
    %c5 = arith.constant 5 : index
    %c0_19 = arith.constant 0 : index
    %c0_20 = arith.constant 0 : index
    %36 = vector.load %arg1[%c5, %c0_19, %c0_20] : memref<25x32x16xbf16, #tpu.memory_space<vmem>>, vector<1x32x16xbf16>
    %37 = vector.shape_cast %36 : vector<1x32x16xbf16> to vector<32x16xbf16>
    %cst_21 = arith.constant dense<0.000000e+00> : vector<512x16xf32>
    %38 = tpu.matmul %35, %37, %cst_21 {dimension_numbers = #tpu.dot_dimension_numbers<[1], [0], [0], [1], [0, 0, 1, 1], [], []>} : vector<512x32xbf16>, vector<32x16xbf16>, vector<512x16xf32> -> vector<512x16xf32>
    %39 = arith.addf %32, %38 : vector<512x16xf32>
    %40 = vector.extract_strided_slice %33 {offsets = [0, 0, 1, 0], sizes = [2, 16, 16, 32], strides = [1, 1, 1, 1]} : vector<2x16x20x32xbf16> to vector<2x16x16x32xbf16>
    %41 = vector.shape_cast %40 : vector<2x16x16x32xbf16> to vector<512x32xbf16>
    %c6 = arith.constant 6 : index
    %c0_22 = arith.constant 0 : index
    %c0_23 = arith.constant 0 : index
    %42 = vector.load %arg1[%c6, %c0_22, %c0_23] : memref<25x32x16xbf16, #tpu.memory_space<vmem>>, vector<1x32x16xbf16>
    %43 = vector.shape_cast %42 : vector<1x32x16xbf16> to vector<32x16xbf16>
    %cst_24 = arith.constant dense<0.000000e+00> : vector<512x16xf32>
    %44 = tpu.matmul %41, %43, %cst_24 {dimension_numbers = #tpu.dot_dimension_numbers<[1], [0], [0], [1], [0, 0, 1, 1], [], []>} : vector<512x32xbf16>, vector<32x16xbf16>, vector<512x16xf32> -> vector<512x16xf32>
    %45 = arith.addf %39, %44 : vector<512x16xf32>
    %46 = vector.extract_strided_slice %33 {offsets = [0, 0, 2, 0], sizes = [2, 16, 16, 32], strides = [1, 1, 1, 1]} : vector<2x16x20x32xbf16> to vector<2x16x16x32xbf16>
    %47 = vector.shape_cast %46 : vector<2x16x16x32xbf16> to vector<512x32xbf16>
    %c7 = arith.constant 7 : index
    %c0_25 = arith.constant 0 : index
    %c0_26 = arith.constant 0 : index
    %48 = vector.load %arg1[%c7, %c0_25, %c0_26] : memref<25x32x16xbf16, #tpu.memory_space<vmem>>, vector<1x32x16xbf16>
    %49 = vector.shape_cast %48 : vector<1x32x16xbf16> to vector<32x16xbf16>
    %cst_27 = arith.constant dense<0.000000e+00> : vector<512x16xf32>
    %50 = tpu.matmul %47, %49, %cst_27 {dimension_numbers = #tpu.dot_dimension_numbers<[1], [0], [0], [1], [0, 0, 1, 1], [], []>} : vector<512x32xbf16>, vector<32x16xbf16>, vector<512x16xf32> -> vector<512x16xf32>
    %51 = arith.addf %45, %50 : vector<512x16xf32>
    %52 = vector.extract_strided_slice %33 {offsets = [0, 0, 3, 0], sizes = [2, 16, 16, 32], strides = [1, 1, 1, 1]} : vector<2x16x20x32xbf16> to vector<2x16x16x32xbf16>
    %53 = vector.shape_cast %52 : vector<2x16x16x32xbf16> to vector<512x32xbf16>
    %c8 = arith.constant 8 : index
    %c0_28 = arith.constant 0 : index
    %c0_29 = arith.constant 0 : index
    %54 = vector.load %arg1[%c8, %c0_28, %c0_29] : memref<25x32x16xbf16, #tpu.memory_space<vmem>>, vector<1x32x16xbf16>
    %55 = vector.shape_cast %54 : vector<1x32x16xbf16> to vector<32x16xbf16>
    %cst_30 = arith.constant dense<0.000000e+00> : vector<512x16xf32>
    %56 = tpu.matmul %53, %55, %cst_30 {dimension_numbers = #tpu.dot_dimension_numbers<[1], [0], [0], [1], [0, 0, 1, 1], [], []>} : vector<512x32xbf16>, vector<32x16xbf16>, vector<512x16xf32> -> vector<512x16xf32>
    %57 = arith.addf %51, %56 : vector<512x16xf32>
    %58 = vector.extract_strided_slice %33 {offsets = [0, 0, 4, 0], sizes = [2, 16, 16, 32], strides = [1, 1, 1, 1]} : vector<2x16x20x32xbf16> to vector<2x16x16x32xbf16>
    %59 = vector.shape_cast %58 : vector<2x16x16x32xbf16> to vector<512x32xbf16>
    %c9 = arith.constant 9 : index
    %c0_31 = arith.constant 0 : index
    %c0_32 = arith.constant 0 : index
    %60 = vector.load %arg1[%c9, %c0_31, %c0_32] : memref<25x32x16xbf16, #tpu.memory_space<vmem>>, vector<1x32x16xbf16>
    %61 = vector.shape_cast %60 : vector<1x32x16xbf16> to vector<32x16xbf16>
    %cst_33 = arith.constant dense<0.000000e+00> : vector<512x16xf32>
    %62 = tpu.matmul %59, %61, %cst_33 {dimension_numbers = #tpu.dot_dimension_numbers<[1], [0], [0], [1], [0, 0, 1, 1], [], []>} : vector<512x32xbf16>, vector<32x16xbf16>, vector<512x16xf32> -> vector<512x16xf32>
    %63 = arith.addf %57, %62 : vector<512x16xf32>
    %64 = vector.extract_strided_slice %0 {offsets = [0, 2, 0, 0], sizes = [2, 16, 20, 32], strides = [1, 1, 1, 1]} : vector<2x20x20x32xbf16> to vector<2x16x20x32xbf16>
    %65 = vector.extract_strided_slice %64 {offsets = [0, 0, 0, 0], sizes = [2, 16, 16, 32], strides = [1, 1, 1, 1]} : vector<2x16x20x32xbf16> to vector<2x16x16x32xbf16>
    %66 = vector.shape_cast %65 : vector<2x16x16x32xbf16> to vector<512x32xbf16>
    %c10 = arith.constant 10 : index
    %c0_34 = arith.constant 0 : index
    %c0_35 = arith.constant 0 : index
    %67 = vector.load %arg1[%c10, %c0_34, %c0_35] : memref<25x32x16xbf16, #tpu.memory_space<vmem>>, vector<1x32x16xbf16>
    %68 = vector.shape_cast %67 : vector<1x32x16xbf16> to vector<32x16xbf16>
    %cst_36 = arith.constant dense<0.000000e+00> : vector<512x16xf32>
    %69 = tpu.matmul %66, %68, %cst_36 {dimension_numbers = #tpu.dot_dimension_numbers<[1], [0], [0], [1], [0, 0, 1, 1], [], []>} : vector<512x32xbf16>, vector<32x16xbf16>, vector<512x16xf32> -> vector<512x16xf32>
    %70 = arith.addf %63, %69 : vector<512x16xf32>
    %71 = vector.extract_strided_slice %64 {offsets = [0, 0, 1, 0], sizes = [2, 16, 16, 32], strides = [1, 1, 1, 1]} : vector<2x16x20x32xbf16> to vector<2x16x16x32xbf16>
    %72 = vector.shape_cast %71 : vector<2x16x16x32xbf16> to vector<512x32xbf16>
    %c11 = arith.constant 11 : index
    %c0_37 = arith.constant 0 : index
    %c0_38 = arith.constant 0 : index
    %73 = vector.load %arg1[%c11, %c0_37, %c0_38] : memref<25x32x16xbf16, #tpu.memory_space<vmem>>, vector<1x32x16xbf16>
    %74 = vector.shape_cast %73 : vector<1x32x16xbf16> to vector<32x16xbf16>
    %cst_39 = arith.constant dense<0.000000e+00> : vector<512x16xf32>
    %75 = tpu.matmul %72, %74, %cst_39 {dimension_numbers = #tpu.dot_dimension_numbers<[1], [0], [0], [1], [0, 0, 1, 1], [], []>} : vector<512x32xbf16>, vector<32x16xbf16>, vector<512x16xf32> -> vector<512x16xf32>
    %76 = arith.addf %70, %75 : vector<512x16xf32>
    %77 = vector.extract_strided_slice %64 {offsets = [0, 0, 2, 0], sizes = [2, 16, 16, 32], strides = [1, 1, 1, 1]} : vector<2x16x20x32xbf16> to vector<2x16x16x32xbf16>
    %78 = vector.shape_cast %77 : vector<2x16x16x32xbf16> to vector<512x32xbf16>
    %c12 = arith.constant 12 : index
    %c0_40 = arith.constant 0 : index
    %c0_41 = arith.constant 0 : index
    %79 = vector.load %arg1[%c12, %c0_40, %c0_41] : memref<25x32x16xbf16, #tpu.memory_space<vmem>>, vector<1x32x16xbf16>
    %80 = vector.shape_cast %79 : vector<1x32x16xbf16> to vector<32x16xbf16>
    %cst_42 = arith.constant dense<0.000000e+00> : vector<512x16xf32>
    %81 = tpu.matmul %78, %80, %cst_42 {dimension_numbers = #tpu.dot_dimension_numbers<[1], [0], [0], [1], [0, 0, 1, 1], [], []>} : vector<512x32xbf16>, vector<32x16xbf16>, vector<512x16xf32> -> vector<512x16xf32>
    %82 = arith.addf %76, %81 : vector<512x16xf32>
    %83 = vector.extract_strided_slice %64 {offsets = [0, 0, 3, 0], sizes = [2, 16, 16, 32], strides = [1, 1, 1, 1]} : vector<2x16x20x32xbf16> to vector<2x16x16x32xbf16>
    %84 = vector.shape_cast %83 : vector<2x16x16x32xbf16> to vector<512x32xbf16>
    %c13 = arith.constant 13 : index
    %c0_43 = arith.constant 0 : index
    %c0_44 = arith.constant 0 : index
    %85 = vector.load %arg1[%c13, %c0_43, %c0_44] : memref<25x32x16xbf16, #tpu.memory_space<vmem>>, vector<1x32x16xbf16>
    %86 = vector.shape_cast %85 : vector<1x32x16xbf16> to vector<32x16xbf16>
    %cst_45 = arith.constant dense<0.000000e+00> : vector<512x16xf32>
    %87 = tpu.matmul %84, %86, %cst_45 {dimension_numbers = #tpu.dot_dimension_numbers<[1], [0], [0], [1], [0, 0, 1, 1], [], []>} : vector<512x32xbf16>, vector<32x16xbf16>, vector<512x16xf32> -> vector<512x16xf32>
    %88 = arith.addf %82, %87 : vector<512x16xf32>
    %89 = vector.extract_strided_slice %64 {offsets = [0, 0, 4, 0], sizes = [2, 16, 16, 32], strides = [1, 1, 1, 1]} : vector<2x16x20x32xbf16> to vector<2x16x16x32xbf16>
    %90 = vector.shape_cast %89 : vector<2x16x16x32xbf16> to vector<512x32xbf16>
    %c14 = arith.constant 14 : index
    %c0_46 = arith.constant 0 : index
    %c0_47 = arith.constant 0 : index
    %91 = vector.load %arg1[%c14, %c0_46, %c0_47] : memref<25x32x16xbf16, #tpu.memory_space<vmem>>, vector<1x32x16xbf16>
    %92 = vector.shape_cast %91 : vector<1x32x16xbf16> to vector<32x16xbf16>
    %cst_48 = arith.constant dense<0.000000e+00> : vector<512x16xf32>
    %93 = tpu.matmul %90, %92, %cst_48 {dimension_numbers = #tpu.dot_dimension_numbers<[1], [0], [0], [1], [0, 0, 1, 1], [], []>} : vector<512x32xbf16>, vector<32x16xbf16>, vector<512x16xf32> -> vector<512x16xf32>
    %94 = arith.addf %88, %93 : vector<512x16xf32>
    %95 = vector.extract_strided_slice %0 {offsets = [0, 3, 0, 0], sizes = [2, 16, 20, 32], strides = [1, 1, 1, 1]} : vector<2x20x20x32xbf16> to vector<2x16x20x32xbf16>
    %96 = vector.extract_strided_slice %95 {offsets = [0, 0, 0, 0], sizes = [2, 16, 16, 32], strides = [1, 1, 1, 1]} : vector<2x16x20x32xbf16> to vector<2x16x16x32xbf16>
    %97 = vector.shape_cast %96 : vector<2x16x16x32xbf16> to vector<512x32xbf16>
    %c15 = arith.constant 15 : index
    %c0_49 = arith.constant 0 : index
    %c0_50 = arith.constant 0 : index
    %98 = vector.load %arg1[%c15, %c0_49, %c0_50] : memref<25x32x16xbf16, #tpu.memory_space<vmem>>, vector<1x32x16xbf16>
    %99 = vector.shape_cast %98 : vector<1x32x16xbf16> to vector<32x16xbf16>
    %cst_51 = arith.constant dense<0.000000e+00> : vector<512x16xf32>
    %100 = tpu.matmul %97, %99, %cst_51 {dimension_numbers = #tpu.dot_dimension_numbers<[1], [0], [0], [1], [0, 0, 1, 1], [], []>} : vector<512x32xbf16>, vector<32x16xbf16>, vector<512x16xf32> -> vector<512x16xf32>
    %101 = arith.addf %94, %100 : vector<512x16xf32>
    %102 = vector.extract_strided_slice %95 {offsets = [0, 0, 1, 0], sizes = [2, 16, 16, 32], strides = [1, 1, 1, 1]} : vector<2x16x20x32xbf16> to vector<2x16x16x32xbf16>
    %103 = vector.shape_cast %102 : vector<2x16x16x32xbf16> to vector<512x32xbf16>
    %c16 = arith.constant 16 : index
    %c0_52 = arith.constant 0 : index
    %c0_53 = arith.constant 0 : index
    %104 = vector.load %arg1[%c16, %c0_52, %c0_53] : memref<25x32x16xbf16, #tpu.memory_space<vmem>>, vector<1x32x16xbf16>
    %105 = vector.shape_cast %104 : vector<1x32x16xbf16> to vector<32x16xbf16>
    %cst_54 = arith.constant dense<0.000000e+00> : vector<512x16xf32>
    %106 = tpu.matmul %103, %105, %cst_54 {dimension_numbers = #tpu.dot_dimension_numbers<[1], [0], [0], [1], [0, 0, 1, 1], [], []>} : vector<512x32xbf16>, vector<32x16xbf16>, vector<512x16xf32> -> vector<512x16xf32>
    %107 = arith.addf %101, %106 : vector<512x16xf32>
    %108 = vector.extract_strided_slice %95 {offsets = [0, 0, 2, 0], sizes = [2, 16, 16, 32], strides = [1, 1, 1, 1]} : vector<2x16x20x32xbf16> to vector<2x16x16x32xbf16>
    %109 = vector.shape_cast %108 : vector<2x16x16x32xbf16> to vector<512x32xbf16>
    %c17 = arith.constant 17 : index
    %c0_55 = arith.constant 0 : index
    %c0_56 = arith.constant 0 : index
    %110 = vector.load %arg1[%c17, %c0_55, %c0_56] : memref<25x32x16xbf16, #tpu.memory_space<vmem>>, vector<1x32x16xbf16>
    %111 = vector.shape_cast %110 : vector<1x32x16xbf16> to vector<32x16xbf16>
    %cst_57 = arith.constant dense<0.000000e+00> : vector<512x16xf32>
    %112 = tpu.matmul %109, %111, %cst_57 {dimension_numbers = #tpu.dot_dimension_numbers<[1], [0], [0], [1], [0, 0, 1, 1], [], []>} : vector<512x32xbf16>, vector<32x16xbf16>, vector<512x16xf32> -> vector<512x16xf32>
    %113 = arith.addf %107, %112 : vector<512x16xf32>
    %114 = vector.extract_strided_slice %95 {offsets = [0, 0, 3, 0], sizes = [2, 16, 16, 32], strides = [1, 1, 1, 1]} : vector<2x16x20x32xbf16> to vector<2x16x16x32xbf16>
    %115 = vector.shape_cast %114 : vector<2x16x16x32xbf16> to vector<512x32xbf16>
    %c18 = arith.constant 18 : index
    %c0_58 = arith.constant 0 : index
    %c0_59 = arith.constant 0 : index
    %116 = vector.load %arg1[%c18, %c0_58, %c0_59] : memref<25x32x16xbf16, #tpu.memory_space<vmem>>, vector<1x32x16xbf16>
    %117 = vector.shape_cast %116 : vector<1x32x16xbf16> to vector<32x16xbf16>
    %cst_60 = arith.constant dense<0.000000e+00> : vector<512x16xf32>
    %118 = tpu.matmul %115, %117, %cst_60 {dimension_numbers = #tpu.dot_dimension_numbers<[1], [0], [0], [1], [0, 0, 1, 1], [], []>} : vector<512x32xbf16>, vector<32x16xbf16>, vector<512x16xf32> -> vector<512x16xf32>
    %119 = arith.addf %113, %118 : vector<512x16xf32>
    %120 = vector.extract_strided_slice %95 {offsets = [0, 0, 4, 0], sizes = [2, 16, 16, 32], strides = [1, 1, 1, 1]} : vector<2x16x20x32xbf16> to vector<2x16x16x32xbf16>
    %121 = vector.shape_cast %120 : vector<2x16x16x32xbf16> to vector<512x32xbf16>
    %c19 = arith.constant 19 : index
    %c0_61 = arith.constant 0 : index
    %c0_62 = arith.constant 0 : index
    %122 = vector.load %arg1[%c19, %c0_61, %c0_62] : memref<25x32x16xbf16, #tpu.memory_space<vmem>>, vector<1x32x16xbf16>
    %123 = vector.shape_cast %122 : vector<1x32x16xbf16> to vector<32x16xbf16>
    %cst_63 = arith.constant dense<0.000000e+00> : vector<512x16xf32>
    %124 = tpu.matmul %121, %123, %cst_63 {dimension_numbers = #tpu.dot_dimension_numbers<[1], [0], [0], [1], [0, 0, 1, 1], [], []>} : vector<512x32xbf16>, vector<32x16xbf16>, vector<512x16xf32> -> vector<512x16xf32>
    %125 = arith.addf %119, %124 : vector<512x16xf32>
    %126 = vector.extract_strided_slice %0 {offsets = [0, 4, 0, 0], sizes = [2, 16, 20, 32], strides = [1, 1, 1, 1]} : vector<2x20x20x32xbf16> to vector<2x16x20x32xbf16>
    %127 = vector.extract_strided_slice %126 {offsets = [0, 0, 0, 0], sizes = [2, 16, 16, 32], strides = [1, 1, 1, 1]} : vector<2x16x20x32xbf16> to vector<2x16x16x32xbf16>
    %128 = vector.shape_cast %127 : vector<2x16x16x32xbf16> to vector<512x32xbf16>
    %c20 = arith.constant 20 : index
    %c0_64 = arith.constant 0 : index
    %c0_65 = arith.constant 0 : index
    %129 = vector.load %arg1[%c20, %c0_64, %c0_65] : memref<25x32x16xbf16, #tpu.memory_space<vmem>>, vector<1x32x16xbf16>
    %130 = vector.shape_cast %129 : vector<1x32x16xbf16> to vector<32x16xbf16>
    %cst_66 = arith.constant dense<0.000000e+00> : vector<512x16xf32>
    %131 = tpu.matmul %128, %130, %cst_66 {dimension_numbers = #tpu.dot_dimension_numbers<[1], [0], [0], [1], [0, 0, 1, 1], [], []>} : vector<512x32xbf16>, vector<32x16xbf16>, vector<512x16xf32> -> vector<512x16xf32>
    %132 = arith.addf %125, %131 : vector<512x16xf32>
    %133 = vector.extract_strided_slice %126 {offsets = [0, 0, 1, 0], sizes = [2, 16, 16, 32], strides = [1, 1, 1, 1]} : vector<2x16x20x32xbf16> to vector<2x16x16x32xbf16>
    %134 = vector.shape_cast %133 : vector<2x16x16x32xbf16> to vector<512x32xbf16>
    %c21 = arith.constant 21 : index
    %c0_67 = arith.constant 0 : index
    %c0_68 = arith.constant 0 : index
    %135 = vector.load %arg1[%c21, %c0_67, %c0_68] : memref<25x32x16xbf16, #tpu.memory_space<vmem>>, vector<1x32x16xbf16>
    %136 = vector.shape_cast %135 : vector<1x32x16xbf16> to vector<32x16xbf16>
    %cst_69 = arith.constant dense<0.000000e+00> : vector<512x16xf32>
    %137 = tpu.matmul %134, %136, %cst_69 {dimension_numbers = #tpu.dot_dimension_numbers<[1], [0], [0], [1], [0, 0, 1, 1], [], []>} : vector<512x32xbf16>, vector<32x16xbf16>, vector<512x16xf32> -> vector<512x16xf32>
    %138 = arith.addf %132, %137 : vector<512x16xf32>
    %139 = vector.extract_strided_slice %126 {offsets = [0, 0, 2, 0], sizes = [2, 16, 16, 32], strides = [1, 1, 1, 1]} : vector<2x16x20x32xbf16> to vector<2x16x16x32xbf16>
    %140 = vector.shape_cast %139 : vector<2x16x16x32xbf16> to vector<512x32xbf16>
    %c22 = arith.constant 22 : index
    %c0_70 = arith.constant 0 : index
    %c0_71 = arith.constant 0 : index
    %141 = vector.load %arg1[%c22, %c0_70, %c0_71] : memref<25x32x16xbf16, #tpu.memory_space<vmem>>, vector<1x32x16xbf16>
    %142 = vector.shape_cast %141 : vector<1x32x16xbf16> to vector<32x16xbf16>
    %cst_72 = arith.constant dense<0.000000e+00> : vector<512x16xf32>
    %143 = tpu.matmul %140, %142, %cst_72 {dimension_numbers = #tpu.dot_dimension_numbers<[1], [0], [0], [1], [0, 0, 1, 1], [], []>} : vector<512x32xbf16>, vector<32x16xbf16>, vector<512x16xf32> -> vector<512x16xf32>
    %144 = arith.addf %138, %143 : vector<512x16xf32>
    %145 = vector.extract_strided_slice %126 {offsets = [0, 0, 3, 0], sizes = [2, 16, 16, 32], strides = [1, 1, 1, 1]} : vector<2x16x20x32xbf16> to vector<2x16x16x32xbf16>
    %146 = vector.shape_cast %145 : vector<2x16x16x32xbf16> to vector<512x32xbf16>
    %c23 = arith.constant 23 : index
    %c0_73 = arith.constant 0 : index
    %c0_74 = arith.constant 0 : index
    %147 = vector.load %arg1[%c23, %c0_73, %c0_74] : memref<25x32x16xbf16, #tpu.memory_space<vmem>>, vector<1x32x16xbf16>
    %148 = vector.shape_cast %147 : vector<1x32x16xbf16> to vector<32x16xbf16>
    %cst_75 = arith.constant dense<0.000000e+00> : vector<512x16xf32>
    %149 = tpu.matmul %146, %148, %cst_75 {dimension_numbers = #tpu.dot_dimension_numbers<[1], [0], [0], [1], [0, 0, 1, 1], [], []>} : vector<512x32xbf16>, vector<32x16xbf16>, vector<512x16xf32> -> vector<512x16xf32>
    %150 = arith.addf %144, %149 : vector<512x16xf32>
    %151 = vector.extract_strided_slice %126 {offsets = [0, 0, 4, 0], sizes = [2, 16, 16, 32], strides = [1, 1, 1, 1]} : vector<2x16x20x32xbf16> to vector<2x16x16x32xbf16>
    %152 = vector.shape_cast %151 : vector<2x16x16x32xbf16> to vector<512x32xbf16>
    %c24 = arith.constant 24 : index
    %c0_76 = arith.constant 0 : index
    %c0_77 = arith.constant 0 : index
    %153 = vector.load %arg1[%c24, %c0_76, %c0_77] : memref<25x32x16xbf16, #tpu.memory_space<vmem>>, vector<1x32x16xbf16>
    %154 = vector.shape_cast %153 : vector<1x32x16xbf16> to vector<32x16xbf16>
    %cst_78 = arith.constant dense<0.000000e+00> : vector<512x16xf32>
    %155 = tpu.matmul %152, %154, %cst_78 {dimension_numbers = #tpu.dot_dimension_numbers<[1], [0], [0], [1], [0, 0, 1, 1], [], []>} : vector<512x32xbf16>, vector<32x16xbf16>, vector<512x16xf32> -> vector<512x16xf32>
    %156 = arith.addf %150, %155 : vector<512x16xf32>
    %c0_79 = arith.constant 0 : index
    %c0_80 = arith.constant 0 : index
    %157 = vector.load %arg2[%c0_79, %c0_80] : memref<1x16xf32, #tpu.memory_space<vmem>>, vector<1x16xf32>
    %158 = vector.broadcast %157 : vector<1x16xf32> to vector<512x16xf32>
    %159 = arith.addf %156, %158 : vector<512x16xf32>
    %cst_81 = arith.constant 0.000000e+00 : f32
    %160 = vector.broadcast %cst_81 : f32 to vector<512x16xf32>
    %161 = arith.cmpf ogt, %159, %160 : vector<512x16xf32>
    %cst_82 = arith.constant 2.000000e-01 : f32
    %162 = vector.broadcast %cst_82 : f32 to vector<512x16xf32>
    %163 = arith.mulf %162, %159 : vector<512x16xf32>
    %164 = arith.select %161, %159, %163 : vector<512x16xi1>, vector<512x16xf32>
    %165 = vector.shape_cast %164 : vector<512x16xf32> to vector<2x256x16xf32>
    %cst_83 = arith.constant dense<0.000000e+00> : vector<2x16xf32>
    %166 = vector.multi_reduction <add>, %165, %cst_83 [1] : vector<2x256x16xf32> to vector<2x16xf32>
    %c0_84 = arith.constant 0 : index
    %c0_85 = arith.constant 0 : index
    %167 = vector.load %arg3[%c0_84, %c0_85] : memref<1x16xf32, #tpu.memory_space<vmem>>, vector<1x16xf32>
    %168 = vector.broadcast %167 : vector<1x16xf32> to vector<2x16xf32>
    %169 = arith.mulf %166, %168 : vector<2x16xf32>
    %cst_86 = arith.constant dense<0.000000e+00> : vector<2xf32>
    %170 = vector.multi_reduction <add>, %169, %cst_86 [1] : vector<2x16xf32> to vector<2xf32>
    %171 = vector.shape_cast %170 : vector<2xf32> to vector<2x1xf32>
    %c0_87 = arith.constant 0 : index
    %c0_88 = arith.constant 0 : index
    %172 = vector.load %arg4[%c0_87, %c0_88] : memref<1x1xf32, #tpu.memory_space<vmem>>, vector<1x1xf32>
    %173 = vector.broadcast %172 : vector<1x1xf32> to vector<2x1xf32>
    %174 = arith.addf %171, %173 : vector<2x1xf32>
    %c0_89 = arith.constant 0 : index
    %c0_90 = arith.constant 0 : index
    %175 = vector.load %arg5[%c0_89, %c0_90] : memref<2x1xf32, #tpu.memory_space<vmem>>, vector<2x1xf32>
    tpu.vector_store %arg5[%c0_89, %c0_90], %174 {strides = array<i32>} : memref<2x1xf32, #tpu.memory_space<vmem>>, vector<2x1xf32>,
    return
  }
}

</mosaic_0001>

<llo_original>
// kernel: lbp_forward.1
$region0: #{lbp_forward.1}
  #allocation0 [shape = 'u32[]', space=smem, size = 0x4, offset = 0x4, fixed_abs, tag = 'smem constant byte address 0x4 - core index']
  #allocation1 [shape = 'u32[144,128]{1,0:T(1,128)}', space=vmem, size = 0x12000, scoped, tag = 'internal scratch']
  #allocation2 [shape = 'f32[1,1]{1,0:T(1,128)S(1)}', space=vmem, size = 0x200, scoped, tag = 'scoped memory for lbp_forward.1']
  %s0 = inlined_call_operand.vmem [shape: bf16[2,20,20,32], index: 0, kind: input, shape index: {}]
  %s1 = inlined_call_operand.vmem [shape: bf16[25,32,16], index: 1, kind: input, shape index: {}]
  %s2 = inlined_call_operand.vmem [shape: f32[1,16], index: 2, kind: input, shape index: {}]
  %s3 = inlined_call_operand.vmem [shape: f32[1,16], index: 3, kind: input, shape index: {}]
  %s4 = inlined_call_operand.<no memory space> [shape: f32[1,1], index: 4, kind: input, shape index: {}]
  %s5 = inlined_call_operand.vmem [shape: f32[2,1], index: 5, kind: output, shape index: {}]
  %s6 = sld [smem:[#allocation0]]
  $region30: #{lbp_forward.1} parent=0
    _
  %s8 = ssub.s32 1, %s6
  %s9 = scalar_select 0, %s8, %s6
  %v10 = vstv %s4
  %11 = vst [vmem:[#allocation2] sm:$0x1] %v10
  // Predicated region
  $region2: #{lbp_forward.1} parent=0 // pred_check
    _
  $region3: #{lbp_forward.1} parent=0 // pred_check_branch
    %13 = sbr.rel (0) target = $region5
  $region4: #{lbp_forward.1} parent=0 // pred_region
    _
  $region5: #{lbp_forward.1} parent=0 // pred_fallthru
    _
  // Predicated region
  $region6: #{lbp_forward.1} parent=0 // pred_check
    _
  $region7: #{lbp_forward.1} parent=0 // pred_check_branch
    %15 = sbr.rel (0) target = $region9
  $region8: #{lbp_forward.1} parent=0 // pred_region
    _
  $region9: #{lbp_forward.1} parent=0 // pred_fallthru
    _
  // Predicated region
  $region10: #{lbp_forward.1} parent=0 // pred_check
    _
  $region11: #{lbp_forward.1} parent=0 // pred_check_branch
    %17 = sbr.rel (0) target = $region13
  $region12: #{lbp_forward.1} parent=0 // pred_region
    _
  $region13: #{lbp_forward.1} parent=0 // pred_fallthru
    _
  // Predicated region
  $region14: #{lbp_forward.1} parent=0 // pred_check
    _
  $region15: #{lbp_forward.1} parent=0 // pred_check_branch
    %19 = sbr.rel (0) target = $region17
  $region16: #{lbp_forward.1} parent=0 // pred_region
    _
  $region17: #{lbp_forward.1} parent=0 // pred_fallthru
    _
  // Predicated region
  $region18: #{lbp_forward.1} parent=0 // pred_check
    _
  $region19: #{lbp_forward.1} parent=0 // pred_check_branch
    %21 = sbr.rel (0) target = $region21
  $region20: #{lbp_forward.1} parent=0 // pred_region
    _
  $region21: #{lbp_forward.1} parent=0 // pred_fallthru
    _
  %v23 = vld [vmem:[%s0] sm:$0xf]
  %v24 = vld [vmem:[%s0 + $0x4] sm:$0xf]
  %v25 = vld [vmem:[%s0 + $0x8] sm:$0x3]
  %v26 = vld [vmem:[%s0 + $0xc] sm:$0xf]
  %v27 = vld [vmem:[%s0 + $0x10] sm:$0xf]
  %v28 = vld [vmem:[%s0 + $0x14] sm:$0x3]
  %v29 = vld [vmem:[%s0 + $0x18] sm:$0xf]
  %v30 = vld [vmem:[%s0 + $0x1c] sm:$0xf]
  %v31 = vld [vmem:[%s0 + $0x20] sm:$0x3]
  %v32 = vld [vmem:[%s0 + $0x24] sm:$0xf]
  %v33 = vld [vmem:[%s0 + $0x28] sm:$0xf]
  %v34 = vld [vmem:[%s0 + $0x2c] sm:$0x3]
  %v35 = vld [vmem:[%s0 + $0x30] sm:$0xf]
  %v36 = vld [vmem:[%s0 + $0x34] sm:$0xf]
  %v37 = vld [vmem:[%s0 + $0x38] sm:$0x3]
  %v38 = vld [vmem:[%s0 + $0x3c] sm:$0xf]
  %v39 = vld [vmem:[%s0 + $0x40] sm:$0xf]
  %v40 = vld [vmem:[%s0 + $0x44] sm:$0x3]
  %v41 = vld [vmem:[%s0 + $0x48] sm:$0xf]
  %v42 = vld [vmem:[%s0 + $0x4c] sm:$0xf]
  %v43 = vld [vmem:[%s0 + $0x50] sm:$0x3]
  %v44 = vld [vmem:[%s0 + $0x54] sm:$0xf]
  %v45 = vld [vmem:[%s0 + $0x58] sm:$0xf]
  %v46 = vld [vmem:[%s0 + $0x5c] sm:$0x3]
  %v47 = vld [vmem:[%s0 + $0x60] sm:$0xf]
  %v48 = vld [vmem:[%s0 + $0x64] sm:$0xf]
  %v49 = vld [vmem:[%s0 + $0x68] sm:$0x3]
  %v50 = vld [vmem:[%s0 + $0x6c] sm:$0xf]
  %v51 = vld [vmem:[%s0 + $0x70] sm:$0xf]
  %v52 = vld [vmem:[%s0 + $0x74] sm:$0x3]
  %v53 = vld [vmem:[%s0 + $0x78] sm:$0xf]
  %v54 = vld [vmem:[%s0 + $0x7c] sm:$0xf]
  %v55 = vld [vmem:[%s0 + $0x80] sm:$0x3]
  %v56 = vld [vmem:[%s0 + $0x84] sm:$0xf]
  %v57 = vld [vmem:[%s0 + $0x88] sm:$0xf]
  %v58 = vld [vmem:[%s0 + $0x8c] sm:$0x3]
  %v59 = vld [vmem:[%s0 + $0x90] sm:$0xf]
  %v60 = vld [vmem:[%s0 + $0x94] sm:$0xf]
  %v61 = vld [vmem:[%s0 + $0x98] sm:$0x3]
  %v62 = vld [vmem:[%s0 + $0x9c] sm:$0xf]
  %v63 = vld [vmem:[%s0 + $0xa0] sm:$0xf]
  %v64 = vld [vmem:[%s0 + $0xa4] sm:$0x3]
  %v65 = vld [vmem:[%s0 + $0xa8] sm:$0xf]
  %v66 = vld [vmem:[%s0 + $0xac] sm:$0xf]
  %v67 = vld [vmem:[%s0 + $0xb0] sm:$0x3]
  %v68 = vld [vmem:[%s0 + $0xb4] sm:$0xf]
  %v69 = vld [vmem:[%s0 + $0xb8] sm:$0xf]
  %v70 = vld [vmem:[%s0 + $0xbc] sm:$0x3]
  %v71 = vld [vmem:[%s0 + $0xc0] sm:$0xf]
  %v72 = vld [vmem:[%s0 + $0xc4] sm:$0xf]
  %v73 = vld [vmem:[%s0 + $0xc8] sm:$0x3]
  %v74 = vld [vmem:[%s0 + $0xcc] sm:$0xf]
  %v75 = vld [vmem:[%s0 + $0xd0] sm:$0xf]
  %v76 = vld [vmem:[%s0 + $0xd4] sm:$0x3]
  %v77 = vld [vmem:[%s0 + $0xd8] sm:$0xf]
  %v78 = vld [vmem:[%s0 + $0xdc] sm:$0xf]
  %v79 = vld [vmem:[%s0 + $0xe0] sm:$0x3]
  %v80 = vld [vmem:[%s0 + $0xe4] sm:$0xf]
  %v81 = vld [vmem:[%s0 + $0xe8] sm:$0xf]
  %v82 = vld [vmem:[%s0 + $0xec] sm:$0x3]
  %v83 = vld [vmem:[%s0 + $0xf0] sm:$0xf]
  %v84 = vld [vmem:[%s0 + $0xf4] sm:$0xf]
  %v85 = vld [vmem:[%s0 + $0xf8] sm:$0x3]
  %v86 = vld [vmem:[%s0 + $0xfc] sm:$0xf]
  %v87 = vld [vmem:[%s0 + $0x100] sm:$0xf]
  %v88 = vld [vmem:[%s0 + $0x104] sm:$0x3]
  %v89 = vld [vmem:[%s0 + $0x108] sm:$0xf]
  %v90 = vld [vmem:[%s0 + $0x10c] sm:$0xf]
  %v91 = vld [vmem:[%s0 + $0x110] sm:$0x3]
  %v92 = vld [vmem:[%s0 + $0x114] sm:$0xf]
  %v93 = vld [vmem:[%s0 + $0x118] sm:$0xf]
  %v94 = vld [vmem:[%s0 + $0x11c] sm:$0x3]
  %v95 = vld [vmem:[%s0 + $0x120] sm:$0xf]
  %v96 = vld [vmem:[%s0 + $0x124] sm:$0xf]
  %v97 = vld [vmem:[%s0 + $0x128] sm:$0x3]
  %v98 = vld [vmem:[%s0 + $0x12c] sm:$0xf]
  %v99 = vld [vmem:[%s0 + $0x130] sm:$0xf]
  %v100 = vld [vmem:[%s0 + $0x134] sm:$0x3]
  %v101 = vld [vmem:[%s0 + $0x138] sm:$0xf]
  %v102 = vld [vmem:[%s0 + $0x13c] sm:$0xf]
  %v103 = vld [vmem:[%s0 + $0x140] sm:$0x3]
  %v104 = vld [vmem:[%s0 + $0x144] sm:$0xf]
  %v105 = vld [vmem:[%s0 + $0x148] sm:$0xf]
  %v106 = vld [vmem:[%s0 + $0x14c] sm:$0x3]
  %v107 = vld [vmem:[%s0 + $0x150] sm:$0xf]
  %v108 = vld [vmem:[%s0 + $0x154] sm:$0xf]
  %v109 = vld [vmem:[%s0 + $0x158] sm:$0x3]
  %v110 = vld [vmem:[%s0 + $0x15c] sm:$0xf]
  %v111 = vld [vmem:[%s0 + $0x160] sm:$0xf]
  %v112 = vld [vmem:[%s0 + $0x164] sm:$0x3]
  %v113 = vld [vmem:[%s0 + $0x168] sm:$0xf]
  %v114 = vld [vmem:[%s0 + $0x16c] sm:$0xf]
  %v115 = vld [vmem:[%s0 + $0x170] sm:$0x3]
  %v116 = vld [vmem:[%s0 + $0x174] sm:$0xf]
  %v117 = vld [vmem:[%s0 + $0x178] sm:$0xf]
  %v118 = vld [vmem:[%s0 + $0x17c] sm:$0x3]
  %v119 = vld [vmem:[%s0 + $0x180] sm:$0xf]
  %v120 = vld [vmem:[%s0 + $0x184] sm:$0xf]
  %v121 = vld [vmem:[%s0 + $0x188] sm:$0x3]
  %v122 = vld [vmem:[%s0 + $0x18c] sm:$0xf]
  %v123 = vld [vmem:[%s0 + $0x190] sm:$0xf]
  %v124 = vld [vmem:[%s0 + $0x194] sm:$0x3]
  %v125 = vld [vmem:[%s0 + $0x198] sm:$0xf]
  %v126 = vld [vmem:[%s0 + $0x19c] sm:$0xf]
  %v127 = vld [vmem:[%s0 + $0x1a0] sm:$0x3]
  %v128 = vld [vmem:[%s0 + $0x1a4] sm:$0xf]
  %v129 = vld [vmem:[%s0 + $0x1a8] sm:$0xf]
  %v130 = vld [vmem:[%s0 + $0x1ac] sm:$0x3]
  %v131 = vld [vmem:[%s0 + $0x1b0] sm:$0xf]
  %v132 = vld [vmem:[%s0 + $0x1b4] sm:$0xf]
  %v133 = vld [vmem:[%s0 + $0x1b8] sm:$0x3]
  %v134 = vld [vmem:[%s0 + $0x1bc] sm:$0xf]
  %v135 = vld [vmem:[%s0 + $0x1c0] sm:$0xf]
  %v136 = vld [vmem:[%s0 + $0x1c4] sm:$0x3]
  %v137 = vld [vmem:[%s0 + $0x1c8] sm:$0xf]
  %v138 = vld [vmem:[%s0 + $0x1cc] sm:$0xf]
  %v139 = vld [vmem:[%s0 + $0x1d0] sm:$0x3]
  %v140 = vld [vmem:[%s0 + $0x1d4] sm:$0xf]
  %v141 = vld [vmem:[%s0 + $0x1d8] sm:$0xf]
  %v142 = vld [vmem:[%s0 + $0x1dc] sm:$0x3]
  %v143 = vld [vmem:[%s1] sm:$0xf]
  %v144 = vld [vmem:[%s1 + $0x4] sm:$0xf]
  %v145 = vld [vmem:[%s1 + $0x8] sm:$0xf]
  %v146 = vld [vmem:[%s1 + $0xc] sm:$0xf]
  %vm147 = vsmask.f32 3328
  %vm148 = vsmask.f32 7440
  %vm149 = vmor %vm147, %vm148
  %v151 = vshrl.u32 %v23, 16
  %v153 = vrot.slane %v151, 4
  %v154 = vshll.u32 %v23, 16
  %v156 = vrot.slane %v154, 5
  %v157 = vor.u32 %v153, %v156
  %v158 = vrot.slane %v157, 4
  %v160 = vshll.u32 %v24, 16
  %v162 = vrot.slane %v160, 5
  %v163 = vsel %vm149, %v158, %v162
  %v164 = vshrl.u32 %v24, 16
  %v166 = vrot.slane %v164, 4
  %v167 = vor.u32 %v166, %v162
  %v168 = vrot.slane %v167, 4
  %v170 = vshll.u32 %v25, 16
  %v172 = vrot.slane %v170, 5
  %v173 = vsel %vm149, %v168, %v172
  %v175 = vshrl.u32 %v26, 16
  %v177 = vrot.slane %v175, 4
  %v178 = vshll.u32 %v26, 16
  %v180 = vrot.slane %v178, 5
  %v181 = vor.u32 %v177, %v180
  %v182 = vrot.slane %v181, 4
  %v184 = vshll.u32 %v27, 16
  %v186 = vrot.slane %v184, 5
  %v187 = vsel %vm149, %v182, %v186
  %v188 = vshrl.u32 %v27, 16
  %v190 = vrot.slane %v188, 4
  %v191 = vor.u32 %v190, %v186
  %v192 = vrot.slane %v191, 4
  %v194 = vshll.u32 %v28, 16
  %v196 = vrot.slane %v194, 5
  %v197 = vsel %vm149, %v192, %v196
  %v199 = vshrl.u32 %v29, 16
  %v201 = vrot.slane %v199, 4
  %v202 = vshll.u32 %v29, 16
  %v204 = vrot.slane %v202, 5
  %v205 = vor.u32 %v201, %v204
  %v206 = vrot.slane %v205, 4
  %v208 = vshll.u32 %v30, 16
  %v210 = vrot.slane %v208, 5
  %v211 = vsel %vm149, %v206, %v210
  %v212 = vshrl.u32 %v30, 16
  %v214 = vrot.slane %v212, 4
  %v215 = vor.u32 %v214, %v210
  %v216 = vrot.slane %v215, 4
  %v218 = vshll.u32 %v31, 16
  %v220 = vrot.slane %v218, 5
  %v221 = vsel %vm149, %v216, %v220
  %v223 = vshrl.u32 %v32, 16
  %v225 = vrot.slane %v223, 4
  %v226 = vshll.u32 %v32, 16
  %v228 = vrot.slane %v226, 5
  %v229 = vor.u32 %v225, %v228
  %v230 = vrot.slane %v229, 4
  %v232 = vshll.u32 %v33, 16
  %v234 = vrot.slane %v232, 5
  %v235 = vsel %vm149, %v230, %v234
  %v236 = vshrl.u32 %v33, 16
  %v238 = vrot.slane %v236, 4
  %v239 = vor.u32 %v238, %v234
  %v240 = vrot.slane %v239, 4
  %v242 = vshll.u32 %v34, 16
  %v244 = vrot.slane %v242, 5
  %v245 = vsel %vm149, %v240, %v244
  %v247 = vshrl.u32 %v35, 16
  %v249 = vrot.slane %v247, 4
  %v250 = vshll.u32 %v35, 16
  %v252 = vrot.slane %v250, 5
  %v253 = vor.u32 %v249, %v252
  %v254 = vrot.slane %v253, 4
  %v256 = vshll.u32 %v36, 16
  %v258 = vrot.slane %v256, 5
  %v259 = vsel %vm149, %v254, %v258
  %v260 = vshrl.u32 %v36, 16
  %v262 = vrot.slane %v260, 4
  %v263 = vor.u32 %v262, %v258
  %v264 = vrot.slane %v263, 4
  %v266 = vshll.u32 %v37, 16
  %v268 = vrot.slane %v266, 5
  %v269 = vsel %vm149, %v264, %v268
  %v271 = vshrl.u32 %v38, 16
  %v273 = vrot.slane %v271, 4
  %v274 = vshll.u32 %v38, 16
  %v276 = vrot.slane %v274, 5
  %v277 = vor.u32 %v273, %v276
  %v278 = vrot.slane %v277, 4
  %v280 = vshll.u32 %v39, 16
  %v282 = vrot.slane %v280, 5
  %v283 = vsel %vm149, %v278, %v282
  %v284 = vshrl.u32 %v39, 16
  %v286 = vrot.slane %v284, 4
  %v287 = vor.u32 %v286, %v282
  %v288 = vrot.slane %v287, 4
  %v290 = vshll.u32 %v40, 16
  %v292 = vrot.slane %v290, 5
  %v293 = vsel %vm149, %v288, %v292
  %v295 = vshrl.u32 %v41, 16
  %v297 = vrot.slane %v295, 4
  %v298 = vshll.u32 %v41, 16
  %v300 = vrot.slane %v298, 5
  %v301 = vor.u32 %v297, %v300
  %v302 = vrot.slane %v301, 4
  %v304 = vshll.u32 %v42, 16
  %v306 = vrot.slane %v304, 5
  %v307 = vsel %vm149, %v302, %v306
  %v308 = vshrl.u32 %v42, 16
  %v310 = vrot.slane %v308, 4
  %v311 = vor.u32 %v310, %v306
  %v312 = vrot.slane %v311, 4
  %v314 = vshll.u32 %v43, 16
  %v316 = vrot.slane %v314, 5
  %v317 = vsel %vm149, %v312, %v316
  %v319 = vshrl.u32 %v44, 16
  %v321 = vrot.slane %v319, 4
  %v322 = vshll.u32 %v44, 16
  %v324 = vrot.slane %v322, 5
  %v325 = vor.u32 %v321, %v324
  %v326 = vrot.slane %v325, 4
  %v328 = vshll.u32 %v45, 16
  %v330 = vrot.slane %v328, 5
  %v331 = vsel %vm149, %v326, %v330
  %v332 = vshrl.u32 %v45, 16
  %v334 = vrot.slane %v332, 4
  %v335 = vor.u32 %v334, %v330
  %v336 = vrot.slane %v335, 4
  %v338 = vshll.u32 %v46, 16
  %v340 = vrot.slane %v338, 5
  %v341 = vsel %vm149, %v336, %v340
  %v343 = vshrl.u32 %v47, 16
  %v345 = vrot.slane %v343, 4
  %v346 = vshll.u32 %v47, 16
  %v348 = vrot.slane %v346, 5
  %v349 = vor.u32 %v345, %v348
  %v350 = vrot.slane %v349, 4
  %v352 = vshll.u32 %v48, 16
  %v354 = vrot.slane %v352, 5
  %v355 = vsel %vm149, %v350, %v354
  %v356 = vshrl.u32 %v48, 16
  %v358 = vrot.slane %v356, 4
  %v359 = vor.u32 %v358, %v354
  %v360 = vrot.slane %v359, 4
  %v362 = vshll.u32 %v49, 16
  %v364 = vrot.slane %v362, 5
  %v365 = vsel %vm149, %v360, %v364
  %v367 = vshrl.u32 %v50, 16
  %v369 = vrot.slane %v367, 4
  %v370 = vshll.u32 %v50, 16
  %v372 = vrot.slane %v370, 5
  %v373 = vor.u32 %v369, %v372
  %v374 = vrot.slane %v373, 4
  %v376 = vshll.u32 %v51, 16
  %v378 = vrot.slane %v376, 5
  %v379 = vsel %vm149, %v374, %v378
  %v380 = vshrl.u32 %v51, 16
  %v382 = vrot.slane %v380, 4
  %v383 = vor.u32 %v382, %v378
  %v384 = vrot.slane %v383, 4
  %v386 = vshll.u32 %v52, 16
  %v388 = vrot.slane %v386, 5
  %v389 = vsel %vm149, %v384, %v388
  %v391 = vshrl.u32 %v53, 16
  %v393 = vrot.slane %v391, 4
  %v394 = vshll.u32 %v53, 16
  %v396 = vrot.slane %v394, 5
  %v397 = vor.u32 %v393, %v396
  %v398 = vrot.slane %v397, 4
  %v400 = vshll.u32 %v54, 16
  %v402 = vrot.slane %v400, 5
  %v403 = vsel %vm149, %v398, %v402
  %v404 = vshrl.u32 %v54, 16
  %v406 = vrot.slane %v404, 4
  %v407 = vor.u32 %v406, %v402
  %v408 = vrot.slane %v407, 4
  %v410 = vshll.u32 %v55, 16
  %v412 = vrot.slane %v410, 5
  %v413 = vsel %vm149, %v408, %v412
  %v415 = vshrl.u32 %v56, 16
  %v417 = vrot.slane %v415, 4
  %v418 = vshll.u32 %v56, 16
  %v420 = vrot.slane %v418, 5
  %v421 = vor.u32 %v417, %v420
  %v422 = vrot.slane %v421, 4
  %v424 = vshll.u32 %v57, 16
  %v426 = vrot.slane %v424, 5
  %v427 = vsel %vm149, %v422, %v426
  %v428 = vshrl.u32 %v57, 16
  %v430 = vrot.slane %v428, 4
  %v431 = vor.u32 %v430, %v426
  %v432 = vrot.slane %v431, 4
  %v434 = vshll.u32 %v58, 16
  %v436 = vrot.slane %v434, 5
  %v437 = vsel %vm149, %v432, %v436
  %v439 = vshrl.u32 %v59, 16
  %v441 = vrot.slane %v439, 4
  %v442 = vshll.u32 %v59, 16
  %v444 = vrot.slane %v442, 5
  %v445 = vor.u32 %v441, %v444
  %v446 = vrot.slane %v445, 4
  %v448 = vshll.u32 %v60, 16
  %v450 = vrot.slane %v448, 5
  %v451 = vsel %vm149, %v446, %v450
  %v452 = vshrl.u32 %v60, 16
  %v454 = vrot.slane %v452, 4
  %v455 = vor.u32 %v454, %v450
  %v456 = vrot.slane %v455, 4
  %v458 = vshll.u32 %v61, 16
  %v460 = vrot.slane %v458, 5
  %v461 = vsel %vm149, %v456, %v460
  %v463 = vshrl.u32 %v62, 16
  %v465 = vrot.slane %v463, 4
  %v466 = vshll.u32 %v62, 16
  %v468 = vrot.slane %v466, 5
  %v469 = vor.u32 %v465, %v468
  %v470 = vrot.slane %v469, 4
  %v472 = vshll.u32 %v63, 16
  %v474 = vrot.slane %v472, 5
  %v475 = vsel %vm149, %v470, %v474
  %v476 = vshrl.u32 %v63, 16
  %v478 = vrot.slane %v476, 4
  %v479 = vor.u32 %v478, %v474
  %v480 = vrot.slane %v479, 4
  %v482 = vshll.u32 %v64, 16
  %v484 = vrot.slane %v482, 5
  %v485 = vsel %vm149, %v480, %v484
  %v487 = vshrl.u32 %v65, 16
  %v489 = vrot.slane %v487, 4
  %v490 = vshll.u32 %v65, 16
  %v492 = vrot.slane %v490, 5
  %v493 = vor.u32 %v489, %v492
  %v494 = vrot.slane %v493, 4
  %v496 = vshll.u32 %v66, 16
  %v498 = vrot.slane %v496, 5
  %v499 = vsel %vm149, %v494, %v498
  %v500 = vshrl.u32 %v66, 16
  %v502 = vrot.slane %v500, 4
  %v503 = vor.u32 %v502, %v498
  %v504 = vrot.slane %v503, 4
  %v506 = vshll.u32 %v67, 16
  %v508 = vrot.slane %v506, 5
  %v509 = vsel %vm149, %v504, %v508
  %v511 = vshrl.u32 %v68, 16
  %v513 = vrot.slane %v511, 4
  %v514 = vshll.u32 %v68, 16
  %v516 = vrot.slane %v514, 5
  %v517 = vor.u32 %v513, %v516
  %v518 = vrot.slane %v517, 4
  %v520 = vshll.u32 %v69, 16
  %v522 = vrot.slane %v520, 5
  %v523 = vsel %vm149, %v518, %v522
  %v524 = vshrl.u32 %v69, 16
  %v526 = vrot.slane %v524, 4
  %v527 = vor.u32 %v526, %v522
  %v528 = vrot.slane %v527, 4
  %v530 = vshll.u32 %v70, 16
  %v532 = vrot.slane %v530, 5
  %v533 = vsel %vm149, %v528, %v532
  %v535 = vshrl.u32 %v83, 16
  %v537 = vrot.slane %v535, 4
  %v538 = vshll.u32 %v83, 16
  %v540 = vrot.slane %v538, 5
  %v541 = vor.u32 %v537, %v540
  %v542 = vrot.slane %v541, 4
  %v544 = vshll.u32 %v84, 16
  %v546 = vrot.slane %v544, 5
  %v547 = vsel %vm149, %v542, %v546
  %v548 = vshrl.u32 %v84, 16
  %v550 = vrot.slane %v548, 4
  %v551 = vor.u32 %v550, %v546
  %v552 = vrot.slane %v551, 4
  %v554 = vshll.u32 %v85, 16
  %v556 = vrot.slane %v554, 5
  %v557 = vsel %vm149, %v552, %v556
  %v559 = vshrl.u32 %v86, 16
  %v561 = vrot.slane %v559, 4
  %v562 = vshll.u32 %v86, 16
  %v564 = vrot.slane %v562, 5
  %v565 = vor.u32 %v561, %v564
  %v566 = vrot.slane %v565, 4
  %v568 = vshll.u32 %v87, 16
  %v570 = vrot.slane %v568, 5
  %v571 = vsel %vm149, %v566, %v570
  %v572 = vshrl.u32 %v87, 16
  %v574 = vrot.slane %v572, 4
  %v575 = vor.u32 %v574, %v570
  %v576 = vrot.slane %v575, 4
  %v578 = vshll.u32 %v88, 16
  %v580 = vrot.slane %v578, 5
  %v581 = vsel %vm149, %v576, %v580
  %v583 = vshrl.u32 %v89, 16
  %v585 = vrot.slane %v583, 4
  %v586 = vshll.u32 %v89, 16
  %v588 = vrot.slane %v586, 5
  %v589 = vor.u32 %v585, %v588
  %v590 = vrot.slane %v589, 4
  %v592 = vshll.u32 %v90, 16
  %v594 = vrot.slane %v592, 5
  %v595 = vsel %vm149, %v590, %v594
  %v596 = vshrl.u32 %v90, 16
  %v598 = vrot.slane %v596, 4
  %v599 = vor.u32 %v598, %v594
  %v600 = vrot.slane %v599, 4
  %v602 = vshll.u32 %v91, 16
  %v604 = vrot.slane %v602, 5
  %v605 = vsel %vm149, %v600, %v604
  %v607 = vshrl.u32 %v92, 16
  %v609 = vrot.slane %v607, 4
  %v610 = vshll.u32 %v92, 16
  %v612 = vrot.slane %v610, 5
  %v613 = vor.u32 %v609, %v612
  %v614 = vrot.slane %v613, 4
  %v616 = vshll.u32 %v93, 16
  %v618 = vrot.slane %v616, 5
  %v619 = vsel %vm149, %v614, %v618
  %v620 = vshrl.u32 %v93, 16
  %v622 = vrot.slane %v620, 4
  %v623 = vor.u32 %v622, %v618
  %v624 = vrot.slane %v623, 4
  %v626 = vshll.u32 %v94, 16
  %v628 = vrot.slane %v626, 5
  %v629 = vsel %vm149, %v624, %v628
  %v631 = vshrl.u32 %v95, 16
  %v633 = vrot.slane %v631, 4
  %v634 = vshll.u32 %v95, 16
  %v636 = vrot.slane %v634, 5
  %v637 = vor.u32 %v633, %v636
  %v638 = vrot.slane %v637, 4
  %v640 = vshll.u32 %v96, 16
  %v642 = vrot.slane %v640, 5
  %v643 = vsel %vm149, %v638, %v642
  %v644 = vshrl.u32 %v96, 16
  %v646 = vrot.slane %v644, 4
  %v647 = vor.u32 %v646, %v642
  %v648 = vrot.slane %v647, 4
  %v650 = vshll.u32 %v97, 16
  %v652 = vrot.slane %v650, 5
  %v653 = vsel %vm149, %v648, %v652
  %v655 = vshrl.u32 %v98, 16
  %v657 = vrot.slane %v655, 4
  %v658 = vshll.u32 %v98, 16
  %v660 = vrot.slane %v658, 5
  %v661 = vor.u32 %v657, %v660
  %v662 = vrot.slane %v661, 4
  %v664 = vshll.u32 %v99, 16
  %v666 = vrot.slane %v664, 5
  %v667 = vsel %vm149, %v662, %v666
  %v668 = vshrl.u32 %v99, 16
  %v670 = vrot.slane %v668, 4
  %v671 = vor.u32 %v670, %v666
  %v672 = vrot.slane %v671, 4
  %v674 = vshll.u32 %v100, 16
  %v676 = vrot.slane %v674, 5
  %v677 = vsel %vm149, %v672, %v676
  %v679 = vshrl.u32 %v101, 16
  %v681 = vrot.slane %v679, 4
  %v682 = vshll.u32 %v101, 16
  %v684 = vrot.slane %v682, 5
  %v685 = vor.u32 %v681, %v684
  %v686 = vrot.slane %v685, 4
  %v688 = vshll.u32 %v102, 16
  %v690 = vrot.slane %v688, 5
  %v691 = vsel %vm149, %v686, %v690
  %v692 = vshrl.u32 %v102, 16
  %v694 = vrot.slane %v692, 4
  %v695 = vor.u32 %v694, %v690
  %v696 = vrot.slane %v695, 4
  %v698 = vshll.u32 %v103, 16
  %v700 = vrot.slane %v698, 5
  %v701 = vsel %vm149, %v696, %v700
  %v703 = vshrl.u32 %v104, 16
  %v705 = vrot.slane %v703, 4
  %v706 = vshll.u32 %v104, 16
  %v708 = vrot.slane %v706, 5
  %v709 = vor.u32 %v705, %v708
  %v710 = vrot.slane %v709, 4
  %v712 = vshll.u32 %v105, 16
  %v714 = vrot.slane %v712, 5
  %v715 = vsel %vm149, %v710, %v714
  %v716 = vshrl.u32 %v105, 16
  %v718 = vrot.slane %v716, 4
  %v719 = vor.u32 %v718, %v714
  %v720 = vrot.slane %v719, 4
  %v722 = vshll.u32 %v106, 16
  %v724 = vrot.slane %v722, 5
  %v725 = vsel %vm149, %v720, %v724
  %v727 = vshrl.u32 %v107, 16
  %v729 = vrot.slane %v727, 4
  %v730 = vshll.u32 %v107, 16
  %v732 = vrot.slane %v730, 5
  %v733 = vor.u32 %v729, %v732
  %v734 = vrot.slane %v733, 4
  %v736 = vshll.u32 %v108, 16
  %v738 = vrot.slane %v736, 5
  %v739 = vsel %vm149, %v734, %v738
  %v740 = vshrl.u32 %v108, 16
  %v742 = vrot.slane %v740, 4
  %v743 = vor.u32 %v742, %v738
  %v744 = vrot.slane %v743, 4
  %v746 = vshll.u32 %v109, 16
  %v748 = vrot.slane %v746, 5
  %v749 = vsel %vm149, %v744, %v748
  %v751 = vshrl.u32 %v110, 16
  %v753 = vrot.slane %v751, 4
  %v754 = vshll.u32 %v110, 16
  %v756 = vrot.slane %v754, 5
  %v757 = vor.u32 %v753, %v756
  %v758 = vrot.slane %v757, 4
  %v760 = vshll.u32 %v111, 16
  %v762 = vrot.slane %v760, 5
  %v763 = vsel %vm149, %v758, %v762
  %v764 = vshrl.u32 %v111, 16
  %v766 = vrot.slane %v764, 4
  %v767 = vor.u32 %v766, %v762
  %v768 = vrot.slane %v767, 4
  %v770 = vshll.u32 %v112, 16
  %v772 = vrot.slane %v770, 5
  %v773 = vsel %vm149, %v768, %v772
  %v775 = vshrl.u32 %v113, 16
  %v777 = vrot.slane %v775, 4
  %v778 = vshll.u32 %v113, 16
  %v780 = vrot.slane %v778, 5
  %v781 = vor.u32 %v777, %v780
  %v782 = vrot.slane %v781, 4
  %v784 = vshll.u32 %v114, 16
  %v786 = vrot.slane %v784, 5
  %v787 = vsel %vm149, %v782, %v786
  %v788 = vshrl.u32 %v114, 16
  %v790 = vrot.slane %v788, 4
  %v791 = vor.u32 %v790, %v786
  %v792 = vrot.slane %v791, 4
  %v794 = vshll.u32 %v115, 16
  %v796 = vrot.slane %v794, 5
  %v797 = vsel %vm149, %v792, %v796
  %v799 = vshrl.u32 %v116, 16
  %v801 = vrot.slane %v799, 4
  %v802 = vshll.u32 %v116, 16
  %v804 = vrot.slane %v802, 5
  %v805 = vor.u32 %v801, %v804
  %v806 = vrot.slane %v805, 4
  %v808 = vshll.u32 %v117, 16
  %v810 = vrot.slane %v808, 5
  %v811 = vsel %vm149, %v806, %v810
  %v812 = vshrl.u32 %v117, 16
  %v814 = vrot.slane %v812, 4
  %v815 = vor.u32 %v814, %v810
  %v816 = vrot.slane %v815, 4
  %v818 = vshll.u32 %v118, 16
  %v820 = vrot.slane %v818, 5
  %v821 = vsel %vm149, %v816, %v820
  %v823 = vshrl.u32 %v119, 16
  %v825 = vrot.slane %v823, 4
  %v826 = vshll.u32 %v119, 16
  %v828 = vrot.slane %v826, 5
  %v829 = vor.u32 %v825, %v828
  %v830 = vrot.slane %v829, 4
  %v832 = vshll.u32 %v120, 16
  %v834 = vrot.slane %v832, 5
  %v835 = vsel %vm149, %v830, %v834
  %v836 = vshrl.u32 %v120, 16
  %v838 = vrot.slane %v836, 4
  %v839 = vor.u32 %v838, %v834
  %v840 = vrot.slane %v839, 4
  %v842 = vshll.u32 %v121, 16
  %v844 = vrot.slane %v842, 5
  %v845 = vsel %vm149, %v840, %v844
  %v847 = vshrl.u32 %v122, 16
  %v849 = vrot.slane %v847, 4
  %v850 = vshll.u32 %v122, 16
  %v852 = vrot.slane %v850, 5
  %v853 = vor.u32 %v849, %v852
  %v854 = vrot.slane %v853, 4
  %v856 = vshll.u32 %v123, 16
  %v858 = vrot.slane %v856, 5
  %v859 = vsel %vm149, %v854, %v858
  %v860 = vshrl.u32 %v123, 16
  %v862 = vrot.slane %v860, 4
  %v863 = vor.u32 %v862, %v858
  %v864 = vrot.slane %v863, 4
  %v866 = vshll.u32 %v124, 16
  %v868 = vrot.slane %v866, 5
  %v869 = vsel %vm149, %v864, %v868
  %v871 = vshrl.u32 %v125, 16
  %v873 = vrot.slane %v871, 4
  %v874 = vshll.u32 %v125, 16
  %v876 = vrot.slane %v874, 5
  %v877 = vor.u32 %v873, %v876
  %v878 = vrot.slane %v877, 4
  %v880 = vshll.u32 %v126, 16
  %v882 = vrot.slane %v880, 5
  %v883 = vsel %vm149, %v878, %v882
  %v884 = vshrl.u32 %v126, 16
  %v886 = vrot.slane %v884, 4
  %v887 = vor.u32 %v886, %v882
  %v888 = vrot.slane %v887, 4
  %v890 = vshll.u32 %v127, 16
  %v892 = vrot.slane %v890, 5
  %v893 = vsel %vm149, %v888, %v892
  %v895 = vshrl.u32 %v128, 16
  %v897 = vrot.slane %v895, 4
  %v898 = vshll.u32 %v128, 16
  %v900 = vrot.slane %v898, 5
  %v901 = vor.u32 %v897, %v900
  %v902 = vrot.slane %v901, 4
  %v904 = vshll.u32 %v129, 16
  %v906 = vrot.slane %v904, 5
  %v907 = vsel %vm149, %v902, %v906
  %v908 = vshrl.u32 %v129, 16
  %v910 = vrot.slane %v908, 4
  %v911 = vor.u32 %v910, %v906
  %v912 = vrot.slane %v911, 4
  %v914 = vshll.u32 %v130, 16
  %v916 = vrot.slane %v914, 5
  %v917 = vsel %vm149, %v912, %v916
  %s918 = scalar_lea.vmem %s1, 16
  %v919 = vld [vmem:[%s918] sm:$0xf]
  %v920 = vld [vmem:[%s918 + $0x4] sm:$0xf]
  %v921 = vld [vmem:[%s918 + $0x8] sm:$0xf]
  %v922 = vld [vmem:[%s918 + $0xc] sm:$0xf]
  %v923 = vunpack.c.l.b16 %v163
  %v924 = vunpack.c.l.b16 %v173
  %v925 = vunpack.c.l.b16 %v187
  %v926 = vunpack.c.l.b16 %v197
  %v927 = vunpack.c.l.b16 %v211
  %v928 = vunpack.c.l.b16 %v221
  %v929 = vunpack.c.l.b16 %v235
  %v930 = vunpack.c.l.b16 %v245
  %v931 = vunpack.c.l.b16 %v259
  %v932 = vunpack.c.l.b16 %v269
  %v933 = vunpack.c.l.b16 %v283
  %v934 = vunpack.c.l.b16 %v293
  %v935 = vunpack.c.l.b16 %v307
  %v936 = vunpack.c.l.b16 %v317
  %v937 = vunpack.c.l.b16 %v331
  %v938 = vunpack.c.l.b16 %v341
  %v939 = vunpack.c.l.b16 %v355
  %v940 = vunpack.c.l.b16 %v365
  %v941 = vunpack.c.l.b16 %v379
  %v942 = vunpack.c.l.b16 %v389
  %v943 = vunpack.c.l.b16 %v403
  %v944 = vunpack.c.l.b16 %v413
  %v945 = vunpack.c.l.b16 %v427
  %v946 = vunpack.c.l.b16 %v437
  %v947 = vunpack.c.l.b16 %v451
  %v948 = vunpack.c.l.b16 %v461
  %v949 = vunpack.c.l.b16 %v475
  %v950 = vunpack.c.l.b16 %v485
  %v951 = vunpack.c.l.b16 %v499
  %v952 = vunpack.c.l.b16 %v509
  %v953 = vunpack.c.l.b16 %v523
  %v954 = vunpack.c.l.b16 %v533
  %v955 = vunpack.c.l.b16 %v547
  %v956 = vunpack.c.l.b16 %v557
  %v957 = vunpack.c.l.b16 %v571
  %v958 = vunpack.c.l.b16 %v581
  %v959 = vunpack.c.l.b16 %v595
  %v960 = vunpack.c.l.b16 %v605
  %v961 = vunpack.c.l.b16 %v619
  %v962 = vunpack.c.l.b16 %v629
  %v963 = vunpack.c.l.b16 %v643
  %v964 = vunpack.c.l.b16 %v653
  %v965 = vunpack.c.l.b16 %v667
  %v966 = vunpack.c.l.b16 %v677
  %v967 = vunpack.c.l.b16 %v691
  %v968 = vunpack.c.l.b16 %v701
  %v969 = vunpack.c.l.b16 %v715
  %v970 = vunpack.c.l.b16 %v725
  %v971 = vunpack.c.l.b16 %v739
  %v972 = vunpack.c.l.b16 %v749
  %v973 = vunpack.c.l.b16 %v763
  %v974 = vunpack.c.l.b16 %v773
  %v975 = vunpack.c.l.b16 %v787
  %v976 = vunpack.c.l.b16 %v797
  %v977 = vunpack.c.l.b16 %v811
  %v978 = vunpack.c.l.b16 %v821
  %v979 = vunpack.c.l.b16 %v835
  %v980 = vunpack.c.l.b16 %v845
  %v981 = vunpack.c.l.b16 %v859
  %v982 = vunpack.c.l.b16 %v869
  %v983 = vunpack.c.l.b16 %v883
  %v984 = vunpack.c.l.b16 %v893
  %v985 = vunpack.c.l.b16 %v907
  %v986 = vunpack.c.l.b16 %v917
  %v987 = vpack.c.b16 %v924, %v923
  %v988 = vpack.c.b16 %v926, %v925
  %v989 = vpack.c.b16 %v928, %v927
  %v990 = vpack.c.b16 %v930, %v929
  %v991 = vpack.c.b16 %v932, %v931
  %v992 = vpack.c.b16 %v934, %v933
  %v993 = vpack.c.b16 %v936, %v935
  %v994 = vpack.c.b16 %v938, %v937
  %v995 = vpack.c.b16 %v940, %v939
  %v996 = vpack.c.b16 %v942, %v941
  %v997 = vpack.c.b16 %v944, %v943
  %v998 = vpack.c.b16 %v946, %v945
  %v999 = vpack.c.b16 %v948, %v947
  %v1000 = vpack.c.b16 %v950, %v949
  %v1001 = vpack.c.b16 %v952, %v951
  %v1002 = vpack.c.b16 %v954, %v953
  %v1003 = vpack.c.b16 %v956, %v955
  %v1004 = vpack.c.b16 %v958, %v957
  %v1005 = vpack.c.b16 %v960, %v959
  %v1006 = vpack.c.b16 %v962, %v961
  %v1007 = vpack.c.b16 %v964, %v963
  %v1008 = vpack.c.b16 %v966, %v965
  %v1009 = vpack.c.b16 %v968, %v967
  %v1010 = vpack.c.b16 %v970, %v969
  %v1011 = vpack.c.b16 %v972, %v971
  %v1012 = vpack.c.b16 %v974, %v973
  %v1013 = vpack.c.b16 %v976, %v975
  %v1014 = vpack.c.b16 %v978, %v977
  %v1015 = vpack.c.b16 %v980, %v979
  %v1016 = vpack.c.b16 %v982, %v981
  %v1017 = vpack.c.b16 %v984, %v983
  %v1018 = vpack.c.b16 %v986, %v985
  %v1023 = vunpack.c.l.b16 %v919
  %v1024 = vunpack.c.l.b16 %v920
  %v1025 = vunpack.c.l.b16 %v921
  %v1026 = vunpack.c.l.b16 %v922
  %v1027 = vpack.c.b16 %v1024, %v1023
  %v1028 = vpack.c.b16 %v1026, %v1025
  %vm1031 = vcmask 261120
  %v1033 = vsel %vm1031, %v987, 0
  %v1036 = vsel %vm1031, %v988, 0
  %v1039 = vsel %vm1031, %v989, 0
  %v1042 = vsel %vm1031, %v990, 0
  %v1045 = vsel %vm1031, %v991, 0
  %v1048 = vsel %vm1031, %v992, 0
  %v1051 = vsel %vm1031, %v993, 0
  %v1054 = vsel %vm1031, %v994, 0
  %v1057 = vsel %vm1031, %v995, 0
  %v1060 = vsel %vm1031, %v996, 0
  %v1063 = vsel %vm1031, %v997, 0
  %v1066 = vsel %vm1031, %v998, 0
  %v1069 = vsel %vm1031, %v999, 0
  %v1072 = vsel %vm1031, %v1000, 0
  %v1075 = vsel %vm1031, %v1001, 0
  %v1078 = vsel %vm1031, %v1002, 0
  %v1081 = vsel %vm1031, %v1003, 0
  %v1084 = vsel %vm1031, %v1004, 0
  %v1087 = vsel %vm1031, %v1005, 0
  %v1090 = vsel %vm1031, %v1006, 0
  %v1093 = vsel %vm1031, %v1007, 0
  %v1096 = vsel %vm1031, %v1008, 0
  %v1099 = vsel %vm1031, %v1009, 0
  %v1102 = vsel %vm1031, %v1010, 0
  %v1105 = vsel %vm1031, %v1011, 0
  %v1108 = vsel %vm1031, %v1012, 0
  %v1111 = vsel %vm1031, %v1013, 0
  %v1114 = vsel %vm1031, %v1014, 0
  %v1117 = vsel %vm1031, %v1015, 0
  %v1120 = vsel %vm1031, %v1016, 0
  %v1123 = vsel %vm1031, %v1017, 0
  %v1126 = vsel %vm1031, %v1018, 0
  %1128 = vmatprep.subr.bf16.mxu0 0
  %1129 = vmatpush1.bf16.msra.mxu0 %v1027
  %1130 = vmatprep.subr.bf16.mxu0 0
  %1131 = vmatpush1.bf16.msra.mxu0 %v1028
  %1132 = vmatprep.subr.bf16.mxu0 0
  %1133 = vmatpush1.bf16.msra.mxu0 0
  %1134 = vmatprep.subr.bf16.mxu0 0
  %1135 = vmatpush1.bf16.msra.mxu0 0
  %1136 = vmatprep.subr.bf16.mxu0 0
  %1137 = vmatpush1.bf16.msra.mxu0 0
  %1138 = vmatprep.subr.bf16.mxu0 0
  %1139 = vmatpush1.bf16.msra.mxu0 0
  %1140 = vmatprep.subr.bf16.mxu0 0
  %1141 = vmatpush1.bf16.msra.mxu0 0
  %1142 = vmatprep.subr.bf16.mxu0 0
  %1143 = vmatpush1.bf16.msra.mxu0 0
  %1144 = vmatprep.subr.bf16.mxu0 0
  %1145 = vmatpush1.bf16.msra.mxu0 0
  %1146 = vmatprep.subr.bf16.mxu0 0
  %1147 = vmatpush1.bf16.msra.mxu0 0
  %1148 = vmatprep.subr.bf16.mxu0 0
  %1149 = vmatpush1.bf16.msra.mxu0 0
  %1150 = vmatprep.subr.bf16.mxu0 0
  %1151 = vmatpush1.bf16.msra.mxu0 0
  %1152 = vmatprep.subr.bf16.mxu0 0
  %1153 = vmatpush1.bf16.msra.mxu0 0
  %1154 = vmatprep.subr.bf16.mxu0 0
  %1155 = vmatpush1.bf16.msra.mxu0 0
  %1156 = vmatprep.subr.bf16.mxu0 0
  %1157 = vmatpush1.bf16.msra.mxu0 0
  %1158 = vmatprep.subr.bf16.mxu0 0
  %1159 = vmatpush1.bf16.msra.mxu0 0
  %1160 = vmatprep.mubr.bf16.mxu0 0
  %1161 = vmatmul.mubr.bf16.gmra.mrb[0].mxu0 %v1033
  %v1162 = vpop.f32.mrb[0].mxu0
  %v1163 = vadd.f32 0.0, %v1162
  %v1164 = vpop.f32.mrb[0].mxu0
  %v1165 = vpop.f32.mrb[0].mxu0
  %v1166 = vadd.f32 0.0, %v1165
  %v1167 = vpop.f32.mrb[0].mxu0
  %1168 = vmatprep.mubr.bf16.mxu0 0
  %1169 = vmatmul.mubr.bf16.gmra.mrb[0].mxu0 %v1036
  %v1170 = vpop.f32.mrb[0].mxu0
  %v1171 = vadd.f32 0.0, %v1170
  %v1172 = vpop.f32.mrb[0].mxu0
  %v1173 = vpop.f32.mrb[0].mxu0
  %v1174 = vadd.f32 0.0, %v1173
  %v1175 = vpop.f32.mrb[0].mxu0
  %1176 = vmatprep.mubr.bf16.mxu0 0
  %1177 = vmatmul.mubr.bf16.gmra.mrb[0].mxu0 %v1039
  %v1178 = vpop.f32.mrb[0].mxu0
  %v1179 = vadd.f32 0.0, %v1178
  %v1180 = vpop.f32.mrb[0].mxu0
  %v1181 = vpop.f32.mrb[0].mxu0
  %v1182 = vadd.f32 0.0, %v1181
  %v1183 = vpop.f32.mrb[0].mxu0
  %1184 = vmatprep.mubr.bf16.mxu0 0
  %1185 = vmatmul.mubr.bf16.gmra.mrb[0].mxu0 %v1042
  %v1186 = vpop.f32.mrb[0].mxu0
  %v1187 = vadd.f32 0.0, %v1186
  %v1188 = vpop.f32.mrb[0].mxu0
  %v1189 = vpop.f32.mrb[0].mxu0
  %v1190 = vadd.f32 0.0, %v1189
  %v1191 = vpop.f32.mrb[0].mxu0
  %1192 = vmatprep.mubr.bf16.mxu0 0
  %1193 = vmatmul.mubr.bf16.gmra.mrb[0].mxu0 %v1045
  %v1194 = vpop.f32.mrb[0].mxu0
  %v1195 = vadd.f32 0.0, %v1194
  %v1196 = vpop.f32.mrb[0].mxu0
  %v1197 = vpop.f32.mrb[0].mxu0
  %v1198 = vadd.f32 0.0, %v1197
  %v1199 = vpop.f32.mrb[0].mxu0
  %1200 = vmatprep.mubr.bf16.mxu0 0
  %1201 = vmatmul.mubr.bf16.gmra.mrb[0].mxu0 %v1048
  %v1202 = vpop.f32.mrb[0].mxu0
  %v1203 = vadd.f32 0.0, %v1202
  %v1204 = vpop.f32.mrb[0].mxu0
  %v1205 = vpop.f32.mrb[0].mxu0
  %v1206 = vadd.f32 0.0, %v1205
  %v1207 = vpop.f32.mrb[0].mxu0
  %1208 = vmatprep.mubr.bf16.mxu0 0
  %1209 = vmatmul.mubr.bf16.gmra.mrb[0].mxu0 %v1051
  %v1210 = vpop.f32.mrb[0].mxu0
  %v1211 = vadd.f32 0.0, %v1210
  %v1212 = vpop.f32.mrb[0].mxu0
  %v1213 = vpop.f32.mrb[0].mxu0
  %v1214 = vadd.f32 0.0, %v1213
  %v1215 = vpop.f32.mrb[0].mxu0
  %1216 = vmatprep.mubr.bf16.mxu0 0
  %1217 = vmatmul.mubr.bf16.gmra.mrb[0].mxu0 %v1054
  %v1218 = vpop.f32.mrb[0].mxu0
  %v1219 = vadd.f32 0.0, %v1218
  %v1220 = vpop.f32.mrb[0].mxu0
  %v1221 = vpop.f32.mrb[0].mxu0
  %v1222 = vadd.f32 0.0, %v1221
  %v1223 = vpop.f32.mrb[0].mxu0
  %1224 = vmatprep.mubr.bf16.mxu0 0
  %1225 = vmatmul.mubr.bf16.gmra.mrb[0].mxu0 %v1057
  %v1226 = vpop.f32.mrb[0].mxu0
  %v1227 = vadd.f32 0.0, %v1226
  %v1228 = vpop.f32.mrb[0].mxu0
  %v1229 = vpop.f32.mrb[0].mxu0
  %v1230 = vadd.f32 0.0, %v1229
  %v1231 = vpop.f32.mrb[0].mxu0
  %1232 = vmatprep.mubr.bf16.mxu0 0
  %1233 = vmatmul.mubr.bf16.gmra.mrb[0].mxu0 %v1060
  %v1234 = vpop.f32.mrb[0].mxu0
  %v1235 = vadd.f32 0.0, %v1234
  %v1236 = vpop.f32.mrb[0].mxu0
  %v1237 = vpop.f32.mrb[0].mxu0
  %v1238 = vadd.f32 0.0, %v1237
  %v1239 = vpop.f32.mrb[0].mxu0
  %1240 = vmatprep.mubr.bf16.mxu0 0
  %1241 = vmatmul.mubr.bf16.gmra.mrb[0].mxu0 %v1063
  %v1242 = vpop.f32.mrb[0].mxu0
  %v1243 = vadd.f32 0.0, %v1242
  %v1244 = vpop.f32.mrb[0].mxu0
  %v1245 = vpop.f32.mrb[0].mxu0
  %v1246 = vadd.f32 0.0, %v1245
  %v1247 = vpop.f32.mrb[0].mxu0
  %1248 = vmatprep.mubr.bf16.mxu0 0
  %1249 = vmatmul.mubr.bf16.gmra.mrb[0].mxu0 %v1066
  %v1250 = vpop.f32.mrb[0].mxu0
  %v1251 = vadd.f32 0.0, %v1250
  %v1252 = vpop.f32.mrb[0].mxu0
  %v1253 = vpop.f32.mrb[0].mxu0
  %v1254 = vadd.f32 0.0, %v1253
  %v1255 = vpop.f32.mrb[0].mxu0
  %1256 = vmatprep.mubr.bf16.mxu0 0
  %1257 = vmatmul.mubr.bf16.gmra.mrb[0].mxu0 %v1069
  %v1258 = vpop.f32.mrb[0].mxu0
  %v1259 = vadd.f32 0.0, %v1258
  %v1260 = vpop.f32.mrb[0].mxu0
  %v1261 = vpop.f32.mrb[0].mxu0
  %v1262 = vadd.f32 0.0, %v1261
  %v1263 = vpop.f32.mrb[0].mxu0
  %1264 = vmatprep.mubr.bf16.mxu0 0
  %1265 = vmatmul.mubr.bf16.gmra.mrb[0].mxu0 %v1072
  %v1266 = vpop.f32.mrb[0].mxu0
  %v1267 = vadd.f32 0.0, %v1266
  %v1268 = vpop.f32.mrb[0].mxu0
  %v1269 = vpop.f32.mrb[0].mxu0
  %v1270 = vadd.f32 0.0, %v1269
  %v1271 = vpop.f32.mrb[0].mxu0
  %1272 = vmatprep.mubr.bf16.mxu0 0
  %1273 = vmatmul.mubr.bf16.gmra.mrb[0].mxu0 %v1075
  %v1274 = vpop.f32.mrb[0].mxu0
  %v1275 = vadd.f32 0.0, %v1274
  %v1276 = vpop.f32.mrb[0].mxu0
  %v1277 = vpop.f32.mrb[0].mxu0
  %v1278 = vadd.f32 0.0, %v1277
  %v1279 = vpop.f32.mrb[0].mxu0
  %1280 = vmatprep.mubr.bf16.mxu0 0
  %1281 = vmatmul.mubr.bf16.gmra.mrb[0].mxu0 %v1078
  %v1282 = vpop.f32.mrb[0].mxu0
  %v1283 = vadd.f32 0.0, %v1282
  %v1284 = vpop.f32.mrb[0].mxu0
  %v1285 = vpop.f32.mrb[0].mxu0
  %v1286 = vadd.f32 0.0, %v1285
  %v1287 = vpop.f32.mrb[0].mxu0
  %1288 = vmatprep.mubr.bf16.mxu0 0
  %1289 = vmatmul.mubr.bf16.gmra.mrb[0].mxu0 %v1081
  %v1290 = vpop.f32.mrb[0].mxu0
  %v1291 = vadd.f32 0.0, %v1290
  %v1292 = vpop.f32.mrb[0].mxu0
  %v1293 = vpop.f32.mrb[0].mxu0
  %v1294 = vadd.f32 0.0, %v1293
  %v1295 = vpop.f32.mrb[0].mxu0
  %1296 = vmatprep.mubr.bf16.mxu0 0
  %1297 = vmatmul.mubr.bf16.gmra.mrb[0].mxu0 %v1084
  %v1298 = vpop.f32.mrb[0].mxu0
  %v1299 = vadd.f32 0.0, %v1298
  %v1300 = vpop.f32.mrb[0].mxu0
  %v1301 = vpop.f32.mrb[0].mxu0
  %v1302 = vadd.f32 0.0, %v1301
  %v1303 = vpop.f32.mrb[0].mxu0
  %1304 = vmatprep.mubr.bf16.mxu0 0
  %1305 = vmatmul.mubr.bf16.gmra.mrb[0].mxu0 %v1087
  %v1306 = vpop.f32.mrb[0].mxu0
  %v1307 = vadd.f32 0.0, %v1306
  %v1308 = vpop.f32.mrb[0].mxu0
  %v1309 = vpop.f32.mrb[0].mxu0
  %v1310 = vadd.f32 0.0, %v1309
  %v1311 = vpop.f32.mrb[0].mxu0
  %1312 = vmatprep.mubr.bf16.mxu0 0
  %1313 = vmatmul.mubr.bf16.gmra.mrb[0].mxu0 %v1090
  %v1314 = vpop.f32.mrb[0].mxu0
  %v1315 = vadd.f32 0.0, %v1314
  %v1316 = vpop.f32.mrb[0].mxu0
  %v1317 = vpop.f32.mrb[0].mxu0
  %v1318 = vadd.f32 0.0, %v1317
  %v1319 = vpop.f32.mrb[0].mxu0
  %1320 = vmatprep.mubr.bf16.mxu0 0
  %1321 = vmatmul.mubr.bf16.gmra.mrb[0].mxu0 %v1093
  %v1322 = vpop.f32.mrb[0].mxu0
  %v1323 = vadd.f32 0.0, %v1322
  %v1324 = vpop.f32.mrb[0].mxu0
  %v1325 = vpop.f32.mrb[0].mxu0
  %v1326 = vadd.f32 0.0, %v1325
  %v1327 = vpop.f32.mrb[0].mxu0
  %1328 = vmatprep.mubr.bf16.mxu0 0
  %1329 = vmatmul.mubr.bf16.gmra.mrb[0].mxu0 %v1096
  %v1330 = vpop.f32.mrb[0].mxu0
  %v1331 = vadd.f32 0.0, %v1330
  %v1332 = vpop.f32.mrb[0].mxu0
  %v1333 = vpop.f32.mrb[0].mxu0
  %v1334 = vadd.f32 0.0, %v1333
  %v1335 = vpop.f32.mrb[0].mxu0
  %1336 = vmatprep.mubr.bf16.mxu0 0
  %1337 = vmatmul.mubr.bf16.gmra.mrb[0].mxu0 %v1099
  %v1338 = vpop.f32.mrb[0].mxu0
  %v1339 = vadd.f32 0.0, %v1338
  %v1340 = vpop.f32.mrb[0].mxu0
  %v1341 = vpop.f32.mrb[0].mxu0
  %v1342 = vadd.f32 0.0, %v1341
  %v1343 = vpop.f32.mrb[0].mxu0
  %1344 = vmatprep.mubr.bf16.mxu0 0
  %1345 = vmatmul.mubr.bf16.gmra.mrb[0].mxu0 %v1102
  %v1346 = vpop.f32.mrb[0].mxu0
  %v1347 = vadd.f32 0.0, %v1346
  %v1348 = vpop.f32.mrb[0].mxu0
  %v1349 = vpop.f32.mrb[0].mxu0
  %v1350 = vadd.f32 0.0, %v1349
  %v1351 = vpop.f32.mrb[0].mxu0
  %1352 = vmatprep.mubr.bf16.mxu0 0
  %1353 = vmatmul.mubr.bf16.gmra.mrb[0].mxu0 %v1105
  %v1354 = vpop.f32.mrb[0].mxu0
  %v1355 = vadd.f32 0.0, %v1354
  %v1356 = vpop.f32.mrb[0].mxu0
  %v1357 = vpop.f32.mrb[0].mxu0
  %v1358 = vadd.f32 0.0, %v1357
  %v1359 = vpop.f32.mrb[0].mxu0
  %1360 = vmatprep.mubr.bf16.mxu0 0
  %1361 = vmatmul.mubr.bf16.gmra.mrb[0].mxu0 %v1108
  %v1362 = vpop.f32.mrb[0].mxu0
  %v1363 = vadd.f32 0.0, %v1362
  %v1364 = vpop.f32.mrb[0].mxu0
  %v1365 = vpop.f32.mrb[0].mxu0
  %v1366 = vadd.f32 0.0, %v1365
  %v1367 = vpop.f32.mrb[0].mxu0
  %1368 = vmatprep.mubr.bf16.mxu0 0
  %1369 = vmatmul.mubr.bf16.gmra.mrb[0].mxu0 %v1111
  %v1370 = vpop.f32.mrb[0].mxu0
  %v1371 = vadd.f32 0.0, %v1370
  %v1372 = vpop.f32.mrb[0].mxu0
  %v1373 = vpop.f32.mrb[0].mxu0
  %v1374 = vadd.f32 0.0, %v1373
  %v1375 = vpop.f32.mrb[0].mxu0
  %1376 = vmatprep.mubr.bf16.mxu0 0
  %1377 = vmatmul.mubr.bf16.gmra.mrb[0].mxu0 %v1114
  %v1378 = vpop.f32.mrb[0].mxu0
  %v1379 = vadd.f32 0.0, %v1378
  %v1380 = vpop.f32.mrb[0].mxu0
  %v1381 = vpop.f32.mrb[0].mxu0
  %v1382 = vadd.f32 0.0, %v1381
  %v1383 = vpop.f32.mrb[0].mxu0
  %1384 = vmatprep.mubr.bf16.mxu0 0
  %1385 = vmatmul.mubr.bf16.gmra.mrb[0].mxu0 %v1117
  %v1386 = vpop.f32.mrb[0].mxu0
  %v1387 = vadd.f32 0.0, %v1386
  %v1388 = vpop.f32.mrb[0].mxu0
  %v1389 = vpop.f32.mrb[0].mxu0
  %v1390 = vadd.f32 0.0, %v1389
  %v1391 = vpop.f32.mrb[0].mxu0
  %1392 = vmatprep.mubr.bf16.mxu0 0
  %1393 = vmatmul.mubr.bf16.gmra.mrb[0].mxu0 %v1120
  %v1394 = vpop.f32.mrb[0].mxu0
  %v1395 = vadd.f32 0.0, %v1394
  %v1396 = vpop.f32.mrb[0].mxu0
  %v1397 = vpop.f32.mrb[0].mxu0
  %v1398 = vadd.f32 0.0, %v1397
  %v1399 = vpop.f32.mrb[0].mxu0
  %1400 = vmatprep.mubr.bf16.mxu0 0
  %1401 = vmatmul.mubr.bf16.gmra.mrb[0].mxu0 %v1123
  %v1402 = vpop.f32.mrb[0].mxu0
  %v1403 = vadd.f32 0.0, %v1402
  %v1404 = vpop.f32.mrb[0].mxu0
  %v1405 = vpop.f32.mrb[0].mxu0
  %v1406 = vadd.f32 0.0, %v1405
  %v1407 = vpop.f32.mrb[0].mxu0
  %1408 = vmatprep.mubr.bf16.mxu0 0
  %1409 = vmatmul.mubr.bf16.gmra.mrb[0].mxu0 %v1126
  %v1410 = vpop.f32.mrb[0].mxu0
  %v1411 = vadd.f32 0.0, %v1410
  %v1412 = vpop.f32.mrb[0].mxu0
  %v1413 = vpop.f32.mrb[0].mxu0
  %v1414 = vadd.f32 0.0, %v1413
  %v1415 = vpop.f32.mrb[0].mxu0
  %1416 = vdwg.mxu0
  %v1481 = vunpack.c.l.b16 %v23
  %v1482 = vunpack.c.l.b16 %v24
  %v1483 = vunpack.c.l.b16 %v26
  %v1484 = vunpack.c.l.b16 %v27
  %v1485 = vunpack.c.l.b16 %v29
  %v1486 = vunpack.c.l.b16 %v30
  %v1487 = vunpack.c.l.b16 %v32
  %v1488 = vunpack.c.l.b16 %v33
  %v1489 = vunpack.c.l.b16 %v35
  %v1490 = vunpack.c.l.b16 %v36
  %v1491 = vunpack.c.l.b16 %v38
  %v1492 = vunpack.c.l.b16 %v39
  %v1493 = vunpack.c.l.b16 %v41
  %v1494 = vunpack.c.l.b16 %v42
  %v1495 = vunpack.c.l.b16 %v44
  %v1496 = vunpack.c.l.b16 %v45
  %v1497 = vunpack.c.l.b16 %v47
  %v1498 = vunpack.c.l.b16 %v48
  %v1499 = vunpack.c.l.b16 %v50
  %v1500 = vunpack.c.l.b16 %v51
  %v1501 = vunpack.c.l.b16 %v53
  %v1502 = vunpack.c.l.b16 %v54
  %v1503 = vunpack.c.l.b16 %v56
  %v1504 = vunpack.c.l.b16 %v57
  %v1505 = vunpack.c.l.b16 %v59
  %v1506 = vunpack.c.l.b16 %v60
  %v1507 = vunpack.c.l.b16 %v62
  %v1508 = vunpack.c.l.b16 %v63
  %v1509 = vunpack.c.l.b16 %v65
  %v1510 = vunpack.c.l.b16 %v66
  %v1511 = vunpack.c.l.b16 %v68
  %v1512 = vunpack.c.l.b16 %v69
  %v1513 = vunpack.c.l.b16 %v83
  %v1514 = vunpack.c.l.b16 %v84
  %v1515 = vunpack.c.l.b16 %v86
  %v1516 = vunpack.c.l.b16 %v87
  %v1517 = vunpack.c.l.b16 %v89
  %v1518 = vunpack.c.l.b16 %v90
  %v1519 = vunpack.c.l.b16 %v92
  %v1520 = vunpack.c.l.b16 %v93
  %v1521 = vunpack.c.l.b16 %v95
  %v1522 = vunpack.c.l.b16 %v96
  %v1523 = vunpack.c.l.b16 %v98
  %v1524 = vunpack.c.l.b16 %v99
  %v1525 = vunpack.c.l.b16 %v101
  %v1526 = vunpack.c.l.b16 %v102
  %v1527 = vunpack.c.l.b16 %v104
  %v1528 = vunpack.c.l.b16 %v105
  %v1529 = vunpack.c.l.b16 %v107
  %v1530 = vunpack.c.l.b16 %v108
  %v1531 = vunpack.c.l.b16 %v110
  %v1532 = vunpack.c.l.b16 %v111
  %v1533 = vunpack.c.l.b16 %v113
  %v1534 = vunpack.c.l.b16 %v114
  %v1535 = vunpack.c.l.b16 %v116
  %v1536 = vunpack.c.l.b16 %v117
  %v1537 = vunpack.c.l.b16 %v119
  %v1538 = vunpack.c.l.b16 %v120
  %v1539 = vunpack.c.l.b16 %v122
  %v1540 = vunpack.c.l.b16 %v123
  %v1541 = vunpack.c.l.b16 %v125
  %v1542 = vunpack.c.l.b16 %v126
  %v1543 = vunpack.c.l.b16 %v128
  %v1544 = vunpack.c.l.b16 %v129
  %v1545 = vpack.c.b16 %v1482, %v1481
  %v1546 = vpack.c.b16 %v1484, %v1483
  %v1547 = vpack.c.b16 %v1486, %v1485
  %v1548 = vpack.c.b16 %v1488, %v1487
  %v1549 = vpack.c.b16 %v1490, %v1489
  %v1550 = vpack.c.b16 %v1492, %v1491
  %v1551 = vpack.c.b16 %v1494, %v1493
  %v1552 = vpack.c.b16 %v1496, %v1495
  %v1553 = vpack.c.b16 %v1498, %v1497
  %v1554 = vpack.c.b16 %v1500, %v1499
  %v1555 = vpack.c.b16 %v1502, %v1501
  %v1556 = vpack.c.b16 %v1504, %v1503
  %v1557 = vpack.c.b16 %v1506, %v1505
  %v1558 = vpack.c.b16 %v1508, %v1507
  %v1559 = vpack.c.b16 %v1510, %v1509
  %v1560 = vpack.c.b16 %v1512, %v1511
  %v1561 = vpack.c.b16 %v1514, %v1513
  %v1562 = vpack.c.b16 %v1516, %v1515
  %v1563 = vpack.c.b16 %v1518, %v1517
  %v1564 = vpack.c.b16 %v1520, %v1519
  %v1565 = vpack.c.b16 %v1522, %v1521
  %v1566 = vpack.c.b16 %v1524, %v1523
  %v1567 = vpack.c.b16 %v1526, %v1525
  %v1568 = vpack.c.b16 %v1528, %v1527
  %v1569 = vpack.c.b16 %v1530, %v1529
  %v1570 = vpack.c.b16 %v1532, %v1531
  %v1571 = vpack.c.b16 %v1534, %v1533
  %v1572 = vpack.c.b16 %v1536, %v1535
  %v1573 = vpack.c.b16 %v1538, %v1537
  %v1574 = vpack.c.b16 %v1540, %v1539
  %v1575 = vpack.c.b16 %v1542, %v1541
  %v1576 = vpack.c.b16 %v1544, %v1543
  %v1581 = vunpack.c.l.b16 %v143
  %v1582 = vunpack.c.l.b16 %v144
  %v1583 = vunpack.c.l.b16 %v145
  %v1584 = vunpack.c.l.b16 %v146
  %v1585 = vpack.c.b16 %v1582, %v1581
  %v1586 = vpack.c.b16 %v1584, %v1583
  %v1590 = vsel %vm1031, %v1545, 0
  %v1593 = vsel %vm1031, %v1546, 0
  %v1596 = vsel %vm1031, %v1547, 0
  %v1599 = vsel %vm1031, %v1548, 0
  %v1602 = vsel %vm1031, %v1549, 0
  %v1605 = vsel %vm1031, %v1550, 0
  %v1608 = vsel %vm1031, %v1551, 0
  %v1611 = vsel %vm1031, %v1552, 0
  %v1614 = vsel %vm1031, %v1553, 0
  %v1617 = vsel %vm1031, %v1554, 0
  %v1620 = vsel %vm1031, %v1555, 0
  %v1623 = vsel %vm1031, %v1556, 0
  %v1626 = vsel %vm1031, %v1557, 0
  %v1629 = vsel %vm1031, %v1558, 0
  %v1632 = vsel %vm1031, %v1559, 0
  %v1635 = vsel %vm1031, %v1560, 0
  %v1638 = vsel %vm1031, %v1561, 0
  %v1641 = vsel %vm1031, %v1562, 0
  %v1644 = vsel %vm1031, %v1563, 0
  %v1647 = vsel %vm1031, %v1564, 0
  %v1650 = vsel %vm1031, %v1565, 0
  %v1653 = vsel %vm1031, %v1566, 0
  %v1656 = vsel %vm1031, %v1567, 0
  %v1659 = vsel %vm1031, %v1568, 0
  %v1662 = vsel %vm1031, %v1569, 0
  %v1665 = vsel %vm1031, %v1570, 0
  %v1668 = vsel %vm1031, %v1571, 0
  %v1671 = vsel %vm1031, %v1572, 0
  %v1674 = vsel %vm1031, %v1573, 0
  %v1677 = vsel %vm1031, %v1574, 0
  %v1680 = vsel %vm1031, %v1575, 0
  %v1683 = vsel %vm1031, %v1576, 0
  %1685 = vmatprep.subr.bf16.mxu0 0
  %1686 = vmatpush1.bf16.msra.mxu0 %v1585
  %1687 = vmatprep.subr.bf16.mxu0 0
  %1688 = vmatpush1.bf16.msra.mxu0 %v1586
  %1689 = vmatprep.subr.bf16.mxu0 0
  %1690 = vmatpush1.bf16.msra.mxu0 0
  %1691 = vmatprep.subr.bf16.mxu0 0
  %1692 = vmatpush1.bf16.msra.mxu0 0
  %1693 = vmatprep.subr.bf16.mxu0 0
  %1694 = vmatpush1.bf16.msra.mxu0 0
  %1695 = vmatprep.subr.bf16.mxu0 0
  %1696 = vmatpush1.bf16.msra.mxu0 0
  %1697 = vmatprep.subr.bf16.mxu0 0
  %1698 = vmatpush1.bf16.msra.mxu0 0
  %1699 = vmatprep.subr.bf16.mxu0 0
  %1700 = vmatpush1.bf16.msra.mxu0 0
  %1701 = vmatprep.subr.bf16.mxu0 0
  %1702 = vmatpush1.bf16.msra.mxu0 0
  %1703 = vmatprep.subr.bf16.mxu0 0
  %1704 = vmatpush1.bf16.msra.mxu0 0
  %1705 = vmatprep.subr.bf16.mxu0 0
  %1706 = vmatpush1.bf16.msra.mxu0 0
  %1707 = vmatprep.subr.bf16.mxu0 0
  %1708 = vmatpush1.bf16.msra.mxu0 0
  %1709 = vmatprep.subr.bf16.mxu0 0
  %1710 = vmatpush1.bf16.msra.mxu0 0
  %1711 = vmatprep.subr.bf16.mxu0 0
  %1712 = vmatpush1.bf16.msra.mxu0 0
  %1713 = vmatprep.subr.bf16.mxu0 0
  %1714 = vmatpush1.bf16.msra.mxu0 0
  %1715 = vmatprep.subr.bf16.mxu0 0
  %1716 = vmatpush1.bf16.msra.mxu0 0
  %1717 = vmatprep.mubr.bf16.mxu0 0
  %1718 = vmatmul.mubr.bf16.gmra.mrb[0].mxu0 %v1590
  %v1719 = vpop.f32.mrb[0].mxu0
  %v1720 = vadd.f32 %v1163, %v1719
  %v1721 = vpop.f32.mrb[0].mxu0
  %v1722 = vpop.f32.mrb[0].mxu0
  %v1723 = vadd.f32 %v1166, %v1722
  %v1724 = vpop.f32.mrb[0].mxu0
  %1725 = vmatprep.mubr.bf16.mxu0 0
  %1726 = vmatmul.mubr.bf16.gmra.mrb[0].mxu0 %v1593
  %v1727 = vpop.f32.mrb[0].mxu0
  %v1728 = vadd.f32 %v1171, %v1727
  %v1729 = vpop.f32.mrb[0].mxu0
  %v1730 = vpop.f32.mrb[0].mxu0
  %v1731 = vadd.f32 %v1174, %v1730
  %v1732 = vpop.f32.mrb[0].mxu0
  %1733 = vmatprep.mubr.bf16.mxu0 0
  %1734 = vmatmul.mubr.bf16.gmra.mrb[0].mxu0 %v1596
  %v1735 = vpop.f32.mrb[0].mxu0
  %v1736 = vadd.f32 %v1179, %v1735
  %v1737 = vpop.f32.mrb[0].mxu0
  %v1738 = vpop.f32.mrb[0].mxu0
  %v1739 = vadd.f32 %v1182, %v1738
  %v1740 = vpop.f32.mrb[0].mxu0
  %1741 = vmatprep.mubr.bf16.mxu0 0
  %1742 = vmatmul.mubr.bf16.gmra.mrb[0].mxu0 %v1599
  %v1743 = vpop.f32.mrb[0].mxu0
  %v1744 = vadd.f32 %v1187, %v1743
  %v1745 = vpop.f32.mrb[0].mxu0
  %v1746 = vpop.f32.mrb[0].mxu0
  %v1747 = vadd.f32 %v1190, %v1746
  %v1748 = vpop.f32.mrb[0].mxu0
  %1749 = vmatprep.mubr.bf16.mxu0 0
  %1750 = vmatmul.mubr.bf16.gmra.mrb[0].mxu0 %v1602
  %v1751 = vpop.f32.mrb[0].mxu0
  %v1752 = vadd.f32 %v1195, %v1751
  %v1753 = vpop.f32.mrb[0].mxu0
  %v1754 = vpop.f32.mrb[0].mxu0
  %v1755 = vadd.f32 %v1198, %v1754
  %v1756 = vpop.f32.mrb[0].mxu0
  %1757 = vmatprep.mubr.bf16.mxu0 0
  %1758 = vmatmul.mubr.bf16.gmra.mrb[0].mxu0 %v1605
  %v1759 = vpop.f32.mrb[0].mxu0
  %v1760 = vadd.f32 %v1203, %v1759
  %v1761 = vpop.f32.mrb[0].mxu0
  %v1762 = vpop.f32.mrb[0].mxu0
  %v1763 = vadd.f32 %v1206, %v1762
  %v1764 = vpop.f32.mrb[0].mxu0
  %1765 = vmatprep.mubr.bf16.mxu0 0
  %1766 = vmatmul.mubr.bf16.gmra.mrb[0].mxu0 %v1608
  %v1767 = vpop.f32.mrb[0].mxu0
  %v1768 = vadd.f32 %v1211, %v1767
  %v1769 = vpop.f32.mrb[0].mxu0
  %v1770 = vpop.f32.mrb[0].mxu0
  %v1771 = vadd.f32 %v1214, %v1770
  %v1772 = vpop.f32.mrb[0].mxu0
  %1773 = vmatprep.mubr.bf16.mxu0 0
  %1774 = vmatmul.mubr.bf16.gmra.mrb[0].mxu0 %v1611
  %v1775 = vpop.f32.mrb[0].mxu0
  %v1776 = vadd.f32 %v1219, %v1775
  %v1777 = vpop.f32.mrb[0].mxu0
  %v1778 = vpop.f32.mrb[0].mxu0
  %v1779 = vadd.f32 %v1222, %v1778
  %v1780 = vpop.f32.mrb[0].mxu0
  %1781 = vmatprep.mubr.bf16.mxu0 0
  %1782 = vmatmul.mubr.bf16.gmra.mrb[0].mxu0 %v1614
  %v1783 = vpop.f32.mrb[0].mxu0
  %v1784 = vadd.f32 %v1227, %v1783
  %v1785 = vpop.f32.mrb[0].mxu0
  %v1786 = vpop.f32.mrb[0].mxu0
  %v1787 = vadd.f32 %v1230, %v1786
  %v1788 = vpop.f32.mrb[0].mxu0
  %1789 = vmatprep.mubr.bf16.mxu0 0
  %1790 = vmatmul.mubr.bf16.gmra.mrb[0].mxu0 %v1617
  %v1791 = vpop.f32.mrb[0].mxu0
  %v1792 = vadd.f32 %v1235, %v1791
  %v1793 = vpop.f32.mrb[0].mxu0
  %v1794 = vpop.f32.mrb[0].mxu0
  %v1795 = vadd.f32 %v1238, %v1794
  %v1796 = vpop.f32.mrb[0].mxu0
  %1797 = vmatprep.mubr.bf16.mxu0 0
  %1798 = vmatmul.mubr.bf16.gmra.mrb[0].mxu0 %v1620
  %v1799 = vpop.f32.mrb[0].mxu0
  %v1800 = vadd.f32 %v1243, %v1799
  %v1801 = vpop.f32.mrb[0].mxu0
  %v1802 = vpop.f32.mrb[0].mxu0
  %v1803 = vadd.f32 %v1246, %v1802
  %v1804 = vpop.f32.mrb[0].mxu0
  %1805 = vmatprep.mubr.bf16.mxu0 0
  %1806 = vmatmul.mubr.bf16.gmra.mrb[0].mxu0 %v1623
  %v1807 = vpop.f32.mrb[0].mxu0
  %v1808 = vadd.f32 %v1251, %v1807
  %v1809 = vpop.f32.mrb[0].mxu0
  %v1810 = vpop.f32.mrb[0].mxu0
  %v1811 = vadd.f32 %v1254, %v1810
  %v1812 = vpop.f32.mrb[0].mxu0
  %1813 = vmatprep.mubr.bf16.mxu0 0
  %1814 = vmatmul.mubr.bf16.gmra.mrb[0].mxu0 %v1626
  %v1815 = vpop.f32.mrb[0].mxu0
  %v1816 = vadd.f32 %v1259, %v1815
  %v1817 = vpop.f32.mrb[0].mxu0
  %v1818 = vpop.f32.mrb[0].mxu0
  %v1819 = vadd.f32 %v1262, %v1818
  %v1820 = vpop.f32.mrb[0].mxu0
  %1821 = vmatprep.mubr.bf16.mxu0 0
  %1822 = vmatmul.mubr.bf16.gmra.mrb[0].mxu0 %v1629
  %v1823 = vpop.f32.mrb[0].mxu0
  %v1824 = vadd.f32 %v1267, %v1823
  %v1825 = vpop.f32.mrb[0].mxu0
  %v1826 = vpop.f32.mrb[0].mxu0
  %v1827 = vadd.f32 %v1270, %v1826
  %v1828 = vpop.f32.mrb[0].mxu0
  %1829 = vmatprep.mubr.bf16.mxu0 0
  %1830 = vmatmul.mubr.bf16.gmra.mrb[0].mxu0 %v1632
  %v1831 = vpop.f32.mrb[0].mxu0
  %v1832 = vadd.f32 %v1275, %v1831
  %v1833 = vpop.f32.mrb[0].mxu0
  %v1834 = vpop.f32.mrb[0].mxu0
  %v1835 = vadd.f32 %v1278, %v1834
  %v1836 = vpop.f32.mrb[0].mxu0
  %1837 = vmatprep.mubr.bf16.mxu0 0
  %1838 = vmatmul.mubr.bf16.gmra.mrb[0].mxu0 %v1635
  %v1839 = vpop.f32.mrb[0].mxu0
  %v1840 = vadd.f32 %v1283, %v1839
  %v1841 = vpop.f32.mrb[0].mxu0
  %v1842 = vpop.f32.mrb[0].mxu0
  %v1843 = vadd.f32 %v1286, %v1842
  %v1844 = vpop.f32.mrb[0].mxu0
  %1845 = vmatprep.mubr.bf16.mxu0 0
  %1846 = vmatmul.mubr.bf16.gmra.mrb[0].mxu0 %v1638
  %v1847 = vpop.f32.mrb[0].mxu0
  %v1848 = vadd.f32 %v1291, %v1847
  %v1849 = vpop.f32.mrb[0].mxu0
  %v1850 = vpop.f32.mrb[0].mxu0
  %v1851 = vadd.f32 %v1294, %v1850
  %v1852 = vpop.f32.mrb[0].mxu0
  %1853 = vmatprep.mubr.bf16.mxu0 0
  %1854 = vmatmul.mubr.bf16.gmra.mrb[0].mxu0 %v1641
  %v1855 = vpop.f32.mrb[0].mxu0
  %v1856 = vadd.f32 %v1299, %v1855
  %v1857 = vpop.f32.mrb[0].mxu0
  %v1858 = vpop.f32.mrb[0].mxu0
  %v1859 = vadd.f32 %v1302, %v1858
  %v1860 = vpop.f32.mrb[0].mxu0
  %1861 = vmatprep.mubr.bf16.mxu0 0
  %1862 = vmatmul.mubr.bf16.gmra.mrb[0].mxu0 %v1644
  %v1863 = vpop.f32.mrb[0].mxu0
  %v1864 = vadd.f32 %v1307, %v1863
  %v1865 = vpop.f32.mrb[0].mxu0
  %v1866 = vpop.f32.mrb[0].mxu0
  %v1867 = vadd.f32 %v1310, %v1866
  %v1868 = vpop.f32.mrb[0].mxu0
  %1869 = vmatprep.mubr.bf16.mxu0 0
  %1870 = vmatmul.mubr.bf16.gmra.mrb[0].mxu0 %v1647
  %v1871 = vpop.f32.mrb[0].mxu0
  %v1872 = vadd.f32 %v1315, %v1871
  %v1873 = vpop.f32.mrb[0].mxu0
  %v1874 = vpop.f32.mrb[0].mxu0
  %v1875 = vadd.f32 %v1318, %v1874
  %v1876 = vpop.f32.mrb[0].mxu0
  %1877 = vmatprep.mubr.bf16.mxu0 0
  %1878 = vmatmul.mubr.bf16.gmra.mrb[0].mxu0 %v1650
  %v1879 = vpop.f32.mrb[0].mxu0
  %v1880 = vadd.f32 %v1323, %v1879
  %v1881 = vpop.f32.mrb[0].mxu0
  %v1882 = vpop.f32.mrb[0].mxu0
  %v1883 = vadd.f32 %v1326, %v1882
  %v1884 = vpop.f32.mrb[0].mxu0
  %1885 = vmatprep.mubr.bf16.mxu0 0
  %1886 = vmatmul.mubr.bf16.gmra.mrb[0].mxu0 %v1653
  %v1887 = vpop.f32.mrb[0].mxu0
  %v1888 = vadd.f32 %v1331, %v1887
  %v1889 = vpop.f32.mrb[0].mxu0
  %v1890 = vpop.f32.mrb[0].mxu0
  %v1891 = vadd.f32 %v1334, %v1890
  %v1892 = vpop.f32.mrb[0].mxu0
  %1893 = vmatprep.mubr.bf16.mxu0 0
  %1894 = vmatmul.mubr.bf16.gmra.mrb[0].mxu0 %v1656
  %v1895 = vpop.f32.mrb[0].mxu0
  %v1896 = vadd.f32 %v1339, %v1895
  %v1897 = vpop.f32.mrb[0].mxu0
  %v1898 = vpop.f32.mrb[0].mxu0
  %v1899 = vadd.f32 %v1342, %v1898
  %v1900 = vpop.f32.mrb[0].mxu0
  %1901 = vmatprep.mubr.bf16.mxu0 0
  %1902 = vmatmul.mubr.bf16.gmra.mrb[0].mxu0 %v1659
  %v1903 = vpop.f32.mrb[0].mxu0
  %v1904 = vadd.f32 %v1347, %v1903
  %v1905 = vpop.f32.mrb[0].mxu0
  %v1906 = vpop.f32.mrb[0].mxu0
  %v1907 = vadd.f32 %v1350, %v1906
  %v1908 = vpop.f32.mrb[0].mxu0
  %1909 = vmatprep.mubr.bf16.mxu0 0
  %1910 = vmatmul.mubr.bf16.gmra.mrb[0].mxu0 %v1662
  %v1911 = vpop.f32.mrb[0].mxu0
  %v1912 = vadd.f32 %v1355, %v1911
  %v1913 = vpop.f32.mrb[0].mxu0
  %v1914 = vpop.f32.mrb[0].mxu0
  %v1915 = vadd.f32 %v1358, %v1914
  %v1916 = vpop.f32.mrb[0].mxu0
  %1917 = vmatprep.mubr.bf16.mxu0 0
  %1918 = vmatmul.mubr.bf16.gmra.mrb[0].mxu0 %v1665
  %v1919 = vpop.f32.mrb[0].mxu0
  %v1920 = vadd.f32 %v1363, %v1919
  %v1921 = vpop.f32.mrb[0].mxu0
  %v1922 = vpop.f32.mrb[0].mxu0
  %v1923 = vadd.f32 %v1366, %v1922
  %v1924 = vpop.f32.mrb[0].mxu0
  %1925 = vmatprep.mubr.bf16.mxu0 0
  %1926 = vmatmul.mubr.bf16.gmra.mrb[0].mxu0 %v1668
  %v1927 = vpop.f32.mrb[0].mxu0
  %v1928 = vadd.f32 %v1371, %v1927
  %v1929 = vpop.f32.mrb[0].mxu0
  %v1930 = vpop.f32.mrb[0].mxu0
  %v1931 = vadd.f32 %v1374, %v1930
  %v1932 = vpop.f32.mrb[0].mxu0
  %1933 = vmatprep.mubr.bf16.mxu0 0
  %1934 = vmatmul.mubr.bf16.gmra.mrb[0].mxu0 %v1671
  %v1935 = vpop.f32.mrb[0].mxu0
  %v1936 = vadd.f32 %v1379, %v1935
  %v1937 = vpop.f32.mrb[0].mxu0
  %v1938 = vpop.f32.mrb[0].mxu0
  %v1939 = vadd.f32 %v1382, %v1938
  %v1940 = vpop.f32.mrb[0].mxu0
  %1941 = vmatprep.mubr.bf16.mxu0 0
  %1942 = vmatmul.mubr.bf16.gmra.mrb[0].mxu0 %v1674
  %v1943 = vpop.f32.mrb[0].mxu0
  %v1944 = vadd.f32 %v1387, %v1943
  %v1945 = vpop.f32.mrb[0].mxu0
  %v1946 = vpop.f32.mrb[0].mxu0
  %v1947 = vadd.f32 %v1390, %v1946
  %v1948 = vpop.f32.mrb[0].mxu0
  %1949 = vmatprep.mubr.bf16.mxu0 0
  %1950 = vmatmul.mubr.bf16.gmra.mrb[0].mxu0 %v1677
  %v1951 = vpop.f32.mrb[0].mxu0
  %v1952 = vadd.f32 %v1395, %v1951
  %v1953 = vpop.f32.mrb[0].mxu0
  %v1954 = vpop.f32.mrb[0].mxu0
  %v1955 = vadd.f32 %v1398, %v1954
  %v1956 = vpop.f32.mrb[0].mxu0
  %1957 = vmatprep.mubr.bf16.mxu0 0
  %1958 = vmatmul.mubr.bf16.gmra.mrb[0].mxu0 %v1680
  %v1959 = vpop.f32.mrb[0].mxu0
  %v1960 = vadd.f32 %v1403, %v1959
  %v1961 = vpop.f32.mrb[0].mxu0
  %v1962 = vpop.f32.mrb[0].mxu0
  %v1963 = vadd.f32 %v1406, %v1962
  %v1964 = vpop.f32.mrb[0].mxu0
  %1965 = vmatprep.mubr.bf16.mxu0 0
  %1966 = vmatmul.mubr.bf16.gmra.mrb[0].mxu0 %v1683
  %v1967 = vpop.f32.mrb[0].mxu0
  %v1968 = vadd.f32 %v1411, %v1967
  %v1969 = vpop.f32.mrb[0].mxu0
  %v1970 = vpop.f32.mrb[0].mxu0
  %v1971 = vadd.f32 %v1414, %v1970
  %v1972 = vpop.f32.mrb[0].mxu0
  %1973 = vdwg.mxu0
  %vm2006 = vcmask 1042432
  %vm2007 = vcmask 1046532
  %vm2008 = vmor %vm2006, %vm2007
  %v2009 = vrot.slane %v23, 5
  %v2010 = vrot.slane %v2009, 4
  %v2011 = vrot.slane %v24, 5
  %v2012 = vsel %vm2008, %v2010, %v2011
  %v2013 = vrot.slane %v2011, 4
  %v2014 = vrot.slane %v25, 5
  %v2015 = vsel %vm2008, %v2013, %v2014
  %v2016 = vrot.slane %v26, 5
  %v2017 = vrot.slane %v2016, 4
  %v2018 = vrot.slane %v27, 5
  %v2019 = vsel %vm2008, %v2017, %v2018
  %v2020 = vrot.slane %v2018, 4
  %v2021 = vrot.slane %v28, 5
  %v2022 = vsel %vm2008, %v2020, %v2021
  %v2023 = vrot.slane %v29, 5
  %v2024 = vrot.slane %v2023, 4
  %v2025 = vrot.slane %v30, 5
  %v2026 = vsel %vm2008, %v2024, %v2025
  %v2027 = vrot.slane %v2025, 4
  %v2028 = vrot.slane %v31, 5
  %v2029 = vsel %vm2008, %v2027, %v2028
  %v2030 = vrot.slane %v32, 5
  %v2031 = vrot.slane %v2030, 4
  %v2032 = vrot.slane %v33, 5
  %v2033 = vsel %vm2008, %v2031, %v2032
  %v2034 = vrot.slane %v2032, 4
  %v2035 = vrot.slane %v34, 5
  %v2036 = vsel %vm2008, %v2034, %v2035
  %v2037 = vrot.slane %v35, 5
  %v2038 = vrot.slane %v2037, 4
  %v2039 = vrot.slane %v36, 5
  %v2040 = vsel %vm2008, %v2038, %v2039
  %v2041 = vrot.slane %v2039, 4
  %v2042 = vrot.slane %v37, 5
  %v2043 = vsel %vm2008, %v2041, %v2042
  %v2044 = vrot.slane %v38, 5
  %v2045 = vrot.slane %v2044, 4
  %v2046 = vrot.slane %v39, 5
  %v2047 = vsel %vm2008, %v2045, %v2046
  %v2048 = vrot.slane %v2046, 4
  %v2049 = vrot.slane %v40, 5
  %v2050 = vsel %vm2008, %v2048, %v2049
  %v2051 = vrot.slane %v41, 5
  %v2052 = vrot.slane %v2051, 4
  %v2053 = vrot.slane %v42, 5
  %v2054 = vsel %vm2008, %v2052, %v2053
  %v2055 = vrot.slane %v2053, 4
  %v2056 = vrot.slane %v43, 5
  %v2057 = vsel %vm2008, %v2055, %v2056
  %v2058 = vrot.slane %v44, 5
  %v2059 = vrot.slane %v2058, 4
  %v2060 = vrot.slane %v45, 5
  %v2061 = vsel %vm2008, %v2059, %v2060
  %v2062 = vrot.slane %v2060, 4
  %v2063 = vrot.slane %v46, 5
  %v2064 = vsel %vm2008, %v2062, %v2063
  %v2065 = vrot.slane %v47, 5
  %v2066 = vrot.slane %v2065, 4
  %v2067 = vrot.slane %v48, 5
  %v2068 = vsel %vm2008, %v2066, %v2067
  %v2069 = vrot.slane %v2067, 4
  %v2070 = vrot.slane %v49, 5
  %v2071 = vsel %vm2008, %v2069, %v2070
  %v2072 = vrot.slane %v50, 5
  %v2073 = vrot.slane %v2072, 4
  %v2074 = vrot.slane %v51, 5
  %v2075 = vsel %vm2008, %v2073, %v2074
  %v2076 = vrot.slane %v2074, 4
  %v2077 = vrot.slane %v52, 5
  %v2078 = vsel %vm2008, %v2076, %v2077
  %v2079 = vrot.slane %v53, 5
  %v2080 = vrot.slane %v2079, 4
  %v2081 = vrot.slane %v54, 5
  %v2082 = vsel %vm2008, %v2080, %v2081
  %v2083 = vrot.slane %v2081, 4
  %v2084 = vrot.slane %v55, 5
  %v2085 = vsel %vm2008, %v2083, %v2084
  %v2086 = vrot.slane %v56, 5
  %v2087 = vrot.slane %v2086, 4
  %v2088 = vrot.slane %v57, 5
  %v2089 = vsel %vm2008, %v2087, %v2088
  %v2090 = vrot.slane %v2088, 4
  %v2091 = vrot.slane %v58, 5
  %v2092 = vsel %vm2008, %v2090, %v2091
  %v2093 = vrot.slane %v59, 5
  %v2094 = vrot.slane %v2093, 4
  %v2095 = vrot.slane %v60, 5
  %v2096 = vsel %vm2008, %v2094, %v2095
  %v2097 = vrot.slane %v2095, 4
  %v2098 = vrot.slane %v61, 5
  %v2099 = vsel %vm2008, %v2097, %v2098
  %v2100 = vrot.slane %v62, 5
  %v2101 = vrot.slane %v2100, 4
  %v2102 = vrot.slane %v63, 5
  %v2103 = vsel %vm2008, %v2101, %v2102
  %v2104 = vrot.slane %v2102, 4
  %v2105 = vrot.slane %v64, 5
  %v2106 = vsel %vm2008, %v2104, %v2105
  %v2107 = vrot.slane %v65, 5
  %v2108 = vrot.slane %v2107, 4
  %v2109 = vrot.slane %v66, 5
  %v2110 = vsel %vm2008, %v2108, %v2109
  %v2111 = vrot.slane %v2109, 4
  %v2112 = vrot.slane %v67, 5
  %v2113 = vsel %vm2008, %v2111, %v2112
  %v2114 = vrot.slane %v68, 5
  %v2115 = vrot.slane %v2114, 4
  %v2116 = vrot.slane %v69, 5
  %v2117 = vsel %vm2008, %v2115, %v2116
  %v2118 = vrot.slane %v2116, 4
  %v2119 = vrot.slane %v70, 5
  %v2120 = vsel %vm2008, %v2118, %v2119
  %v2121 = vrot.slane %v83, 5
  %v2122 = vrot.slane %v2121, 4
  %v2123 = vrot.slane %v84, 5
  %v2124 = vsel %vm2008, %v2122, %v2123
  %v2125 = vrot.slane %v2123, 4
  %v2126 = vrot.slane %v85, 5
  %v2127 = vsel %vm2008, %v2125, %v2126
  %v2128 = vrot.slane %v86, 5
  %v2129 = vrot.slane %v2128, 4
  %v2130 = vrot.slane %v87, 5
  %v2131 = vsel %vm2008, %v2129, %v2130
  %v2132 = vrot.slane %v2130, 4
  %v2133 = vrot.slane %v88, 5
  %v2134 = vsel %vm2008, %v2132, %v2133
  %v2135 = vrot.slane %v89, 5
  %v2136 = vrot.slane %v2135, 4
  %v2137 = vrot.slane %v90, 5
  %v2138 = vsel %vm2008, %v2136, %v2137
  %v2139 = vrot.slane %v2137, 4
  %v2140 = vrot.slane %v91, 5
  %v2141 = vsel %vm2008, %v2139, %v2140
  %v2142 = vrot.slane %v92, 5
  %v2143 = vrot.slane %v2142, 4
  %v2144 = vrot.slane %v93, 5
  %v2145 = vsel %vm2008, %v2143, %v2144
  %v2146 = vrot.slane %v2144, 4
  %v2147 = vrot.slane %v94, 5
  %v2148 = vsel %vm2008, %v2146, %v2147
  %v2149 = vrot.slane %v95, 5
  %v2150 = vrot.slane %v2149, 4
  %v2151 = vrot.slane %v96, 5
  %v2152 = vsel %vm2008, %v2150, %v2151
  %v2153 = vrot.slane %v2151, 4
  %v2154 = vrot.slane %v97, 5
  %v2155 = vsel %vm2008, %v2153, %v2154
  %v2156 = vrot.slane %v98, 5
  %v2157 = vrot.slane %v2156, 4
  %v2158 = vrot.slane %v99, 5
  %v2159 = vsel %vm2008, %v2157, %v2158
  %v2160 = vrot.slane %v2158, 4
  %v2161 = vrot.slane %v100, 5
  %v2162 = vsel %vm2008, %v2160, %v2161
  %v2163 = vrot.slane %v101, 5
  %v2164 = vrot.slane %v2163, 4
  %v2165 = vrot.slane %v102, 5
  %v2166 = vsel %vm2008, %v2164, %v2165
  %v2167 = vrot.slane %v2165, 4
  %v2168 = vrot.slane %v103, 5
  %v2169 = vsel %vm2008, %v2167, %v2168
  %v2170 = vrot.slane %v104, 5
  %v2171 = vrot.slane %v2170, 4
  %v2172 = vrot.slane %v105, 5
  %v2173 = vsel %vm2008, %v2171, %v2172
  %v2174 = vrot.slane %v2172, 4
  %v2175 = vrot.slane %v106, 5
  %v2176 = vsel %vm2008, %v2174, %v2175
  %v2177 = vrot.slane %v107, 5
  %v2178 = vrot.slane %v2177, 4
  %v2179 = vrot.slane %v108, 5
  %v2180 = vsel %vm2008, %v2178, %v2179
  %v2181 = vrot.slane %v2179, 4
  %v2182 = vrot.slane %v109, 5
  %v2183 = vsel %vm2008, %v2181, %v2182
  %v2184 = vrot.slane %v110, 5
  %v2185 = vrot.slane %v2184, 4
  %v2186 = vrot.slane %v111, 5
  %v2187 = vsel %vm2008, %v2185, %v2186
  %v2188 = vrot.slane %v2186, 4
  %v2189 = vrot.slane %v112, 5
  %v2190 = vsel %vm2008, %v2188, %v2189
  %v2191 = vrot.slane %v113, 5
  %v2192 = vrot.slane %v2191, 4
  %v2193 = vrot.slane %v114, 5
  %v2194 = vsel %vm2008, %v2192, %v2193
  %v2195 = vrot.slane %v2193, 4
  %v2196 = vrot.slane %v115, 5
  %v2197 = vsel %vm2008, %v2195, %v2196
  %v2198 = vrot.slane %v116, 5
  %v2199 = vrot.slane %v2198, 4
  %v2200 = vrot.slane %v117, 5
  %v2201 = vsel %vm2008, %v2199, %v2200
  %v2202 = vrot.slane %v2200, 4
  %v2203 = vrot.slane %v118, 5
  %v2204 = vsel %vm2008, %v2202, %v2203
  %v2205 = vrot.slane %v119, 5
  %v2206 = vrot.slane %v2205, 4
  %v2207 = vrot.slane %v120, 5
  %v2208 = vsel %vm2008, %v2206, %v2207
  %v2209 = vrot.slane %v2207, 4
  %v2210 = vrot.slane %v121, 5
  %v2211 = vsel %vm2008, %v2209, %v2210
  %v2212 = vrot.slane %v122, 5
  %v2213 = vrot.slane %v2212, 4
  %v2214 = vrot.slane %v123, 5
  %v2215 = vsel %vm2008, %v2213, %v2214
  %v2216 = vrot.slane %v2214, 4
  %v2217 = vrot.slane %v124, 5
  %v2218 = vsel %vm2008, %v2216, %v2217
  %v2219 = vrot.slane %v125, 5
  %v2220 = vrot.slane %v2219, 4
  %v2221 = vrot.slane %v126, 5
  %v2222 = vsel %vm2008, %v2220, %v2221
  %v2223 = vrot.slane %v2221, 4
  %v2224 = vrot.slane %v127, 5
  %v2225 = vsel %vm2008, %v2223, %v2224
  %v2226 = vrot.slane %v128, 5
  %v2227 = vrot.slane %v2226, 4
  %v2228 = vrot.slane %v129, 5
  %v2229 = vsel %vm2008, %v2227, %v2228
  %v2230 = vrot.slane %v2228, 4
  %v2231 = vrot.slane %v130, 5
  %v2232 = vsel %vm2008, %v2230, %v2231
  %s2233 = scalar_lea.vmem %s1, 32
  %v2234 = vld [vmem:[%s2233] sm:$0xf]
  %v2235 = vld [vmem:[%s2233 + $0x4] sm:$0xf]
  %v2236 = vld [vmem:[%s2233 + $0x8] sm:$0xf]
  %v2237 = vld [vmem:[%s2233 + $0xc] sm:$0xf]
  %v2238 = vunpack.c.l.b16 %v2012
  %v2239 = vunpack.c.l.b16 %v2015
  %v2240 = vunpack.c.l.b16 %v2019
  %v2241 = vunpack.c.l.b16 %v2022
  %v2242 = vunpack.c.l.b16 %v2026
  %v2243 = vunpack.c.l.b16 %v2029
  %v2244 = vunpack.c.l.b16 %v2033
  %v2245 = vunpack.c.l.b16 %v2036
  %v2246 = vunpack.c.l.b16 %v2040
  %v2247 = vunpack.c.l.b16 %v2043
  %v2248 = vunpack.c.l.b16 %v2047
  %v2249 = vunpack.c.l.b16 %v2050
  %v2250 = vunpack.c.l.b16 %v2054
  %v2251 = vunpack.c.l.b16 %v2057
  %v2252 = vunpack.c.l.b16 %v2061
  %v2253 = vunpack.c.l.b16 %v2064
  %v2254 = vunpack.c.l.b16 %v2068
  %v2255 = vunpack.c.l.b16 %v2071
  %v2256 = vunpack.c.l.b16 %v2075
  %v2257 = vunpack.c.l.b16 %v2078
  %v2258 = vunpack.c.l.b16 %v2082
  %v2259 = vunpack.c.l.b16 %v2085
  %v2260 = vunpack.c.l.b16 %v2089
  %v2261 = vunpack.c.l.b16 %v2092
  %v2262 = vunpack.c.l.b16 %v2096
  %v2263 = vunpack.c.l.b16 %v2099
  %v2264 = vunpack.c.l.b16 %v2103
  %v2265 = vunpack.c.l.b16 %v2106
  %v2266 = vunpack.c.l.b16 %v2110
  %v2267 = vunpack.c.l.b16 %v2113
  %v2268 = vunpack.c.l.b16 %v2117
  %v2269 = vunpack.c.l.b16 %v2120
  %v2270 = vunpack.c.l.b16 %v2124
  %v2271 = vunpack.c.l.b16 %v2127
  %v2272 = vunpack.c.l.b16 %v2131
  %v2273 = vunpack.c.l.b16 %v2134
  %v2274 = vunpack.c.l.b16 %v2138
  %v2275 = vunpack.c.l.b16 %v2141
  %v2276 = vunpack.c.l.b16 %v2145
  %v2277 = vunpack.c.l.b16 %v2148
  %v2278 = vunpack.c.l.b16 %v2152
  %v2279 = vunpack.c.l.b16 %v2155
  %v2280 = vunpack.c.l.b16 %v2159
  %v2281 = vunpack.c.l.b16 %v2162
  %v2282 = vunpack.c.l.b16 %v2166
  %v2283 = vunpack.c.l.b16 %v2169
  %v2284 = vunpack.c.l.b16 %v2173
  %v2285 = vunpack.c.l.b16 %v2176
  %v2286 = vunpack.c.l.b16 %v2180
  %v2287 = vunpack.c.l.b16 %v2183
  %v2288 = vunpack.c.l.b16 %v2187
  %v2289 = vunpack.c.l.b16 %v2190
  %v2290 = vunpack.c.l.b16 %v2194
  %v2291 = vunpack.c.l.b16 %v2197
  %v2292 = vunpack.c.l.b16 %v2201
  %v2293 = vunpack.c.l.b16 %v2204
  %v2294 = vunpack.c.l.b16 %v2208
  %v2295 = vunpack.c.l.b16 %v2211
  %v2296 = vunpack.c.l.b16 %v2215
  %v2297 = vunpack.c.l.b16 %v2218
  %v2298 = vunpack.c.l.b16 %v2222
  %v2299 = vunpack.c.l.b16 %v2225
  %v2300 = vunpack.c.l.b16 %v2229
  %v2301 = vunpack.c.l.b16 %v2232
  %v2302 = vpack.c.b16 %v2239, %v2238
  %v2303 = vpack.c.b16 %v2241, %v2240
  %v2304 = vpack.c.b16 %v2243, %v2242
  %v2305 = vpack.c.b16 %v2245, %v2244
  %v2306 = vpack.c.b16 %v2247, %v2246
  %v2307 = vpack.c.b16 %v2249, %v2248
  %v2308 = vpack.c.b16 %v2251, %v2250
  %v2309 = vpack.c.b16 %v2253, %v2252
  %v2310 = vpack.c.b16 %v2255, %v2254
  %v2311 = vpack.c.b16 %v2257, %v2256
  %v2312 = vpack.c.b16 %v2259, %v2258
  %v2313 = vpack.c.b16 %v2261, %v2260
  %v2314 = vpack.c.b16 %v2263, %v2262
  %v2315 = vpack.c.b16 %v2265, %v2264
  %v2316 = vpack.c.b16 %v2267, %v2266
  %v2317 = vpack.c.b16 %v2269, %v2268
  %v2318 = vpack.c.b16 %v2271, %v2270
  %v2319 = vpack.c.b16 %v2273, %v2272
  %v2320 = vpack.c.b16 %v2275, %v2274
  %v2321 = vpack.c.b16 %v2277, %v2276
  %v2322 = vpack.c.b16 %v2279, %v2278
  %v2323 = vpack.c.b16 %v2281, %v2280
  %v2324 = vpack.c.b16 %v2283, %v2282
  %v2325 = vpack.c.b16 %v2285, %v2284
  %v2326 = vpack.c.b16 %v2287, %v2286
  %v2327 = vpack.c.b16 %v2289, %v2288
  %v2328 = vpack.c.b16 %v2291, %v2290
  %v2329 = vpack.c.b16 %v2293, %v2292
  %v2330 = vpack.c.b16 %v2295, %v2294
  %v2331 = vpack.c.b16 %v2297, %v2296
  %v2332 = vpack.c.b16 %v2299, %v2298
  %v2333 = vpack.c.b16 %v2301, %v2300
  %v2338 = vunpack.c.l.b16 %v2234
  %v2339 = vunpack.c.l.b16 %v2235
  %v2340 = vunpack.c.l.b16 %v2236
  %v2341 = vunpack.c.l.b16 %v2237
  %v2342 = vpack.c.b16 %v2339, %v2338
  %v2343 = vpack.c.b16 %v2341, %v2340
  %v2347 = vsel %vm1031, %v2302, 0
  %v2350 = vsel %vm1031, %v2303, 0
  %v2353 = vsel %vm1031, %v2304, 0
  %v2356 = vsel %vm1031, %v2305, 0
  %v2359 = vsel %vm1031, %v2306, 0
  %v2362 = vsel %vm1031, %v2307, 0
  %v2365 = vsel %vm1031, %v2308, 0
  %v2368 = vsel %vm1031, %v2309, 0
  %v2371 = vsel %vm1031, %v2310, 0
  %v2374 = vsel %vm1031, %v2311, 0
  %v2377 = vsel %vm1031, %v2312, 0
  %v2380 = vsel %vm1031, %v2313, 0
  %v2383 = vsel %vm1031, %v2314, 0
  %v2386 = vsel %vm1031, %v2315, 0
  %v2389 = vsel %vm1031, %v2316, 0
  %v2392 = vsel %vm1031, %v2317, 0
  %v2395 = vsel %vm1031, %v2318, 0
  %v2398 = vsel %vm1031, %v2319, 0
  %v2401 = vsel %vm1031, %v2320, 0
  %v2404 = vsel %vm1031, %v2321, 0
  %v2407 = vsel %vm1031, %v2322, 0
  %v2410 = vsel %vm1031, %v2323, 0
  %v2413 = vsel %vm1031, %v2324, 0
  %v2416 = vsel %vm1031, %v2325, 0
  %v2419 = vsel %vm1031, %v2326, 0
  %v2422 = vsel %vm1031, %v2327, 0
  %v2425 = vsel %vm1031, %v2328, 0
  %v2428 = vsel %vm1031, %v2329, 0
  %v2431 = vsel %vm1031, %v2330, 0
  %v2434 = vsel %vm1031, %v2331, 0
  %v2437 = vsel %vm1031, %v2332, 0
  %v2440 = vsel %vm1031, %v2333, 0
  %2442 = vmatprep.subr.bf16.mxu0 0
  %2443 = vmatpush1.bf16.msra.mxu0 %v2342
  %2444 = vmatprep.subr.bf16.mxu0 0
  %2445 = vmatpush1.bf16.msra.mxu0 %v2343
  %2446 = vmatprep.subr.bf16.mxu0 0
  %2447 = vmatpush1.bf16.msra.mxu0 0
  %2448 = vmatprep.subr.bf16.mxu0 0
  %2449 = vmatpush1.bf16.msra.mxu0 0
  %2450 = vmatprep.subr.bf16.mxu0 0
  %2451 = vmatpush1.bf16.msra.mxu0 0
  %2452 = vmatprep.subr.bf16.mxu0 0
  %2453 = vmatpush1.bf16.msra.mxu0 0
  %2454 = vmatprep.subr.bf16.mxu0 0
  %2455 = vmatpush1.bf16.msra.mxu0 0
  %2456 = vmatprep.subr.bf16.mxu0 0
  %2457 = vmatpush1.bf16.msra.mxu0 0
  %2458 = vmatprep.subr.bf16.mxu0 0
  %2459 = vmatpush1.bf16.msra.mxu0 0
  %2460 = vmatprep.subr.bf16.mxu0 0
  %2461 = vmatpush1.bf16.msra.mxu0 0
  %2462 = vmatprep.subr.bf16.mxu0 0
  %2463 = vmatpush1.bf16.msra.mxu0 0
  %2464 = vmatprep.subr.bf16.mxu0 0
  %2465 = vmatpush1.bf16.msra.mxu0 0
  %2466 = vmatprep.subr.bf16.mxu0 0
  %2467 = vmatpush1.bf16.msra.mxu0 0
  %2468 = vmatprep.subr.bf16.mxu0 0
  %2469 = vmatpush1.bf16.msra.mxu0 0
  %2470 = vmatprep.subr.bf16.mxu0 0
  %2471 = vmatpush1.bf16.msra.mxu0 0
  %2472 = vmatprep.subr.bf16.mxu0 0
  %2473 = vmatpush1.bf16.msra.mxu0 0
  %2474 = vmatprep.mubr.bf16.mxu0 0
  %2475 = vmatmul.mubr.bf16.gmra.mrb[0].mxu0 %v2347
  %v2476 = vpop.f32.mrb[0].mxu0
  %v2477 = vadd.f32 0.0, %v2476
  %v2478 = vpop.f32.mrb[0].mxu0
  %v2479 = vpop.f32.mrb[0].mxu0
  %v2480 = vadd.f32 0.0, %v2479
  %v2481 = vpop.f32.mrb[0].mxu0
  %2482 = vmatprep.mubr.bf16.mxu0 0
  %2483 = vmatmul.mubr.bf16.gmra.mrb[0].mxu0 %v2350
  %v2484 = vpop.f32.mrb[0].mxu0
  %v2485 = vadd.f32 0.0, %v2484
  %v2486 = vpop.f32.mrb[0].mxu0
  %v2487 = vpop.f32.mrb[0].mxu0
  %v2488 = vadd.f32 0.0, %v2487
  %v2489 = vpop.f32.mrb[0].mxu0
  %2490 = vmatprep.mubr.bf16.mxu0 0
  %2491 = vmatmul.mubr.bf16.gmra.mrb[0].mxu0 %v2353
  %v2492 = vpop.f32.mrb[0].mxu0
  %v2493 = vadd.f32 0.0, %v2492
  %v2494 = vpop.f32.mrb[0].mxu0
  %v2495 = vpop.f32.mrb[0].mxu0
  %v2496 = vadd.f32 0.0, %v2495
  %v2497 = vpop.f32.mrb[0].mxu0
  %2498 = vmatprep.mubr.bf16.mxu0 0
  %2499 = vmatmul.mubr.bf16.gmra.mrb[0].mxu0 %v2356
  %v2500 = vpop.f32.mrb[0].mxu0
  %v2501 = vadd.f32 0.0, %v2500
  %v2502 = vpop.f32.mrb[0].mxu0
  %v2503 = vpop.f32.mrb[0].mxu0
  %v2504 = vadd.f32 0.0, %v2503
  %v2505 = vpop.f32.mrb[0].mxu0
  %2506 = vmatprep.mubr.bf16.mxu0 0
  %2507 = vmatmul.mubr.bf16.gmra.mrb[0].mxu0 %v2359
  %v2508 = vpop.f32.mrb[0].mxu0
  %v2509 = vadd.f32 0.0, %v2508
  %v2510 = vpop.f32.mrb[0].mxu0
  %v2511 = vpop.f32.mrb[0].mxu0
  %v2512 = vadd.f32 0.0, %v2511
  %v2513 = vpop.f32.mrb[0].mxu0
  %2514 = vmatprep.mubr.bf16.mxu0 0
  %2515 = vmatmul.mubr.bf16.gmra.mrb[0].mxu0 %v2362
  %v2516 = vpop.f32.mrb[0].mxu0
  %v2517 = vadd.f32 0.0, %v2516
  %v2518 = vpop.f32.mrb[0].mxu0
  %v2519 = vpop.f32.mrb[0].mxu0
  %v2520 = vadd.f32 0.0, %v2519
  %v2521 = vpop.f32.mrb[0].mxu0
  %2522 = vmatprep.mubr.bf16.mxu0 0
  %2523 = vmatmul.mubr.bf16.gmra.mrb[0].mxu0 %v2365
  %v2524 = vpop.f32.mrb[0].mxu0
  %v2525 = vadd.f32 0.0, %v2524
  %v2526 = vpop.f32.mrb[0].mxu0
  %v2527 = vpop.f32.mrb[0].mxu0
  %v2528 = vadd.f32 0.0, %v2527
  %v2529 = vpop.f32.mrb[0].mxu0
  %2530 = vmatprep.mubr.bf16.mxu0 0
  %2531 = vmatmul.mubr.bf16.gmra.mrb[0].mxu0 %v2368
  %v2532 = vpop.f32.mrb[0].mxu0
  %v2533 = vadd.f32 0.0, %v2532
  %v2534 = vpop.f32.mrb[0].mxu0
  %v2535 = vpop.f32.mrb[0].mxu0
  %v2536 = vadd.f32 0.0, %v2535
  %v2537 = vpop.f32.mrb[0].mxu0
  %2538 = vmatprep.mubr.bf16.mxu0 0
  %2539 = vmatmul.mubr.bf16.gmra.mrb[0].mxu0 %v2371
  %v2540 = vpop.f32.mrb[0].mxu0
  %v2541 = vadd.f32 0.0, %v2540
  %v2542 = vpop.f32.mrb[0].mxu0
  %v2543 = vpop.f32.mrb[0].mxu0
  %v2544 = vadd.f32 0.0, %v2543
  %v2545 = vpop.f32.mrb[0].mxu0
  %2546 = vmatprep.mubr.bf16.mxu0 0
  %2547 = vmatmul.mubr.bf16.gmra.mrb[0].mxu0 %v2374
  %v2548 = vpop.f32.mrb[0].mxu0
  %v2549 = vadd.f32 0.0, %v2548
  %v2550 = vpop.f32.mrb[0].mxu0
  %v2551 = vpop.f32.mrb[0].mxu0
  %v2552 = vadd.f32 0.0, %v2551
  %v2553 = vpop.f32.mrb[0].mxu0
  %2554 = vmatprep.mubr.bf16.mxu0 0
  %2555 = vmatmul.mubr.bf16.gmra.mrb[0].mxu0 %v2377
  %v2556 = vpop.f32.mrb[0].mxu0
  %v2557 = vadd.f32 0.0, %v2556
  %v2558 = vpop.f32.mrb[0].mxu0
  %v2559 = vpop.f32.mrb[0].mxu0
  %v2560 = vadd.f32 0.0, %v2559
  %v2561 = vpop.f32.mrb[0].mxu0
  %2562 = vmatprep.mubr.bf16.mxu0 0
  %2563 = vmatmul.mubr.bf16.gmra.mrb[0].mxu0 %v2380
  %v2564 = vpop.f32.mrb[0].mxu0
  %v2565 = vadd.f32 0.0, %v2564
  %v2566 = vpop.f32.mrb[0].mxu0
  %v2567 = vpop.f32.mrb[0].mxu0
  %v2568 = vadd.f32 0.0, %v2567
  %v2569 = vpop.f32.mrb[0].mxu0
  %2570 = vmatprep.mubr.bf16.mxu0 0
  %2571 = vmatmul.mubr.bf16.gmra.mrb[0].mxu0 %v2383
  %v2572 = vpop.f32.mrb[0].mxu0
  %v2573 = vadd.f32 0.0, %v2572
  %v2574 = vpop.f32.mrb[0].mxu0
  %v2575 = vpop.f32.mrb[0].mxu0
  %v2576 = vadd.f32 0.0, %v2575
  %v2577 = vpop.f32.mrb[0].mxu0
  %2578 = vmatprep.mubr.bf16.mxu0 0
  %2579 = vmatmul.mubr.bf16.gmra.mrb[0].mxu0 %v2386
  %v2580 = vpop.f32.mrb[0].mxu0
  %v2581 = vadd.f32 0.0, %v2580
  %v2582 = vpop.f32.mrb[0].mxu0
  %v2583 = vpop.f32.mrb[0].mxu0
  %v2584 = vadd.f32 0.0, %v2583
  %v2585 = vpop.f32.mrb[0].mxu0
  %2586 = vmatprep.mubr.bf16.mxu0 0
  %2587 = vmatmul.mubr.bf16.gmra.mrb[0].mxu0 %v2389
  %v2588 = vpop.f32.mrb[0].mxu0
  %v2589 = vadd.f32 0.0, %v2588
  %v2590 = vpop.f32.mrb[0].mxu0
  %v2591 = vpop.f32.mrb[0].mxu0
  %v2592 = vadd.f32 0.0, %v2591
  %v2593 = vpop.f32.mrb[0].mxu0
  %2594 = vmatprep.mubr.bf16.mxu0 0
  %2595 = vmatmul.mubr.bf16.gmra.mrb[0].mxu0 %v2392
  %v2596 = vpop.f32.mrb[0].mxu0
  %v2597 = vadd.f32 0.0, %v2596
  %v2598 = vpop.f32.mrb[0].mxu0
  %v2599 = vpop.f32.mrb[0].mxu0
  %v2600 = vadd.f32 0.0, %v2599
  %v2601 = vpop.f32.mrb[0].mxu0
  %2602 = vmatprep.mubr.bf16.mxu0 0
  %2603 = vmatmul.mubr.bf16.gmra.mrb[0].mxu0 %v2395
  %v2604 = vpop.f32.mrb[0].mxu0
  %v2605 = vadd.f32 0.0, %v2604
  %v2606 = vpop.f32.mrb[0].mxu0
  %v2607 = vpop.f32.mrb[0].mxu0
  %v2608 = vadd.f32 0.0, %v2607
  %v2609 = vpop.f32.mrb[0].mxu0
  %2610 = vmatprep.mubr.bf16.mxu0 0
  %2611 = vmatmul.mubr.bf16.gmra.mrb[0].mxu0 %v2398
  %v2612 = vpop.f32.mrb[0].mxu0
  %v2613 = vadd.f32 0.0, %v2612
  %v2614 = vpop.f32.mrb[0].mxu0
  %v2615 = vpop.f32.mrb[0].mxu0
  %v2616 = vadd.f32 0.0, %v2615
  %v2617 = vpop.f32.mrb[0].mxu0
  %2618 = vmatprep.mubr.bf16.mxu0 0
  %2619 = vmatmul.mubr.bf16.gmra.mrb[0].mxu0 %v2401
  %v2620 = vpop.f32.mrb[0].mxu0
  %v2621 = vadd.f32 0.0, %v2620
  %v2622 = vpop.f32.mrb[0].mxu0
  %v2623 = vpop.f32.mrb[0].mxu0
  %v2624 = vadd.f32 0.0, %v2623
  %v2625 = vpop.f32.mrb[0].mxu0
  %2626 = vmatprep.mubr.bf16.mxu0 0
  %2627 = vmatmul.mubr.bf16.gmra.mrb[0].mxu0 %v2404
  %v2628 = vpop.f32.mrb[0].mxu0
  %v2629 = vadd.f32 0.0, %v2628
  %v2630 = vpop.f32.mrb[0].mxu0
  %v2631 = vpop.f32.mrb[0].mxu0
  %v2632 = vadd.f32 0.0, %v2631
  %v2633 = vpop.f32.mrb[0].mxu0
  %2634 = vmatprep.mubr.bf16.mxu0 0
  %2635 = vmatmul.mubr.bf16.gmra.mrb[0].mxu0 %v2407
  %v2636 = vpop.f32.mrb[0].mxu0
  %v2637 = vadd.f32 0.0, %v2636
  %v2638 = vpop.f32.mrb[0].mxu0
  %v2639 = vpop.f32.mrb[0].mxu0
  %v2640 = vadd.f32 0.0, %v2639
  %v2641 = vpop.f32.mrb[0].mxu0
  %2642 = vmatprep.mubr.bf16.mxu0 0
  %2643 = vmatmul.mubr.bf16.gmra.mrb[0].mxu0 %v2410
  %v2644 = vpop.f32.mrb[0].mxu0
  %v2645 = vadd.f32 0.0, %v2644
  %v2646 = vpop.f32.mrb[0].mxu0
  %v2647 = vpop.f32.mrb[0].mxu0
  %v2648 = vadd.f32 0.0, %v2647
  %v2649 = vpop.f32.mrb[0].mxu0
  %2650 = vmatprep.mubr.bf16.mxu0 0
  %2651 = vmatmul.mubr.bf16.gmra.mrb[0].mxu0 %v2413
  %v2652 = vpop.f32.mrb[0].mxu0
  %v2653 = vadd.f32 0.0, %v2652
  %v2654 = vpop.f32.mrb[0].mxu0
  %v2655 = vpop.f32.mrb[0].mxu0
  %v2656 = vadd.f32 0.0, %v2655
  %v2657 = vpop.f32.mrb[0].mxu0
  %2658 = vmatprep.mubr.bf16.mxu0 0
  %2659 = vmatmul.mubr.bf16.gmra.mrb[0].mxu0 %v2416
  %v2660 = vpop.f32.mrb[0].mxu0
  %v2661 = vadd.f32 0.0, %v2660
  %v2662 = vpop.f32.mrb[0].mxu0
  %v2663 = vpop.f32.mrb[0].mxu0
  %v2664 = vadd.f32 0.0, %v2663
  %v2665 = vpop.f32.mrb[0].mxu0
  %2666 = vmatprep.mubr.bf16.mxu0 0
  %2667 = vmatmul.mubr.bf16.gmra.mrb[0].mxu0 %v2419
  %v2668 = vpop.f32.mrb[0].mxu0
  %v2669 = vadd.f32 0.0, %v2668
  %v2670 = vpop.f32.mrb[0].mxu0
  %v2671 = vpop.f32.mrb[0].mxu0
  %v2672 = vadd.f32 0.0, %v2671
  %v2673 = vpop.f32.mrb[0].mxu0
  %2674 = vmatprep.mubr.bf16.mxu0 0
  %2675 = vmatmul.mubr.bf16.gmra.mrb[0].mxu0 %v2422
  %v2676 = vpop.f32.mrb[0].mxu0
  %v2677 = vadd.f32 0.0, %v2676
  %v2678 = vpop.f32.mrb[0].mxu0
  %v2679 = vpop.f32.mrb[0].mxu0
  %v2680 = vadd.f32 0.0, %v2679
  %v2681 = vpop.f32.mrb[0].mxu0
  %2682 = vmatprep.mubr.bf16.mxu0 0
  %2683 = vmatmul.mubr.bf16.gmra.mrb[0].mxu0 %v2425
  %v2684 = vpop.f32.mrb[0].mxu0
  %v2685 = vadd.f32 0.0, %v2684
  %v2686 = vpop.f32.mrb[0].mxu0
  %v2687 = vpop.f32.mrb[0].mxu0
  %v2688 = vadd.f32 0.0, %v2687
  %v2689 = vpop.f32.mrb[0].mxu0
  %2690 = vmatprep.mubr.bf16.mxu0 0
  %2691 = vmatmul.mubr.bf16.gmra.mrb[0].mxu0 %v2428
  %v2692 = vpop.f32.mrb[0].mxu0
  %v2693 = vadd.f32 0.0, %v2692
  %v2694 = vpop.f32.mrb[0].mxu0
  %v2695 = vpop.f32.mrb[0].mxu0
  %v2696 = vadd.f32 0.0, %v2695
  %v2697 = vpop.f32.mrb[0].mxu0
  %2698 = vmatprep.mubr.bf16.mxu0 0
  %2699 = vmatmul.mubr.bf16.gmra.mrb[0].mxu0 %v2431
  %v2700 = vpop.f32.mrb[0].mxu0
  %v2701 = vadd.f32 0.0, %v2700
  %v2702 = vpop.f32.mrb[0].mxu0
  %v2703 = vpop.f32.mrb[0].mxu0
  %v2704 = vadd.f32 0.0, %v2703
  %v2705 = vpop.f32.mrb[0].mxu0
  %2706 = vmatprep.mubr.bf16.mxu0 0
  %2707 = vmatmul.mubr.bf16.gmra.mrb[0].mxu0 %v2434
  %v2708 = vpop.f32.mrb[0].mxu0
  %v2709 = vadd.f32 0.0, %v2708
  %v2710 = vpop.f32.mrb[0].mxu0
  %v2711 = vpop.f32.mrb[0].mxu0
  %v2712 = vadd.f32 0.0, %v2711
  %v2713 = vpop.f32.mrb[0].mxu0
  %2714 = vmatprep.mubr.bf16.mxu0 0
  %2715 = vmatmul.mubr.bf16.gmra.mrb[0].mxu0 %v2437
  %v2716 = vpop.f32.mrb[0].mxu0
  %v2717 = vadd.f32 0.0, %v2716
  %v2718 = vpop.f32.mrb[0].mxu0
  %v2719 = vpop.f32.mrb[0].mxu0
  %v2720 = vadd.f32 0.0, %v2719
  %v2721 = vpop.f32.mrb[0].mxu0
  %2722 = vmatprep.mubr.bf16.mxu0 0
  %2723 = vmatmul.mubr.bf16.gmra.mrb[0].mxu0 %v2440
  %v2724 = vpop.f32.mrb[0].mxu0
  %v2725 = vadd.f32 0.0, %v2724
  %v2726 = vpop.f32.mrb[0].mxu0
  %v2727 = vpop.f32.mrb[0].mxu0
  %v2728 = vadd.f32 0.0, %v2727
  %v2729 = vpop.f32.mrb[0].mxu0
  %2730 = vdwg.mxu0
  %v2731 = vadd.f32 %v1720, %v2477
  %v2732 = vadd.f32 %v1723, %v2480
  %v2733 = vadd.f32 %v1728, %v2485
  %v2734 = vadd.f32 %v1731, %v2488
  %v2735 = vadd.f32 %v1736, %v2493
  %v2736 = vadd.f32 %v1739, %v2496
  %v2737 = vadd.f32 %v1744, %v2501
  %v2738 = vadd.f32 %v1747, %v2504
  %v2739 = vadd.f32 %v1752, %v2509
  %v2740 = vadd.f32 %v1755, %v2512
  %v2741 = vadd.f32 %v1760, %v2517
  %v2742 = vadd.f32 %v1763, %v2520
  %v2743 = vadd.f32 %v1768, %v2525
  %v2744 = vadd.f32 %v1771, %v2528
  %v2745 = vadd.f32 %v1776, %v2533
  %v2746 = vadd.f32 %v1779, %v2536
  %v2747 = vadd.f32 %v1784, %v2541
  %v2748 = vadd.f32 %v1787, %v2544
  %v2749 = vadd.f32 %v1792, %v2549
  %v2750 = vadd.f32 %v1795, %v2552
  %v2751 = vadd.f32 %v1800, %v2557
  %v2752 = vadd.f32 %v1803, %v2560
  %v2753 = vadd.f32 %v1808, %v2565
  %v2754 = vadd.f32 %v1811, %v2568
  %v2755 = vadd.f32 %v1816, %v2573
  %v2756 = vadd.f32 %v1819, %v2576
  %v2757 = vadd.f32 %v1824, %v2581
  %v2758 = vadd.f32 %v1827, %v2584
  %v2759 = vadd.f32 %v1832, %v2589
  %v2760 = vadd.f32 %v1835, %v2592
  %v2761 = vadd.f32 %v1840, %v2597
  %v2762 = vadd.f32 %v1843, %v2600
  %v2763 = vadd.f32 %v1848, %v2605
  %v2764 = vadd.f32 %v1851, %v2608
  %v2765 = vadd.f32 %v1856, %v2613
  %v2766 = vadd.f32 %v1859, %v2616
  %v2767 = vadd.f32 %v1864, %v2621
  %v2768 = vadd.f32 %v1867, %v2624
  %v2769 = vadd.f32 %v1872, %v2629
  %v2770 = vadd.f32 %v1875, %v2632
  %v2771 = vadd.f32 %v1880, %v2637
  %v2772 = vadd.f32 %v1883, %v2640
  %v2773 = vadd.f32 %v1888, %v2645
  %v2774 = vadd.f32 %v1891, %v2648
  %v2775 = vadd.f32 %v1896, %v2653
  %v2776 = vadd.f32 %v1899, %v2656
  %v2777 = vadd.f32 %v1904, %v2661
  %v2778 = vadd.f32 %v1907, %v2664
  %v2779 = vadd.f32 %v1912, %v2669
  %v2780 = vadd.f32 %v1915, %v2672
  %v2781 = vadd.f32 %v1920, %v2677
  %v2782 = vadd.f32 %v1923, %v2680
  %v2783 = vadd.f32 %v1928, %v2685
  %v2784 = vadd.f32 %v1931, %v2688
  %v2785 = vadd.f32 %v1936, %v2693
  %v2786 = vadd.f32 %v1939, %v2696
  %v2787 = vadd.f32 %v1944, %v2701
  %v2788 = vadd.f32 %v1947, %v2704
  %v2789 = vadd.f32 %v1952, %v2709
  %v2790 = vadd.f32 %v1955, %v2712
  %v2791 = vadd.f32 %v1960, %v2717
  %v2792 = vadd.f32 %v1963, %v2720
  %v2793 = vadd.f32 %v1968, %v2725
  %v2794 = vadd.f32 %v1971, %v2728
  %vm2795 = vsmask.f32 2304
  %vm2796 = vsmask.f32 6416
  %vm2797 = vmor %vm2795, %vm2796
  %v2798 = vrot.slane %v151, 5
  %v2799 = vrot.slane %v154, 6
  %v2800 = vor.u32 %v2798, %v2799
  %v2801 = vrot.slane %v2800, 4
  %v2802 = vrot.slane %v164, 5
  %v2803 = vrot.slane %v160, 6
  %v2804 = vor.u32 %v2802, %v2803
  %v2805 = vsel %vm2797, %v2801, %v2804
  %v2806 = vrot.slane %v2804, 4
  %v2807 = vshrl.u32 %v25, 16
  %v2809 = vrot.slane %v2807, 5
  %v2810 = vrot.slane %v170, 6
  %v2811 = vor.u32 %v2809, %v2810
  %v2812 = vsel %vm2797, %v2806, %v2811
  %v2813 = vrot.slane %v175, 5
  %v2814 = vrot.slane %v178, 6
  %v2815 = vor.u32 %v2813, %v2814
  %v2816 = vrot.slane %v2815, 4
  %v2817 = vrot.slane %v188, 5
  %v2818 = vrot.slane %v184, 6
  %v2819 = vor.u32 %v2817, %v2818
  %v2820 = vsel %vm2797, %v2816, %v2819
  %v2821 = vrot.slane %v2819, 4
  %v2822 = vshrl.u32 %v28, 16
  %v2824 = vrot.slane %v2822, 5
  %v2825 = vrot.slane %v194, 6
  %v2826 = vor.u32 %v2824, %v2825
  %v2827 = vsel %vm2797, %v2821, %v2826
  %v2828 = vrot.slane %v199, 5
  %v2829 = vrot.slane %v202, 6
  %v2830 = vor.u32 %v2828, %v2829
  %v2831 = vrot.slane %v2830, 4
  %v2832 = vrot.slane %v212, 5
  %v2833 = vrot.slane %v208, 6
  %v2834 = vor.u32 %v2832, %v2833
  %v2835 = vsel %vm2797, %v2831, %v2834
  %v2836 = vrot.slane %v2834, 4
  %v2837 = vshrl.u32 %v31, 16
  %v2839 = vrot.slane %v2837, 5
  %v2840 = vrot.slane %v218, 6
  %v2841 = vor.u32 %v2839, %v2840
  %v2842 = vsel %vm2797, %v2836, %v2841
  %v2843 = vrot.slane %v223, 5
  %v2844 = vrot.slane %v226, 6
  %v2845 = vor.u32 %v2843, %v2844
  %v2846 = vrot.slane %v2845, 4
  %v2847 = vrot.slane %v236, 5
  %v2848 = vrot.slane %v232, 6
  %v2849 = vor.u32 %v2847, %v2848
  %v2850 = vsel %vm2797, %v2846, %v2849
  %v2851 = vrot.slane %v2849, 4
  %v2852 = vshrl.u32 %v34, 16
  %v2854 = vrot.slane %v2852, 5
  %v2855 = vrot.slane %v242, 6
  %v2856 = vor.u32 %v2854, %v2855
  %v2857 = vsel %vm2797, %v2851, %v2856
  %v2858 = vrot.slane %v247, 5
  %v2859 = vrot.slane %v250, 6
  %v2860 = vor.u32 %v2858, %v2859
  %v2861 = vrot.slane %v2860, 4
  %v2862 = vrot.slane %v260, 5
  %v2863 = vrot.slane %v256, 6
  %v2864 = vor.u32 %v2862, %v2863
  %v2865 = vsel %vm2797, %v2861, %v2864
  %v2866 = vrot.slane %v2864, 4
  %v2867 = vshrl.u32 %v37, 16
  %v2869 = vrot.slane %v2867, 5
  %v2870 = vrot.slane %v266, 6
  %v2871 = vor.u32 %v2869, %v2870
  %v2872 = vsel %vm2797, %v2866, %v2871
  %v2873 = vrot.slane %v271, 5
  %v2874 = vrot.slane %v274, 6
  %v2875 = vor.u32 %v2873, %v2874
  %v2876 = vrot.slane %v2875, 4
  %v2877 = vrot.slane %v284, 5
  %v2878 = vrot.slane %v280, 6
  %v2879 = vor.u32 %v2877, %v2878
  %v2880 = vsel %vm2797, %v2876, %v2879
  %v2881 = vrot.slane %v2879, 4
  %v2882 = vshrl.u32 %v40, 16
  %v2884 = vrot.slane %v2882, 5
  %v2885 = vrot.slane %v290, 6
  %v2886 = vor.u32 %v2884, %v2885
  %v2887 = vsel %vm2797, %v2881, %v2886
  %v2888 = vrot.slane %v295, 5
  %v2889 = vrot.slane %v298, 6
  %v2890 = vor.u32 %v2888, %v2889
  %v2891 = vrot.slane %v2890, 4
  %v2892 = vrot.slane %v308, 5
  %v2893 = vrot.slane %v304, 6
  %v2894 = vor.u32 %v2892, %v2893
  %v2895 = vsel %vm2797, %v2891, %v2894
  %v2896 = vrot.slane %v2894, 4
  %v2897 = vshrl.u32 %v43, 16
  %v2899 = vrot.slane %v2897, 5
  %v2900 = vrot.slane %v314, 6
  %v2901 = vor.u32 %v2899, %v2900
  %v2902 = vsel %vm2797, %v2896, %v2901
  %v2903 = vrot.slane %v319, 5
  %v2904 = vrot.slane %v322, 6
  %v2905 = vor.u32 %v2903, %v2904
  %v2906 = vrot.slane %v2905, 4
  %v2907 = vrot.slane %v332, 5
  %v2908 = vrot.slane %v328, 6
  %v2909 = vor.u32 %v2907, %v2908
  %v2910 = vsel %vm2797, %v2906, %v2909
  %v2911 = vrot.slane %v2909, 4
  %v2912 = vshrl.u32 %v46, 16
  %v2914 = vrot.slane %v2912, 5
  %v2915 = vrot.slane %v338, 6
  %v2916 = vor.u32 %v2914, %v2915
  %v2917 = vsel %vm2797, %v2911, %v2916
  %v2918 = vrot.slane %v343, 5
  %v2919 = vrot.slane %v346, 6
  %v2920 = vor.u32 %v2918, %v2919
  %v2921 = vrot.slane %v2920, 4
  %v2922 = vrot.slane %v356, 5
  %v2923 = vrot.slane %v352, 6
  %v2924 = vor.u32 %v2922, %v2923
  %v2925 = vsel %vm2797, %v2921, %v2924
  %v2926 = vrot.slane %v2924, 4
  %v2927 = vshrl.u32 %v49, 16
  %v2929 = vrot.slane %v2927, 5
  %v2930 = vrot.slane %v362, 6
  %v2931 = vor.u32 %v2929, %v2930
  %v2932 = vsel %vm2797, %v2926, %v2931
  %v2933 = vrot.slane %v367, 5
  %v2934 = vrot.slane %v370, 6
  %v2935 = vor.u32 %v2933, %v2934
  %v2936 = vrot.slane %v2935, 4
  %v2937 = vrot.slane %v380, 5
  %v2938 = vrot.slane %v376, 6
  %v2939 = vor.u32 %v2937, %v2938
  %v2940 = vsel %vm2797, %v2936, %v2939
  %v2941 = vrot.slane %v2939, 4
  %v2942 = vshrl.u32 %v52, 16
  %v2944 = vrot.slane %v2942, 5
  %v2945 = vrot.slane %v386, 6
  %v2946 = vor.u32 %v2944, %v2945
  %v2947 = vsel %vm2797, %v2941, %v2946
  %v2948 = vrot.slane %v391, 5
  %v2949 = vrot.slane %v394, 6
  %v2950 = vor.u32 %v2948, %v2949
  %v2951 = vrot.slane %v2950, 4
  %v2952 = vrot.slane %v404, 5
  %v2953 = vrot.slane %v400, 6
  %v2954 = vor.u32 %v2952, %v2953
  %v2955 = vsel %vm2797, %v2951, %v2954
  %v2956 = vrot.slane %v2954, 4
  %v2957 = vshrl.u32 %v55, 16
  %v2959 = vrot.slane %v2957, 5
  %v2960 = vrot.slane %v410, 6
  %v2961 = vor.u32 %v2959, %v2960
  %v2962 = vsel %vm2797, %v2956, %v2961
  %v2963 = vrot.slane %v415, 5
  %v2964 = vrot.slane %v418, 6
  %v2965 = vor.u32 %v2963, %v2964
  %v2966 = vrot.slane %v2965, 4
  %v2967 = vrot.slane %v428, 5
  %v2968 = vrot.slane %v424, 6
  %v2969 = vor.u32 %v2967, %v2968
  %v2970 = vsel %vm2797, %v2966, %v2969
  %v2971 = vrot.slane %v2969, 4
  %v2972 = vshrl.u32 %v58, 16
  %v2974 = vrot.slane %v2972, 5
  %v2975 = vrot.slane %v434, 6
  %v2976 = vor.u32 %v2974, %v2975
  %v2977 = vsel %vm2797, %v2971, %v2976
  %v2978 = vrot.slane %v439, 5
  %v2979 = vrot.slane %v442, 6
  %v2980 = vor.u32 %v2978, %v2979
  %v2981 = vrot.slane %v2980, 4
  %v2982 = vrot.slane %v452, 5
  %v2983 = vrot.slane %v448, 6
  %v2984 = vor.u32 %v2982, %v2983
  %v2985 = vsel %vm2797, %v2981, %v2984
  %v2986 = vrot.slane %v2984, 4
  %v2987 = vshrl.u32 %v61, 16
  %v2989 = vrot.slane %v2987, 5
  %v2990 = vrot.slane %v458, 6
  %v2991 = vor.u32 %v2989, %v2990
  %v2992 = vsel %vm2797, %v2986, %v2991
  %v2993 = vrot.slane %v463, 5
  %v2994 = vrot.slane %v466, 6
  %v2995 = vor.u32 %v2993, %v2994
  %v2996 = vrot.slane %v2995, 4
  %v2997 = vrot.slane %v476, 5
  %v2998 = vrot.slane %v472, 6
  %v2999 = vor.u32 %v2997, %v2998
  %v3000 = vsel %vm2797, %v2996, %v2999
  %v3001 = vrot.slane %v2999, 4
  %v3002 = vshrl.u32 %v64, 16
  %v3004 = vrot.slane %v3002, 5
  %v3005 = vrot.slane %v482, 6
  %v3006 = vor.u32 %v3004, %v3005
  %v3007 = vsel %vm2797, %v3001, %v3006
  %v3008 = vrot.slane %v487, 5
  %v3009 = vrot.slane %v490, 6
  %v3010 = vor.u32 %v3008, %v3009
  %v3011 = vrot.slane %v3010, 4
  %v3012 = vrot.slane %v500, 5
  %v3013 = vrot.slane %v496, 6
  %v3014 = vor.u32 %v3012, %v3013
  %v3015 = vsel %vm2797, %v3011, %v3014
  %v3016 = vrot.slane %v3014, 4
  %v3017 = vshrl.u32 %v67, 16
  %v3019 = vrot.slane %v3017, 5
  %v3020 = vrot.slane %v506, 6
  %v3021 = vor.u32 %v3019, %v3020
  %v3022 = vsel %vm2797, %v3016, %v3021
  %v3023 = vrot.slane %v511, 5
  %v3024 = vrot.slane %v514, 6
  %v3025 = vor.u32 %v3023, %v3024
  %v3026 = vrot.slane %v3025, 4
  %v3027 = vrot.slane %v524, 5
  %v3028 = vrot.slane %v520, 6
  %v3029 = vor.u32 %v3027, %v3028
  %v3030 = vsel %vm2797, %v3026, %v3029
  %v3031 = vrot.slane %v3029, 4
  %v3032 = vshrl.u32 %v70, 16
  %v3034 = vrot.slane %v3032, 5
  %v3035 = vrot.slane %v530, 6
  %v3036 = vor.u32 %v3034, %v3035
  %v3037 = vsel %vm2797, %v3031, %v3036
  %v3038 = vrot.slane %v535, 5
  %v3039 = vrot.slane %v538, 6
  %v3040 = vor.u32 %v3038, %v3039
  %v3041 = vrot.slane %v3040, 4
  %v3042 = vrot.slane %v548, 5
  %v3043 = vrot.slane %v544, 6
  %v3044 = vor.u32 %v3042, %v3043
  %v3045 = vsel %vm2797, %v3041, %v3044
  %v3046 = vrot.slane %v3044, 4
  %v3047 = vshrl.u32 %v85, 16
  %v3049 = vrot.slane %v3047, 5
  %v3050 = vrot.slane %v554, 6
  %v3051 = vor.u32 %v3049, %v3050
  %v3052 = vsel %vm2797, %v3046, %v3051
  %v3053 = vrot.slane %v559, 5
  %v3054 = vrot.slane %v562, 6
  %v3055 = vor.u32 %v3053, %v3054
  %v3056 = vrot.slane %v3055, 4
  %v3057 = vrot.slane %v572, 5
  %v3058 = vrot.slane %v568, 6
  %v3059 = vor.u32 %v3057, %v3058
  %v3060 = vsel %vm2797, %v3056, %v3059
  %v3061 = vrot.slane %v3059, 4
  %v3062 = vshrl.u32 %v88, 16
  %v3064 = vrot.slane %v3062, 5
  %v3065 = vrot.slane %v578, 6
  %v3066 = vor.u32 %v3064, %v3065
  %v3067 = vsel %vm2797, %v3061, %v3066
  %v3068 = vrot.slane %v583, 5
  %v3069 = vrot.slane %v586, 6
  %v3070 = vor.u32 %v3068, %v3069
  %v3071 = vrot.slane %v3070, 4
  %v3072 = vrot.slane %v596, 5
  %v3073 = vrot.slane %v592, 6
  %v3074 = vor.u32 %v3072, %v3073
  %v3075 = vsel %vm2797, %v3071, %v3074
  %v3076 = vrot.slane %v3074, 4
  %v3077 = vshrl.u32 %v91, 16
  %v3079 = vrot.slane %v3077, 5
  %v3080 = vrot.slane %v602, 6
  %v3081 = vor.u32 %v3079, %v3080
  %v3082 = vsel %vm2797, %v3076, %v3081
  %v3083 = vrot.slane %v607, 5
  %v3084 = vrot.slane %v610, 6
  %v3085 = vor.u32 %v3083, %v3084
  %v3086 = vrot.slane %v3085, 4
  %v3087 = vrot.slane %v620, 5
  %v3088 = vrot.slane %v616, 6
  %v3089 = vor.u32 %v3087, %v3088
  %v3090 = vsel %vm2797, %v3086, %v3089
  %v3091 = vrot.slane %v3089, 4
  %v3092 = vshrl.u32 %v94, 16
  %v3094 = vrot.slane %v3092, 5
  %v3095 = vrot.slane %v626, 6
  %v3096 = vor.u32 %v3094, %v3095
  %v3097 = vsel %vm2797, %v3091, %v3096
  %v3098 = vrot.slane %v631, 5
  %v3099 = vrot.slane %v634, 6
  %v3100 = vor.u32 %v3098, %v3099
  %v3101 = vrot.slane %v3100, 4
  %v3102 = vrot.slane %v644, 5
  %v3103 = vrot.slane %v640, 6
  %v3104 = vor.u32 %v3102, %v3103
  %v3105 = vsel %vm2797, %v3101, %v3104
  %v3106 = vrot.slane %v3104, 4
  %v3107 = vshrl.u32 %v97, 16
  %v3109 = vrot.slane %v3107, 5
  %v3110 = vrot.slane %v650, 6
  %v3111 = vor.u32 %v3109, %v3110
  %v3112 = vsel %vm2797, %v3106, %v3111
  %v3113 = vrot.slane %v655, 5
  %v3114 = vrot.slane %v658, 6
  %v3115 = vor.u32 %v3113, %v3114
  %v3116 = vrot.slane %v3115, 4
  %v3117 = vrot.slane %v668, 5
  %v3118 = vrot.slane %v664, 6
  %v3119 = vor.u32 %v3117, %v3118
  %v3120 = vsel %vm2797, %v3116, %v3119
  %v3121 = vrot.slane %v3119, 4
  %v3122 = vshrl.u32 %v100, 16
  %v3124 = vrot.slane %v3122, 5
  %v3125 = vrot.slane %v674, 6
  %v3126 = vor.u32 %v3124, %v3125
  %v3127 = vsel %vm2797, %v3121, %v3126
  %v3128 = vrot.slane %v679, 5
  %v3129 = vrot.slane %v682, 6
  %v3130 = vor.u32 %v3128, %v3129
  %v3131 = vrot.slane %v3130, 4
  %v3132 = vrot.slane %v692, 5
  %v3133 = vrot.slane %v688, 6
  %v3134 = vor.u32 %v3132, %v3133
  %v3135 = vsel %vm2797, %v3131, %v3134
  %v3136 = vrot.slane %v3134, 4
  %v3137 = vshrl.u32 %v103, 16
  %v3139 = vrot.slane %v3137, 5
  %v3140 = vrot.slane %v698, 6
  %v3141 = vor.u32 %v3139, %v3140
  %v3142 = vsel %vm2797, %v3136, %v3141
  %v3143 = vrot.slane %v703, 5
  %v3144 = vrot.slane %v706, 6
  %v3145 = vor.u32 %v3143, %v3144
  %v3146 = vrot.slane %v3145, 4
  %v3147 = vrot.slane %v716, 5
  %v3148 = vrot.slane %v712, 6
  %v3149 = vor.u32 %v3147, %v3148
  %v3150 = vsel %vm2797, %v3146, %v3149
  %v3151 = vrot.slane %v3149, 4
  %v3152 = vshrl.u32 %v106, 16
  %v3154 = vrot.slane %v3152, 5
  %v3155 = vrot.slane %v722, 6
  %v3156 = vor.u32 %v3154, %v3155
  %v3157 = vsel %vm2797, %v3151, %v3156
  %v3158 = vrot.slane %v727, 5
  %v3159 = vrot.slane %v730, 6
  %v3160 = vor.u32 %v3158, %v3159
  %v3161 = vrot.slane %v3160, 4
  %v3162 = vrot.slane %v740, 5
  %v3163 = vrot.slane %v736, 6
  %v3164 = vor.u32 %v3162, %v3163
  %v3165 = vsel %vm2797, %v3161, %v3164
  %v3166 = vrot.slane %v3164, 4
  %v3167 = vshrl.u32 %v109, 16
  %v3169 = vrot.slane %v3167, 5
  %v3170 = vrot.slane %v746, 6
  %v3171 = vor.u32 %v3169, %v3170
  %v3172 = vsel %vm2797, %v3166, %v3171
  %v3173 = vrot.slane %v751, 5
  %v3174 = vrot.slane %v754, 6
  %v3175 = vor.u32 %v3173, %v3174
  %v3176 = vrot.slane %v3175, 4
  %v3177 = vrot.slane %v764, 5
  %v3178 = vrot.slane %v760, 6
  %v3179 = vor.u32 %v3177, %v3178
  %v3180 = vsel %vm2797, %v3176, %v3179
  %v3181 = vrot.slane %v3179, 4
  %v3182 = vshrl.u32 %v112, 16
  %v3184 = vrot.slane %v3182, 5
  %v3185 = vrot.slane %v770, 6
  %v3186 = vor.u32 %v3184, %v3185
  %v3187 = vsel %vm2797, %v3181, %v3186
  %v3188 = vrot.slane %v775, 5
  %v3189 = vrot.slane %v778, 6
  %v3190 = vor.u32 %v3188, %v3189
  %v3191 = vrot.slane %v3190, 4
  %v3192 = vrot.slane %v788, 5
  %v3193 = vrot.slane %v784, 6
  %v3194 = vor.u32 %v3192, %v3193
  %v3195 = vsel %vm2797, %v3191, %v3194
  %v3196 = vrot.slane %v3194, 4
  %v3197 = vshrl.u32 %v115, 16
  %v3199 = vrot.slane %v3197, 5
  %v3200 = vrot.slane %v794, 6
  %v3201 = vor.u32 %v3199, %v3200
  %v3202 = vsel %vm2797, %v3196, %v3201
  %v3203 = vrot.slane %v799, 5
  %v3204 = vrot.slane %v802, 6
  %v3205 = vor.u32 %v3203, %v3204
  %v3206 = vrot.slane %v3205, 4
  %v3207 = vrot.slane %v812, 5
  %v3208 = vrot.slane %v808, 6
  %v3209 = vor.u32 %v3207, %v3208
  %v3210 = vsel %vm2797, %v3206, %v3209
  %v3211 = vrot.slane %v3209, 4
  %v3212 = vshrl.u32 %v118, 16
  %v3214 = vrot.slane %v3212, 5
  %v3215 = vrot.slane %v818, 6
  %v3216 = vor.u32 %v3214, %v3215
  %v3217 = vsel %vm2797, %v3211, %v3216
  %v3218 = vrot.slane %v823, 5
  %v3219 = vrot.slane %v826, 6
  %v3220 = vor.u32 %v3218, %v3219
  %v3221 = vrot.slane %v3220, 4
  %v3222 = vrot.slane %v836, 5
  %v3223 = vrot.slane %v832, 6
  %v3224 = vor.u32 %v3222, %v3223
  %v3225 = vsel %vm2797, %v3221, %v3224
  %v3226 = vrot.slane %v3224, 4
  %v3227 = vshrl.u32 %v121, 16
  %v3229 = vrot.slane %v3227, 5
  %v3230 = vrot.slane %v842, 6
  %v3231 = vor.u32 %v3229, %v3230
  %v3232 = vsel %vm2797, %v3226, %v3231
  %v3233 = vrot.slane %v847, 5
  %v3234 = vrot.slane %v850, 6
  %v3235 = vor.u32 %v3233, %v3234
  %v3236 = vrot.slane %v3235, 4
  %v3237 = vrot.slane %v860, 5
  %v3238 = vrot.slane %v856, 6
  %v3239 = vor.u32 %v3237, %v3238
  %v3240 = vsel %vm2797, %v3236, %v3239
  %v3241 = vrot.slane %v3239, 4
  %v3242 = vshrl.u32 %v124, 16
  %v3244 = vrot.slane %v3242, 5
  %v3245 = vrot.slane %v866, 6
  %v3246 = vor.u32 %v3244, %v3245
  %v3247 = vsel %vm2797, %v3241, %v3246
  %v3248 = vrot.slane %v871, 5
  %v3249 = vrot.slane %v874, 6
  %v3250 = vor.u32 %v3248, %v3249
  %v3251 = vrot.slane %v3250, 4
  %v3252 = vrot.slane %v884, 5
  %v3253 = vrot.slane %v880, 6
  %v3254 = vor.u32 %v3252, %v3253
  %v3255 = vsel %vm2797, %v3251, %v3254
  %v3256 = vrot.slane %v3254, 4
  %v3257 = vshrl.u32 %v127, 16
  %v3259 = vrot.slane %v3257, 5
  %v3260 = vrot.slane %v890, 6
  %v3261 = vor.u32 %v3259, %v3260
  %v3262 = vsel %vm2797, %v3256, %v3261
  %v3263 = vrot.slane %v895, 5
  %v3264 = vrot.slane %v898, 6
  %v3265 = vor.u32 %v3263, %v3264
  %v3266 = vrot.slane %v3265, 4
  %v3267 = vrot.slane %v908, 5
  %v3268 = vrot.slane %v904, 6
  %v3269 = vor.u32 %v3267, %v3268
  %v3270 = vsel %vm2797, %v3266, %v3269
  %v3271 = vrot.slane %v3269, 4
  %v3272 = vshrl.u32 %v130, 16
  %v3274 = vrot.slane %v3272, 5
  %v3275 = vrot.slane %v914, 6
  %v3276 = vor.u32 %v3274, %v3275
  %v3277 = vsel %vm2797, %v3271, %v3276
  %s3278 = scalar_lea.vmem %s1, 48
  %v3279 = vld [vmem:[%s3278] sm:$0xf]
  %v3280 = vld [vmem:[%s3278 + $0x4] sm:$0xf]
  %v3281 = vld [vmem:[%s3278 + $0x8] sm:$0xf]
  %v3282 = vld [vmem:[%s3278 + $0xc] sm:$0xf]
  %v3283 = vunpack.c.l.b16 %v2805
  %v3284 = vunpack.c.l.b16 %v2812
  %v3285 = vunpack.c.l.b16 %v2820
  %v3286 = vunpack.c.l.b16 %v2827
  %v3287 = vunpack.c.l.b16 %v2835
  %v3288 = vunpack.c.l.b16 %v2842
  %v3289 = vunpack.c.l.b16 %v2850
  %v3290 = vunpack.c.l.b16 %v2857
  %v3291 = vunpack.c.l.b16 %v2865
  %v3292 = vunpack.c.l.b16 %v2872
  %v3293 = vunpack.c.l.b16 %v2880
  %v3294 = vunpack.c.l.b16 %v2887
  %v3295 = vunpack.c.l.b16 %v2895
  %v3296 = vunpack.c.l.b16 %v2902
  %v3297 = vunpack.c.l.b16 %v2910
  %v3298 = vunpack.c.l.b16 %v2917
  %v3299 = vunpack.c.l.b16 %v2925
  %v3300 = vunpack.c.l.b16 %v2932
  %v3301 = vunpack.c.l.b16 %v2940
  %v3302 = vunpack.c.l.b16 %v2947
  %v3303 = vunpack.c.l.b16 %v2955
  %v3304 = vunpack.c.l.b16 %v2962
  %v3305 = vunpack.c.l.b16 %v2970
  %v3306 = vunpack.c.l.b16 %v2977
  %v3307 = vunpack.c.l.b16 %v2985
  %v3308 = vunpack.c.l.b16 %v2992
  %v3309 = vunpack.c.l.b16 %v3000
  %v3310 = vunpack.c.l.b16 %v3007
  %v3311 = vunpack.c.l.b16 %v3015
  %v3312 = vunpack.c.l.b16 %v3022
  %v3313 = vunpack.c.l.b16 %v3030
  %v3314 = vunpack.c.l.b16 %v3037
  %v3315 = vunpack.c.l.b16 %v3045
  %v3316 = vunpack.c.l.b16 %v3052
  %v3317 = vunpack.c.l.b16 %v3060
  %v3318 = vunpack.c.l.b16 %v3067
  %v3319 = vunpack.c.l.b16 %v3075
  %v3320 = vunpack.c.l.b16 %v3082
  %v3321 = vunpack.c.l.b16 %v3090
  %v3322 = vunpack.c.l.b16 %v3097
  %v3323 = vunpack.c.l.b16 %v3105
  %v3324 = vunpack.c.l.b16 %v3112
  %v3325 = vunpack.c.l.b16 %v3120
  %v3326 = vunpack.c.l.b16 %v3127
  %v3327 = vunpack.c.l.b16 %v3135
  %v3328 = vunpack.c.l.b16 %v3142
  %v3329 = vunpack.c.l.b16 %v3150
  %v3330 = vunpack.c.l.b16 %v3157
  %v3331 = vunpack.c.l.b16 %v3165
  %v3332 = vunpack.c.l.b16 %v3172
  %v3333 = vunpack.c.l.b16 %v3180
  %v3334 = vunpack.c.l.b16 %v3187
  %v3335 = vunpack.c.l.b16 %v3195
  %v3336 = vunpack.c.l.b16 %v3202
  %v3337 = vunpack.c.l.b16 %v3210
  %v3338 = vunpack.c.l.b16 %v3217
  %v3339 = vunpack.c.l.b16 %v3225
  %v3340 = vunpack.c.l.b16 %v3232
  %v3341 = vunpack.c.l.b16 %v3240
  %v3342 = vunpack.c.l.b16 %v3247
  %v3343 = vunpack.c.l.b16 %v3255
  %v3344 = vunpack.c.l.b16 %v3262
  %v3345 = vunpack.c.l.b16 %v3270
  %v3346 = vunpack.c.l.b16 %v3277
  %v3347 = vpack.c.b16 %v3284, %v3283
  %v3348 = vpack.c.b16 %v3286, %v3285
  %v3349 = vpack.c.b16 %v3288, %v3287
  %v3350 = vpack.c.b16 %v3290, %v3289
  %v3351 = vpack.c.b16 %v3292, %v3291
  %v3352 = vpack.c.b16 %v3294, %v3293
  %v3353 = vpack.c.b16 %v3296, %v3295
  %v3354 = vpack.c.b16 %v3298, %v3297
  %v3355 = vpack.c.b16 %v3300, %v3299
  %v3356 = vpack.c.b16 %v3302, %v3301
  %v3357 = vpack.c.b16 %v3304, %v3303
  %v3358 = vpack.c.b16 %v3306, %v3305
  %v3359 = vpack.c.b16 %v3308, %v3307
  %v3360 = vpack.c.b16 %v3310, %v3309
  %v3361 = vpack.c.b16 %v3312, %v3311
  %v3362 = vpack.c.b16 %v3314, %v3313
  %v3363 = vpack.c.b16 %v3316, %v3315
  %v3364 = vpack.c.b16 %v3318, %v3317
  %v3365 = vpack.c.b16 %v3320, %v3319
  %v3366 = vpack.c.b16 %v3322, %v3321
  %v3367 = vpack.c.b16 %v3324, %v3323
  %v3368 = vpack.c.b16 %v3326, %v3325
  %v3369 = vpack.c.b16 %v3328, %v3327
  %v3370 = vpack.c.b16 %v3330, %v3329
  %v3371 = vpack.c.b16 %v3332, %v3331
  %v3372 = vpack.c.b16 %v3334, %v3333
  %v3373 = vpack.c.b16 %v3336, %v3335
  %v3374 = vpack.c.b16 %v3338, %v3337
  %v3375 = vpack.c.b16 %v3340, %v3339
  %v3376 = vpack.c.b16 %v3342, %v3341
  %v3377 = vpack.c.b16 %v3344, %v3343
  %v3378 = vpack.c.b16 %v3346, %v3345
  %v3383 = vunpack.c.l.b16 %v3279
  %v3384 = vunpack.c.l.b16 %v3280
  %v3385 = vunpack.c.l.b16 %v3281
  %v3386 = vunpack.c.l.b16 %v3282
  %v3387 = vpack.c.b16 %v3384, %v3383
  %v3388 = vpack.c.b16 %v3386, %v3385
  %v3392 = vsel %vm1031, %v3347, 0
  %v3395 = vsel %vm1031, %v3348, 0
  %v3398 = vsel %vm1031, %v3349, 0
  %v3401 = vsel %vm1031, %v3350, 0
  %v3404 = vsel %vm1031, %v3351, 0
  %v3407 = vsel %vm1031, %v3352, 0
  %v3410 = vsel %vm1031, %v3353, 0
  %v3413 = vsel %vm1031, %v3354, 0
  %v3416 = vsel %vm1031, %v3355, 0
  %v3419 = vsel %vm1031, %v3356, 0
  %v3422 = vsel %vm1031, %v3357, 0
  %v3425 = vsel %vm1031, %v3358, 0
  %v3428 = vsel %vm1031, %v3359, 0
  %v3431 = vsel %vm1031, %v3360, 0
  %v3434 = vsel %vm1031, %v3361, 0
  %v3437 = vsel %vm1031, %v3362, 0
  %v3440 = vsel %vm1031, %v3363, 0
  %v3443 = vsel %vm1031, %v3364, 0
  %v3446 = vsel %vm1031, %v3365, 0
  %v3449 = vsel %vm1031, %v3366, 0
  %v3452 = vsel %vm1031, %v3367, 0
  %v3455 = vsel %vm1031, %v3368, 0
  %v3458 = vsel %vm1031, %v3369, 0
  %v3461 = vsel %vm1031, %v3370, 0
  %v3464 = vsel %vm1031, %v3371, 0
  %v3467 = vsel %vm1031, %v3372, 0
  %v3470 = vsel %vm1031, %v3373, 0
  %v3473 = vsel %vm1031, %v3374, 0
  %v3476 = vsel %vm1031, %v3375, 0
  %v3479 = vsel %vm1031, %v3376, 0
  %v3482 = vsel %vm1031, %v3377, 0
  %v3485 = vsel %vm1031, %v3378, 0
  %3487 = vmatprep.subr.bf16.mxu0 0
  %3488 = vmatpush1.bf16.msra.mxu0 %v3387
  %3489 = vmatprep.subr.bf16.mxu0 0
  %3490 = vmatpush1.bf16.msra.mxu0 %v3388
  %3491 = vmatprep.subr.bf16.mxu0 0
  %3492 = vmatpush1.bf16.msra.mxu0 0
  %3493 = vmatprep.subr.bf16.mxu0 0
  %3494 = vmatpush1.bf16.msra.mxu0 0
  %3495 = vmatprep.subr.bf16.mxu0 0
  %3496 = vmatpush1.bf16.msra.mxu0 0
  %3497 = vmatprep.subr.bf16.mxu0 0
  %3498 = vmatpush1.bf16.msra.mxu0 0
  %3499 = vmatprep.subr.bf16.mxu0 0
  %3500 = vmatpush1.bf16.msra.mxu0 0
  %3501 = vmatprep.subr.bf16.mxu0 0
  %3502 = vmatpush1.bf16.msra.mxu0 0
  %3503 = vmatprep.subr.bf16.mxu0 0
  %3504 = vmatpush1.bf16.msra.mxu0 0
  %3505 = vmatprep.subr.bf16.mxu0 0
  %3506 = vmatpush1.bf16.msra.mxu0 0
  %3507 = vmatprep.subr.bf16.mxu0 0
  %3508 = vmatpush1.bf16.msra.mxu0 0
  %3509 = vmatprep.subr.bf16.mxu0 0
  %3510 = vmatpush1.bf16.msra.mxu0 0
  %3511 = vmatprep.subr.bf16.mxu0 0
  %3512 = vmatpush1.bf16.msra.mxu0 0
  %3513 = vmatprep.subr.bf16.mxu0 0
  %3514 = vmatpush1.bf16.msra.mxu0 0
  %3515 = vmatprep.subr.bf16.mxu0 0
  %3516 = vmatpush1.bf16.msra.mxu0 0
  %3517 = vmatprep.subr.bf16.mxu0 0
  %3518 = vmatpush1.bf16.msra.mxu0 0
  %3519 = vmatprep.mubr.bf16.mxu0 0
  %3520 = vmatmul.mubr.bf16.gmra.mrb[0].mxu0 %v3392
  %v3521 = vpop.f32.mrb[0].mxu0
  %v3522 = vadd.f32 0.0, %v3521
  %v3523 = vpop.f32.mrb[0].mxu0
  %v3524 = vpop.f32.mrb[0].mxu0
  %v3525 = vadd.f32 0.0, %v3524
  %v3526 = vpop.f32.mrb[0].mxu0
  %3527 = vmatprep.mubr.bf16.mxu0 0
  %3528 = vmatmul.mubr.bf16.gmra.mrb[0].mxu0 %v3395
  %v3529 = vpop.f32.mrb[0].mxu0
  %v3530 = vadd.f32 0.0, %v3529
  %v3531 = vpop.f32.mrb[0].mxu0
  %v3532 = vpop.f32.mrb[0].mxu0
  %v3533 = vadd.f32 0.0, %v3532
  %v3534 = vpop.f32.mrb[0].mxu0
  %3535 = vmatprep.mubr.bf16.mxu0 0
  %3536 = vmatmul.mubr.bf16.gmra.mrb[0].mxu0 %v3398
  %v3537 = vpop.f32.mrb[0].mxu0
  %v3538 = vadd.f32 0.0, %v3537
  %v3539 = vpop.f32.mrb[0].mxu0
  %v3540 = vpop.f32.mrb[0].mxu0
  %v3541 = vadd.f32 0.0, %v3540
  %v3542 = vpop.f32.mrb[0].mxu0
  %3543 = vmatprep.mubr.bf16.mxu0 0
  %3544 = vmatmul.mubr.bf16.gmra.mrb[0].mxu0 %v3401
  %v3545 = vpop.f32.mrb[0].mxu0
  %v3546 = vadd.f32 0.0, %v3545
  %v3547 = vpop.f32.mrb[0].mxu0
  %v3548 = vpop.f32.mrb[0].mxu0
  %v3549 = vadd.f32 0.0, %v3548
  %v3550 = vpop.f32.mrb[0].mxu0
  %3551 = vmatprep.mubr.bf16.mxu0 0
  %3552 = vmatmul.mubr.bf16.gmra.mrb[0].mxu0 %v3404
  %v3553 = vpop.f32.mrb[0].mxu0
  %v3554 = vadd.f32 0.0, %v3553
  %v3555 = vpop.f32.mrb[0].mxu0
  %v3556 = vpop.f32.mrb[0].mxu0
  %v3557 = vadd.f32 0.0, %v3556
  %v3558 = vpop.f32.mrb[0].mxu0
  %3559 = vmatprep.mubr.bf16.mxu0 0
  %3560 = vmatmul.mubr.bf16.gmra.mrb[0].mxu0 %v3407
  %v3561 = vpop.f32.mrb[0].mxu0
  %v3562 = vadd.f32 0.0, %v3561
  %v3563 = vpop.f32.mrb[0].mxu0
  %v3564 = vpop.f32.mrb[0].mxu0
  %v3565 = vadd.f32 0.0, %v3564
  %v3566 = vpop.f32.mrb[0].mxu0
  %3567 = vmatprep.mubr.bf16.mxu0 0
  %3568 = vmatmul.mubr.bf16.gmra.mrb[0].mxu0 %v3410
  %v3569 = vpop.f32.mrb[0].mxu0
  %v3570 = vadd.f32 0.0, %v3569
  %v3571 = vpop.f32.mrb[0].mxu0
  %v3572 = vpop.f32.mrb[0].mxu0
  %v3573 = vadd.f32 0.0, %v3572
  %v3574 = vpop.f32.mrb[0].mxu0
  %3575 = vmatprep.mubr.bf16.mxu0 0
  %3576 = vmatmul.mubr.bf16.gmra.mrb[0].mxu0 %v3413
  %v3577 = vpop.f32.mrb[0].mxu0
  %v3578 = vadd.f32 0.0, %v3577
  %v3579 = vpop.f32.mrb[0].mxu0
  %v3580 = vpop.f32.mrb[0].mxu0
  %v3581 = vadd.f32 0.0, %v3580
  %v3582 = vpop.f32.mrb[0].mxu0
  %3583 = vmatprep.mubr.bf16.mxu0 0
  %3584 = vmatmul.mubr.bf16.gmra.mrb[0].mxu0 %v3416
  %v3585 = vpop.f32.mrb[0].mxu0
  %v3586 = vadd.f32 0.0, %v3585
  %v3587 = vpop.f32.mrb[0].mxu0
  %v3588 = vpop.f32.mrb[0].mxu0
  %v3589 = vadd.f32 0.0, %v3588
  %v3590 = vpop.f32.mrb[0].mxu0
  %3591 = vmatprep.mubr.bf16.mxu0 0
  %3592 = vmatmul.mubr.bf16.gmra.mrb[0].mxu0 %v3419
  %v3593 = vpop.f32.mrb[0].mxu0
  %v3594 = vadd.f32 0.0, %v3593
  %v3595 = vpop.f32.mrb[0].mxu0
  %v3596 = vpop.f32.mrb[0].mxu0
  %v3597 = vadd.f32 0.0, %v3596
  %v3598 = vpop.f32.mrb[0].mxu0
  %3599 = vmatprep.mubr.bf16.mxu0 0
  %3600 = vmatmul.mubr.bf16.gmra.mrb[0].mxu0 %v3422
  %v3601 = vpop.f32.mrb[0].mxu0
  %v3602 = vadd.f32 0.0, %v3601
  %v3603 = vpop.f32.mrb[0].mxu0
  %v3604 = vpop.f32.mrb[0].mxu0
  %v3605 = vadd.f32 0.0, %v3604
  %v3606 = vpop.f32.mrb[0].mxu0
  %3607 = vmatprep.mubr.bf16.mxu0 0
  %3608 = vmatmul.mubr.bf16.gmra.mrb[0].mxu0 %v3425
  %v3609 = vpop.f32.mrb[0].mxu0
  %v3610 = vadd.f32 0.0, %v3609
  %v3611 = vpop.f32.mrb[0].mxu0
  %v3612 = vpop.f32.mrb[0].mxu0
  %v3613 = vadd.f32 0.0, %v3612
  %v3614 = vpop.f32.mrb[0].mxu0
  %3615 = vmatprep.mubr.bf16.mxu0 0
  %3616 = vmatmul.mubr.bf16.gmra.mrb[0].mxu0 %v3428
  %v3617 = vpop.f32.mrb[0].mxu0
  %v3618 = vadd.f32 0.0, %v3617
  %v3619 = vpop.f32.mrb[0].mxu0
  %v3620 = vpop.f32.mrb[0].mxu0
  %v3621 = vadd.f32 0.0, %v3620
  %v3622 = vpop.f32.mrb[0].mxu0
  %3623 = vmatprep.mubr.bf16.mxu0 0
  %3624 = vmatmul.mubr.bf16.gmra.mrb[0].mxu0 %v3431
  %v3625 = vpop.f32.mrb[0].mxu0
  %v3626 = vadd.f32 0.0, %v3625
  %v3627 = vpop.f32.mrb[0].mxu0
  %v3628 = vpop.f32.mrb[0].mxu0
  %v3629 = vadd.f32 0.0, %v3628
  %v3630 = vpop.f32.mrb[0].mxu0
  %3631 = vmatprep.mubr.bf16.mxu0 0
  %3632 = vmatmul.mubr.bf16.gmra.mrb[0].mxu0 %v3434
  %v3633 = vpop.f32.mrb[0].mxu0
  %v3634 = vadd.f32 0.0, %v3633
  %v3635 = vpop.f32.mrb[0].mxu0
  %v3636 = vpop.f32.mrb[0].mxu0
  %v3637 = vadd.f32 0.0, %v3636
  %v3638 = vpop.f32.mrb[0].mxu0
  %3639 = vmatprep.mubr.bf16.mxu0 0
  %3640 = vmatmul.mubr.bf16.gmra.mrb[0].mxu0 %v3437
  %v3641 = vpop.f32.mrb[0].mxu0
  %v3642 = vadd.f32 0.0, %v3641
  %v3643 = vpop.f32.mrb[0].mxu0
  %v3644 = vpop.f32.mrb[0].mxu0
  %v3645 = vadd.f32 0.0, %v3644
  %v3646 = vpop.f32.mrb[0].mxu0
  %3647 = vmatprep.mubr.bf16.mxu0 0
  %3648 = vmatmul.mubr.bf16.gmra.mrb[0].mxu0 %v3440
  %v3649 = vpop.f32.mrb[0].mxu0
  %v3650 = vadd.f32 0.0, %v3649
  %v3651 = vpop.f32.mrb[0].mxu0
  %v3652 = vpop.f32.mrb[0].mxu0
  %v3653 = vadd.f32 0.0, %v3652
  %v3654 = vpop.f32.mrb[0].mxu0
  %3655 = vmatprep.mubr.bf16.mxu0 0
  %3656 = vmatmul.mubr.bf16.gmra.mrb[0].mxu0 %v3443
  %v3657 = vpop.f32.mrb[0].mxu0
  %v3658 = vadd.f32 0.0, %v3657
  %v3659 = vpop.f32.mrb[0].mxu0
  %v3660 = vpop.f32.mrb[0].mxu0
  %v3661 = vadd.f32 0.0, %v3660
  %v3662 = vpop.f32.mrb[0].mxu0
  %3663 = vmatprep.mubr.bf16.mxu0 0
  %3664 = vmatmul.mubr.bf16.gmra.mrb[0].mxu0 %v3446
  %v3665 = vpop.f32.mrb[0].mxu0
  %v3666 = vadd.f32 0.0, %v3665
  %v3667 = vpop.f32.mrb[0].mxu0
  %v3668 = vpop.f32.mrb[0].mxu0
  %v3669 = vadd.f32 0.0, %v3668
  %v3670 = vpop.f32.mrb[0].mxu0
  %3671 = vmatprep.mubr.bf16.mxu0 0
  %3672 = vmatmul.mubr.bf16.gmra.mrb[0].mxu0 %v3449
  %v3673 = vpop.f32.mrb[0].mxu0
  %v3674 = vadd.f32 0.0, %v3673
  %v3675 = vpop.f32.mrb[0].mxu0
  %v3676 = vpop.f32.mrb[0].mxu0
  %v3677 = vadd.f32 0.0, %v3676
  %v3678 = vpop.f32.mrb[0].mxu0
  %3679 = vmatprep.mubr.bf16.mxu0 0
  %3680 = vmatmul.mubr.bf16.gmra.mrb[0].mxu0 %v3452
  %v3681 = vpop.f32.mrb[0].mxu0
  %v3682 = vadd.f32 0.0, %v3681
  %v3683 = vpop.f32.mrb[0].mxu0
  %v3684 = vpop.f32.mrb[0].mxu0
  %v3685 = vadd.f32 0.0, %v3684
  %v3686 = vpop.f32.mrb[0].mxu0
  %3687 = vmatprep.mubr.bf16.mxu0 0
  %3688 = vmatmul.mubr.bf16.gmra.mrb[0].mxu0 %v3455
  %v3689 = vpop.f32.mrb[0].mxu0
  %v3690 = vadd.f32 0.0, %v3689
  %v3691 = vpop.f32.mrb[0].mxu0
  %v3692 = vpop.f32.mrb[0].mxu0
  %v3693 = vadd.f32 0.0, %v3692
  %v3694 = vpop.f32.mrb[0].mxu0
  %3695 = vmatprep.mubr.bf16.mxu0 0
  %3696 = vmatmul.mubr.bf16.gmra.mrb[0].mxu0 %v3458
  %v3697 = vpop.f32.mrb[0].mxu0
  %v3698 = vadd.f32 0.0, %v3697
  %v3699 = vpop.f32.mrb[0].mxu0
  %v3700 = vpop.f32.mrb[0].mxu0
  %v3701 = vadd.f32 0.0, %v3700
  %v3702 = vpop.f32.mrb[0].mxu0
  %3703 = vmatprep.mubr.bf16.mxu0 0
  %3704 = vmatmul.mubr.bf16.gmra.mrb[0].mxu0 %v3461
  %v3705 = vpop.f32.mrb[0].mxu0
  %v3706 = vadd.f32 0.0, %v3705
  %v3707 = vpop.f32.mrb[0].mxu0
  %v3708 = vpop.f32.mrb[0].mxu0
  %v3709 = vadd.f32 0.0, %v3708
  %v3710 = vpop.f32.mrb[0].mxu0
  %3711 = vmatprep.mubr.bf16.mxu0 0
  %3712 = vmatmul.mubr.bf16.gmra.mrb[0].mxu0 %v3464
  %v3713 = vpop.f32.mrb[0].mxu0
  %v3714 = vadd.f32 0.0, %v3713
  %v3715 = vpop.f32.mrb[0].mxu0
  %v3716 = vpop.f32.mrb[0].mxu0
  %v3717 = vadd.f32 0.0, %v3716
  %v3718 = vpop.f32.mrb[0].mxu0
  %3719 = vmatprep.mubr.bf16.mxu0 0
  %3720 = vmatmul.mubr.bf16.gmra.mrb[0].mxu0 %v3467
  %v3721 = vpop.f32.mrb[0].mxu0
  %v3722 = vadd.f32 0.0, %v3721
  %v3723 = vpop.f32.mrb[0].mxu0
  %v3724 = vpop.f32.mrb[0].mxu0
  %v3725 = vadd.f32 0.0, %v3724
  %v3726 = vpop.f32.mrb[0].mxu0
  %3727 = vmatprep.mubr.bf16.mxu0 0
  %3728 = vmatmul.mubr.bf16.gmra.mrb[0].mxu0 %v3470
  %v3729 = vpop.f32.mrb[0].mxu0
  %v3730 = vadd.f32 0.0, %v3729
  %v3731 = vpop.f32.mrb[0].mxu0
  %v3732 = vpop.f32.mrb[0].mxu0
  %v3733 = vadd.f32 0.0, %v3732
  %v3734 = vpop.f32.mrb[0].mxu0
  %3735 = vmatprep.mubr.bf16.mxu0 0
  %3736 = vmatmul.mubr.bf16.gmra.mrb[0].mxu0 %v3473
  %v3737 = vpop.f32.mrb[0].mxu0
  %v3738 = vadd.f32 0.0, %v3737
  %v3739 = vpop.f32.mrb[0].mxu0
  %v3740 = vpop.f32.mrb[0].mxu0
  %v3741 = vadd.f32 0.0, %v3740
  %v3742 = vpop.f32.mrb[0].mxu0
  %3743 = vmatprep.mubr.bf16.mxu0 0
  %3744 = vmatmul.mubr.bf16.gmra.mrb[0].mxu0 %v3476
  %v3745 = vpop.f32.mrb[0].mxu0
  %v3746 = vadd.f32 0.0, %v3745
  %v3747 = vpop.f32.mrb[0].mxu0
  %v3748 = vpop.f32.mrb[0].mxu0
  %v3749 = vadd.f32 0.0, %v3748
  %v3750 = vpop.f32.mrb[0].mxu0
  %3751 = vmatprep.mubr.bf16.mxu0 0
  %3752 = vmatmul.mubr.bf16.gmra.mrb[0].mxu0 %v3479
  %v3753 = vpop.f32.mrb[0].mxu0
  %v3754 = vadd.f32 0.0, %v3753
  %v3755 = vpop.f32.mrb[0].mxu0
  %v3756 = vpop.f32.mrb[0].mxu0
  %v3757 = vadd.f32 0.0, %v3756
  %v3758 = vpop.f32.mrb[0].mxu0
  %3759 = vmatprep.mubr.bf16.mxu0 0
  %3760 = vmatmul.mubr.bf16.gmra.mrb[0].mxu0 %v3482
  %v3761 = vpop.f32.mrb[0].mxu0
  %v3762 = vadd.f32 0.0, %v3761
  %v3763 = vpop.f32.mrb[0].mxu0
  %v3764 = vpop.f32.mrb[0].mxu0
  %v3765 = vadd.f32 0.0, %v3764
  %v3766 = vpop.f32.mrb[0].mxu0
  %3767 = vmatprep.mubr.bf16.mxu0 0
  %3768 = vmatmul.mubr.bf16.gmra.mrb[0].mxu0 %v3485
  %v3769 = vpop.f32.mrb[0].mxu0
  %v3770 = vadd.f32 0.0, %v3769
  %v3771 = vpop.f32.mrb[0].mxu0
  %v3772 = vpop.f32.mrb[0].mxu0
  %v3773 = vadd.f32 0.0, %v3772
  %v3774 = vpop.f32.mrb[0].mxu0
  %3775 = vdwg.mxu0
  %v3776 = vadd.f32 %v2731, %v3522
  %v3777 = vadd.f32 %v2732, %v3525
  %v3778 = vadd.f32 %v2733, %v3530
  %v3779 = vadd.f32 %v2734, %v3533
  %v3780 = vadd.f32 %v2735, %v3538
  %v3781 = vadd.f32 %v2736, %v3541
  %v3782 = vadd.f32 %v2737, %v3546
  %v3783 = vadd.f32 %v2738, %v3549
  %v3784 = vadd.f32 %v2739, %v3554
  %v3785 = vadd.f32 %v2740, %v3557
  %v3786 = vadd.f32 %v2741, %v3562
  %v3787 = vadd.f32 %v2742, %v3565
  %v3788 = vadd.f32 %v2743, %v3570
  %v3789 = vadd.f32 %v2744, %v3573
  %v3790 = vadd.f32 %v2745, %v3578
  %v3791 = vadd.f32 %v2746, %v3581
  %v3792 = vadd.f32 %v2747, %v3586
  %v3793 = vadd.f32 %v2748, %v3589
  %v3794 = vadd.f32 %v2749, %v3594
  %v3795 = vadd.f32 %v2750, %v3597
  %v3796 = vadd.f32 %v2751, %v3602
  %v3797 = vadd.f32 %v2752, %v3605
  %v3798 = vadd.f32 %v2753, %v3610
  %v3799 = vadd.f32 %v2754, %v3613
  %v3800 = vadd.f32 %v2755, %v3618
  %v3801 = vadd.f32 %v2756, %v3621
  %v3802 = vadd.f32 %v2757, %v3626
  %v3803 = vadd.f32 %v2758, %v3629
  %v3804 = vadd.f32 %v2759, %v3634
  %v3805 = vadd.f32 %v2760, %v3637
  %v3806 = vadd.f32 %v2761, %v3642
  %v3807 = vadd.f32 %v2762, %v3645
  %v3808 = vadd.f32 %v2763, %v3650
  %v3809 = vadd.f32 %v2764, %v3653
  %v3810 = vadd.f32 %v2765, %v3658
  %v3811 = vadd.f32 %v2766, %v3661
  %v3812 = vadd.f32 %v2767, %v3666
  %v3813 = vadd.f32 %v2768, %v3669
  %v3814 = vadd.f32 %v2769, %v3674
  %v3815 = vadd.f32 %v2770, %v3677
  %v3816 = vadd.f32 %v2771, %v3682
  %v3817 = vadd.f32 %v2772, %v3685
  %v3818 = vadd.f32 %v2773, %v3690
  %v3819 = vadd.f32 %v2774, %v3693
  %v3820 = vadd.f32 %v2775, %v3698
  %v3821 = vadd.f32 %v2776, %v3701
  %v3822 = vadd.f32 %v2777, %v3706
  %v3823 = vadd.f32 %v2778, %v3709
  %v3824 = vadd.f32 %v2779, %v3714
  %v3825 = vadd.f32 %v2780, %v3717
  %v3826 = vadd.f32 %v2781, %v3722
  %v3827 = vadd.f32 %v2782, %v3725
  %v3828 = vadd.f32 %v2783, %v3730
  %v3829 = vadd.f32 %v2784, %v3733
  %v3830 = vadd.f32 %v2785, %v3738
  %v3831 = vadd.f32 %v2786, %v3741
  %v3832 = vadd.f32 %v2787, %v3746
  %v3833 = vadd.f32 %v2788, %v3749
  %v3834 = vadd.f32 %v2789, %v3754
  %v3835 = vadd.f32 %v2790, %v3757
  %v3836 = vadd.f32 %v2791, %v3762
  %v3837 = vadd.f32 %v2792, %v3765
  %v3838 = vadd.f32 %v2793, %v3770
  %v3839 = vadd.f32 %v2794, %v3773
  %vm3840 = vcmask 1041408
  %vm3841 = vcmask 1045508
  %vm3842 = vmor %vm3840, %vm3841
  %v3843 = vrot.slane %v23, 6
  %v3844 = vrot.slane %v3843, 4
  %v3845 = vrot.slane %v24, 6
  %v3846 = vsel %vm3842, %v3844, %v3845
  %v3847 = vrot.slane %v3845, 4
  %v3848 = vrot.slane %v25, 6
  %v3849 = vsel %vm3842, %v3847, %v3848
  %v3850 = vrot.slane %v26, 6
  %v3851 = vrot.slane %v3850, 4
  %v3852 = vrot.slane %v27, 6
  %v3853 = vsel %vm3842, %v3851, %v3852
  %v3854 = vrot.slane %v3852, 4
  %v3855 = vrot.slane %v28, 6
  %v3856 = vsel %vm3842, %v3854, %v3855
  %v3857 = vrot.slane %v29, 6
  %v3858 = vrot.slane %v3857, 4
  %v3859 = vrot.slane %v30, 6
  %v3860 = vsel %vm3842, %v3858, %v3859
  %v3861 = vrot.slane %v3859, 4
  %v3862 = vrot.slane %v31, 6
  %v3863 = vsel %vm3842, %v3861, %v3862
  %v3864 = vrot.slane %v32, 6
  %v3865 = vrot.slane %v3864, 4
  %v3866 = vrot.slane %v33, 6
  %v3867 = vsel %vm3842, %v3865, %v3866
  %v3868 = vrot.slane %v3866, 4
  %v3869 = vrot.slane %v34, 6
  %v3870 = vsel %vm3842, %v3868, %v3869
  %v3871 = vrot.slane %v35, 6
  %v3872 = vrot.slane %v3871, 4
  %v3873 = vrot.slane %v36, 6
  %v3874 = vsel %vm3842, %v3872, %v3873
  %v3875 = vrot.slane %v3873, 4
  %v3876 = vrot.slane %v37, 6
  %v3877 = vsel %vm3842, %v3875, %v3876
  %v3878 = vrot.slane %v38, 6
  %v3879 = vrot.slane %v3878, 4
  %v3880 = vrot.slane %v39, 6
  %v3881 = vsel %vm3842, %v3879, %v3880
  %v3882 = vrot.slane %v3880, 4
  %v3883 = vrot.slane %v40, 6
  %v3884 = vsel %vm3842, %v3882, %v3883
  %v3885 = vrot.slane %v41, 6
  %v3886 = vrot.slane %v3885, 4
  %v3887 = vrot.slane %v42, 6
  %v3888 = vsel %vm3842, %v3886, %v3887
  %v3889 = vrot.slane %v3887, 4
  %v3890 = vrot.slane %v43, 6
  %v3891 = vsel %vm3842, %v3889, %v3890
  %v3892 = vrot.slane %v44, 6
  %v3893 = vrot.slane %v3892, 4
  %v3894 = vrot.slane %v45, 6
  %v3895 = vsel %vm3842, %v3893, %v3894
  %v3896 = vrot.slane %v3894, 4
  %v3897 = vrot.slane %v46, 6
  %v3898 = vsel %vm3842, %v3896, %v3897
  %v3899 = vrot.slane %v47, 6
  %v3900 = vrot.slane %v3899, 4
  %v3901 = vrot.slane %v48, 6
  %v3902 = vsel %vm3842, %v3900, %v3901
  %v3903 = vrot.slane %v3901, 4
  %v3904 = vrot.slane %v49, 6
  %v3905 = vsel %vm3842, %v3903, %v3904
  %v3906 = vrot.slane %v50, 6
  %v3907 = vrot.slane %v3906, 4
  %v3908 = vrot.slane %v51, 6
  %v3909 = vsel %vm3842, %v3907, %v3908
  %v3910 = vrot.slane %v3908, 4
  %v3911 = vrot.slane %v52, 6
  %v3912 = vsel %vm3842, %v3910, %v3911
  %v3913 = vrot.slane %v53, 6
  %v3914 = vrot.slane %v3913, 4
  %v3915 = vrot.slane %v54, 6
  %v3916 = vsel %vm3842, %v3914, %v3915
  %v3917 = vrot.slane %v3915, 4
  %v3918 = vrot.slane %v55, 6
  %v3919 = vsel %vm3842, %v3917, %v3918
  %v3920 = vrot.slane %v56, 6
  %v3921 = vrot.slane %v3920, 4
  %v3922 = vrot.slane %v57, 6
  %v3923 = vsel %vm3842, %v3921, %v3922
  %v3924 = vrot.slane %v3922, 4
  %v3925 = vrot.slane %v58, 6
  %v3926 = vsel %vm3842, %v3924, %v3925
  %v3927 = vrot.slane %v59, 6
  %v3928 = vrot.slane %v3927, 4
  %v3929 = vrot.slane %v60, 6
  %v3930 = vsel %vm3842, %v3928, %v3929
  %v3931 = vrot.slane %v3929, 4
  %v3932 = vrot.slane %v61, 6
  %v3933 = vsel %vm3842, %v3931, %v3932
  %v3934 = vrot.slane %v62, 6
  %v3935 = vrot.slane %v3934, 4
  %v3936 = vrot.slane %v63, 6
  %v3937 = vsel %vm3842, %v3935, %v3936
  %v3938 = vrot.slane %v3936, 4
  %v3939 = vrot.slane %v64, 6
  %v3940 = vsel %vm3842, %v3938, %v3939
  %v3941 = vrot.slane %v65, 6
  %v3942 = vrot.slane %v3941, 4
  %v3943 = vrot.slane %v66, 6
  %v3944 = vsel %vm3842, %v3942, %v3943
  %v3945 = vrot.slane %v3943, 4
  %v3946 = vrot.slane %v67, 6
  %v3947 = vsel %vm3842, %v3945, %v3946
  %v3948 = vrot.slane %v68, 6
  %v3949 = vrot.slane %v3948, 4
  %v3950 = vrot.slane %v69, 6
  %v3951 = vsel %vm3842, %v3949, %v3950
  %v3952 = vrot.slane %v3950, 4
  %v3953 = vrot.slane %v70, 6
  %v3954 = vsel %vm3842, %v3952, %v3953
  %v3955 = vrot.slane %v83, 6
  %v3956 = vrot.slane %v3955, 4
  %v3957 = vrot.slane %v84, 6
  %v3958 = vsel %vm3842, %v3956, %v3957
  %v3959 = vrot.slane %v3957, 4
  %v3960 = vrot.slane %v85, 6
  %v3961 = vsel %vm3842, %v3959, %v3960
  %v3962 = vrot.slane %v86, 6
  %v3963 = vrot.slane %v3962, 4
  %v3964 = vrot.slane %v87, 6
  %v3965 = vsel %vm3842, %v3963, %v3964
  %v3966 = vrot.slane %v3964, 4
  %v3967 = vrot.slane %v88, 6
  %v3968 = vsel %vm3842, %v3966, %v3967
  %v3969 = vrot.slane %v89, 6
  %v3970 = vrot.slane %v3969, 4
  %v3971 = vrot.slane %v90, 6
  %v3972 = vsel %vm3842, %v3970, %v3971
  %v3973 = vrot.slane %v3971, 4
  %v3974 = vrot.slane %v91, 6
  %v3975 = vsel %vm3842, %v3973, %v3974
  %v3976 = vrot.slane %v92, 6
  %v3977 = vrot.slane %v3976, 4
  %v3978 = vrot.slane %v93, 6
  %v3979 = vsel %vm3842, %v3977, %v3978
  %v3980 = vrot.slane %v3978, 4
  %v3981 = vrot.slane %v94, 6
  %v3982 = vsel %vm3842, %v3980, %v3981
  %v3983 = vrot.slane %v95, 6
  %v3984 = vrot.slane %v3983, 4
  %v3985 = vrot.slane %v96, 6
  %v3986 = vsel %vm3842, %v3984, %v3985
  %v3987 = vrot.slane %v3985, 4
  %v3988 = vrot.slane %v97, 6
  %v3989 = vsel %vm3842, %v3987, %v3988
  %v3990 = vrot.slane %v98, 6
  %v3991 = vrot.slane %v3990, 4
  %v3992 = vrot.slane %v99, 6
  %v3993 = vsel %vm3842, %v3991, %v3992
  %v3994 = vrot.slane %v3992, 4
  %v3995 = vrot.slane %v100, 6
  %v3996 = vsel %vm3842, %v3994, %v3995
  %v3997 = vrot.slane %v101, 6
  %v3998 = vrot.slane %v3997, 4
  %v3999 = vrot.slane %v102, 6
  %v4000 = vsel %vm3842, %v3998, %v3999
  %v4001 = vrot.slane %v3999, 4
  %v4002 = vrot.slane %v103, 6
  %v4003 = vsel %vm3842, %v4001, %v4002
  %v4004 = vrot.slane %v104, 6
  %v4005 = vrot.slane %v4004, 4
  %v4006 = vrot.slane %v105, 6
  %v4007 = vsel %vm3842, %v4005, %v4006
  %v4008 = vrot.slane %v4006, 4
  %v4009 = vrot.slane %v106, 6
  %v4010 = vsel %vm3842, %v4008, %v4009
  %v4011 = vrot.slane %v107, 6
  %v4012 = vrot.slane %v4011, 4
  %v4013 = vrot.slane %v108, 6
  %v4014 = vsel %vm3842, %v4012, %v4013
  %v4015 = vrot.slane %v4013, 4
  %v4016 = vrot.slane %v109, 6
  %v4017 = vsel %vm3842, %v4015, %v4016
  %v4018 = vrot.slane %v110, 6
  %v4019 = vrot.slane %v4018, 4
  %v4020 = vrot.slane %v111, 6
  %v4021 = vsel %vm3842, %v4019, %v4020
  %v4022 = vrot.slane %v4020, 4
  %v4023 = vrot.slane %v112, 6
  %v4024 = vsel %vm3842, %v4022, %v4023
  %v4025 = vrot.slane %v113, 6
  %v4026 = vrot.slane %v4025, 4
  %v4027 = vrot.slane %v114, 6
  %v4028 = vsel %vm3842, %v4026, %v4027
  %v4029 = vrot.slane %v4027, 4
  %v4030 = vrot.slane %v115, 6
  %v4031 = vsel %vm3842, %v4029, %v4030
  %v4032 = vrot.slane %v116, 6
  %v4033 = vrot.slane %v4032, 4
  %v4034 = vrot.slane %v117, 6
  %v4035 = vsel %vm3842, %v4033, %v4034
  %v4036 = vrot.slane %v4034, 4
  %v4037 = vrot.slane %v118, 6
  %v4038 = vsel %vm3842, %v4036, %v4037
  %v4039 = vrot.slane %v119, 6
  %v4040 = vrot.slane %v4039, 4
  %v4041 = vrot.slane %v120, 6
  %v4042 = vsel %vm3842, %v4040, %v4041
  %v4043 = vrot.slane %v4041, 4
  %v4044 = vrot.slane %v121, 6
  %v4045 = vsel %vm3842, %v4043, %v4044
  %v4046 = vrot.slane %v122, 6
  %v4047 = vrot.slane %v4046, 4
  %v4048 = vrot.slane %v123, 6
  %v4049 = vsel %vm3842, %v4047, %v4048
  %v4050 = vrot.slane %v4048, 4
  %v4051 = vrot.slane %v124, 6
  %v4052 = vsel %vm3842, %v4050, %v4051
  %v4053 = vrot.slane %v125, 6
  %v4054 = vrot.slane %v4053, 4
  %v4055 = vrot.slane %v126, 6
  %v4056 = vsel %vm3842, %v4054, %v4055
  %v4057 = vrot.slane %v4055, 4
  %v4058 = vrot.slane %v127, 6
  %v4059 = vsel %vm3842, %v4057, %v4058
  %v4060 = vrot.slane %v128, 6
  %v4061 = vrot.slane %v4060, 4
  %v4062 = vrot.slane %v129, 6
  %v4063 = vsel %vm3842, %v4061, %v4062
  %v4064 = vrot.slane %v4062, 4
  %v4065 = vrot.slane %v130, 6
  %v4066 = vsel %vm3842, %v4064, %v4065
  %s4067 = scalar_lea.vmem %s1, 64
  %v4068 = vld [vmem:[%s4067] sm:$0xf]
  %v4069 = vld [vmem:[%s4067 + $0x4] sm:$0xf]
  %v4070 = vld [vmem:[%s4067 + $0x8] sm:$0xf]
  %v4071 = vld [vmem:[%s4067 + $0xc] sm:$0xf]
  %v4072 = vunpack.c.l.b16 %v3846
  %v4073 = vunpack.c.l.b16 %v3849
  %v4074 = vunpack.c.l.b16 %v3853
  %v4075 = vunpack.c.l.b16 %v3856
  %v4076 = vunpack.c.l.b16 %v3860
  %v4077 = vunpack.c.l.b16 %v3863
  %v4078 = vunpack.c.l.b16 %v3867
  %v4079 = vunpack.c.l.b16 %v3870
  %v4080 = vunpack.c.l.b16 %v3874
  %v4081 = vunpack.c.l.b16 %v3877
  %v4082 = vunpack.c.l.b16 %v3881
  %v4083 = vunpack.c.l.b16 %v3884
  %v4084 = vunpack.c.l.b16 %v3888
  %v4085 = vunpack.c.l.b16 %v3891
  %v4086 = vunpack.c.l.b16 %v3895
  %v4087 = vunpack.c.l.b16 %v3898
  %v4088 = vunpack.c.l.b16 %v3902
  %v4089 = vunpack.c.l.b16 %v3905
  %v4090 = vunpack.c.l.b16 %v3909
  %v4091 = vunpack.c.l.b16 %v3912
  %v4092 = vunpack.c.l.b16 %v3916
  %v4093 = vunpack.c.l.b16 %v3919
  %v4094 = vunpack.c.l.b16 %v3923
  %v4095 = vunpack.c.l.b16 %v3926
  %v4096 = vunpack.c.l.b16 %v3930
  %v4097 = vunpack.c.l.b16 %v3933
  %v4098 = vunpack.c.l.b16 %v3937
  %v4099 = vunpack.c.l.b16 %v3940
  %v4100 = vunpack.c.l.b16 %v3944
  %v4101 = vunpack.c.l.b16 %v3947
  %v4102 = vunpack.c.l.b16 %v3951
  %v4103 = vunpack.c.l.b16 %v3954
  %v4104 = vunpack.c.l.b16 %v3958
  %v4105 = vunpack.c.l.b16 %v3961
  %v4106 = vunpack.c.l.b16 %v3965
  %v4107 = vunpack.c.l.b16 %v3968
  %v4108 = vunpack.c.l.b16 %v3972
  %v4109 = vunpack.c.l.b16 %v3975
  %v4110 = vunpack.c.l.b16 %v3979
  %v4111 = vunpack.c.l.b16 %v3982
  %v4112 = vunpack.c.l.b16 %v3986
  %v4113 = vunpack.c.l.b16 %v3989
  %v4114 = vunpack.c.l.b16 %v3993
  %v4115 = vunpack.c.l.b16 %v3996
  %v4116 = vunpack.c.l.b16 %v4000
  %v4117 = vunpack.c.l.b16 %v4003
  %v4118 = vunpack.c.l.b16 %v4007
  %v4119 = vunpack.c.l.b16 %v4010
  %v4120 = vunpack.c.l.b16 %v4014
  %v4121 = vunpack.c.l.b16 %v4017
  %v4122 = vunpack.c.l.b16 %v4021
  %v4123 = vunpack.c.l.b16 %v4024
  %v4124 = vunpack.c.l.b16 %v4028
  %v4125 = vunpack.c.l.b16 %v4031
  %v4126 = vunpack.c.l.b16 %v4035
  %v4127 = vunpack.c.l.b16 %v4038
  %v4128 = vunpack.c.l.b16 %v4042
  %v4129 = vunpack.c.l.b16 %v4045
  %v4130 = vunpack.c.l.b16 %v4049
  %v4131 = vunpack.c.l.b16 %v4052
  %v4132 = vunpack.c.l.b16 %v4056
  %v4133 = vunpack.c.l.b16 %v4059
  %v4134 = vunpack.c.l.b16 %v4063
  %v4135 = vunpack.c.l.b16 %v4066
  %v4136 = vpack.c.b16 %v4073, %v4072
  %v4137 = vpack.c.b16 %v4075, %v4074
  %v4138 = vpack.c.b16 %v4077, %v4076
  %v4139 = vpack.c.b16 %v4079, %v4078
  %v4140 = vpack.c.b16 %v4081, %v4080
  %v4141 = vpack.c.b16 %v4083, %v4082
  %v4142 = vpack.c.b16 %v4085, %v4084
  %v4143 = vpack.c.b16 %v4087, %v4086
  %v4144 = vpack.c.b16 %v4089, %v4088
  %v4145 = vpack.c.b16 %v4091, %v4090
  %v4146 = vpack.c.b16 %v4093, %v4092
  %v4147 = vpack.c.b16 %v4095, %v4094
  %v4148 = vpack.c.b16 %v4097, %v4096
  %v4149 = vpack.c.b16 %v4099, %v4098
  %v4150 = vpack.c.b16 %v4101, %v4100
  %v4151 = vpack.c.b16 %v4103, %v4102
  %v4152 = vpack.c.b16 %v4105, %v4104
  %v4153 = vpack.c.b16 %v4107, %v4106
  %v4154 = vpack.c.b16 %v4109, %v4108
  %v4155 = vpack.c.b16 %v4111, %v4110
  %v4156 = vpack.c.b16 %v4113, %v4112
  %v4157 = vpack.c.b16 %v4115, %v4114
  %v4158 = vpack.c.b16 %v4117, %v4116
  %v4159 = vpack.c.b16 %v4119, %v4118
  %v4160 = vpack.c.b16 %v4121, %v4120
  %v4161 = vpack.c.b16 %v4123, %v4122
  %v4162 = vpack.c.b16 %v4125, %v4124
  %v4163 = vpack.c.b16 %v4127, %v4126
  %v4164 = vpack.c.b16 %v4129, %v4128
  %v4165 = vpack.c.b16 %v4131, %v4130
  %v4166 = vpack.c.b16 %v4133, %v4132
  %v4167 = vpack.c.b16 %v4135, %v4134
  %v4172 = vunpack.c.l.b16 %v4068
  %v4173 = vunpack.c.l.b16 %v4069
  %v4174 = vunpack.c.l.b16 %v4070
  %v4175 = vunpack.c.l.b16 %v4071
  %v4176 = vpack.c.b16 %v4173, %v4172
  %v4177 = vpack.c.b16 %v4175, %v4174
  %v4181 = vsel %vm1031, %v4136, 0
  %v4184 = vsel %vm1031, %v4137, 0
  %v4187 = vsel %vm1031, %v4138, 0
  %v4190 = vsel %vm1031, %v4139, 0
  %v4193 = vsel %vm1031, %v4140, 0
  %v4196 = vsel %vm1031, %v4141, 0
  %v4199 = vsel %vm1031, %v4142, 0
  %v4202 = vsel %vm1031, %v4143, 0
  %v4205 = vsel %vm1031, %v4144, 0
  %v4208 = vsel %vm1031, %v4145, 0
  %v4211 = vsel %vm1031, %v4146, 0
  %v4214 = vsel %vm1031, %v4147, 0
  %v4217 = vsel %vm1031, %v4148, 0
  %v4220 = vsel %vm1031, %v4149, 0
  %v4223 = vsel %vm1031, %v4150, 0
  %v4226 = vsel %vm1031, %v4151, 0
  %v4229 = vsel %vm1031, %v4152, 0
  %v4232 = vsel %vm1031, %v4153, 0
  %v4235 = vsel %vm1031, %v4154, 0
  %v4238 = vsel %vm1031, %v4155, 0
  %v4241 = vsel %vm1031, %v4156, 0
  %v4244 = vsel %vm1031, %v4157, 0
  %v4247 = vsel %vm1031, %v4158, 0
  %v4250 = vsel %vm1031, %v4159, 0
  %v4253 = vsel %vm1031, %v4160, 0
  %v4256 = vsel %vm1031, %v4161, 0
  %v4259 = vsel %vm1031, %v4162, 0
  %v4262 = vsel %vm1031, %v4163, 0
  %v4265 = vsel %vm1031, %v4164, 0
  %v4268 = vsel %vm1031, %v4165, 0
  %v4271 = vsel %vm1031, %v4166, 0
  %v4274 = vsel %vm1031, %v4167, 0
  %4276 = vmatprep.subr.bf16.mxu0 0
  %4277 = vmatpush1.bf16.msra.mxu0 %v4176
  %4278 = vmatprep.subr.bf16.mxu0 0
  %4279 = vmatpush1.bf16.msra.mxu0 %v4177
  %4280 = vmatprep.subr.bf16.mxu0 0
  %4281 = vmatpush1.bf16.msra.mxu0 0
  %4282 = vmatprep.subr.bf16.mxu0 0
  %4283 = vmatpush1.bf16.msra.mxu0 0
  %4284 = vmatprep.subr.bf16.mxu0 0
  %4285 = vmatpush1.bf16.msra.mxu0 0
  %4286 = vmatprep.subr.bf16.mxu0 0
  %4287 = vmatpush1.bf16.msra.mxu0 0
  %4288 = vmatprep.subr.bf16.mxu0 0
  %4289 = vmatpush1.bf16.msra.mxu0 0
  %4290 = vmatprep.subr.bf16.mxu0 0
  %4291 = vmatpush1.bf16.msra.mxu0 0
  %4292 = vmatprep.subr.bf16.mxu0 0
  %4293 = vmatpush1.bf16.msra.mxu0 0
  %4294 = vmatprep.subr.bf16.mxu0 0
  %4295 = vmatpush1.bf16.msra.mxu0 0
  %4296 = vmatprep.subr.bf16.mxu0 0
  %4297 = vmatpush1.bf16.msra.mxu0 0
  %4298 = vmatprep.subr.bf16.mxu0 0
  %4299 = vmatpush1.bf16.msra.mxu0 0
  %4300 = vmatprep.subr.bf16.mxu0 0
  %4301 = vmatpush1.bf16.msra.mxu0 0
  %4302 = vmatprep.subr.bf16.mxu0 0
  %4303 = vmatpush1.bf16.msra.mxu0 0
  %4304 = vmatprep.subr.bf16.mxu0 0
  %4305 = vmatpush1.bf16.msra.mxu0 0
  %4306 = vmatprep.subr.bf16.mxu0 0
  %4307 = vmatpush1.bf16.msra.mxu0 0
  %4308 = vmatprep.mubr.bf16.mxu0 0
  %4309 = vmatmul.mubr.bf16.gmra.mrb[0].mxu0 %v4181
  %v4310 = vpop.f32.mrb[0].mxu0
  %v4311 = vadd.f32 0.0, %v4310
  %v4312 = vpop.f32.mrb[0].mxu0
  %v4313 = vpop.f32.mrb[0].mxu0
  %v4314 = vadd.f32 0.0, %v4313
  %v4315 = vpop.f32.mrb[0].mxu0
  %4316 = vmatprep.mubr.bf16.mxu0 0
  %4317 = vmatmul.mubr.bf16.gmra.mrb[0].mxu0 %v4184
  %v4318 = vpop.f32.mrb[0].mxu0
  %v4319 = vadd.f32 0.0, %v4318
  %v4320 = vpop.f32.mrb[0].mxu0
  %v4321 = vpop.f32.mrb[0].mxu0
  %v4322 = vadd.f32 0.0, %v4321
  %v4323 = vpop.f32.mrb[0].mxu0
  %4324 = vmatprep.mubr.bf16.mxu0 0
  %4325 = vmatmul.mubr.bf16.gmra.mrb[0].mxu0 %v4187
  %v4326 = vpop.f32.mrb[0].mxu0
  %v4327 = vadd.f32 0.0, %v4326
  %v4328 = vpop.f32.mrb[0].mxu0
  %v4329 = vpop.f32.mrb[0].mxu0
  %v4330 = vadd.f32 0.0, %v4329
  %v4331 = vpop.f32.mrb[0].mxu0
  %4332 = vmatprep.mubr.bf16.mxu0 0
  %4333 = vmatmul.mubr.bf16.gmra.mrb[0].mxu0 %v4190
  %v4334 = vpop.f32.mrb[0].mxu0
  %v4335 = vadd.f32 0.0, %v4334
  %v4336 = vpop.f32.mrb[0].mxu0
  %v4337 = vpop.f32.mrb[0].mxu0
  %v4338 = vadd.f32 0.0, %v4337
  %v4339 = vpop.f32.mrb[0].mxu0
  %4340 = vmatprep.mubr.bf16.mxu0 0
  %4341 = vmatmul.mubr.bf16.gmra.mrb[0].mxu0 %v4193
  %v4342 = vpop.f32.mrb[0].mxu0
  %v4343 = vadd.f32 0.0, %v4342
  %v4344 = vpop.f32.mrb[0].mxu0
  %v4345 = vpop.f32.mrb[0].mxu0
  %v4346 = vadd.f32 0.0, %v4345
  %v4347 = vpop.f32.mrb[0].mxu0
  %4348 = vmatprep.mubr.bf16.mxu0 0
  %4349 = vmatmul.mubr.bf16.gmra.mrb[0].mxu0 %v4196
  %v4350 = vpop.f32.mrb[0].mxu0
  %v4351 = vadd.f32 0.0, %v4350
  %v4352 = vpop.f32.mrb[0].mxu0
  %v4353 = vpop.f32.mrb[0].mxu0
  %v4354 = vadd.f32 0.0, %v4353
  %v4355 = vpop.f32.mrb[0].mxu0
  %4356 = vmatprep.mubr.bf16.mxu0 0
  %4357 = vmatmul.mubr.bf16.gmra.mrb[0].mxu0 %v4199
  %v4358 = vpop.f32.mrb[0].mxu0
  %v4359 = vadd.f32 0.0, %v4358
  %v4360 = vpop.f32.mrb[0].mxu0
  %v4361 = vpop.f32.mrb[0].mxu0
  %v4362 = vadd.f32 0.0, %v4361
  %v4363 = vpop.f32.mrb[0].mxu0
  %4364 = vmatprep.mubr.bf16.mxu0 0
  %4365 = vmatmul.mubr.bf16.gmra.mrb[0].mxu0 %v4202
  %v4366 = vpop.f32.mrb[0].mxu0
  %v4367 = vadd.f32 0.0, %v4366
  %v4368 = vpop.f32.mrb[0].mxu0
  %v4369 = vpop.f32.mrb[0].mxu0
  %v4370 = vadd.f32 0.0, %v4369
  %v4371 = vpop.f32.mrb[0].mxu0
  %4372 = vmatprep.mubr.bf16.mxu0 0
  %4373 = vmatmul.mubr.bf16.gmra.mrb[0].mxu0 %v4205
  %v4374 = vpop.f32.mrb[0].mxu0
  %v4375 = vadd.f32 0.0, %v4374
  %v4376 = vpop.f32.mrb[0].mxu0
  %v4377 = vpop.f32.mrb[0].mxu0
  %v4378 = vadd.f32 0.0, %v4377
  %v4379 = vpop.f32.mrb[0].mxu0
  %4380 = vmatprep.mubr.bf16.mxu0 0
  %4381 = vmatmul.mubr.bf16.gmra.mrb[0].mxu0 %v4208
  %v4382 = vpop.f32.mrb[0].mxu0
  %v4383 = vadd.f32 0.0, %v4382
  %v4384 = vpop.f32.mrb[0].mxu0
  %v4385 = vpop.f32.mrb[0].mxu0
  %v4386 = vadd.f32 0.0, %v4385
  %v4387 = vpop.f32.mrb[0].mxu0
  %4388 = vmatprep.mubr.bf16.mxu0 0
  %4389 = vmatmul.mubr.bf16.gmra.mrb[0].mxu0 %v4211
  %v4390 = vpop.f32.mrb[0].mxu0
  %v4391 = vadd.f32 0.0, %v4390
  %v4392 = vpop.f32.mrb[0].mxu0
  %v4393 = vpop.f32.mrb[0].mxu0
  %v4394 = vadd.f32 0.0, %v4393
  %v4395 = vpop.f32.mrb[0].mxu0
  %4396 = vmatprep.mubr.bf16.mxu0 0
  %4397 = vmatmul.mubr.bf16.gmra.mrb[0].mxu0 %v4214
  %v4398 = vpop.f32.mrb[0].mxu0
  %v4399 = vadd.f32 0.0, %v4398
  %v4400 = vpop.f32.mrb[0].mxu0
  %v4401 = vpop.f32.mrb[0].mxu0
  %v4402 = vadd.f32 0.0, %v4401
  %v4403 = vpop.f32.mrb[0].mxu0
  %4404 = vmatprep.mubr.bf16.mxu0 0
  %4405 = vmatmul.mubr.bf16.gmra.mrb[0].mxu0 %v4217
  %v4406 = vpop.f32.mrb[0].mxu0
  %v4407 = vadd.f32 0.0, %v4406
  %v4408 = vpop.f32.mrb[0].mxu0
  %v4409 = vpop.f32.mrb[0].mxu0
  %v4410 = vadd.f32 0.0, %v4409
  %v4411 = vpop.f32.mrb[0].mxu0
  %4412 = vmatprep.mubr.bf16.mxu0 0
  %4413 = vmatmul.mubr.bf16.gmra.mrb[0].mxu0 %v4220
  %v4414 = vpop.f32.mrb[0].mxu0
  %v4415 = vadd.f32 0.0, %v4414
  %v4416 = vpop.f32.mrb[0].mxu0
  %v4417 = vpop.f32.mrb[0].mxu0
  %v4418 = vadd.f32 0.0, %v4417
  %v4419 = vpop.f32.mrb[0].mxu0
  %4420 = vmatprep.mubr.bf16.mxu0 0
  %4421 = vmatmul.mubr.bf16.gmra.mrb[0].mxu0 %v4223
  %v4422 = vpop.f32.mrb[0].mxu0
  %v4423 = vadd.f32 0.0, %v4422
  %v4424 = vpop.f32.mrb[0].mxu0
  %v4425 = vpop.f32.mrb[0].mxu0
  %v4426 = vadd.f32 0.0, %v4425
  %v4427 = vpop.f32.mrb[0].mxu0
  %4428 = vmatprep.mubr.bf16.mxu0 0
  %4429 = vmatmul.mubr.bf16.gmra.mrb[0].mxu0 %v4226
  %v4430 = vpop.f32.mrb[0].mxu0
  %v4431 = vadd.f32 0.0, %v4430
  %v4432 = vpop.f32.mrb[0].mxu0
  %v4433 = vpop.f32.mrb[0].mxu0
  %v4434 = vadd.f32 0.0, %v4433
  %v4435 = vpop.f32.mrb[0].mxu0
  %4436 = vmatprep.mubr.bf16.mxu0 0
  %4437 = vmatmul.mubr.bf16.gmra.mrb[0].mxu0 %v4229
  %v4438 = vpop.f32.mrb[0].mxu0
  %v4439 = vadd.f32 0.0, %v4438
  %v4440 = vpop.f32.mrb[0].mxu0
  %v4441 = vpop.f32.mrb[0].mxu0
  %v4442 = vadd.f32 0.0, %v4441
  %v4443 = vpop.f32.mrb[0].mxu0
  %4444 = vmatprep.mubr.bf16.mxu0 0
  %4445 = vmatmul.mubr.bf16.gmra.mrb[0].mxu0 %v4232
  %v4446 = vpop.f32.mrb[0].mxu0
  %v4447 = vadd.f32 0.0, %v4446
  %v4448 = vpop.f32.mrb[0].mxu0
  %v4449 = vpop.f32.mrb[0].mxu0
  %v4450 = vadd.f32 0.0, %v4449
  %v4451 = vpop.f32.mrb[0].mxu0
  %4452 = vmatprep.mubr.bf16.mxu0 0
  %4453 = vmatmul.mubr.bf16.gmra.mrb[0].mxu0 %v4235
  %v4454 = vpop.f32.mrb[0].mxu0
  %v4455 = vadd.f32 0.0, %v4454
  %v4456 = vpop.f32.mrb[0].mxu0
  %v4457 = vpop.f32.mrb[0].mxu0
  %v4458 = vadd.f32 0.0, %v4457
  %v4459 = vpop.f32.mrb[0].mxu0
  %4460 = vmatprep.mubr.bf16.mxu0 0
  %4461 = vmatmul.mubr.bf16.gmra.mrb[0].mxu0 %v4238
  %v4462 = vpop.f32.mrb[0].mxu0
  %v4463 = vadd.f32 0.0, %v4462
  %v4464 = vpop.f32.mrb[0].mxu0
  %v4465 = vpop.f32.mrb[0].mxu0
  %v4466 = vadd.f32 0.0, %v4465
  %v4467 = vpop.f32.mrb[0].mxu0
  %4468 = vmatprep.mubr.bf16.mxu0 0
  %4469 = vmatmul.mubr.bf16.gmra.mrb[0].mxu0 %v4241
  %v4470 = vpop.f32.mrb[0].mxu0
  %v4471 = vadd.f32 0.0, %v4470
  %v4472 = vpop.f32.mrb[0].mxu0
  %v4473 = vpop.f32.mrb[0].mxu0
  %v4474 = vadd.f32 0.0, %v4473
  %v4475 = vpop.f32.mrb[0].mxu0
  %4476 = vmatprep.mubr.bf16.mxu0 0
  %4477 = vmatmul.mubr.bf16.gmra.mrb[0].mxu0 %v4244
  %v4478 = vpop.f32.mrb[0].mxu0
  %v4479 = vadd.f32 0.0, %v4478
  %v4480 = vpop.f32.mrb[0].mxu0
  %v4481 = vpop.f32.mrb[0].mxu0
  %v4482 = vadd.f32 0.0, %v4481
  %v4483 = vpop.f32.mrb[0].mxu0
  %4484 = vmatprep.mubr.bf16.mxu0 0
  %4485 = vmatmul.mubr.bf16.gmra.mrb[0].mxu0 %v4247
  %v4486 = vpop.f32.mrb[0].mxu0
  %v4487 = vadd.f32 0.0, %v4486
  %v4488 = vpop.f32.mrb[0].mxu0
  %v4489 = vpop.f32.mrb[0].mxu0
  %v4490 = vadd.f32 0.0, %v4489
  %v4491 = vpop.f32.mrb[0].mxu0
  %4492 = vmatprep.mubr.bf16.mxu0 0
  %4493 = vmatmul.mubr.bf16.gmra.mrb[0].mxu0 %v4250
  %v4494 = vpop.f32.mrb[0].mxu0
  %v4495 = vadd.f32 0.0, %v4494
  %v4496 = vpop.f32.mrb[0].mxu0
  %v4497 = vpop.f32.mrb[0].mxu0
  %v4498 = vadd.f32 0.0, %v4497
  %v4499 = vpop.f32.mrb[0].mxu0
  %4500 = vmatprep.mubr.bf16.mxu0 0
  %4501 = vmatmul.mubr.bf16.gmra.mrb[0].mxu0 %v4253
  %v4502 = vpop.f32.mrb[0].mxu0
  %v4503 = vadd.f32 0.0, %v4502
  %v4504 = vpop.f32.mrb[0].mxu0
  %v4505 = vpop.f32.mrb[0].mxu0
  %v4506 = vadd.f32 0.0, %v4505
  %v4507 = vpop.f32.mrb[0].mxu0
  %4508 = vmatprep.mubr.bf16.mxu0 0
  %4509 = vmatmul.mubr.bf16.gmra.mrb[0].mxu0 %v4256
  %v4510 = vpop.f32.mrb[0].mxu0
  %v4511 = vadd.f32 0.0, %v4510
  %v4512 = vpop.f32.mrb[0].mxu0
  %v4513 = vpop.f32.mrb[0].mxu0
  %v4514 = vadd.f32 0.0, %v4513
  %v4515 = vpop.f32.mrb[0].mxu0
  %4516 = vmatprep.mubr.bf16.mxu0 0
  %4517 = vmatmul.mubr.bf16.gmra.mrb[0].mxu0 %v4259
  %v4518 = vpop.f32.mrb[0].mxu0
  %v4519 = vadd.f32 0.0, %v4518
  %v4520 = vpop.f32.mrb[0].mxu0
  %v4521 = vpop.f32.mrb[0].mxu0
  %v4522 = vadd.f32 0.0, %v4521
  %v4523 = vpop.f32.mrb[0].mxu0
  %4524 = vmatprep.mubr.bf16.mxu0 0
  %4525 = vmatmul.mubr.bf16.gmra.mrb[0].mxu0 %v4262
  %v4526 = vpop.f32.mrb[0].mxu0
  %v4527 = vadd.f32 0.0, %v4526
  %v4528 = vpop.f32.mrb[0].mxu0
  %v4529 = vpop.f32.mrb[0].mxu0
  %v4530 = vadd.f32 0.0, %v4529
  %v4531 = vpop.f32.mrb[0].mxu0
  %4532 = vmatprep.mubr.bf16.mxu0 0
  %4533 = vmatmul.mubr.bf16.gmra.mrb[0].mxu0 %v4265
  %v4534 = vpop.f32.mrb[0].mxu0
  %v4535 = vadd.f32 0.0, %v4534
  %v4536 = vpop.f32.mrb[0].mxu0
  %v4537 = vpop.f32.mrb[0].mxu0
  %v4538 = vadd.f32 0.0, %v4537
  %v4539 = vpop.f32.mrb[0].mxu0
  %4540 = vmatprep.mubr.bf16.mxu0 0
  %4541 = vmatmul.mubr.bf16.gmra.mrb[0].mxu0 %v4268
  %v4542 = vpop.f32.mrb[0].mxu0
  %v4543 = vadd.f32 0.0, %v4542
  %v4544 = vpop.f32.mrb[0].mxu0
  %v4545 = vpop.f32.mrb[0].mxu0
  %v4546 = vadd.f32 0.0, %v4545
  %v4547 = vpop.f32.mrb[0].mxu0
  %4548 = vmatprep.mubr.bf16.mxu0 0
  %4549 = vmatmul.mubr.bf16.gmra.mrb[0].mxu0 %v4271
  %v4550 = vpop.f32.mrb[0].mxu0
  %v4551 = vadd.f32 0.0, %v4550
  %v4552 = vpop.f32.mrb[0].mxu0
  %v4553 = vpop.f32.mrb[0].mxu0
  %v4554 = vadd.f32 0.0, %v4553
  %v4555 = vpop.f32.mrb[0].mxu0
  %4556 = vmatprep.mubr.bf16.mxu0 0
  %4557 = vmatmul.mubr.bf16.gmra.mrb[0].mxu0 %v4274
  %v4558 = vpop.f32.mrb[0].mxu0
  %v4559 = vadd.f32 0.0, %v4558
  %v4560 = vpop.f32.mrb[0].mxu0
  %v4561 = vpop.f32.mrb[0].mxu0
  %v4562 = vadd.f32 0.0, %v4561
  %v4563 = vpop.f32.mrb[0].mxu0
  %4564 = vdwg.mxu0
  %v4565 = vadd.f32 %v3776, %v4311
  %v4566 = vadd.f32 %v3777, %v4314
  %v4567 = vadd.f32 %v3778, %v4319
  %v4568 = vadd.f32 %v3779, %v4322
  %v4569 = vadd.f32 %v3780, %v4327
  %v4570 = vadd.f32 %v3781, %v4330
  %v4571 = vadd.f32 %v3782, %v4335
  %v4572 = vadd.f32 %v3783, %v4338
  %v4573 = vadd.f32 %v3784, %v4343
  %v4574 = vadd.f32 %v3785, %v4346
  %v4575 = vadd.f32 %v3786, %v4351
  %v4576 = vadd.f32 %v3787, %v4354
  %v4577 = vadd.f32 %v3788, %v4359
  %v4578 = vadd.f32 %v3789, %v4362
  %v4579 = vadd.f32 %v3790, %v4367
  %v4580 = vadd.f32 %v3791, %v4370
  %v4581 = vadd.f32 %v3792, %v4375
  %v4582 = vadd.f32 %v3793, %v4378
  %v4583 = vadd.f32 %v3794, %v4383
  %v4584 = vadd.f32 %v3795, %v4386
  %v4585 = vadd.f32 %v3796, %v4391
  %v4586 = vadd.f32 %v3797, %v4394
  %v4587 = vadd.f32 %v3798, %v4399
  %v4588 = vadd.f32 %v3799, %v4402
  %v4589 = vadd.f32 %v3800, %v4407
  %v4590 = vadd.f32 %v3801, %v4410
  %v4591 = vadd.f32 %v3802, %v4415
  %v4592 = vadd.f32 %v3803, %v4418
  %v4593 = vadd.f32 %v3804, %v4423
  %v4594 = vadd.f32 %v3805, %v4426
  %v4595 = vadd.f32 %v3806, %v4431
  %v4596 = vadd.f32 %v3807, %v4434
  %v4597 = vadd.f32 %v3808, %v4439
  %v4598 = vadd.f32 %v3809, %v4442
  %v4599 = vadd.f32 %v3810, %v4447
  %v4600 = vadd.f32 %v3811, %v4450
  %v4601 = vadd.f32 %v3812, %v4455
  %v4602 = vadd.f32 %v3813, %v4458
  %v4603 = vadd.f32 %v3814, %v4463
  %v4604 = vadd.f32 %v3815, %v4466
  %v4605 = vadd.f32 %v3816, %v4471
  %v4606 = vadd.f32 %v3817, %v4474
  %v4607 = vadd.f32 %v3818, %v4479
  %v4608 = vadd.f32 %v3819, %v4482
  %v4609 = vadd.f32 %v3820, %v4487
  %v4610 = vadd.f32 %v3821, %v4490
  %v4611 = vadd.f32 %v3822, %v4495
  %v4612 = vadd.f32 %v3823, %v4498
  %v4613 = vadd.f32 %v3824, %v4503
  %v4614 = vadd.f32 %v3825, %v4506
  %v4615 = vadd.f32 %v3826, %v4511
  %v4616 = vadd.f32 %v3827, %v4514
  %v4617 = vadd.f32 %v3828, %v4519
  %v4618 = vadd.f32 %v3829, %v4522
  %v4619 = vadd.f32 %v3830, %v4527
  %v4620 = vadd.f32 %v3831, %v4530
  %v4621 = vadd.f32 %v3832, %v4535
  %v4622 = vadd.f32 %v3833, %v4538
  %v4623 = vadd.f32 %v3834, %v4543
  %v4624 = vadd.f32 %v3835, %v4546
  %v4625 = vadd.f32 %v3836, %v4551
  %v4626 = vadd.f32 %v3837, %v4554
  %v4627 = vadd.f32 %v3838, %v4559
  %v4628 = vadd.f32 %v3839, %v4562
  %s4629 = scalar_lea.vmem %s1, 80
  %v4630 = vld [vmem:[%s4629] sm:$0xf]
  %v4631 = vld [vmem:[%s4629 + $0x4] sm:$0xf]
  %v4632 = vld [vmem:[%s4629 + $0x8] sm:$0xf]
  %v4633 = vld [vmem:[%s4629 + $0xc] sm:$0xf]
  %v4638 = vunpack.c.l.b16 %v71
  %v4639 = vunpack.c.l.b16 %v72
  %v4640 = vunpack.c.l.b16 %v131
  %v4641 = vunpack.c.l.b16 %v132
  %v4642 = vpack.c.b16 %v4639, %v4638
  %v4643 = vpack.c.b16 %v4641, %v4640
  %v4648 = vunpack.c.l.b16 %v4630
  %v4649 = vunpack.c.l.b16 %v4631
  %v4650 = vunpack.c.l.b16 %v4632
  %v4651 = vunpack.c.l.b16 %v4633
  %v4652 = vpack.c.b16 %v4649, %v4648
  %v4653 = vpack.c.b16 %v4651, %v4650
  %v4657 = vsel %vm1031, %v4642, 0
  %v4660 = vsel %vm1031, %v4643, 0
  %4662 = vmatprep.subr.bf16.mxu0 0
  %4663 = vmatpush1.bf16.msra.mxu0 %v4652
  %4664 = vmatprep.subr.bf16.mxu0 0
  %4665 = vmatpush1.bf16.msra.mxu0 %v4653
  %4666 = vmatprep.subr.bf16.mxu0 0
  %4667 = vmatpush1.bf16.msra.mxu0 0
  %4668 = vmatprep.subr.bf16.mxu0 0
  %4669 = vmatpush1.bf16.msra.mxu0 0
  %4670 = vmatprep.subr.bf16.mxu0 0
  %4671 = vmatpush1.bf16.msra.mxu0 0
  %4672 = vmatprep.subr.bf16.mxu0 0
  %4673 = vmatpush1.bf16.msra.mxu0 0
  %4674 = vmatprep.subr.bf16.mxu0 0
  %4675 = vmatpush1.bf16.msra.mxu0 0
  %4676 = vmatprep.subr.bf16.mxu0 0
  %4677 = vmatpush1.bf16.msra.mxu0 0
  %4678 = vmatprep.subr.bf16.mxu0 0
  %4679 = vmatpush1.bf16.msra.mxu0 0
  %4680 = vmatprep.subr.bf16.mxu0 0
  %4681 = vmatpush1.bf16.msra.mxu0 0
  %4682 = vmatprep.subr.bf16.mxu0 0
  %4683 = vmatpush1.bf16.msra.mxu0 0
  %4684 = vmatprep.subr.bf16.mxu0 0
  %4685 = vmatpush1.bf16.msra.mxu0 0
  %4686 = vmatprep.subr.bf16.mxu0 0
  %4687 = vmatpush1.bf16.msra.mxu0 0
  %4688 = vmatprep.subr.bf16.mxu0 0
  %4689 = vmatpush1.bf16.msra.mxu0 0
  %4690 = vmatprep.subr.bf16.mxu0 0
  %4691 = vmatpush1.bf16.msra.mxu0 0
  %4692 = vmatprep.subr.bf16.mxu0 0
  %4693 = vmatpush1.bf16.msra.mxu0 0
  %4694 = vmatprep.mubr.bf16.mxu0 0
  %4695 = vmatmul.mubr.bf16.gmra.mrb[0].mxu0 %v1593
  %v4696 = vpop.f32.mrb[0].mxu0
  %v4697 = vadd.f32 0.0, %v4696
  %v4698 = vpop.f32.mrb[0].mxu0
  %v4699 = vpop.f32.mrb[0].mxu0
  %v4700 = vadd.f32 0.0, %v4699
  %v4701 = vpop.f32.mrb[0].mxu0
  %4702 = vmatprep.mubr.bf16.mxu0 0
  %4703 = vmatmul.mubr.bf16.gmra.mrb[0].mxu0 %v1596
  %v4704 = vpop.f32.mrb[0].mxu0
  %v4705 = vadd.f32 0.0, %v4704
  %v4706 = vpop.f32.mrb[0].mxu0
  %v4707 = vpop.f32.mrb[0].mxu0
  %v4708 = vadd.f32 0.0, %v4707
  %v4709 = vpop.f32.mrb[0].mxu0
  %4710 = vmatprep.mubr.bf16.mxu0 0
  %4711 = vmatmul.mubr.bf16.gmra.mrb[0].mxu0 %v1599
  %v4712 = vpop.f32.mrb[0].mxu0
  %v4713 = vadd.f32 0.0, %v4712
  %v4714 = vpop.f32.mrb[0].mxu0
  %v4715 = vpop.f32.mrb[0].mxu0
  %v4716 = vadd.f32 0.0, %v4715
  %v4717 = vpop.f32.mrb[0].mxu0
  %4718 = vmatprep.mubr.bf16.mxu0 0
  %4719 = vmatmul.mubr.bf16.gmra.mrb[0].mxu0 %v1602
  %v4720 = vpop.f32.mrb[0].mxu0
  %v4721 = vadd.f32 0.0, %v4720
  %v4722 = vpop.f32.mrb[0].mxu0
  %v4723 = vpop.f32.mrb[0].mxu0
  %v4724 = vadd.f32 0.0, %v4723
  %v4725 = vpop.f32.mrb[0].mxu0
  %4726 = vmatprep.mubr.bf16.mxu0 0
  %4727 = vmatmul.mubr.bf16.gmra.mrb[0].mxu0 %v1605
  %v4728 = vpop.f32.mrb[0].mxu0
  %v4729 = vadd.f32 0.0, %v4728
  %v4730 = vpop.f32.mrb[0].mxu0
  %v4731 = vpop.f32.mrb[0].mxu0
  %v4732 = vadd.f32 0.0, %v4731
  %v4733 = vpop.f32.mrb[0].mxu0
  %4734 = vmatprep.mubr.bf16.mxu0 0
  %4735 = vmatmul.mubr.bf16.gmra.mrb[0].mxu0 %v1608
  %v4736 = vpop.f32.mrb[0].mxu0
  %v4737 = vadd.f32 0.0, %v4736
  %v4738 = vpop.f32.mrb[0].mxu0
  %v4739 = vpop.f32.mrb[0].mxu0
  %v4740 = vadd.f32 0.0, %v4739
  %v4741 = vpop.f32.mrb[0].mxu0
  %4742 = vmatprep.mubr.bf16.mxu0 0
  %4743 = vmatmul.mubr.bf16.gmra.mrb[0].mxu0 %v1611
  %v4744 = vpop.f32.mrb[0].mxu0
  %v4745 = vadd.f32 0.0, %v4744
  %v4746 = vpop.f32.mrb[0].mxu0
  %v4747 = vpop.f32.mrb[0].mxu0
  %v4748 = vadd.f32 0.0, %v4747
  %v4749 = vpop.f32.mrb[0].mxu0
  %4750 = vmatprep.mubr.bf16.mxu0 0
  %4751 = vmatmul.mubr.bf16.gmra.mrb[0].mxu0 %v1614
  %v4752 = vpop.f32.mrb[0].mxu0
  %v4753 = vadd.f32 0.0, %v4752
  %v4754 = vpop.f32.mrb[0].mxu0
  %v4755 = vpop.f32.mrb[0].mxu0
  %v4756 = vadd.f32 0.0, %v4755
  %v4757 = vpop.f32.mrb[0].mxu0
  %4758 = vmatprep.mubr.bf16.mxu0 0
  %4759 = vmatmul.mubr.bf16.gmra.mrb[0].mxu0 %v1617
  %v4760 = vpop.f32.mrb[0].mxu0
  %v4761 = vadd.f32 0.0, %v4760
  %v4762 = vpop.f32.mrb[0].mxu0
  %v4763 = vpop.f32.mrb[0].mxu0
  %v4764 = vadd.f32 0.0, %v4763
  %v4765 = vpop.f32.mrb[0].mxu0
  %4766 = vmatprep.mubr.bf16.mxu0 0
  %4767 = vmatmul.mubr.bf16.gmra.mrb[0].mxu0 %v1620
  %v4768 = vpop.f32.mrb[0].mxu0
  %v4769 = vadd.f32 0.0, %v4768
  %v4770 = vpop.f32.mrb[0].mxu0
  %v4771 = vpop.f32.mrb[0].mxu0
  %v4772 = vadd.f32 0.0, %v4771
  %v4773 = vpop.f32.mrb[0].mxu0
  %4774 = vmatprep.mubr.bf16.mxu0 0
  %4775 = vmatmul.mubr.bf16.gmra.mrb[0].mxu0 %v1623
  %v4776 = vpop.f32.mrb[0].mxu0
  %v4777 = vadd.f32 0.0, %v4776
  %v4778 = vpop.f32.mrb[0].mxu0
  %v4779 = vpop.f32.mrb[0].mxu0
  %v4780 = vadd.f32 0.0, %v4779
  %v4781 = vpop.f32.mrb[0].mxu0
  %4782 = vmatprep.mubr.bf16.mxu0 0
  %4783 = vmatmul.mubr.bf16.gmra.mrb[0].mxu0 %v1626
  %v4784 = vpop.f32.mrb[0].mxu0
  %v4785 = vadd.f32 0.0, %v4784
  %v4786 = vpop.f32.mrb[0].mxu0
  %v4787 = vpop.f32.mrb[0].mxu0
  %v4788 = vadd.f32 0.0, %v4787
  %v4789 = vpop.f32.mrb[0].mxu0
  %4790 = vmatprep.mubr.bf16.mxu0 0
  %4791 = vmatmul.mubr.bf16.gmra.mrb[0].mxu0 %v1629
  %v4792 = vpop.f32.mrb[0].mxu0
  %v4793 = vadd.f32 0.0, %v4792
  %v4794 = vpop.f32.mrb[0].mxu0
  %v4795 = vpop.f32.mrb[0].mxu0
  %v4796 = vadd.f32 0.0, %v4795
  %v4797 = vpop.f32.mrb[0].mxu0
  %4798 = vmatprep.mubr.bf16.mxu0 0
  %4799 = vmatmul.mubr.bf16.gmra.mrb[0].mxu0 %v1632
  %v4800 = vpop.f32.mrb[0].mxu0
  %v4801 = vadd.f32 0.0, %v4800
  %v4802 = vpop.f32.mrb[0].mxu0
  %v4803 = vpop.f32.mrb[0].mxu0
  %v4804 = vadd.f32 0.0, %v4803
  %v4805 = vpop.f32.mrb[0].mxu0
  %4806 = vmatprep.mubr.bf16.mxu0 0
  %4807 = vmatmul.mubr.bf16.gmra.mrb[0].mxu0 %v1635
  %v4808 = vpop.f32.mrb[0].mxu0
  %v4809 = vadd.f32 0.0, %v4808
  %v4810 = vpop.f32.mrb[0].mxu0
  %v4811 = vpop.f32.mrb[0].mxu0
  %v4812 = vadd.f32 0.0, %v4811
  %v4813 = vpop.f32.mrb[0].mxu0
  %4814 = vmatprep.mubr.bf16.mxu0 0
  %4815 = vmatmul.mubr.bf16.gmra.mrb[0].mxu0 %v4657
  %v4816 = vpop.f32.mrb[0].mxu0
  %v4817 = vadd.f32 0.0, %v4816
  %v4818 = vpop.f32.mrb[0].mxu0
  %v4819 = vpop.f32.mrb[0].mxu0
  %v4820 = vadd.f32 0.0, %v4819
  %v4821 = vpop.f32.mrb[0].mxu0
  %4822 = vmatprep.mubr.bf16.mxu0 0
  %4823 = vmatmul.mubr.bf16.gmra.mrb[0].mxu0 %v1641
  %v4824 = vpop.f32.mrb[0].mxu0
  %v4825 = vadd.f32 0.0, %v4824
  %v4826 = vpop.f32.mrb[0].mxu0
  %v4827 = vpop.f32.mrb[0].mxu0
  %v4828 = vadd.f32 0.0, %v4827
  %v4829 = vpop.f32.mrb[0].mxu0
  %4830 = vmatprep.mubr.bf16.mxu0 0
  %4831 = vmatmul.mubr.bf16.gmra.mrb[0].mxu0 %v1644
  %v4832 = vpop.f32.mrb[0].mxu0
  %v4833 = vadd.f32 0.0, %v4832
  %v4834 = vpop.f32.mrb[0].mxu0
  %v4835 = vpop.f32.mrb[0].mxu0
  %v4836 = vadd.f32 0.0, %v4835
  %v4837 = vpop.f32.mrb[0].mxu0
  %4838 = vmatprep.mubr.bf16.mxu0 0
  %4839 = vmatmul.mubr.bf16.gmra.mrb[0].mxu0 %v1647
  %v4840 = vpop.f32.mrb[0].mxu0
  %v4841 = vadd.f32 0.0, %v4840
  %v4842 = vpop.f32.mrb[0].mxu0
  %v4843 = vpop.f32.mrb[0].mxu0
  %v4844 = vadd.f32 0.0, %v4843
  %v4845 = vpop.f32.mrb[0].mxu0
  %4846 = vmatprep.mubr.bf16.mxu0 0
  %4847 = vmatmul.mubr.bf16.gmra.mrb[0].mxu0 %v1650
  %v4848 = vpop.f32.mrb[0].mxu0
  %v4849 = vadd.f32 0.0, %v4848
  %v4850 = vpop.f32.mrb[0].mxu0
  %v4851 = vpop.f32.mrb[0].mxu0
  %v4852 = vadd.f32 0.0, %v4851
  %v4853 = vpop.f32.mrb[0].mxu0
  %4854 = vmatprep.mubr.bf16.mxu0 0
  %4855 = vmatmul.mubr.bf16.gmra.mrb[0].mxu0 %v1653
  %v4856 = vpop.f32.mrb[0].mxu0
  %v4857 = vadd.f32 0.0, %v4856
  %v4858 = vpop.f32.mrb[0].mxu0
  %v4859 = vpop.f32.mrb[0].mxu0
  %v4860 = vadd.f32 0.0, %v4859
  %v4861 = vpop.f32.mrb[0].mxu0
  %4862 = vmatprep.mubr.bf16.mxu0 0
  %4863 = vmatmul.mubr.bf16.gmra.mrb[0].mxu0 %v1656
  %v4864 = vpop.f32.mrb[0].mxu0
  %v4865 = vadd.f32 0.0, %v4864
  %v4866 = vpop.f32.mrb[0].mxu0
  %v4867 = vpop.f32.mrb[0].mxu0
  %v4868 = vadd.f32 0.0, %v4867
  %v4869 = vpop.f32.mrb[0].mxu0
  %4870 = vmatprep.mubr.bf16.mxu0 0
  %4871 = vmatmul.mubr.bf16.gmra.mrb[0].mxu0 %v1659
  %v4872 = vpop.f32.mrb[0].mxu0
  %v4873 = vadd.f32 0.0, %v4872
  %v4874 = vpop.f32.mrb[0].mxu0
  %v4875 = vpop.f32.mrb[0].mxu0
  %v4876 = vadd.f32 0.0, %v4875
  %v4877 = vpop.f32.mrb[0].mxu0
  %4878 = vmatprep.mubr.bf16.mxu0 0
  %4879 = vmatmul.mubr.bf16.gmra.mrb[0].mxu0 %v1662
  %v4880 = vpop.f32.mrb[0].mxu0
  %v4881 = vadd.f32 0.0, %v4880
  %v4882 = vpop.f32.mrb[0].mxu0
  %v4883 = vpop.f32.mrb[0].mxu0
  %v4884 = vadd.f32 0.0, %v4883
  %v4885 = vpop.f32.mrb[0].mxu0
  %4886 = vmatprep.mubr.bf16.mxu0 0
  %4887 = vmatmul.mubr.bf16.gmra.mrb[0].mxu0 %v1665
  %v4888 = vpop.f32.mrb[0].mxu0
  %v4889 = vadd.f32 0.0, %v4888
  %v4890 = vpop.f32.mrb[0].mxu0
  %v4891 = vpop.f32.mrb[0].mxu0
  %v4892 = vadd.f32 0.0, %v4891
  %v4893 = vpop.f32.mrb[0].mxu0
  %4894 = vmatprep.mubr.bf16.mxu0 0
  %4895 = vmatmul.mubr.bf16.gmra.mrb[0].mxu0 %v1668
  %v4896 = vpop.f32.mrb[0].mxu0
  %v4897 = vadd.f32 0.0, %v4896
  %v4898 = vpop.f32.mrb[0].mxu0
  %v4899 = vpop.f32.mrb[0].mxu0
  %v4900 = vadd.f32 0.0, %v4899
  %v4901 = vpop.f32.mrb[0].mxu0
  %4902 = vmatprep.mubr.bf16.mxu0 0
  %4903 = vmatmul.mubr.bf16.gmra.mrb[0].mxu0 %v1671
  %v4904 = vpop.f32.mrb[0].mxu0
  %v4905 = vadd.f32 0.0, %v4904
  %v4906 = vpop.f32.mrb[0].mxu0
  %v4907 = vpop.f32.mrb[0].mxu0
  %v4908 = vadd.f32 0.0, %v4907
  %v4909 = vpop.f32.mrb[0].mxu0
  %4910 = vmatprep.mubr.bf16.mxu0 0
  %4911 = vmatmul.mubr.bf16.gmra.mrb[0].mxu0 %v1674
  %v4912 = vpop.f32.mrb[0].mxu0
  %v4913 = vadd.f32 0.0, %v4912
  %v4914 = vpop.f32.mrb[0].mxu0
  %v4915 = vpop.f32.mrb[0].mxu0
  %v4916 = vadd.f32 0.0, %v4915
  %v4917 = vpop.f32.mrb[0].mxu0
  %4918 = vmatprep.mubr.bf16.mxu0 0
  %4919 = vmatmul.mubr.bf16.gmra.mrb[0].mxu0 %v1677
  %v4920 = vpop.f32.mrb[0].mxu0
  %v4921 = vadd.f32 0.0, %v4920
  %v4922 = vpop.f32.mrb[0].mxu0
  %v4923 = vpop.f32.mrb[0].mxu0
  %v4924 = vadd.f32 0.0, %v4923
  %v4925 = vpop.f32.mrb[0].mxu0
  %4926 = vmatprep.mubr.bf16.mxu0 0
  %4927 = vmatmul.mubr.bf16.gmra.mrb[0].mxu0 %v1680
  %v4928 = vpop.f32.mrb[0].mxu0
  %v4929 = vadd.f32 0.0, %v4928
  %v4930 = vpop.f32.mrb[0].mxu0
  %v4931 = vpop.f32.mrb[0].mxu0
  %v4932 = vadd.f32 0.0, %v4931
  %v4933 = vpop.f32.mrb[0].mxu0
  %4934 = vmatprep.mubr.bf16.mxu0 0
  %4935 = vmatmul.mubr.bf16.gmra.mrb[0].mxu0 %v1683
  %v4936 = vpop.f32.mrb[0].mxu0
  %v4937 = vadd.f32 0.0, %v4936
  %v4938 = vpop.f32.mrb[0].mxu0
  %v4939 = vpop.f32.mrb[0].mxu0
  %v4940 = vadd.f32 0.0, %v4939
  %v4941 = vpop.f32.mrb[0].mxu0
  %4942 = vmatprep.mubr.bf16.mxu0 0
  %4943 = vmatmul.mubr.bf16.gmra.mrb[0].mxu0 %v4660
  %v4944 = vpop.f32.mrb[0].mxu0
  %v4945 = vadd.f32 0.0, %v4944
  %v4946 = vpop.f32.mrb[0].mxu0
  %v4947 = vpop.f32.mrb[0].mxu0
  %v4948 = vadd.f32 0.0, %v4947
  %v4949 = vpop.f32.mrb[0].mxu0
  %4950 = vdwg.mxu0
  %v4951 = vadd.f32 %v4565, %v4697
  %v4952 = vadd.f32 %v4566, %v4700
  %v4953 = vadd.f32 %v4567, %v4705
  %v4954 = vadd.f32 %v4568, %v4708
  %v4955 = vadd.f32 %v4569, %v4713
  %v4956 = vadd.f32 %v4570, %v4716
  %v4957 = vadd.f32 %v4571, %v4721
  %v4958 = vadd.f32 %v4572, %v4724
  %v4959 = vadd.f32 %v4573, %v4729
  %v4960 = vadd.f32 %v4574, %v4732
  %v4961 = vadd.f32 %v4575, %v4737
  %v4962 = vadd.f32 %v4576, %v4740
  %v4963 = vadd.f32 %v4577, %v4745
  %v4964 = vadd.f32 %v4578, %v4748
  %v4965 = vadd.f32 %v4579, %v4753
  %v4966 = vadd.f32 %v4580, %v4756
  %v4967 = vadd.f32 %v4581, %v4761
  %v4968 = vadd.f32 %v4582, %v4764
  %v4969 = vadd.f32 %v4583, %v4769
  %v4970 = vadd.f32 %v4584, %v4772
  %v4971 = vadd.f32 %v4585, %v4777
  %v4972 = vadd.f32 %v4586, %v4780
  %v4973 = vadd.f32 %v4587, %v4785
  %v4974 = vadd.f32 %v4588, %v4788
  %v4975 = vadd.f32 %v4589, %v4793
  %v4976 = vadd.f32 %v4590, %v4796
  %v4977 = vadd.f32 %v4591, %v4801
  %v4978 = vadd.f32 %v4592, %v4804
  %v4979 = vadd.f32 %v4593, %v4809
  %v4980 = vadd.f32 %v4594, %v4812
  %v4981 = vadd.f32 %v4595, %v4817
  %v4982 = vadd.f32 %v4596, %v4820
  %v4983 = vadd.f32 %v4597, %v4825
  %v4984 = vadd.f32 %v4598, %v4828
  %v4985 = vadd.f32 %v4599, %v4833
  %v4986 = vadd.f32 %v4600, %v4836
  %v4987 = vadd.f32 %v4601, %v4841
  %v4988 = vadd.f32 %v4602, %v4844
  %v4989 = vadd.f32 %v4603, %v4849
  %v4990 = vadd.f32 %v4604, %v4852
  %v4991 = vadd.f32 %v4605, %v4857
  %v4992 = vadd.f32 %v4606, %v4860
  %v4993 = vadd.f32 %v4607, %v4865
  %v4994 = vadd.f32 %v4608, %v4868
  %v4995 = vadd.f32 %v4609, %v4873
  %v4996 = vadd.f32 %v4610, %v4876
  %v4997 = vadd.f32 %v4611, %v4881
  %v4998 = vadd.f32 %v4612, %v4884
  %v4999 = vadd.f32 %v4613, %v4889
  %v5000 = vadd.f32 %v4614, %v4892
  %v5001 = vadd.f32 %v4615, %v4897
  %v5002 = vadd.f32 %v4616, %v4900
  %v5003 = vadd.f32 %v4617, %v4905
  %v5004 = vadd.f32 %v4618, %v4908
  %v5005 = vadd.f32 %v4619, %v4913
  %v5006 = vadd.f32 %v4620, %v4916
  %v5007 = vadd.f32 %v4621, %v4921
  %v5008 = vadd.f32 %v4622, %v4924
  %v5009 = vadd.f32 %v4623, %v4929
  %v5010 = vadd.f32 %v4624, %v4932
  %v5011 = vadd.f32 %v4625, %v4937
  %v5012 = vadd.f32 %v4626, %v4940
  %v5013 = vadd.f32 %v4627, %v4945
  %v5014 = vadd.f32 %v4628, %v4948
  %v5016 = vshrl.u32 %v71, 16
  %v5018 = vrot.slane %v5016, 4
  %v5019 = vshll.u32 %v71, 16
  %v5021 = vrot.slane %v5019, 5
  %v5022 = vor.u32 %v5018, %v5021
  %v5023 = vrot.slane %v5022, 4
  %v5025 = vshll.u32 %v72, 16
  %v5027 = vrot.slane %v5025, 5
  %v5028 = vsel %vm149, %v5023, %v5027
  %v5029 = vshrl.u32 %v72, 16
  %v5031 = vrot.slane %v5029, 4
  %v5032 = vor.u32 %v5031, %v5027
  %v5033 = vrot.slane %v5032, 4
  %v5035 = vshll.u32 %v73, 16
  %v5037 = vrot.slane %v5035, 5
  %v5038 = vsel %vm149, %v5033, %v5037
  %v5040 = vshrl.u32 %v131, 16
  %v5042 = vrot.slane %v5040, 4
  %v5043 = vshll.u32 %v131, 16
  %v5045 = vrot.slane %v5043, 5
  %v5046 = vor.u32 %v5042, %v5045
  %v5047 = vrot.slane %v5046, 4
  %v5049 = vshll.u32 %v132, 16
  %v5051 = vrot.slane %v5049, 5
  %v5052 = vsel %vm149, %v5047, %v5051
  %v5053 = vshrl.u32 %v132, 16
  %v5055 = vrot.slane %v5053, 4
  %v5056 = vor.u32 %v5055, %v5051
  %v5057 = vrot.slane %v5056, 4
  %v5059 = vshll.u32 %v133, 16
  %v5061 = vrot.slane %v5059, 5
  %v5062 = vsel %vm149, %v5057, %v5061
  %s5063 = scalar_lea.vmem %s1, 96
  %v5064 = vld [vmem:[%s5063] sm:$0xf]
  %v5065 = vld [vmem:[%s5063 + $0x4] sm:$0xf]
  %v5066 = vld [vmem:[%s5063 + $0x8] sm:$0xf]
  %v5067 = vld [vmem:[%s5063 + $0xc] sm:$0xf]
  %v5068 = vunpack.c.l.b16 %v5028
  %v5069 = vunpack.c.l.b16 %v5038
  %v5070 = vunpack.c.l.b16 %v5052
  %v5071 = vunpack.c.l.b16 %v5062
  %v5072 = vpack.c.b16 %v5069, %v5068
  %v5073 = vpack.c.b16 %v5071, %v5070
  %v5078 = vunpack.c.l.b16 %v5064
  %v5079 = vunpack.c.l.b16 %v5065
  %v5080 = vunpack.c.l.b16 %v5066
  %v5081 = vunpack.c.l.b16 %v5067
  %v5082 = vpack.c.b16 %v5079, %v5078
  %v5083 = vpack.c.b16 %v5081, %v5080
  %v5087 = vsel %vm1031, %v5072, 0
  %v5090 = vsel %vm1031, %v5073, 0
  %5092 = vmatprep.subr.bf16.mxu0 0
  %5093 = vmatpush1.bf16.msra.mxu0 %v5082
  %5094 = vmatprep.subr.bf16.mxu0 0
  %5095 = vmatpush1.bf16.msra.mxu0 %v5083
  %5096 = vmatprep.subr.bf16.mxu0 0
  %5097 = vmatpush1.bf16.msra.mxu0 0
  %5098 = vmatprep.subr.bf16.mxu0 0
  %5099 = vmatpush1.bf16.msra.mxu0 0
  %5100 = vmatprep.subr.bf16.mxu0 0
  %5101 = vmatpush1.bf16.msra.mxu0 0
  %5102 = vmatprep.subr.bf16.mxu0 0
  %5103 = vmatpush1.bf16.msra.mxu0 0
  %5104 = vmatprep.subr.bf16.mxu0 0
  %5105 = vmatpush1.bf16.msra.mxu0 0
  %5106 = vmatprep.subr.bf16.mxu0 0
  %5107 = vmatpush1.bf16.msra.mxu0 0
  %5108 = vmatprep.subr.bf16.mxu0 0
  %5109 = vmatpush1.bf16.msra.mxu0 0
  %5110 = vmatprep.subr.bf16.mxu0 0
  %5111 = vmatpush1.bf16.msra.mxu0 0
  %5112 = vmatprep.subr.bf16.mxu0 0
  %5113 = vmatpush1.bf16.msra.mxu0 0
  %5114 = vmatprep.subr.bf16.mxu0 0
  %5115 = vmatpush1.bf16.msra.mxu0 0
  %5116 = vmatprep.subr.bf16.mxu0 0
  %5117 = vmatpush1.bf16.msra.mxu0 0
  %5118 = vmatprep.subr.bf16.mxu0 0
  %5119 = vmatpush1.bf16.msra.mxu0 0
  %5120 = vmatprep.subr.bf16.mxu0 0
  %5121 = vmatpush1.bf16.msra.mxu0 0
  %5122 = vmatprep.subr.bf16.mxu0 0
  %5123 = vmatpush1.bf16.msra.mxu0 0
  %5124 = vmatprep.mubr.bf16.mxu0 0
  %5125 = vmatmul.mubr.bf16.gmra.mrb[0].mxu0 %v1036
  %v5126 = vpop.f32.mrb[0].mxu0
  %v5127 = vadd.f32 0.0, %v5126
  %v5128 = vpop.f32.mrb[0].mxu0
  %v5129 = vpop.f32.mrb[0].mxu0
  %v5130 = vadd.f32 0.0, %v5129
  %v5131 = vpop.f32.mrb[0].mxu0
  %5132 = vmatprep.mubr.bf16.mxu0 0
  %5133 = vmatmul.mubr.bf16.gmra.mrb[0].mxu0 %v1039
  %v5134 = vpop.f32.mrb[0].mxu0
  %v5135 = vadd.f32 0.0, %v5134
  %v5136 = vpop.f32.mrb[0].mxu0
  %v5137 = vpop.f32.mrb[0].mxu0
  %v5138 = vadd.f32 0.0, %v5137
  %v5139 = vpop.f32.mrb[0].mxu0
  %5140 = vmatprep.mubr.bf16.mxu0 0
  %5141 = vmatmul.mubr.bf16.gmra.mrb[0].mxu0 %v1042
  %v5142 = vpop.f32.mrb[0].mxu0
  %v5143 = vadd.f32 0.0, %v5142
  %v5144 = vpop.f32.mrb[0].mxu0
  %v5145 = vpop.f32.mrb[0].mxu0
  %v5146 = vadd.f32 0.0, %v5145
  %v5147 = vpop.f32.mrb[0].mxu0
  %5148 = vmatprep.mubr.bf16.mxu0 0
  %5149 = vmatmul.mubr.bf16.gmra.mrb[0].mxu0 %v1045
  %v5150 = vpop.f32.mrb[0].mxu0
  %v5151 = vadd.f32 0.0, %v5150
  %v5152 = vpop.f32.mrb[0].mxu0
  %v5153 = vpop.f32.mrb[0].mxu0
  %v5154 = vadd.f32 0.0, %v5153
  %v5155 = vpop.f32.mrb[0].mxu0
  %5156 = vmatprep.mubr.bf16.mxu0 0
  %5157 = vmatmul.mubr.bf16.gmra.mrb[0].mxu0 %v1048
  %v5158 = vpop.f32.mrb[0].mxu0
  %v5159 = vadd.f32 0.0, %v5158
  %v5160 = vpop.f32.mrb[0].mxu0
  %v5161 = vpop.f32.mrb[0].mxu0
  %v5162 = vadd.f32 0.0, %v5161
  %v5163 = vpop.f32.mrb[0].mxu0
  %5164 = vmatprep.mubr.bf16.mxu0 0
  %5165 = vmatmul.mubr.bf16.gmra.mrb[0].mxu0 %v1051
  %v5166 = vpop.f32.mrb[0].mxu0
  %v5167 = vadd.f32 0.0, %v5166
  %v5168 = vpop.f32.mrb[0].mxu0
  %v5169 = vpop.f32.mrb[0].mxu0
  %v5170 = vadd.f32 0.0, %v5169
  %v5171 = vpop.f32.mrb[0].mxu0
  %5172 = vmatprep.mubr.bf16.mxu0 0
  %5173 = vmatmul.mubr.bf16.gmra.mrb[0].mxu0 %v1054
  %v5174 = vpop.f32.mrb[0].mxu0
  %v5175 = vadd.f32 0.0, %v5174
  %v5176 = vpop.f32.mrb[0].mxu0
  %v5177 = vpop.f32.mrb[0].mxu0
  %v5178 = vadd.f32 0.0, %v5177
  %v5179 = vpop.f32.mrb[0].mxu0
  %5180 = vmatprep.mubr.bf16.mxu0 0
  %5181 = vmatmul.mubr.bf16.gmra.mrb[0].mxu0 %v1057
  %v5182 = vpop.f32.mrb[0].mxu0
  %v5183 = vadd.f32 0.0, %v5182
  %v5184 = vpop.f32.mrb[0].mxu0
  %v5185 = vpop.f32.mrb[0].mxu0
  %v5186 = vadd.f32 0.0, %v5185
  %v5187 = vpop.f32.mrb[0].mxu0
  %5188 = vmatprep.mubr.bf16.mxu0 0
  %5189 = vmatmul.mubr.bf16.gmra.mrb[0].mxu0 %v1060
  %v5190 = vpop.f32.mrb[0].mxu0
  %v5191 = vadd.f32 0.0, %v5190
  %v5192 = vpop.f32.mrb[0].mxu0
  %v5193 = vpop.f32.mrb[0].mxu0
  %v5194 = vadd.f32 0.0, %v5193
  %v5195 = vpop.f32.mrb[0].mxu0
  %5196 = vmatprep.mubr.bf16.mxu0 0
  %5197 = vmatmul.mubr.bf16.gmra.mrb[0].mxu0 %v1063
  %v5198 = vpop.f32.mrb[0].mxu0
  %v5199 = vadd.f32 0.0, %v5198
  %v5200 = vpop.f32.mrb[0].mxu0
  %v5201 = vpop.f32.mrb[0].mxu0
  %v5202 = vadd.f32 0.0, %v5201
  %v5203 = vpop.f32.mrb[0].mxu0
  %5204 = vmatprep.mubr.bf16.mxu0 0
  %5205 = vmatmul.mubr.bf16.gmra.mrb[0].mxu0 %v1066
  %v5206 = vpop.f32.mrb[0].mxu0
  %v5207 = vadd.f32 0.0, %v5206
  %v5208 = vpop.f32.mrb[0].mxu0
  %v5209 = vpop.f32.mrb[0].mxu0
  %v5210 = vadd.f32 0.0, %v5209
  %v5211 = vpop.f32.mrb[0].mxu0
  %5212 = vmatprep.mubr.bf16.mxu0 0
  %5213 = vmatmul.mubr.bf16.gmra.mrb[0].mxu0 %v1069
  %v5214 = vpop.f32.mrb[0].mxu0
  %v5215 = vadd.f32 0.0, %v5214
  %v5216 = vpop.f32.mrb[0].mxu0
  %v5217 = vpop.f32.mrb[0].mxu0
  %v5218 = vadd.f32 0.0, %v5217
  %v5219 = vpop.f32.mrb[0].mxu0
  %5220 = vmatprep.mubr.bf16.mxu0 0
  %5221 = vmatmul.mubr.bf16.gmra.mrb[0].mxu0 %v1072
  %v5222 = vpop.f32.mrb[0].mxu0
  %v5223 = vadd.f32 0.0, %v5222
  %v5224 = vpop.f32.mrb[0].mxu0
  %v5225 = vpop.f32.mrb[0].mxu0
  %v5226 = vadd.f32 0.0, %v5225
  %v5227 = vpop.f32.mrb[0].mxu0
  %5228 = vmatprep.mubr.bf16.mxu0 0
  %5229 = vmatmul.mubr.bf16.gmra.mrb[0].mxu0 %v1075
  %v5230 = vpop.f32.mrb[0].mxu0
  %v5231 = vadd.f32 0.0, %v5230
  %v5232 = vpop.f32.mrb[0].mxu0
  %v5233 = vpop.f32.mrb[0].mxu0
  %v5234 = vadd.f32 0.0, %v5233
  %v5235 = vpop.f32.mrb[0].mxu0
  %5236 = vmatprep.mubr.bf16.mxu0 0
  %5237 = vmatmul.mubr.bf16.gmra.mrb[0].mxu0 %v1078
  %v5238 = vpop.f32.mrb[0].mxu0
  %v5239 = vadd.f32 0.0, %v5238
  %v5240 = vpop.f32.mrb[0].mxu0
  %v5241 = vpop.f32.mrb[0].mxu0
  %v5242 = vadd.f32 0.0, %v5241
  %v5243 = vpop.f32.mrb[0].mxu0
  %5244 = vmatprep.mubr.bf16.mxu0 0
  %5245 = vmatmul.mubr.bf16.gmra.mrb[0].mxu0 %v5087
  %v5246 = vpop.f32.mrb[0].mxu0
  %v5247 = vadd.f32 0.0, %v5246
  %v5248 = vpop.f32.mrb[0].mxu0
  %v5249 = vpop.f32.mrb[0].mxu0
  %v5250 = vadd.f32 0.0, %v5249
  %v5251 = vpop.f32.mrb[0].mxu0
  %5252 = vmatprep.mubr.bf16.mxu0 0
  %5253 = vmatmul.mubr.bf16.gmra.mrb[0].mxu0 %v1084
  %v5254 = vpop.f32.mrb[0].mxu0
  %v5255 = vadd.f32 0.0, %v5254
  %v5256 = vpop.f32.mrb[0].mxu0
  %v5257 = vpop.f32.mrb[0].mxu0
  %v5258 = vadd.f32 0.0, %v5257
  %v5259 = vpop.f32.mrb[0].mxu0
  %5260 = vmatprep.mubr.bf16.mxu0 0
  %5261 = vmatmul.mubr.bf16.gmra.mrb[0].mxu0 %v1087
  %v5262 = vpop.f32.mrb[0].mxu0
  %v5263 = vadd.f32 0.0, %v5262
  %v5264 = vpop.f32.mrb[0].mxu0
  %v5265 = vpop.f32.mrb[0].mxu0
  %v5266 = vadd.f32 0.0, %v5265
  %v5267 = vpop.f32.mrb[0].mxu0
  %5268 = vmatprep.mubr.bf16.mxu0 0
  %5269 = vmatmul.mubr.bf16.gmra.mrb[0].mxu0 %v1090
  %v5270 = vpop.f32.mrb[0].mxu0
  %v5271 = vadd.f32 0.0, %v5270
  %v5272 = vpop.f32.mrb[0].mxu0
  %v5273 = vpop.f32.mrb[0].mxu0
  %v5274 = vadd.f32 0.0, %v5273
  %v5275 = vpop.f32.mrb[0].mxu0
  %5276 = vmatprep.mubr.bf16.mxu0 0
  %5277 = vmatmul.mubr.bf16.gmra.mrb[0].mxu0 %v1093
  %v5278 = vpop.f32.mrb[0].mxu0
  %v5279 = vadd.f32 0.0, %v5278
  %v5280 = vpop.f32.mrb[0].mxu0
  %v5281 = vpop.f32.mrb[0].mxu0
  %v5282 = vadd.f32 0.0, %v5281
  %v5283 = vpop.f32.mrb[0].mxu0
  %5284 = vmatprep.mubr.bf16.mxu0 0
  %5285 = vmatmul.mubr.bf16.gmra.mrb[0].mxu0 %v1096
  %v5286 = vpop.f32.mrb[0].mxu0
  %v5287 = vadd.f32 0.0, %v5286
  %v5288 = vpop.f32.mrb[0].mxu0
  %v5289 = vpop.f32.mrb[0].mxu0
  %v5290 = vadd.f32 0.0, %v5289
  %v5291 = vpop.f32.mrb[0].mxu0
  %5292 = vmatprep.mubr.bf16.mxu0 0
  %5293 = vmatmul.mubr.bf16.gmra.mrb[0].mxu0 %v1099
  %v5294 = vpop.f32.mrb[0].mxu0
  %v5295 = vadd.f32 0.0, %v5294
  %v5296 = vpop.f32.mrb[0].mxu0
  %v5297 = vpop.f32.mrb[0].mxu0
  %v5298 = vadd.f32 0.0, %v5297
  %v5299 = vpop.f32.mrb[0].mxu0
  %5300 = vmatprep.mubr.bf16.mxu0 0
  %5301 = vmatmul.mubr.bf16.gmra.mrb[0].mxu0 %v1102
  %v5302 = vpop.f32.mrb[0].mxu0
  %v5303 = vadd.f32 0.0, %v5302
  %v5304 = vpop.f32.mrb[0].mxu0
  %v5305 = vpop.f32.mrb[0].mxu0
  %v5306 = vadd.f32 0.0, %v5305
  %v5307 = vpop.f32.mrb[0].mxu0
  %5308 = vmatprep.mubr.bf16.mxu0 0
  %5309 = vmatmul.mubr.bf16.gmra.mrb[0].mxu0 %v1105
  %v5310 = vpop.f32.mrb[0].mxu0
  %v5311 = vadd.f32 0.0, %v5310
  %v5312 = vpop.f32.mrb[0].mxu0
  %v5313 = vpop.f32.mrb[0].mxu0
  %v5314 = vadd.f32 0.0, %v5313
  %v5315 = vpop.f32.mrb[0].mxu0
  %5316 = vmatprep.mubr.bf16.mxu0 0
  %5317 = vmatmul.mubr.bf16.gmra.mrb[0].mxu0 %v1108
  %v5318 = vpop.f32.mrb[0].mxu0
  %v5319 = vadd.f32 0.0, %v5318
  %v5320 = vpop.f32.mrb[0].mxu0
  %v5321 = vpop.f32.mrb[0].mxu0
  %v5322 = vadd.f32 0.0, %v5321
  %v5323 = vpop.f32.mrb[0].mxu0
  %5324 = vmatprep.mubr.bf16.mxu0 0
  %5325 = vmatmul.mubr.bf16.gmra.mrb[0].mxu0 %v1111
  %v5326 = vpop.f32.mrb[0].mxu0
  %v5327 = vadd.f32 0.0, %v5326
  %v5328 = vpop.f32.mrb[0].mxu0
  %v5329 = vpop.f32.mrb[0].mxu0
  %v5330 = vadd.f32 0.0, %v5329
  %v5331 = vpop.f32.mrb[0].mxu0
  %5332 = vmatprep.mubr.bf16.mxu0 0
  %5333 = vmatmul.mubr.bf16.gmra.mrb[0].mxu0 %v1114
  %v5334 = vpop.f32.mrb[0].mxu0
  %v5335 = vadd.f32 0.0, %v5334
  %v5336 = vpop.f32.mrb[0].mxu0
  %v5337 = vpop.f32.mrb[0].mxu0
  %v5338 = vadd.f32 0.0, %v5337
  %v5339 = vpop.f32.mrb[0].mxu0
  %5340 = vmatprep.mubr.bf16.mxu0 0
  %5341 = vmatmul.mubr.bf16.gmra.mrb[0].mxu0 %v1117
  %v5342 = vpop.f32.mrb[0].mxu0
  %v5343 = vadd.f32 0.0, %v5342
  %v5344 = vpop.f32.mrb[0].mxu0
  %v5345 = vpop.f32.mrb[0].mxu0
  %v5346 = vadd.f32 0.0, %v5345
  %v5347 = vpop.f32.mrb[0].mxu0
  %5348 = vmatprep.mubr.bf16.mxu0 0
  %5349 = vmatmul.mubr.bf16.gmra.mrb[0].mxu0 %v1120
  %v5350 = vpop.f32.mrb[0].mxu0
  %v5351 = vadd.f32 0.0, %v5350
  %v5352 = vpop.f32.mrb[0].mxu0
  %v5353 = vpop.f32.mrb[0].mxu0
  %v5354 = vadd.f32 0.0, %v5353
  %v5355 = vpop.f32.mrb[0].mxu0
  %5356 = vmatprep.mubr.bf16.mxu0 0
  %5357 = vmatmul.mubr.bf16.gmra.mrb[0].mxu0 %v1123
  %v5358 = vpop.f32.mrb[0].mxu0
  %v5359 = vadd.f32 0.0, %v5358
  %v5360 = vpop.f32.mrb[0].mxu0
  %v5361 = vpop.f32.mrb[0].mxu0
  %v5362 = vadd.f32 0.0, %v5361
  %v5363 = vpop.f32.mrb[0].mxu0
  %5364 = vmatprep.mubr.bf16.mxu0 0
  %5365 = vmatmul.mubr.bf16.gmra.mrb[0].mxu0 %v1126
  %v5366 = vpop.f32.mrb[0].mxu0
  %v5367 = vadd.f32 0.0, %v5366
  %v5368 = vpop.f32.mrb[0].mxu0
  %v5369 = vpop.f32.mrb[0].mxu0
  %v5370 = vadd.f32 0.0, %v5369
  %v5371 = vpop.f32.mrb[0].mxu0
  %5372 = vmatprep.mubr.bf16.mxu0 0
  %5373 = vmatmul.mubr.bf16.gmra.mrb[0].mxu0 %v5090
  %v5374 = vpop.f32.mrb[0].mxu0
  %v5375 = vadd.f32 0.0, %v5374
  %v5376 = vpop.f32.mrb[0].mxu0
  %v5377 = vpop.f32.mrb[0].mxu0
  %v5378 = vadd.f32 0.0, %v5377
  %v5379 = vpop.f32.mrb[0].mxu0
  %5380 = vdwg.mxu0
  %v5381 = vadd.f32 %v4951, %v5127
  %v5382 = vadd.f32 %v4952, %v5130
  %v5383 = vadd.f32 %v4953, %v5135
  %v5384 = vadd.f32 %v4954, %v5138
  %v5385 = vadd.f32 %v4955, %v5143
  %v5386 = vadd.f32 %v4956, %v5146
  %v5387 = vadd.f32 %v4957, %v5151
  %v5388 = vadd.f32 %v4958, %v5154
  %v5389 = vadd.f32 %v4959, %v5159
  %v5390 = vadd.f32 %v4960, %v5162
  %v5391 = vadd.f32 %v4961, %v5167
  %v5392 = vadd.f32 %v4962, %v5170
  %v5393 = vadd.f32 %v4963, %v5175
  %v5394 = vadd.f32 %v4964, %v5178
  %v5395 = vadd.f32 %v4965, %v5183
  %v5396 = vadd.f32 %v4966, %v5186
  %v5397 = vadd.f32 %v4967, %v5191
  %v5398 = vadd.f32 %v4968, %v5194
  %v5399 = vadd.f32 %v4969, %v5199
  %v5400 = vadd.f32 %v4970, %v5202
  %v5401 = vadd.f32 %v4971, %v5207
  %v5402 = vadd.f32 %v4972, %v5210
  %v5403 = vadd.f32 %v4973, %v5215
  %v5404 = vadd.f32 %v4974, %v5218
  %v5405 = vadd.f32 %v4975, %v5223
  %v5406 = vadd.f32 %v4976, %v5226
  %v5407 = vadd.f32 %v4977, %v5231
  %v5408 = vadd.f32 %v4978, %v5234
  %v5409 = vadd.f32 %v4979, %v5239
  %v5410 = vadd.f32 %v4980, %v5242
  %v5411 = vadd.f32 %v4981, %v5247
  %v5412 = vadd.f32 %v4982, %v5250
  %v5413 = vadd.f32 %v4983, %v5255
  %v5414 = vadd.f32 %v4984, %v5258
  %v5415 = vadd.f32 %v4985, %v5263
  %v5416 = vadd.f32 %v4986, %v5266
  %v5417 = vadd.f32 %v4987, %v5271
  %v5418 = vadd.f32 %v4988, %v5274
  %v5419 = vadd.f32 %v4989, %v5279
  %v5420 = vadd.f32 %v4990, %v5282
  %v5421 = vadd.f32 %v4991, %v5287
  %v5422 = vadd.f32 %v4992, %v5290
  %v5423 = vadd.f32 %v4993, %v5295
  %v5424 = vadd.f32 %v4994, %v5298
  %v5425 = vadd.f32 %v4995, %v5303
  %v5426 = vadd.f32 %v4996, %v5306
  %v5427 = vadd.f32 %v4997, %v5311
  %v5428 = vadd.f32 %v4998, %v5314
  %v5429 = vadd.f32 %v4999, %v5319
  %v5430 = vadd.f32 %v5000, %v5322
  %v5431 = vadd.f32 %v5001, %v5327
  %v5432 = vadd.f32 %v5002, %v5330
  %v5433 = vadd.f32 %v5003, %v5335
  %v5434 = vadd.f32 %v5004, %v5338
  %v5435 = vadd.f32 %v5005, %v5343
  %v5436 = vadd.f32 %v5006, %v5346
  %v5437 = vadd.f32 %v5007, %v5351
  %v5438 = vadd.f32 %v5008, %v5354
  %v5439 = vadd.f32 %v5009, %v5359
  %v5440 = vadd.f32 %v5010, %v5362
  %v5441 = vadd.f32 %v5011, %v5367
  %v5442 = vadd.f32 %v5012, %v5370
  %v5443 = vadd.f32 %v5013, %v5375
  %v5444 = vadd.f32 %v5014, %v5378
  %v5447 = vrot.slane %v71, 5
  %v5448 = vrot.slane %v5447, 4
  %v5449 = vrot.slane %v72, 5
  %v5450 = vsel %vm2008, %v5448, %v5449
  %v5451 = vrot.slane %v5449, 4
  %v5452 = vrot.slane %v73, 5
  %v5453 = vsel %vm2008, %v5451, %v5452
  %v5454 = vrot.slane %v131, 5
  %v5455 = vrot.slane %v5454, 4
  %v5456 = vrot.slane %v132, 5
  %v5457 = vsel %vm2008, %v5455, %v5456
  %v5458 = vrot.slane %v5456, 4
  %v5459 = vrot.slane %v133, 5
  %v5460 = vsel %vm2008, %v5458, %v5459
  %s5461 = scalar_lea.vmem %s1, 112
  %v5462 = vld [vmem:[%s5461] sm:$0xf]
  %v5463 = vld [vmem:[%s5461 + $0x4] sm:$0xf]
  %v5464 = vld [vmem:[%s5461 + $0x8] sm:$0xf]
  %v5465 = vld [vmem:[%s5461 + $0xc] sm:$0xf]
  %v5466 = vunpack.c.l.b16 %v5450
  %v5467 = vunpack.c.l.b16 %v5453
  %v5468 = vunpack.c.l.b16 %v5457
  %v5469 = vunpack.c.l.b16 %v5460
  %v5470 = vpack.c.b16 %v5467, %v5466
  %v5471 = vpack.c.b16 %v5469, %v5468
  %v5476 = vunpack.c.l.b16 %v5462
  %v5477 = vunpack.c.l.b16 %v5463
  %v5478 = vunpack.c.l.b16 %v5464
  %v5479 = vunpack.c.l.b16 %v5465
  %v5480 = vpack.c.b16 %v5477, %v5476
  %v5481 = vpack.c.b16 %v5479, %v5478
  %v5485 = vsel %vm1031, %v5470, 0
  %v5488 = vsel %vm1031, %v5471, 0
  %5490 = vmatprep.subr.bf16.mxu0 0
  %5491 = vmatpush1.bf16.msra.mxu0 %v5480
  %5492 = vmatprep.subr.bf16.mxu0 0
  %5493 = vmatpush1.bf16.msra.mxu0 %v5481
  %5494 = vmatprep.subr.bf16.mxu0 0
  %5495 = vmatpush1.bf16.msra.mxu0 0
  %5496 = vmatprep.subr.bf16.mxu0 0
  %5497 = vmatpush1.bf16.msra.mxu0 0
  %5498 = vmatprep.subr.bf16.mxu0 0
  %5499 = vmatpush1.bf16.msra.mxu0 0
  %5500 = vmatprep.subr.bf16.mxu0 0
  %5501 = vmatpush1.bf16.msra.mxu0 0
  %5502 = vmatprep.subr.bf16.mxu0 0
  %5503 = vmatpush1.bf16.msra.mxu0 0
  %5504 = vmatprep.subr.bf16.mxu0 0
  %5505 = vmatpush1.bf16.msra.mxu0 0
  %5506 = vmatprep.subr.bf16.mxu0 0
  %5507 = vmatpush1.bf16.msra.mxu0 0
  %5508 = vmatprep.subr.bf16.mxu0 0
  %5509 = vmatpush1.bf16.msra.mxu0 0
  %5510 = vmatprep.subr.bf16.mxu0 0
  %5511 = vmatpush1.bf16.msra.mxu0 0
  %5512 = vmatprep.subr.bf16.mxu0 0
  %5513 = vmatpush1.bf16.msra.mxu0 0
  %5514 = vmatprep.subr.bf16.mxu0 0
  %5515 = vmatpush1.bf16.msra.mxu0 0
  %5516 = vmatprep.subr.bf16.mxu0 0
  %5517 = vmatpush1.bf16.msra.mxu0 0
  %5518 = vmatprep.subr.bf16.mxu0 0
  %5519 = vmatpush1.bf16.msra.mxu0 0
  %5520 = vmatprep.subr.bf16.mxu0 0
  %5521 = vmatpush1.bf16.msra.mxu0 0
  %5522 = vmatprep.mubr.bf16.mxu0 0
  %5523 = vmatmul.mubr.bf16.gmra.mrb[0].mxu0 %v2350
  %v5524 = vpop.f32.mrb[0].mxu0
  %v5525 = vadd.f32 0.0, %v5524
  %v5526 = vpop.f32.mrb[0].mxu0
  %v5527 = vpop.f32.mrb[0].mxu0
  %v5528 = vadd.f32 0.0, %v5527
  %v5529 = vpop.f32.mrb[0].mxu0
  %5530 = vmatprep.mubr.bf16.mxu0 0
  %5531 = vmatmul.mubr.bf16.gmra.mrb[0].mxu0 %v2353
  %v5532 = vpop.f32.mrb[0].mxu0
  %v5533 = vadd.f32 0.0, %v5532
  %v5534 = vpop.f32.mrb[0].mxu0
  %v5535 = vpop.f32.mrb[0].mxu0
  %v5536 = vadd.f32 0.0, %v5535
  %v5537 = vpop.f32.mrb[0].mxu0
  %5538 = vmatprep.mubr.bf16.mxu0 0
  %5539 = vmatmul.mubr.bf16.gmra.mrb[0].mxu0 %v2356
  %v5540 = vpop.f32.mrb[0].mxu0
  %v5541 = vadd.f32 0.0, %v5540
  %v5542 = vpop.f32.mrb[0].mxu0
  %v5543 = vpop.f32.mrb[0].mxu0
  %v5544 = vadd.f32 0.0, %v5543
  %v5545 = vpop.f32.mrb[0].mxu0
  %5546 = vmatprep.mubr.bf16.mxu0 0
  %5547 = vmatmul.mubr.bf16.gmra.mrb[0].mxu0 %v2359
  %v5548 = vpop.f32.mrb[0].mxu0
  %v5549 = vadd.f32 0.0, %v5548
  %v5550 = vpop.f32.mrb[0].mxu0
  %v5551 = vpop.f32.mrb[0].mxu0
  %v5552 = vadd.f32 0.0, %v5551
  %v5553 = vpop.f32.mrb[0].mxu0
  %5554 = vmatprep.mubr.bf16.mxu0 0
  %5555 = vmatmul.mubr.bf16.gmra.mrb[0].mxu0 %v2362
  %v5556 = vpop.f32.mrb[0].mxu0
  %v5557 = vadd.f32 0.0, %v5556
  %v5558 = vpop.f32.mrb[0].mxu0
  %v5559 = vpop.f32.mrb[0].mxu0
  %v5560 = vadd.f32 0.0, %v5559
  %v5561 = vpop.f32.mrb[0].mxu0
  %5562 = vmatprep.mubr.bf16.mxu0 0
  %5563 = vmatmul.mubr.bf16.gmra.mrb[0].mxu0 %v2365
  %v5564 = vpop.f32.mrb[0].mxu0
  %v5565 = vadd.f32 0.0, %v5564
  %v5566 = vpop.f32.mrb[0].mxu0
  %v5567 = vpop.f32.mrb[0].mxu0
  %v5568 = vadd.f32 0.0, %v5567
  %v5569 = vpop.f32.mrb[0].mxu0
  %5570 = vmatprep.mubr.bf16.mxu0 0
  %5571 = vmatmul.mubr.bf16.gmra.mrb[0].mxu0 %v2368
  %v5572 = vpop.f32.mrb[0].mxu0
  %v5573 = vadd.f32 0.0, %v5572
  %v5574 = vpop.f32.mrb[0].mxu0
  %v5575 = vpop.f32.mrb[0].mxu0
  %v5576 = vadd.f32 0.0, %v5575
  %v5577 = vpop.f32.mrb[0].mxu0
  %5578 = vmatprep.mubr.bf16.mxu0 0
  %5579 = vmatmul.mubr.bf16.gmra.mrb[0].mxu0 %v2371
  %v5580 = vpop.f32.mrb[0].mxu0
  %v5581 = vadd.f32 0.0, %v5580
  %v5582 = vpop.f32.mrb[0].mxu0
  %v5583 = vpop.f32.mrb[0].mxu0
  %v5584 = vadd.f32 0.0, %v5583
  %v5585 = vpop.f32.mrb[0].mxu0
  %5586 = vmatprep.mubr.bf16.mxu0 0
  %5587 = vmatmul.mubr.bf16.gmra.mrb[0].mxu0 %v2374
  %v5588 = vpop.f32.mrb[0].mxu0
  %v5589 = vadd.f32 0.0, %v5588
  %v5590 = vpop.f32.mrb[0].mxu0
  %v5591 = vpop.f32.mrb[0].mxu0
  %v5592 = vadd.f32 0.0, %v5591
  %v5593 = vpop.f32.mrb[0].mxu0
  %5594 = vmatprep.mubr.bf16.mxu0 0
  %5595 = vmatmul.mubr.bf16.gmra.mrb[0].mxu0 %v2377
  %v5596 = vpop.f32.mrb[0].mxu0
  %v5597 = vadd.f32 0.0, %v5596
  %v5598 = vpop.f32.mrb[0].mxu0
  %v5599 = vpop.f32.mrb[0].mxu0
  %v5600 = vadd.f32 0.0, %v5599
  %v5601 = vpop.f32.mrb[0].mxu0
  %5602 = vmatprep.mubr.bf16.mxu0 0
  %5603 = vmatmul.mubr.bf16.gmra.mrb[0].mxu0 %v2380
  %v5604 = vpop.f32.mrb[0].mxu0
  %v5605 = vadd.f32 0.0, %v5604
  %v5606 = vpop.f32.mrb[0].mxu0
  %v5607 = vpop.f32.mrb[0].mxu0
  %v5608 = vadd.f32 0.0, %v5607
  %v5609 = vpop.f32.mrb[0].mxu0
  %5610 = vmatprep.mubr.bf16.mxu0 0
  %5611 = vmatmul.mubr.bf16.gmra.mrb[0].mxu0 %v2383
  %v5612 = vpop.f32.mrb[0].mxu0
  %v5613 = vadd.f32 0.0, %v5612
  %v5614 = vpop.f32.mrb[0].mxu0
  %v5615 = vpop.f32.mrb[0].mxu0
  %v5616 = vadd.f32 0.0, %v5615
  %v5617 = vpop.f32.mrb[0].mxu0
  %5618 = vmatprep.mubr.bf16.mxu0 0
  %5619 = vmatmul.mubr.bf16.gmra.mrb[0].mxu0 %v2386
  %v5620 = vpop.f32.mrb[0].mxu0
  %v5621 = vadd.f32 0.0, %v5620
  %v5622 = vpop.f32.mrb[0].mxu0
  %v5623 = vpop.f32.mrb[0].mxu0
  %v5624 = vadd.f32 0.0, %v5623
  %v5625 = vpop.f32.mrb[0].mxu0
  %5626 = vmatprep.mubr.bf16.mxu0 0
  %5627 = vmatmul.mubr.bf16.gmra.mrb[0].mxu0 %v2389
  %v5628 = vpop.f32.mrb[0].mxu0
  %v5629 = vadd.f32 0.0, %v5628
  %v5630 = vpop.f32.mrb[0].mxu0
  %v5631 = vpop.f32.mrb[0].mxu0
  %v5632 = vadd.f32 0.0, %v5631
  %v5633 = vpop.f32.mrb[0].mxu0
  %5634 = vmatprep.mubr.bf16.mxu0 0
  %5635 = vmatmul.mubr.bf16.gmra.mrb[0].mxu0 %v2392
  %v5636 = vpop.f32.mrb[0].mxu0
  %v5637 = vadd.f32 0.0, %v5636
  %v5638 = vpop.f32.mrb[0].mxu0
  %v5639 = vpop.f32.mrb[0].mxu0
  %v5640 = vadd.f32 0.0, %v5639
  %v5641 = vpop.f32.mrb[0].mxu0
  %5642 = vmatprep.mubr.bf16.mxu0 0
  %5643 = vmatmul.mubr.bf16.gmra.mrb[0].mxu0 %v5485
  %v5644 = vpop.f32.mrb[0].mxu0
  %v5645 = vadd.f32 0.0, %v5644
  %v5646 = vpop.f32.mrb[0].mxu0
  %v5647 = vpop.f32.mrb[0].mxu0
  %v5648 = vadd.f32 0.0, %v5647
  %v5649 = vpop.f32.mrb[0].mxu0
  %5650 = vmatprep.mubr.bf16.mxu0 0
  %5651 = vmatmul.mubr.bf16.gmra.mrb[0].mxu0 %v2398
  %v5652 = vpop.f32.mrb[0].mxu0
  %v5653 = vadd.f32 0.0, %v5652
  %v5654 = vpop.f32.mrb[0].mxu0
  %v5655 = vpop.f32.mrb[0].mxu0
  %v5656 = vadd.f32 0.0, %v5655
  %v5657 = vpop.f32.mrb[0].mxu0
  %5658 = vmatprep.mubr.bf16.mxu0 0
  %5659 = vmatmul.mubr.bf16.gmra.mrb[0].mxu0 %v2401
  %v5660 = vpop.f32.mrb[0].mxu0
  %v5661 = vadd.f32 0.0, %v5660
  %v5662 = vpop.f32.mrb[0].mxu0
  %v5663 = vpop.f32.mrb[0].mxu0
  %v5664 = vadd.f32 0.0, %v5663
  %v5665 = vpop.f32.mrb[0].mxu0
  %5666 = vmatprep.mubr.bf16.mxu0 0
  %5667 = vmatmul.mubr.bf16.gmra.mrb[0].mxu0 %v2404
  %v5668 = vpop.f32.mrb[0].mxu0
  %v5669 = vadd.f32 0.0, %v5668
  %v5670 = vpop.f32.mrb[0].mxu0
  %v5671 = vpop.f32.mrb[0].mxu0
  %v5672 = vadd.f32 0.0, %v5671
  %v5673 = vpop.f32.mrb[0].mxu0
  %5674 = vmatprep.mubr.bf16.mxu0 0
  %5675 = vmatmul.mubr.bf16.gmra.mrb[0].mxu0 %v2407
  %v5676 = vpop.f32.mrb[0].mxu0
  %v5677 = vadd.f32 0.0, %v5676
  %v5678 = vpop.f32.mrb[0].mxu0
  %v5679 = vpop.f32.mrb[0].mxu0
  %v5680 = vadd.f32 0.0, %v5679
  %v5681 = vpop.f32.mrb[0].mxu0
  %5682 = vmatprep.mubr.bf16.mxu0 0
  %5683 = vmatmul.mubr.bf16.gmra.mrb[0].mxu0 %v2410
  %v5684 = vpop.f32.mrb[0].mxu0
  %v5685 = vadd.f32 0.0, %v5684
  %v5686 = vpop.f32.mrb[0].mxu0
  %v5687 = vpop.f32.mrb[0].mxu0
  %v5688 = vadd.f32 0.0, %v5687
  %v5689 = vpop.f32.mrb[0].mxu0
  %5690 = vmatprep.mubr.bf16.mxu0 0
  %5691 = vmatmul.mubr.bf16.gmra.mrb[0].mxu0 %v2413
  %v5692 = vpop.f32.mrb[0].mxu0
  %v5693 = vadd.f32 0.0, %v5692
  %v5694 = vpop.f32.mrb[0].mxu0
  %v5695 = vpop.f32.mrb[0].mxu0
  %v5696 = vadd.f32 0.0, %v5695
  %v5697 = vpop.f32.mrb[0].mxu0
  %5698 = vmatprep.mubr.bf16.mxu0 0
  %5699 = vmatmul.mubr.bf16.gmra.mrb[0].mxu0 %v2416
  %v5700 = vpop.f32.mrb[0].mxu0
  %v5701 = vadd.f32 0.0, %v5700
  %v5702 = vpop.f32.mrb[0].mxu0
  %v5703 = vpop.f32.mrb[0].mxu0
  %v5704 = vadd.f32 0.0, %v5703
  %v5705 = vpop.f32.mrb[0].mxu0
  %5706 = vmatprep.mubr.bf16.mxu0 0
  %5707 = vmatmul.mubr.bf16.gmra.mrb[0].mxu0 %v2419
  %v5708 = vpop.f32.mrb[0].mxu0
  %v5709 = vadd.f32 0.0, %v5708
  %v5710 = vpop.f32.mrb[0].mxu0
  %v5711 = vpop.f32.mrb[0].mxu0
  %v5712 = vadd.f32 0.0, %v5711
  %v5713 = vpop.f32.mrb[0].mxu0
  %5714 = vmatprep.mubr.bf16.mxu0 0
  %5715 = vmatmul.mubr.bf16.gmra.mrb[0].mxu0 %v2422
  %v5716 = vpop.f32.mrb[0].mxu0
  %v5717 = vadd.f32 0.0, %v5716
  %v5718 = vpop.f32.mrb[0].mxu0
  %v5719 = vpop.f32.mrb[0].mxu0
  %v5720 = vadd.f32 0.0, %v5719
  %v5721 = vpop.f32.mrb[0].mxu0
  %5722 = vmatprep.mubr.bf16.mxu0 0
  %5723 = vmatmul.mubr.bf16.gmra.mrb[0].mxu0 %v2425
  %v5724 = vpop.f32.mrb[0].mxu0
  %v5725 = vadd.f32 0.0, %v5724
  %v5726 = vpop.f32.mrb[0].mxu0
  %v5727 = vpop.f32.mrb[0].mxu0
  %v5728 = vadd.f32 0.0, %v5727
  %v5729 = vpop.f32.mrb[0].mxu0
  %5730 = vmatprep.mubr.bf16.mxu0 0
  %5731 = vmatmul.mubr.bf16.gmra.mrb[0].mxu0 %v2428
  %v5732 = vpop.f32.mrb[0].mxu0
  %v5733 = vadd.f32 0.0, %v5732
  %v5734 = vpop.f32.mrb[0].mxu0
  %v5735 = vpop.f32.mrb[0].mxu0
  %v5736 = vadd.f32 0.0, %v5735
  %v5737 = vpop.f32.mrb[0].mxu0
  %5738 = vmatprep.mubr.bf16.mxu0 0
  %5739 = vmatmul.mubr.bf16.gmra.mrb[0].mxu0 %v2431
  %v5740 = vpop.f32.mrb[0].mxu0
  %v5741 = vadd.f32 0.0, %v5740
  %v5742 = vpop.f32.mrb[0].mxu0
  %v5743 = vpop.f32.mrb[0].mxu0
  %v5744 = vadd.f32 0.0, %v5743
  %v5745 = vpop.f32.mrb[0].mxu0
  %5746 = vmatprep.mubr.bf16.mxu0 0
  %5747 = vmatmul.mubr.bf16.gmra.mrb[0].mxu0 %v2434
  %v5748 = vpop.f32.mrb[0].mxu0
  %v5749 = vadd.f32 0.0, %v5748
  %v5750 = vpop.f32.mrb[0].mxu0
  %v5751 = vpop.f32.mrb[0].mxu0
  %v5752 = vadd.f32 0.0, %v5751
  %v5753 = vpop.f32.mrb[0].mxu0
  %5754 = vmatprep.mubr.bf16.mxu0 0
  %5755 = vmatmul.mubr.bf16.gmra.mrb[0].mxu0 %v2437
  %v5756 = vpop.f32.mrb[0].mxu0
  %v5757 = vadd.f32 0.0, %v5756
  %v5758 = vpop.f32.mrb[0].mxu0
  %v5759 = vpop.f32.mrb[0].mxu0
  %v5760 = vadd.f32 0.0, %v5759
  %v5761 = vpop.f32.mrb[0].mxu0
  %5762 = vmatprep.mubr.bf16.mxu0 0
  %5763 = vmatmul.mubr.bf16.gmra.mrb[0].mxu0 %v2440
  %v5764 = vpop.f32.mrb[0].mxu0
  %v5765 = vadd.f32 0.0, %v5764
  %v5766 = vpop.f32.mrb[0].mxu0
  %v5767 = vpop.f32.mrb[0].mxu0
  %v5768 = vadd.f32 0.0, %v5767
  %v5769 = vpop.f32.mrb[0].mxu0
  %5770 = vmatprep.mubr.bf16.mxu0 0
  %5771 = vmatmul.mubr.bf16.gmra.mrb[0].mxu0 %v5488
  %v5772 = vpop.f32.mrb[0].mxu0
  %v5773 = vadd.f32 0.0, %v5772
  %v5774 = vpop.f32.mrb[0].mxu0
  %v5775 = vpop.f32.mrb[0].mxu0
  %v5776 = vadd.f32 0.0, %v5775
  %v5777 = vpop.f32.mrb[0].mxu0
  %5778 = vdwg.mxu0
  %v5779 = vadd.f32 %v5381, %v5525
  %v5780 = vadd.f32 %v5382, %v5528
  %v5781 = vadd.f32 %v5383, %v5533
  %v5782 = vadd.f32 %v5384, %v5536
  %v5783 = vadd.f32 %v5385, %v5541
  %v5784 = vadd.f32 %v5386, %v5544
  %v5785 = vadd.f32 %v5387, %v5549
  %v5786 = vadd.f32 %v5388, %v5552
  %v5787 = vadd.f32 %v5389, %v5557
  %v5788 = vadd.f32 %v5390, %v5560
  %v5789 = vadd.f32 %v5391, %v5565
  %v5790 = vadd.f32 %v5392, %v5568
  %v5791 = vadd.f32 %v5393, %v5573
  %v5792 = vadd.f32 %v5394, %v5576
  %v5793 = vadd.f32 %v5395, %v5581
  %v5794 = vadd.f32 %v5396, %v5584
  %v5795 = vadd.f32 %v5397, %v5589
  %v5796 = vadd.f32 %v5398, %v5592
  %v5797 = vadd.f32 %v5399, %v5597
  %v5798 = vadd.f32 %v5400, %v5600
  %v5799 = vadd.f32 %v5401, %v5605
  %v5800 = vadd.f32 %v5402, %v5608
  %v5801 = vadd.f32 %v5403, %v5613
  %v5802 = vadd.f32 %v5404, %v5616
  %v5803 = vadd.f32 %v5405, %v5621
  %v5804 = vadd.f32 %v5406, %v5624
  %v5805 = vadd.f32 %v5407, %v5629
  %v5806 = vadd.f32 %v5408, %v5632
  %v5807 = vadd.f32 %v5409, %v5637
  %v5808 = vadd.f32 %v5410, %v5640
  %v5809 = vadd.f32 %v5411, %v5645
  %v5810 = vadd.f32 %v5412, %v5648
  %v5811 = vadd.f32 %v5413, %v5653
  %v5812 = vadd.f32 %v5414, %v5656
  %v5813 = vadd.f32 %v5415, %v5661
  %v5814 = vadd.f32 %v5416, %v5664
  %v5815 = vadd.f32 %v5417, %v5669
  %v5816 = vadd.f32 %v5418, %v5672
  %v5817 = vadd.f32 %v5419, %v5677
  %v5818 = vadd.f32 %v5420, %v5680
  %v5819 = vadd.f32 %v5421, %v5685
  %v5820 = vadd.f32 %v5422, %v5688
  %v5821 = vadd.f32 %v5423, %v5693
  %v5822 = vadd.f32 %v5424, %v5696
  %v5823 = vadd.f32 %v5425, %v5701
  %v5824 = vadd.f32 %v5426, %v5704
  %v5825 = vadd.f32 %v5427, %v5709
  %v5826 = vadd.f32 %v5428, %v5712
  %v5827 = vadd.f32 %v5429, %v5717
  %v5828 = vadd.f32 %v5430, %v5720
  %v5829 = vadd.f32 %v5431, %v5725
  %v5830 = vadd.f32 %v5432, %v5728
  %v5831 = vadd.f32 %v5433, %v5733
  %v5832 = vadd.f32 %v5434, %v5736
  %v5833 = vadd.f32 %v5435, %v5741
  %v5834 = vadd.f32 %v5436, %v5744
  %v5835 = vadd.f32 %v5437, %v5749
  %v5836 = vadd.f32 %v5438, %v5752
  %v5837 = vadd.f32 %v5439, %v5757
  %v5838 = vadd.f32 %v5440, %v5760
  %v5839 = vadd.f32 %v5441, %v5765
  %v5840 = vadd.f32 %v5442, %v5768
  %v5841 = vadd.f32 %v5443, %v5773
  %v5842 = vadd.f32 %v5444, %v5776
  %v5843 = vrot.slane %v5016, 5
  %v5844 = vrot.slane %v5019, 6
  %v5845 = vor.u32 %v5843, %v5844
  %v5846 = vrot.slane %v5845, 4
  %v5847 = vrot.slane %v5029, 5
  %v5848 = vrot.slane %v5025, 6
  %v5849 = vor.u32 %v5847, %v5848
  %v5850 = vsel %vm2797, %v5846, %v5849
  %v5851 = vrot.slane %v5849, 4
  %v5852 = vshrl.u32 %v73, 16
  %v5854 = vrot.slane %v5852, 5
  %v5855 = vrot.slane %v5035, 6
  %v5856 = vor.u32 %v5854, %v5855
  %v5857 = vsel %vm2797, %v5851, %v5856
  %v5858 = vrot.slane %v5040, 5
  %v5859 = vrot.slane %v5043, 6
  %v5860 = vor.u32 %v5858, %v5859
  %v5861 = vrot.slane %v5860, 4
  %v5862 = vrot.slane %v5053, 5
  %v5863 = vrot.slane %v5049, 6
  %v5864 = vor.u32 %v5862, %v5863
  %v5865 = vsel %vm2797, %v5861, %v5864
  %v5866 = vrot.slane %v5864, 4
  %v5867 = vshrl.u32 %v133, 16
  %v5869 = vrot.slane %v5867, 5
  %v5870 = vrot.slane %v5059, 6
  %v5871 = vor.u32 %v5869, %v5870
  %v5872 = vsel %vm2797, %v5866, %v5871
  %s5873 = scalar_lea.vmem %s1, 128
  %v5874 = vld [vmem:[%s5873] sm:$0xf]
  %v5875 = vld [vmem:[%s5873 + $0x4] sm:$0xf]
  %v5876 = vld [vmem:[%s5873 + $0x8] sm:$0xf]
  %v5877 = vld [vmem:[%s5873 + $0xc] sm:$0xf]
  %v5878 = vunpack.c.l.b16 %v5850
  %v5879 = vunpack.c.l.b16 %v5857
  %v5880 = vunpack.c.l.b16 %v5865
  %v5881 = vunpack.c.l.b16 %v5872
  %v5882 = vpack.c.b16 %v5879, %v5878
  %v5883 = vpack.c.b16 %v5881, %v5880
  %v5888 = vunpack.c.l.b16 %v5874
  %v5889 = vunpack.c.l.b16 %v5875
  %v5890 = vunpack.c.l.b16 %v5876
  %v5891 = vunpack.c.l.b16 %v5877
  %v5892 = vpack.c.b16 %v5889, %v5888
  %v5893 = vpack.c.b16 %v5891, %v5890
  %v5897 = vsel %vm1031, %v5882, 0
  %v5900 = vsel %vm1031, %v5883, 0
  %5902 = vmatprep.subr.bf16.mxu0 0
  %5903 = vmatpush1.bf16.msra.mxu0 %v5892
  %5904 = vmatprep.subr.bf16.mxu0 0
  %5905 = vmatpush1.bf16.msra.mxu0 %v5893
  %5906 = vmatprep.subr.bf16.mxu0 0
  %5907 = vmatpush1.bf16.msra.mxu0 0
  %5908 = vmatprep.subr.bf16.mxu0 0
  %5909 = vmatpush1.bf16.msra.mxu0 0
  %5910 = vmatprep.subr.bf16.mxu0 0
  %5911 = vmatpush1.bf16.msra.mxu0 0
  %5912 = vmatprep.subr.bf16.mxu0 0
  %5913 = vmatpush1.bf16.msra.mxu0 0
  %5914 = vmatprep.subr.bf16.mxu0 0
  %5915 = vmatpush1.bf16.msra.mxu0 0
  %5916 = vmatprep.subr.bf16.mxu0 0
  %5917 = vmatpush1.bf16.msra.mxu0 0
  %5918 = vmatprep.subr.bf16.mxu0 0
  %5919 = vmatpush1.bf16.msra.mxu0 0
  %5920 = vmatprep.subr.bf16.mxu0 0
  %5921 = vmatpush1.bf16.msra.mxu0 0
  %5922 = vmatprep.subr.bf16.mxu0 0
  %5923 = vmatpush1.bf16.msra.mxu0 0
  %5924 = vmatprep.subr.bf16.mxu0 0
  %5925 = vmatpush1.bf16.msra.mxu0 0
  %5926 = vmatprep.subr.bf16.mxu0 0
  %5927 = vmatpush1.bf16.msra.mxu0 0
  %5928 = vmatprep.subr.bf16.mxu0 0
  %5929 = vmatpush1.bf16.msra.mxu0 0
  %5930 = vmatprep.subr.bf16.mxu0 0
  %5931 = vmatpush1.bf16.msra.mxu0 0
  %5932 = vmatprep.subr.bf16.mxu0 0
  %5933 = vmatpush1.bf16.msra.mxu0 0
  %5934 = vmatprep.mubr.bf16.mxu0 0
  %5935 = vmatmul.mubr.bf16.gmra.mrb[0].mxu0 %v3395
  %v5936 = vpop.f32.mrb[0].mxu0
  %v5937 = vadd.f32 0.0, %v5936
  %v5938 = vpop.f32.mrb[0].mxu0
  %v5939 = vpop.f32.mrb[0].mxu0
  %v5940 = vadd.f32 0.0, %v5939
  %v5941 = vpop.f32.mrb[0].mxu0
  %5942 = vmatprep.mubr.bf16.mxu0 0
  %5943 = vmatmul.mubr.bf16.gmra.mrb[0].mxu0 %v3398
  %v5944 = vpop.f32.mrb[0].mxu0
  %v5945 = vadd.f32 0.0, %v5944
  %v5946 = vpop.f32.mrb[0].mxu0
  %v5947 = vpop.f32.mrb[0].mxu0
  %v5948 = vadd.f32 0.0, %v5947
  %v5949 = vpop.f32.mrb[0].mxu0
  %5950 = vmatprep.mubr.bf16.mxu0 0
  %5951 = vmatmul.mubr.bf16.gmra.mrb[0].mxu0 %v3401
  %v5952 = vpop.f32.mrb[0].mxu0
  %v5953 = vadd.f32 0.0, %v5952
  %v5954 = vpop.f32.mrb[0].mxu0
  %v5955 = vpop.f32.mrb[0].mxu0
  %v5956 = vadd.f32 0.0, %v5955
  %v5957 = vpop.f32.mrb[0].mxu0
  %5958 = vmatprep.mubr.bf16.mxu0 0
  %5959 = vmatmul.mubr.bf16.gmra.mrb[0].mxu0 %v3404
  %v5960 = vpop.f32.mrb[0].mxu0
  %v5961 = vadd.f32 0.0, %v5960
  %v5962 = vpop.f32.mrb[0].mxu0
  %v5963 = vpop.f32.mrb[0].mxu0
  %v5964 = vadd.f32 0.0, %v5963
  %v5965 = vpop.f32.mrb[0].mxu0
  %5966 = vmatprep.mubr.bf16.mxu0 0
  %5967 = vmatmul.mubr.bf16.gmra.mrb[0].mxu0 %v3407
  %v5968 = vpop.f32.mrb[0].mxu0
  %v5969 = vadd.f32 0.0, %v5968
  %v5970 = vpop.f32.mrb[0].mxu0
  %v5971 = vpop.f32.mrb[0].mxu0
  %v5972 = vadd.f32 0.0, %v5971
  %v5973 = vpop.f32.mrb[0].mxu0
  %5974 = vmatprep.mubr.bf16.mxu0 0
  %5975 = vmatmul.mubr.bf16.gmra.mrb[0].mxu0 %v3410
  %v5976 = vpop.f32.mrb[0].mxu0
  %v5977 = vadd.f32 0.0, %v5976
  %v5978 = vpop.f32.mrb[0].mxu0
  %v5979 = vpop.f32.mrb[0].mxu0
  %v5980 = vadd.f32 0.0, %v5979
  %v5981 = vpop.f32.mrb[0].mxu0
  %5982 = vmatprep.mubr.bf16.mxu0 0
  %5983 = vmatmul.mubr.bf16.gmra.mrb[0].mxu0 %v3413
  %v5984 = vpop.f32.mrb[0].mxu0
  %v5985 = vadd.f32 0.0, %v5984
  %v5986 = vpop.f32.mrb[0].mxu0
  %v5987 = vpop.f32.mrb[0].mxu0
  %v5988 = vadd.f32 0.0, %v5987
  %v5989 = vpop.f32.mrb[0].mxu0
  %5990 = vmatprep.mubr.bf16.mxu0 0
  %5991 = vmatmul.mubr.bf16.gmra.mrb[0].mxu0 %v3416
  %v5992 = vpop.f32.mrb[0].mxu0
  %v5993 = vadd.f32 0.0, %v5992
  %v5994 = vpop.f32.mrb[0].mxu0
  %v5995 = vpop.f32.mrb[0].mxu0
  %v5996 = vadd.f32 0.0, %v5995
  %v5997 = vpop.f32.mrb[0].mxu0
  %5998 = vmatprep.mubr.bf16.mxu0 0
  %5999 = vmatmul.mubr.bf16.gmra.mrb[0].mxu0 %v3419
  %v6000 = vpop.f32.mrb[0].mxu0
  %v6001 = vadd.f32 0.0, %v6000
  %v6002 = vpop.f32.mrb[0].mxu0
  %v6003 = vpop.f32.mrb[0].mxu0
  %v6004 = vadd.f32 0.0, %v6003
  %v6005 = vpop.f32.mrb[0].mxu0
  %6006 = vmatprep.mubr.bf16.mxu0 0
  %6007 = vmatmul.mubr.bf16.gmra.mrb[0].mxu0 %v3422
  %v6008 = vpop.f32.mrb[0].mxu0
  %v6009 = vadd.f32 0.0, %v6008
  %v6010 = vpop.f32.mrb[0].mxu0
  %v6011 = vpop.f32.mrb[0].mxu0
  %v6012 = vadd.f32 0.0, %v6011
  %v6013 = vpop.f32.mrb[0].mxu0
  %6014 = vmatprep.mubr.bf16.mxu0 0
  %6015 = vmatmul.mubr.bf16.gmra.mrb[0].mxu0 %v3425
  %v6016 = vpop.f32.mrb[0].mxu0
  %v6017 = vadd.f32 0.0, %v6016
  %v6018 = vpop.f32.mrb[0].mxu0
  %v6019 = vpop.f32.mrb[0].mxu0
  %v6020 = vadd.f32 0.0, %v6019
  %v6021 = vpop.f32.mrb[0].mxu0
  %6022 = vmatprep.mubr.bf16.mxu0 0
  %6023 = vmatmul.mubr.bf16.gmra.mrb[0].mxu0 %v3428
  %v6024 = vpop.f32.mrb[0].mxu0
  %v6025 = vadd.f32 0.0, %v6024
  %v6026 = vpop.f32.mrb[0].mxu0
  %v6027 = vpop.f32.mrb[0].mxu0
  %v6028 = vadd.f32 0.0, %v6027
  %v6029 = vpop.f32.mrb[0].mxu0
  %6030 = vmatprep.mubr.bf16.mxu0 0
  %6031 = vmatmul.mubr.bf16.gmra.mrb[0].mxu0 %v3431
  %v6032 = vpop.f32.mrb[0].mxu0
  %v6033 = vadd.f32 0.0, %v6032
  %v6034 = vpop.f32.mrb[0].mxu0
  %v6035 = vpop.f32.mrb[0].mxu0
  %v6036 = vadd.f32 0.0, %v6035
  %v6037 = vpop.f32.mrb[0].mxu0
  %6038 = vmatprep.mubr.bf16.mxu0 0
  %6039 = vmatmul.mubr.bf16.gmra.mrb[0].mxu0 %v3434
  %v6040 = vpop.f32.mrb[0].mxu0
  %v6041 = vadd.f32 0.0, %v6040
  %v6042 = vpop.f32.mrb[0].mxu0
  %v6043 = vpop.f32.mrb[0].mxu0
  %v6044 = vadd.f32 0.0, %v6043
  %v6045 = vpop.f32.mrb[0].mxu0
  %6046 = vmatprep.mubr.bf16.mxu0 0
  %6047 = vmatmul.mubr.bf16.gmra.mrb[0].mxu0 %v3437
  %v6048 = vpop.f32.mrb[0].mxu0
  %v6049 = vadd.f32 0.0, %v6048
  %v6050 = vpop.f32.mrb[0].mxu0
  %v6051 = vpop.f32.mrb[0].mxu0
  %v6052 = vadd.f32 0.0, %v6051
  %v6053 = vpop.f32.mrb[0].mxu0
  %6054 = vmatprep.mubr.bf16.mxu0 0
  %6055 = vmatmul.mubr.bf16.gmra.mrb[0].mxu0 %v5897
  %v6056 = vpop.f32.mrb[0].mxu0
  %v6057 = vadd.f32 0.0, %v6056
  %v6058 = vpop.f32.mrb[0].mxu0
  %v6059 = vpop.f32.mrb[0].mxu0
  %v6060 = vadd.f32 0.0, %v6059
  %v6061 = vpop.f32.mrb[0].mxu0
  %6062 = vmatprep.mubr.bf16.mxu0 0
  %6063 = vmatmul.mubr.bf16.gmra.mrb[0].mxu0 %v3443
  %v6064 = vpop.f32.mrb[0].mxu0
  %v6065 = vadd.f32 0.0, %v6064
  %v6066 = vpop.f32.mrb[0].mxu0
  %v6067 = vpop.f32.mrb[0].mxu0
  %v6068 = vadd.f32 0.0, %v6067
  %v6069 = vpop.f32.mrb[0].mxu0
  %6070 = vmatprep.mubr.bf16.mxu0 0
  %6071 = vmatmul.mubr.bf16.gmra.mrb[0].mxu0 %v3446
  %v6072 = vpop.f32.mrb[0].mxu0
  %v6073 = vadd.f32 0.0, %v6072
  %v6074 = vpop.f32.mrb[0].mxu0
  %v6075 = vpop.f32.mrb[0].mxu0
  %v6076 = vadd.f32 0.0, %v6075
  %v6077 = vpop.f32.mrb[0].mxu0
  %6078 = vmatprep.mubr.bf16.mxu0 0
  %6079 = vmatmul.mubr.bf16.gmra.mrb[0].mxu0 %v3449
  %v6080 = vpop.f32.mrb[0].mxu0
  %v6081 = vadd.f32 0.0, %v6080
  %v6082 = vpop.f32.mrb[0].mxu0
  %v6083 = vpop.f32.mrb[0].mxu0
  %v6084 = vadd.f32 0.0, %v6083
  %v6085 = vpop.f32.mrb[0].mxu0
  %6086 = vmatprep.mubr.bf16.mxu0 0
  %6087 = vmatmul.mubr.bf16.gmra.mrb[0].mxu0 %v3452
  %v6088 = vpop.f32.mrb[0].mxu0
  %v6089 = vadd.f32 0.0, %v6088
  %v6090 = vpop.f32.mrb[0].mxu0
  %v6091 = vpop.f32.mrb[0].mxu0
  %v6092 = vadd.f32 0.0, %v6091
  %v6093 = vpop.f32.mrb[0].mxu0
  %6094 = vmatprep.mubr.bf16.mxu0 0
  %6095 = vmatmul.mubr.bf16.gmra.mrb[0].mxu0 %v3455
  %v6096 = vpop.f32.mrb[0].mxu0
  %v6097 = vadd.f32 0.0, %v6096
  %v6098 = vpop.f32.mrb[0].mxu0
  %v6099 = vpop.f32.mrb[0].mxu0
  %v6100 = vadd.f32 0.0, %v6099
  %v6101 = vpop.f32.mrb[0].mxu0
  %6102 = vmatprep.mubr.bf16.mxu0 0
  %6103 = vmatmul.mubr.bf16.gmra.mrb[0].mxu0 %v3458
  %v6104 = vpop.f32.mrb[0].mxu0
  %v6105 = vadd.f32 0.0, %v6104
  %v6106 = vpop.f32.mrb[0].mxu0
  %v6107 = vpop.f32.mrb[0].mxu0
  %v6108 = vadd.f32 0.0, %v6107
  %v6109 = vpop.f32.mrb[0].mxu0
  %6110 = vmatprep.mubr.bf16.mxu0 0
  %6111 = vmatmul.mubr.bf16.gmra.mrb[0].mxu0 %v3461
  %v6112 = vpop.f32.mrb[0].mxu0
  %v6113 = vadd.f32 0.0, %v6112
  %v6114 = vpop.f32.mrb[0].mxu0
  %v6115 = vpop.f32.mrb[0].mxu0
  %v6116 = vadd.f32 0.0, %v6115
  %v6117 = vpop.f32.mrb[0].mxu0
  %6118 = vmatprep.mubr.bf16.mxu0 0
  %6119 = vmatmul.mubr.bf16.gmra.mrb[0].mxu0 %v3464
  %v6120 = vpop.f32.mrb[0].mxu0
  %v6121 = vadd.f32 0.0, %v6120
  %v6122 = vpop.f32.mrb[0].mxu0
  %v6123 = vpop.f32.mrb[0].mxu0
  %v6124 = vadd.f32 0.0, %v6123
  %v6125 = vpop.f32.mrb[0].mxu0
  %6126 = vmatprep.mubr.bf16.mxu0 0
  %6127 = vmatmul.mubr.bf16.gmra.mrb[0].mxu0 %v3467
  %v6128 = vpop.f32.mrb[0].mxu0
  %v6129 = vadd.f32 0.0, %v6128
  %v6130 = vpop.f32.mrb[0].mxu0
  %v6131 = vpop.f32.mrb[0].mxu0
  %v6132 = vadd.f32 0.0, %v6131
  %v6133 = vpop.f32.mrb[0].mxu0
  %6134 = vmatprep.mubr.bf16.mxu0 0
  %6135 = vmatmul.mubr.bf16.gmra.mrb[0].mxu0 %v3470
  %v6136 = vpop.f32.mrb[0].mxu0
  %v6137 = vadd.f32 0.0, %v6136
  %v6138 = vpop.f32.mrb[0].mxu0
  %v6139 = vpop.f32.mrb[0].mxu0
  %v6140 = vadd.f32 0.0, %v6139
  %v6141 = vpop.f32.mrb[0].mxu0
  %6142 = vmatprep.mubr.bf16.mxu0 0
  %6143 = vmatmul.mubr.bf16.gmra.mrb[0].mxu0 %v3473
  %v6144 = vpop.f32.mrb[0].mxu0
  %v6145 = vadd.f32 0.0, %v6144
  %v6146 = vpop.f32.mrb[0].mxu0
  %v6147 = vpop.f32.mrb[0].mxu0
  %v6148 = vadd.f32 0.0, %v6147
  %v6149 = vpop.f32.mrb[0].mxu0
  %6150 = vmatprep.mubr.bf16.mxu0 0
  %6151 = vmatmul.mubr.bf16.gmra.mrb[0].mxu0 %v3476
  %v6152 = vpop.f32.mrb[0].mxu0
  %v6153 = vadd.f32 0.0, %v6152
  %v6154 = vpop.f32.mrb[0].mxu0
  %v6155 = vpop.f32.mrb[0].mxu0
  %v6156 = vadd.f32 0.0, %v6155
  %v6157 = vpop.f32.mrb[0].mxu0
  %6158 = vmatprep.mubr.bf16.mxu0 0
  %6159 = vmatmul.mubr.bf16.gmra.mrb[0].mxu0 %v3479
  %v6160 = vpop.f32.mrb[0].mxu0
  %v6161 = vadd.f32 0.0, %v6160
  %v6162 = vpop.f32.mrb[0].mxu0
  %v6163 = vpop.f32.mrb[0].mxu0
  %v6164 = vadd.f32 0.0, %v6163
  %v6165 = vpop.f32.mrb[0].mxu0
  %6166 = vmatprep.mubr.bf16.mxu0 0
  %6167 = vmatmul.mubr.bf16.gmra.mrb[0].mxu0 %v3482
  %v6168 = vpop.f32.mrb[0].mxu0
  %v6169 = vadd.f32 0.0, %v6168
  %v6170 = vpop.f32.mrb[0].mxu0
  %v6171 = vpop.f32.mrb[0].mxu0
  %v6172 = vadd.f32 0.0, %v6171
  %v6173 = vpop.f32.mrb[0].mxu0
  %6174 = vmatprep.mubr.bf16.mxu0 0
  %6175 = vmatmul.mubr.bf16.gmra.mrb[0].mxu0 %v3485
  %v6176 = vpop.f32.mrb[0].mxu0
  %v6177 = vadd.f32 0.0, %v6176
  %v6178 = vpop.f32.mrb[0].mxu0
  %v6179 = vpop.f32.mrb[0].mxu0
  %v6180 = vadd.f32 0.0, %v6179
  %v6181 = vpop.f32.mrb[0].mxu0
  %6182 = vmatprep.mubr.bf16.mxu0 0
  %6183 = vmatmul.mubr.bf16.gmra.mrb[0].mxu0 %v5900
  %v6184 = vpop.f32.mrb[0].mxu0
  %v6185 = vadd.f32 0.0, %v6184
  %v6186 = vpop.f32.mrb[0].mxu0
  %v6187 = vpop.f32.mrb[0].mxu0
  %v6188 = vadd.f32 0.0, %v6187
  %v6189 = vpop.f32.mrb[0].mxu0
  %6190 = vdwg.mxu0
  %v6191 = vadd.f32 %v5779, %v5937
  %v6192 = vadd.f32 %v5780, %v5940
  %v6193 = vadd.f32 %v5781, %v5945
  %v6194 = vadd.f32 %v5782, %v5948
  %v6195 = vadd.f32 %v5783, %v5953
  %v6196 = vadd.f32 %v5784, %v5956
  %v6197 = vadd.f32 %v5785, %v5961
  %v6198 = vadd.f32 %v5786, %v5964
  %v6199 = vadd.f32 %v5787, %v5969
  %v6200 = vadd.f32 %v5788, %v5972
  %v6201 = vadd.f32 %v5789, %v5977
  %v6202 = vadd.f32 %v5790, %v5980
  %v6203 = vadd.f32 %v5791, %v5985
  %v6204 = vadd.f32 %v5792, %v5988
  %v6205 = vadd.f32 %v5793, %v5993
  %v6206 = vadd.f32 %v5794, %v5996
  %v6207 = vadd.f32 %v5795, %v6001
  %v6208 = vadd.f32 %v5796, %v6004
  %v6209 = vadd.f32 %v5797, %v6009
  %v6210 = vadd.f32 %v5798, %v6012
  %v6211 = vadd.f32 %v5799, %v6017
  %v6212 = vadd.f32 %v5800, %v6020
  %v6213 = vadd.f32 %v5801, %v6025
  %v6214 = vadd.f32 %v5802, %v6028
  %v6215 = vadd.f32 %v5803, %v6033
  %v6216 = vadd.f32 %v5804, %v6036
  %v6217 = vadd.f32 %v5805, %v6041
  %v6218 = vadd.f32 %v5806, %v6044
  %v6219 = vadd.f32 %v5807, %v6049
  %v6220 = vadd.f32 %v5808, %v6052
  %v6221 = vadd.f32 %v5809, %v6057
  %v6222 = vadd.f32 %v5810, %v6060
  %v6223 = vadd.f32 %v5811, %v6065
  %v6224 = vadd.f32 %v5812, %v6068
  %v6225 = vadd.f32 %v5813, %v6073
  %v6226 = vadd.f32 %v5814, %v6076
  %v6227 = vadd.f32 %v5815, %v6081
  %v6228 = vadd.f32 %v5816, %v6084
  %v6229 = vadd.f32 %v5817, %v6089
  %v6230 = vadd.f32 %v5818, %v6092
  %v6231 = vadd.f32 %v5819, %v6097
  %v6232 = vadd.f32 %v5820, %v6100
  %v6233 = vadd.f32 %v5821, %v6105
  %v6234 = vadd.f32 %v5822, %v6108
  %v6235 = vadd.f32 %v5823, %v6113
  %v6236 = vadd.f32 %v5824, %v6116
  %v6237 = vadd.f32 %v5825, %v6121
  %v6238 = vadd.f32 %v5826, %v6124
  %v6239 = vadd.f32 %v5827, %v6129
  %v6240 = vadd.f32 %v5828, %v6132
  %v6241 = vadd.f32 %v5829, %v6137
  %v6242 = vadd.f32 %v5830, %v6140
  %v6243 = vadd.f32 %v5831, %v6145
  %v6244 = vadd.f32 %v5832, %v6148
  %v6245 = vadd.f32 %v5833, %v6153
  %v6246 = vadd.f32 %v5834, %v6156
  %v6247 = vadd.f32 %v5835, %v6161
  %v6248 = vadd.f32 %v5836, %v6164
  %v6249 = vadd.f32 %v5837, %v6169
  %v6250 = vadd.f32 %v5838, %v6172
  %v6251 = vadd.f32 %v5839, %v6177
  %v6252 = vadd.f32 %v5840, %v6180
  %v6253 = vadd.f32 %v5841, %v6185
  %v6254 = vadd.f32 %v5842, %v6188
  %v6255 = vrot.slane %v71, 6
  %v6256 = vrot.slane %v6255, 4
  %v6257 = vrot.slane %v72, 6
  %v6258 = vsel %vm3842, %v6256, %v6257
  %v6259 = vrot.slane %v6257, 4
  %v6260 = vrot.slane %v73, 6
  %v6261 = vsel %vm3842, %v6259, %v6260
  %v6262 = vrot.slane %v131, 6
  %v6263 = vrot.slane %v6262, 4
  %v6264 = vrot.slane %v132, 6
  %v6265 = vsel %vm3842, %v6263, %v6264
  %v6266 = vrot.slane %v6264, 4
  %v6267 = vrot.slane %v133, 6
  %v6268 = vsel %vm3842, %v6266, %v6267
  %s6269 = scalar_lea.vmem %s1, 144
  %v6270 = vld [vmem:[%s6269] sm:$0xf]
  %v6271 = vld [vmem:[%s6269 + $0x4] sm:$0xf]
  %v6272 = vld [vmem:[%s6269 + $0x8] sm:$0xf]
  %v6273 = vld [vmem:[%s6269 + $0xc] sm:$0xf]
  %v6274 = vunpack.c.l.b16 %v6258
  %v6275 = vunpack.c.l.b16 %v6261
  %v6276 = vunpack.c.l.b16 %v6265
  %v6277 = vunpack.c.l.b16 %v6268
  %v6278 = vpack.c.b16 %v6275, %v6274
  %v6279 = vpack.c.b16 %v6277, %v6276
  %v6284 = vunpack.c.l.b16 %v6270
  %v6285 = vunpack.c.l.b16 %v6271
  %v6286 = vunpack.c.l.b16 %v6272
  %v6287 = vunpack.c.l.b16 %v6273
  %v6288 = vpack.c.b16 %v6285, %v6284
  %v6289 = vpack.c.b16 %v6287, %v6286
  %v6293 = vsel %vm1031, %v6278, 0
  %v6296 = vsel %vm1031, %v6279, 0
  %6298 = vmatprep.subr.bf16.mxu0 0
  %6299 = vmatpush1.bf16.msra.mxu0 %v6288
  %6300 = vmatprep.subr.bf16.mxu0 0
  %6301 = vmatpush1.bf16.msra.mxu0 %v6289
  %6302 = vmatprep.subr.bf16.mxu0 0
  %6303 = vmatpush1.bf16.msra.mxu0 0
  %6304 = vmatprep.subr.bf16.mxu0 0
  %6305 = vmatpush1.bf16.msra.mxu0 0
  %6306 = vmatprep.subr.bf16.mxu0 0
  %6307 = vmatpush1.bf16.msra.mxu0 0
  %6308 = vmatprep.subr.bf16.mxu0 0
  %6309 = vmatpush1.bf16.msra.mxu0 0
  %6310 = vmatprep.subr.bf16.mxu0 0
  %6311 = vmatpush1.bf16.msra.mxu0 0
  %6312 = vmatprep.subr.bf16.mxu0 0
  %6313 = vmatpush1.bf16.msra.mxu0 0
  %6314 = vmatprep.subr.bf16.mxu0 0
  %6315 = vmatpush1.bf16.msra.mxu0 0
  %6316 = vmatprep.subr.bf16.mxu0 0
  %6317 = vmatpush1.bf16.msra.mxu0 0
  %6318 = vmatprep.subr.bf16.mxu0 0
  %6319 = vmatpush1.bf16.msra.mxu0 0
  %6320 = vmatprep.subr.bf16.mxu0 0
  %6321 = vmatpush1.bf16.msra.mxu0 0
  %6322 = vmatprep.subr.bf16.mxu0 0
  %6323 = vmatpush1.bf16.msra.mxu0 0
  %6324 = vmatprep.subr.bf16.mxu0 0
  %6325 = vmatpush1.bf16.msra.mxu0 0
  %6326 = vmatprep.subr.bf16.mxu0 0
  %6327 = vmatpush1.bf16.msra.mxu0 0
  %6328 = vmatprep.subr.bf16.mxu0 0
  %6329 = vmatpush1.bf16.msra.mxu0 0
  %6330 = vmatprep.mubr.bf16.mxu0 0
  %6331 = vmatmul.mubr.bf16.gmra.mrb[0].mxu0 %v4184
  %v6332 = vpop.f32.mrb[0].mxu0
  %v6333 = vadd.f32 0.0, %v6332
  %v6334 = vpop.f32.mrb[0].mxu0
  %v6335 = vpop.f32.mrb[0].mxu0
  %v6336 = vadd.f32 0.0, %v6335
  %v6337 = vpop.f32.mrb[0].mxu0
  %6338 = vmatprep.mubr.bf16.mxu0 0
  %6339 = vmatmul.mubr.bf16.gmra.mrb[0].mxu0 %v4187
  %v6340 = vpop.f32.mrb[0].mxu0
  %v6341 = vadd.f32 0.0, %v6340
  %v6342 = vpop.f32.mrb[0].mxu0
  %v6343 = vpop.f32.mrb[0].mxu0
  %v6344 = vadd.f32 0.0, %v6343
  %v6345 = vpop.f32.mrb[0].mxu0
  %6346 = vmatprep.mubr.bf16.mxu0 0
  %6347 = vmatmul.mubr.bf16.gmra.mrb[0].mxu0 %v4190
  %v6348 = vpop.f32.mrb[0].mxu0
  %v6349 = vadd.f32 0.0, %v6348
  %v6350 = vpop.f32.mrb[0].mxu0
  %v6351 = vpop.f32.mrb[0].mxu0
  %v6352 = vadd.f32 0.0, %v6351
  %v6353 = vpop.f32.mrb[0].mxu0
  %6354 = vmatprep.mubr.bf16.mxu0 0
  %6355 = vmatmul.mubr.bf16.gmra.mrb[0].mxu0 %v4193
  %v6356 = vpop.f32.mrb[0].mxu0
  %v6357 = vadd.f32 0.0, %v6356
  %v6358 = vpop.f32.mrb[0].mxu0
  %v6359 = vpop.f32.mrb[0].mxu0
  %v6360 = vadd.f32 0.0, %v6359
  %v6361 = vpop.f32.mrb[0].mxu0
  %6362 = vmatprep.mubr.bf16.mxu0 0
  %6363 = vmatmul.mubr.bf16.gmra.mrb[0].mxu0 %v4196
  %v6364 = vpop.f32.mrb[0].mxu0
  %v6365 = vadd.f32 0.0, %v6364
  %v6366 = vpop.f32.mrb[0].mxu0
  %v6367 = vpop.f32.mrb[0].mxu0
  %v6368 = vadd.f32 0.0, %v6367
  %v6369 = vpop.f32.mrb[0].mxu0
  %6370 = vmatprep.mubr.bf16.mxu0 0
  %6371 = vmatmul.mubr.bf16.gmra.mrb[0].mxu0 %v4199
  %v6372 = vpop.f32.mrb[0].mxu0
  %v6373 = vadd.f32 0.0, %v6372
  %v6374 = vpop.f32.mrb[0].mxu0
  %v6375 = vpop.f32.mrb[0].mxu0
  %v6376 = vadd.f32 0.0, %v6375
  %v6377 = vpop.f32.mrb[0].mxu0
  %6378 = vmatprep.mubr.bf16.mxu0 0
  %6379 = vmatmul.mubr.bf16.gmra.mrb[0].mxu0 %v4202
  %v6380 = vpop.f32.mrb[0].mxu0
  %v6381 = vadd.f32 0.0, %v6380
  %v6382 = vpop.f32.mrb[0].mxu0
  %v6383 = vpop.f32.mrb[0].mxu0
  %v6384 = vadd.f32 0.0, %v6383
  %v6385 = vpop.f32.mrb[0].mxu0
  %6386 = vmatprep.mubr.bf16.mxu0 0
  %6387 = vmatmul.mubr.bf16.gmra.mrb[0].mxu0 %v4205
  %v6388 = vpop.f32.mrb[0].mxu0
  %v6389 = vadd.f32 0.0, %v6388
  %v6390 = vpop.f32.mrb[0].mxu0
  %v6391 = vpop.f32.mrb[0].mxu0
  %v6392 = vadd.f32 0.0, %v6391
  %v6393 = vpop.f32.mrb[0].mxu0
  %6394 = vmatprep.mubr.bf16.mxu0 0
  %6395 = vmatmul.mubr.bf16.gmra.mrb[0].mxu0 %v4208
  %v6396 = vpop.f32.mrb[0].mxu0
  %v6397 = vadd.f32 0.0, %v6396
  %v6398 = vpop.f32.mrb[0].mxu0
  %v6399 = vpop.f32.mrb[0].mxu0
  %v6400 = vadd.f32 0.0, %v6399
  %v6401 = vpop.f32.mrb[0].mxu0
  %6402 = vmatprep.mubr.bf16.mxu0 0
  %6403 = vmatmul.mubr.bf16.gmra.mrb[0].mxu0 %v4211
  %v6404 = vpop.f32.mrb[0].mxu0
  %v6405 = vadd.f32 0.0, %v6404
  %v6406 = vpop.f32.mrb[0].mxu0
  %v6407 = vpop.f32.mrb[0].mxu0
  %v6408 = vadd.f32 0.0, %v6407
  %v6409 = vpop.f32.mrb[0].mxu0
  %6410 = vmatprep.mubr.bf16.mxu0 0
  %6411 = vmatmul.mubr.bf16.gmra.mrb[0].mxu0 %v4214
  %v6412 = vpop.f32.mrb[0].mxu0
  %v6413 = vadd.f32 0.0, %v6412
  %v6414 = vpop.f32.mrb[0].mxu0
  %v6415 = vpop.f32.mrb[0].mxu0
  %v6416 = vadd.f32 0.0, %v6415
  %v6417 = vpop.f32.mrb[0].mxu0
  %6418 = vmatprep.mubr.bf16.mxu0 0
  %6419 = vmatmul.mubr.bf16.gmra.mrb[0].mxu0 %v4217
  %v6420 = vpop.f32.mrb[0].mxu0
  %v6421 = vadd.f32 0.0, %v6420
  %v6422 = vpop.f32.mrb[0].mxu0
  %v6423 = vpop.f32.mrb[0].mxu0
  %v6424 = vadd.f32 0.0, %v6423
  %v6425 = vpop.f32.mrb[0].mxu0
  %6426 = vmatprep.mubr.bf16.mxu0 0
  %6427 = vmatmul.mubr.bf16.gmra.mrb[0].mxu0 %v4220
  %v6428 = vpop.f32.mrb[0].mxu0
  %v6429 = vadd.f32 0.0, %v6428
  %v6430 = vpop.f32.mrb[0].mxu0
  %v6431 = vpop.f32.mrb[0].mxu0
  %v6432 = vadd.f32 0.0, %v6431
  %v6433 = vpop.f32.mrb[0].mxu0
  %6434 = vmatprep.mubr.bf16.mxu0 0
  %6435 = vmatmul.mubr.bf16.gmra.mrb[0].mxu0 %v4223
  %v6436 = vpop.f32.mrb[0].mxu0
  %v6437 = vadd.f32 0.0, %v6436
  %v6438 = vpop.f32.mrb[0].mxu0
  %v6439 = vpop.f32.mrb[0].mxu0
  %v6440 = vadd.f32 0.0, %v6439
  %v6441 = vpop.f32.mrb[0].mxu0
  %6442 = vmatprep.mubr.bf16.mxu0 0
  %6443 = vmatmul.mubr.bf16.gmra.mrb[0].mxu0 %v4226
  %v6444 = vpop.f32.mrb[0].mxu0
  %v6445 = vadd.f32 0.0, %v6444
  %v6446 = vpop.f32.mrb[0].mxu0
  %v6447 = vpop.f32.mrb[0].mxu0
  %v6448 = vadd.f32 0.0, %v6447
  %v6449 = vpop.f32.mrb[0].mxu0
  %6450 = vmatprep.mubr.bf16.mxu0 0
  %6451 = vmatmul.mubr.bf16.gmra.mrb[0].mxu0 %v6293
  %v6452 = vpop.f32.mrb[0].mxu0
  %v6453 = vadd.f32 0.0, %v6452
  %v6454 = vpop.f32.mrb[0].mxu0
  %v6455 = vpop.f32.mrb[0].mxu0
  %v6456 = vadd.f32 0.0, %v6455
  %v6457 = vpop.f32.mrb[0].mxu0
  %6458 = vmatprep.mubr.bf16.mxu0 0
  %6459 = vmatmul.mubr.bf16.gmra.mrb[0].mxu0 %v4232
  %v6460 = vpop.f32.mrb[0].mxu0
  %v6461 = vadd.f32 0.0, %v6460
  %v6462 = vpop.f32.mrb[0].mxu0
  %v6463 = vpop.f32.mrb[0].mxu0
  %v6464 = vadd.f32 0.0, %v6463
  %v6465 = vpop.f32.mrb[0].mxu0
  %6466 = vmatprep.mubr.bf16.mxu0 0
  %6467 = vmatmul.mubr.bf16.gmra.mrb[0].mxu0 %v4235
  %v6468 = vpop.f32.mrb[0].mxu0
  %v6469 = vadd.f32 0.0, %v6468
  %v6470 = vpop.f32.mrb[0].mxu0
  %v6471 = vpop.f32.mrb[0].mxu0
  %v6472 = vadd.f32 0.0, %v6471
  %v6473 = vpop.f32.mrb[0].mxu0
  %6474 = vmatprep.mubr.bf16.mxu0 0
  %6475 = vmatmul.mubr.bf16.gmra.mrb[0].mxu0 %v4238
  %v6476 = vpop.f32.mrb[0].mxu0
  %v6477 = vadd.f32 0.0, %v6476
  %v6478 = vpop.f32.mrb[0].mxu0
  %v6479 = vpop.f32.mrb[0].mxu0
  %v6480 = vadd.f32 0.0, %v6479
  %v6481 = vpop.f32.mrb[0].mxu0
  %6482 = vmatprep.mubr.bf16.mxu0 0
  %6483 = vmatmul.mubr.bf16.gmra.mrb[0].mxu0 %v4241
  %v6484 = vpop.f32.mrb[0].mxu0
  %v6485 = vadd.f32 0.0, %v6484
  %v6486 = vpop.f32.mrb[0].mxu0
  %v6487 = vpop.f32.mrb[0].mxu0
  %v6488 = vadd.f32 0.0, %v6487
  %v6489 = vpop.f32.mrb[0].mxu0
  %6490 = vmatprep.mubr.bf16.mxu0 0
  %6491 = vmatmul.mubr.bf16.gmra.mrb[0].mxu0 %v4244
  %v6492 = vpop.f32.mrb[0].mxu0
  %v6493 = vadd.f32 0.0, %v6492
  %v6494 = vpop.f32.mrb[0].mxu0
  %v6495 = vpop.f32.mrb[0].mxu0
  %v6496 = vadd.f32 0.0, %v6495
  %v6497 = vpop.f32.mrb[0].mxu0
  %6498 = vmatprep.mubr.bf16.mxu0 0
  %6499 = vmatmul.mubr.bf16.gmra.mrb[0].mxu0 %v4247
  %v6500 = vpop.f32.mrb[0].mxu0
  %v6501 = vadd.f32 0.0, %v6500
  %v6502 = vpop.f32.mrb[0].mxu0
  %v6503 = vpop.f32.mrb[0].mxu0
  %v6504 = vadd.f32 0.0, %v6503
  %v6505 = vpop.f32.mrb[0].mxu0
  %6506 = vmatprep.mubr.bf16.mxu0 0
  %6507 = vmatmul.mubr.bf16.gmra.mrb[0].mxu0 %v4250
  %v6508 = vpop.f32.mrb[0].mxu0
  %v6509 = vadd.f32 0.0, %v6508
  %v6510 = vpop.f32.mrb[0].mxu0
  %v6511 = vpop.f32.mrb[0].mxu0
  %v6512 = vadd.f32 0.0, %v6511
  %v6513 = vpop.f32.mrb[0].mxu0
  %6514 = vmatprep.mubr.bf16.mxu0 0
  %6515 = vmatmul.mubr.bf16.gmra.mrb[0].mxu0 %v4253
  %v6516 = vpop.f32.mrb[0].mxu0
  %v6517 = vadd.f32 0.0, %v6516
  %v6518 = vpop.f32.mrb[0].mxu0
  %v6519 = vpop.f32.mrb[0].mxu0
  %v6520 = vadd.f32 0.0, %v6519
  %v6521 = vpop.f32.mrb[0].mxu0
  %6522 = vmatprep.mubr.bf16.mxu0 0
  %6523 = vmatmul.mubr.bf16.gmra.mrb[0].mxu0 %v4256
  %v6524 = vpop.f32.mrb[0].mxu0
  %v6525 = vadd.f32 0.0, %v6524
  %v6526 = vpop.f32.mrb[0].mxu0
  %v6527 = vpop.f32.mrb[0].mxu0
  %v6528 = vadd.f32 0.0, %v6527
  %v6529 = vpop.f32.mrb[0].mxu0
  %6530 = vmatprep.mubr.bf16.mxu0 0
  %6531 = vmatmul.mubr.bf16.gmra.mrb[0].mxu0 %v4259
  %v6532 = vpop.f32.mrb[0].mxu0
  %v6533 = vadd.f32 0.0, %v6532
  %v6534 = vpop.f32.mrb[0].mxu0
  %v6535 = vpop.f32.mrb[0].mxu0
  %v6536 = vadd.f32 0.0, %v6535
  %v6537 = vpop.f32.mrb[0].mxu0
  %6538 = vmatprep.mubr.bf16.mxu0 0
  %6539 = vmatmul.mubr.bf16.gmra.mrb[0].mxu0 %v4262
  %v6540 = vpop.f32.mrb[0].mxu0
  %v6541 = vadd.f32 0.0, %v6540
  %v6542 = vpop.f32.mrb[0].mxu0
  %v6543 = vpop.f32.mrb[0].mxu0
  %v6544 = vadd.f32 0.0, %v6543
  %v6545 = vpop.f32.mrb[0].mxu0
  %6546 = vmatprep.mubr.bf16.mxu0 0
  %6547 = vmatmul.mubr.bf16.gmra.mrb[0].mxu0 %v4265
  %v6548 = vpop.f32.mrb[0].mxu0
  %v6549 = vadd.f32 0.0, %v6548
  %v6550 = vpop.f32.mrb[0].mxu0
  %v6551 = vpop.f32.mrb[0].mxu0
  %v6552 = vadd.f32 0.0, %v6551
  %v6553 = vpop.f32.mrb[0].mxu0
  %6554 = vmatprep.mubr.bf16.mxu0 0
  %6555 = vmatmul.mubr.bf16.gmra.mrb[0].mxu0 %v4268
  %v6556 = vpop.f32.mrb[0].mxu0
  %v6557 = vadd.f32 0.0, %v6556
  %v6558 = vpop.f32.mrb[0].mxu0
  %v6559 = vpop.f32.mrb[0].mxu0
  %v6560 = vadd.f32 0.0, %v6559
  %v6561 = vpop.f32.mrb[0].mxu0
  %6562 = vmatprep.mubr.bf16.mxu0 0
  %6563 = vmatmul.mubr.bf16.gmra.mrb[0].mxu0 %v4271
  %v6564 = vpop.f32.mrb[0].mxu0
  %v6565 = vadd.f32 0.0, %v6564
  %v6566 = vpop.f32.mrb[0].mxu0
  %v6567 = vpop.f32.mrb[0].mxu0
  %v6568 = vadd.f32 0.0, %v6567
  %v6569 = vpop.f32.mrb[0].mxu0
  %6570 = vmatprep.mubr.bf16.mxu0 0
  %6571 = vmatmul.mubr.bf16.gmra.mrb[0].mxu0 %v4274
  %v6572 = vpop.f32.mrb[0].mxu0
  %v6573 = vadd.f32 0.0, %v6572
  %v6574 = vpop.f32.mrb[0].mxu0
  %v6575 = vpop.f32.mrb[0].mxu0
  %v6576 = vadd.f32 0.0, %v6575
  %v6577 = vpop.f32.mrb[0].mxu0
  %6578 = vmatprep.mubr.bf16.mxu0 0
  %6579 = vmatmul.mubr.bf16.gmra.mrb[0].mxu0 %v6296
  %v6580 = vpop.f32.mrb[0].mxu0
  %v6581 = vadd.f32 0.0, %v6580
  %v6582 = vpop.f32.mrb[0].mxu0
  %v6583 = vpop.f32.mrb[0].mxu0
  %v6584 = vadd.f32 0.0, %v6583
  %v6585 = vpop.f32.mrb[0].mxu0
  %6586 = vdwg.mxu0
  %v6587 = vadd.f32 %v6191, %v6333
  %v6588 = vadd.f32 %v6192, %v6336
  %v6589 = vadd.f32 %v6193, %v6341
  %v6590 = vadd.f32 %v6194, %v6344
  %v6591 = vadd.f32 %v6195, %v6349
  %v6592 = vadd.f32 %v6196, %v6352
  %v6593 = vadd.f32 %v6197, %v6357
  %v6594 = vadd.f32 %v6198, %v6360
  %v6595 = vadd.f32 %v6199, %v6365
  %v6596 = vadd.f32 %v6200, %v6368
  %v6597 = vadd.f32 %v6201, %v6373
  %v6598 = vadd.f32 %v6202, %v6376
  %v6599 = vadd.f32 %v6203, %v6381
  %v6600 = vadd.f32 %v6204, %v6384
  %v6601 = vadd.f32 %v6205, %v6389
  %v6602 = vadd.f32 %v6206, %v6392
  %v6603 = vadd.f32 %v6207, %v6397
  %v6604 = vadd.f32 %v6208, %v6400
  %v6605 = vadd.f32 %v6209, %v6405
  %v6606 = vadd.f32 %v6210, %v6408
  %v6607 = vadd.f32 %v6211, %v6413
  %v6608 = vadd.f32 %v6212, %v6416
  %v6609 = vadd.f32 %v6213, %v6421
  %v6610 = vadd.f32 %v6214, %v6424
  %v6611 = vadd.f32 %v6215, %v6429
  %v6612 = vadd.f32 %v6216, %v6432
  %v6613 = vadd.f32 %v6217, %v6437
  %v6614 = vadd.f32 %v6218, %v6440
  %v6615 = vadd.f32 %v6219, %v6445
  %v6616 = vadd.f32 %v6220, %v6448
  %v6617 = vadd.f32 %v6221, %v6453
  %v6618 = vadd.f32 %v6222, %v6456
  %v6619 = vadd.f32 %v6223, %v6461
  %v6620 = vadd.f32 %v6224, %v6464
  %v6621 = vadd.f32 %v6225, %v6469
  %v6622 = vadd.f32 %v6226, %v6472
  %v6623 = vadd.f32 %v6227, %v6477
  %v6624 = vadd.f32 %v6228, %v6480
  %v6625 = vadd.f32 %v6229, %v6485
  %v6626 = vadd.f32 %v6230, %v6488
  %v6627 = vadd.f32 %v6231, %v6493
  %v6628 = vadd.f32 %v6232, %v6496
  %v6629 = vadd.f32 %v6233, %v6501
  %v6630 = vadd.f32 %v6234, %v6504
  %v6631 = vadd.f32 %v6235, %v6509
  %v6632 = vadd.f32 %v6236, %v6512
  %v6633 = vadd.f32 %v6237, %v6517
  %v6634 = vadd.f32 %v6238, %v6520
  %v6635 = vadd.f32 %v6239, %v6525
  %v6636 = vadd.f32 %v6240, %v6528
  %v6637 = vadd.f32 %v6241, %v6533
  %v6638 = vadd.f32 %v6242, %v6536
  %v6639 = vadd.f32 %v6243, %v6541
  %v6640 = vadd.f32 %v6244, %v6544
  %v6641 = vadd.f32 %v6245, %v6549
  %v6642 = vadd.f32 %v6246, %v6552
  %v6643 = vadd.f32 %v6247, %v6557
  %v6644 = vadd.f32 %v6248, %v6560
  %v6645 = vadd.f32 %v6249, %v6565
  %v6646 = vadd.f32 %v6250, %v6568
  %v6647 = vadd.f32 %v6251, %v6573
  %v6648 = vadd.f32 %v6252, %v6576
  %v6649 = vadd.f32 %v6253, %v6581
  %v6650 = vadd.f32 %v6254, %v6584
  %s6651 = scalar_lea.vmem %s1, 160
  %v6652 = vld [vmem:[%s6651] sm:$0xf]
  %v6653 = vld [vmem:[%s6651 + $0x4] sm:$0xf]
  %v6654 = vld [vmem:[%s6651 + $0x8] sm:$0xf]
  %v6655 = vld [vmem:[%s6651 + $0xc] sm:$0xf]
  %v6660 = vunpack.c.l.b16 %v74
  %v6661 = vunpack.c.l.b16 %v75
  %v6662 = vunpack.c.l.b16 %v134
  %v6663 = vunpack.c.l.b16 %v135
  %v6664 = vpack.c.b16 %v6661, %v6660
  %v6665 = vpack.c.b16 %v6663, %v6662
  %v6670 = vunpack.c.l.b16 %v6652
  %v6671 = vunpack.c.l.b16 %v6653
  %v6672 = vunpack.c.l.b16 %v6654
  %v6673 = vunpack.c.l.b16 %v6655
  %v6674 = vpack.c.b16 %v6671, %v6670
  %v6675 = vpack.c.b16 %v6673, %v6672
  %v6679 = vsel %vm1031, %v6664, 0
  %v6682 = vsel %vm1031, %v6665, 0
  %6684 = vmatprep.subr.bf16.mxu0 0
  %6685 = vmatpush1.bf16.msra.mxu0 %v6674
  %6686 = vmatprep.subr.bf16.mxu0 0
  %6687 = vmatpush1.bf16.msra.mxu0 %v6675
  %6688 = vmatprep.subr.bf16.mxu0 0
  %6689 = vmatpush1.bf16.msra.mxu0 0
  %6690 = vmatprep.subr.bf16.mxu0 0
  %6691 = vmatpush1.bf16.msra.mxu0 0
  %6692 = vmatprep.subr.bf16.mxu0 0
  %6693 = vmatpush1.bf16.msra.mxu0 0
  %6694 = vmatprep.subr.bf16.mxu0 0
  %6695 = vmatpush1.bf16.msra.mxu0 0
  %6696 = vmatprep.subr.bf16.mxu0 0
  %6697 = vmatpush1.bf16.msra.mxu0 0
  %6698 = vmatprep.subr.bf16.mxu0 0
  %6699 = vmatpush1.bf16.msra.mxu0 0
  %6700 = vmatprep.subr.bf16.mxu0 0
  %6701 = vmatpush1.bf16.msra.mxu0 0
  %6702 = vmatprep.subr.bf16.mxu0 0
  %6703 = vmatpush1.bf16.msra.mxu0 0
  %6704 = vmatprep.subr.bf16.mxu0 0
  %6705 = vmatpush1.bf16.msra.mxu0 0
  %6706 = vmatprep.subr.bf16.mxu0 0
  %6707 = vmatpush1.bf16.msra.mxu0 0
  %6708 = vmatprep.subr.bf16.mxu0 0
  %6709 = vmatpush1.bf16.msra.mxu0 0
  %6710 = vmatprep.subr.bf16.mxu0 0
  %6711 = vmatpush1.bf16.msra.mxu0 0
  %6712 = vmatprep.subr.bf16.mxu0 0
  %6713 = vmatpush1.bf16.msra.mxu0 0
  %6714 = vmatprep.subr.bf16.mxu0 0
  %6715 = vmatpush1.bf16.msra.mxu0 0
  %6716 = vmatprep.mubr.bf16.mxu0 0
  %6717 = vmatmul.mubr.bf16.gmra.mrb[0].mxu0 %v1596
  %v6718 = vpop.f32.mrb[0].mxu0
  %v6719 = vadd.f32 0.0, %v6718
  %v6720 = vpop.f32.mrb[0].mxu0
  %v6721 = vpop.f32.mrb[0].mxu0
  %v6722 = vadd.f32 0.0, %v6721
  %v6723 = vpop.f32.mrb[0].mxu0
  %6724 = vmatprep.mubr.bf16.mxu0 0
  %6725 = vmatmul.mubr.bf16.gmra.mrb[0].mxu0 %v1599
  %v6726 = vpop.f32.mrb[0].mxu0
  %v6727 = vadd.f32 0.0, %v6726
  %v6728 = vpop.f32.mrb[0].mxu0
  %v6729 = vpop.f32.mrb[0].mxu0
  %v6730 = vadd.f32 0.0, %v6729
  %v6731 = vpop.f32.mrb[0].mxu0
  %6732 = vmatprep.mubr.bf16.mxu0 0
  %6733 = vmatmul.mubr.bf16.gmra.mrb[0].mxu0 %v1602
  %v6734 = vpop.f32.mrb[0].mxu0
  %v6735 = vadd.f32 0.0, %v6734
  %v6736 = vpop.f32.mrb[0].mxu0
  %v6737 = vpop.f32.mrb[0].mxu0
  %v6738 = vadd.f32 0.0, %v6737
  %v6739 = vpop.f32.mrb[0].mxu0
  %6740 = vmatprep.mubr.bf16.mxu0 0
  %6741 = vmatmul.mubr.bf16.gmra.mrb[0].mxu0 %v1605
  %v6742 = vpop.f32.mrb[0].mxu0
  %v6743 = vadd.f32 0.0, %v6742
  %v6744 = vpop.f32.mrb[0].mxu0
  %v6745 = vpop.f32.mrb[0].mxu0
  %v6746 = vadd.f32 0.0, %v6745
  %v6747 = vpop.f32.mrb[0].mxu0
  %6748 = vmatprep.mubr.bf16.mxu0 0
  %6749 = vmatmul.mubr.bf16.gmra.mrb[0].mxu0 %v1608
  %v6750 = vpop.f32.mrb[0].mxu0
  %v6751 = vadd.f32 0.0, %v6750
  %v6752 = vpop.f32.mrb[0].mxu0
  %v6753 = vpop.f32.mrb[0].mxu0
  %v6754 = vadd.f32 0.0, %v6753
  %v6755 = vpop.f32.mrb[0].mxu0
  %6756 = vmatprep.mubr.bf16.mxu0 0
  %6757 = vmatmul.mubr.bf16.gmra.mrb[0].mxu0 %v1611
  %v6758 = vpop.f32.mrb[0].mxu0
  %v6759 = vadd.f32 0.0, %v6758
  %v6760 = vpop.f32.mrb[0].mxu0
  %v6761 = vpop.f32.mrb[0].mxu0
  %v6762 = vadd.f32 0.0, %v6761
  %v6763 = vpop.f32.mrb[0].mxu0
  %6764 = vmatprep.mubr.bf16.mxu0 0
  %6765 = vmatmul.mubr.bf16.gmra.mrb[0].mxu0 %v1614
  %v6766 = vpop.f32.mrb[0].mxu0
  %v6767 = vadd.f32 0.0, %v6766
  %v6768 = vpop.f32.mrb[0].mxu0
  %v6769 = vpop.f32.mrb[0].mxu0
  %v6770 = vadd.f32 0.0, %v6769
  %v6771 = vpop.f32.mrb[0].mxu0
  %6772 = vmatprep.mubr.bf16.mxu0 0
  %6773 = vmatmul.mubr.bf16.gmra.mrb[0].mxu0 %v1617
  %v6774 = vpop.f32.mrb[0].mxu0
  %v6775 = vadd.f32 0.0, %v6774
  %v6776 = vpop.f32.mrb[0].mxu0
  %v6777 = vpop.f32.mrb[0].mxu0
  %v6778 = vadd.f32 0.0, %v6777
  %v6779 = vpop.f32.mrb[0].mxu0
  %6780 = vmatprep.mubr.bf16.mxu0 0
  %6781 = vmatmul.mubr.bf16.gmra.mrb[0].mxu0 %v1620
  %v6782 = vpop.f32.mrb[0].mxu0
  %v6783 = vadd.f32 0.0, %v6782
  %v6784 = vpop.f32.mrb[0].mxu0
  %v6785 = vpop.f32.mrb[0].mxu0
  %v6786 = vadd.f32 0.0, %v6785
  %v6787 = vpop.f32.mrb[0].mxu0
  %6788 = vmatprep.mubr.bf16.mxu0 0
  %6789 = vmatmul.mubr.bf16.gmra.mrb[0].mxu0 %v1623
  %v6790 = vpop.f32.mrb[0].mxu0
  %v6791 = vadd.f32 0.0, %v6790
  %v6792 = vpop.f32.mrb[0].mxu0
  %v6793 = vpop.f32.mrb[0].mxu0
  %v6794 = vadd.f32 0.0, %v6793
  %v6795 = vpop.f32.mrb[0].mxu0
  %6796 = vmatprep.mubr.bf16.mxu0 0
  %6797 = vmatmul.mubr.bf16.gmra.mrb[0].mxu0 %v1626
  %v6798 = vpop.f32.mrb[0].mxu0
  %v6799 = vadd.f32 0.0, %v6798
  %v6800 = vpop.f32.mrb[0].mxu0
  %v6801 = vpop.f32.mrb[0].mxu0
  %v6802 = vadd.f32 0.0, %v6801
  %v6803 = vpop.f32.mrb[0].mxu0
  %6804 = vmatprep.mubr.bf16.mxu0 0
  %6805 = vmatmul.mubr.bf16.gmra.mrb[0].mxu0 %v1629
  %v6806 = vpop.f32.mrb[0].mxu0
  %v6807 = vadd.f32 0.0, %v6806
  %v6808 = vpop.f32.mrb[0].mxu0
  %v6809 = vpop.f32.mrb[0].mxu0
  %v6810 = vadd.f32 0.0, %v6809
  %v6811 = vpop.f32.mrb[0].mxu0
  %6812 = vmatprep.mubr.bf16.mxu0 0
  %6813 = vmatmul.mubr.bf16.gmra.mrb[0].mxu0 %v1632
  %v6814 = vpop.f32.mrb[0].mxu0
  %v6815 = vadd.f32 0.0, %v6814
  %v6816 = vpop.f32.mrb[0].mxu0
  %v6817 = vpop.f32.mrb[0].mxu0
  %v6818 = vadd.f32 0.0, %v6817
  %v6819 = vpop.f32.mrb[0].mxu0
  %6820 = vmatprep.mubr.bf16.mxu0 0
  %6821 = vmatmul.mubr.bf16.gmra.mrb[0].mxu0 %v1635
  %v6822 = vpop.f32.mrb[0].mxu0
  %v6823 = vadd.f32 0.0, %v6822
  %v6824 = vpop.f32.mrb[0].mxu0
  %v6825 = vpop.f32.mrb[0].mxu0
  %v6826 = vadd.f32 0.0, %v6825
  %v6827 = vpop.f32.mrb[0].mxu0
  %6828 = vmatprep.mubr.bf16.mxu0 0
  %6829 = vmatmul.mubr.bf16.gmra.mrb[0].mxu0 %v4657
  %v6830 = vpop.f32.mrb[0].mxu0
  %v6831 = vadd.f32 0.0, %v6830
  %v6832 = vpop.f32.mrb[0].mxu0
  %v6833 = vpop.f32.mrb[0].mxu0
  %v6834 = vadd.f32 0.0, %v6833
  %v6835 = vpop.f32.mrb[0].mxu0
  %6836 = vmatprep.mubr.bf16.mxu0 0
  %6837 = vmatmul.mubr.bf16.gmra.mrb[0].mxu0 %v6679
  %v6838 = vpop.f32.mrb[0].mxu0
  %v6839 = vadd.f32 0.0, %v6838
  %v6840 = vpop.f32.mrb[0].mxu0
  %v6841 = vpop.f32.mrb[0].mxu0
  %v6842 = vadd.f32 0.0, %v6841
  %v6843 = vpop.f32.mrb[0].mxu0
  %6844 = vmatprep.mubr.bf16.mxu0 0
  %6845 = vmatmul.mubr.bf16.gmra.mrb[0].mxu0 %v1644
  %v6846 = vpop.f32.mrb[0].mxu0
  %v6847 = vadd.f32 0.0, %v6846
  %v6848 = vpop.f32.mrb[0].mxu0
  %v6849 = vpop.f32.mrb[0].mxu0
  %v6850 = vadd.f32 0.0, %v6849
  %v6851 = vpop.f32.mrb[0].mxu0
  %6852 = vmatprep.mubr.bf16.mxu0 0
  %6853 = vmatmul.mubr.bf16.gmra.mrb[0].mxu0 %v1647
  %v6854 = vpop.f32.mrb[0].mxu0
  %v6855 = vadd.f32 0.0, %v6854
  %v6856 = vpop.f32.mrb[0].mxu0
  %v6857 = vpop.f32.mrb[0].mxu0
  %v6858 = vadd.f32 0.0, %v6857
  %v6859 = vpop.f32.mrb[0].mxu0
  %6860 = vmatprep.mubr.bf16.mxu0 0
  %6861 = vmatmul.mubr.bf16.gmra.mrb[0].mxu0 %v1650
  %v6862 = vpop.f32.mrb[0].mxu0
  %v6863 = vadd.f32 0.0, %v6862
  %v6864 = vpop.f32.mrb[0].mxu0
  %v6865 = vpop.f32.mrb[0].mxu0
  %v6866 = vadd.f32 0.0, %v6865
  %v6867 = vpop.f32.mrb[0].mxu0
  %6868 = vmatprep.mubr.bf16.mxu0 0
  %6869 = vmatmul.mubr.bf16.gmra.mrb[0].mxu0 %v1653
  %v6870 = vpop.f32.mrb[0].mxu0
  %v6871 = vadd.f32 0.0, %v6870
  %v6872 = vpop.f32.mrb[0].mxu0
  %v6873 = vpop.f32.mrb[0].mxu0
  %v6874 = vadd.f32 0.0, %v6873
  %v6875 = vpop.f32.mrb[0].mxu0
  %6876 = vmatprep.mubr.bf16.mxu0 0
  %6877 = vmatmul.mubr.bf16.gmra.mrb[0].mxu0 %v1656
  %v6878 = vpop.f32.mrb[0].mxu0
  %v6879 = vadd.f32 0.0, %v6878
  %v6880 = vpop.f32.mrb[0].mxu0
  %v6881 = vpop.f32.mrb[0].mxu0
  %v6882 = vadd.f32 0.0, %v6881
  %v6883 = vpop.f32.mrb[0].mxu0
  %6884 = vmatprep.mubr.bf16.mxu0 0
  %6885 = vmatmul.mubr.bf16.gmra.mrb[0].mxu0 %v1659
  %v6886 = vpop.f32.mrb[0].mxu0
  %v6887 = vadd.f32 0.0, %v6886
  %v6888 = vpop.f32.mrb[0].mxu0
  %v6889 = vpop.f32.mrb[0].mxu0
  %v6890 = vadd.f32 0.0, %v6889
  %v6891 = vpop.f32.mrb[0].mxu0
  %6892 = vmatprep.mubr.bf16.mxu0 0
  %6893 = vmatmul.mubr.bf16.gmra.mrb[0].mxu0 %v1662
  %v6894 = vpop.f32.mrb[0].mxu0
  %v6895 = vadd.f32 0.0, %v6894
  %v6896 = vpop.f32.mrb[0].mxu0
  %v6897 = vpop.f32.mrb[0].mxu0
  %v6898 = vadd.f32 0.0, %v6897
  %v6899 = vpop.f32.mrb[0].mxu0
  %6900 = vmatprep.mubr.bf16.mxu0 0
  %6901 = vmatmul.mubr.bf16.gmra.mrb[0].mxu0 %v1665
  %v6902 = vpop.f32.mrb[0].mxu0
  %v6903 = vadd.f32 0.0, %v6902
  %v6904 = vpop.f32.mrb[0].mxu0
  %v6905 = vpop.f32.mrb[0].mxu0
  %v6906 = vadd.f32 0.0, %v6905
  %v6907 = vpop.f32.mrb[0].mxu0
  %6908 = vmatprep.mubr.bf16.mxu0 0
  %6909 = vmatmul.mubr.bf16.gmra.mrb[0].mxu0 %v1668
  %v6910 = vpop.f32.mrb[0].mxu0
  %v6911 = vadd.f32 0.0, %v6910
  %v6912 = vpop.f32.mrb[0].mxu0
  %v6913 = vpop.f32.mrb[0].mxu0
  %v6914 = vadd.f32 0.0, %v6913
  %v6915 = vpop.f32.mrb[0].mxu0
  %6916 = vmatprep.mubr.bf16.mxu0 0
  %6917 = vmatmul.mubr.bf16.gmra.mrb[0].mxu0 %v1671
  %v6918 = vpop.f32.mrb[0].mxu0
  %v6919 = vadd.f32 0.0, %v6918
  %v6920 = vpop.f32.mrb[0].mxu0
  %v6921 = vpop.f32.mrb[0].mxu0
  %v6922 = vadd.f32 0.0, %v6921
  %v6923 = vpop.f32.mrb[0].mxu0
  %6924 = vmatprep.mubr.bf16.mxu0 0
  %6925 = vmatmul.mubr.bf16.gmra.mrb[0].mxu0 %v1674
  %v6926 = vpop.f32.mrb[0].mxu0
  %v6927 = vadd.f32 0.0, %v6926
  %v6928 = vpop.f32.mrb[0].mxu0
  %v6929 = vpop.f32.mrb[0].mxu0
  %v6930 = vadd.f32 0.0, %v6929
  %v6931 = vpop.f32.mrb[0].mxu0
  %6932 = vmatprep.mubr.bf16.mxu0 0
  %6933 = vmatmul.mubr.bf16.gmra.mrb[0].mxu0 %v1677
  %v6934 = vpop.f32.mrb[0].mxu0
  %v6935 = vadd.f32 0.0, %v6934
  %v6936 = vpop.f32.mrb[0].mxu0
  %v6937 = vpop.f32.mrb[0].mxu0
  %v6938 = vadd.f32 0.0, %v6937
  %v6939 = vpop.f32.mrb[0].mxu0
  %6940 = vmatprep.mubr.bf16.mxu0 0
  %6941 = vmatmul.mubr.bf16.gmra.mrb[0].mxu0 %v1680
  %v6942 = vpop.f32.mrb[0].mxu0
  %v6943 = vadd.f32 0.0, %v6942
  %v6944 = vpop.f32.mrb[0].mxu0
  %v6945 = vpop.f32.mrb[0].mxu0
  %v6946 = vadd.f32 0.0, %v6945
  %v6947 = vpop.f32.mrb[0].mxu0
  %6948 = vmatprep.mubr.bf16.mxu0 0
  %6949 = vmatmul.mubr.bf16.gmra.mrb[0].mxu0 %v1683
  %v6950 = vpop.f32.mrb[0].mxu0
  %v6951 = vadd.f32 0.0, %v6950
  %v6952 = vpop.f32.mrb[0].mxu0
  %v6953 = vpop.f32.mrb[0].mxu0
  %v6954 = vadd.f32 0.0, %v6953
  %v6955 = vpop.f32.mrb[0].mxu0
  %6956 = vmatprep.mubr.bf16.mxu0 0
  %6957 = vmatmul.mubr.bf16.gmra.mrb[0].mxu0 %v4660
  %v6958 = vpop.f32.mrb[0].mxu0
  %v6959 = vadd.f32 0.0, %v6958
  %v6960 = vpop.f32.mrb[0].mxu0
  %v6961 = vpop.f32.mrb[0].mxu0
  %v6962 = vadd.f32 0.0, %v6961
  %v6963 = vpop.f32.mrb[0].mxu0
  %6964 = vmatprep.mubr.bf16.mxu0 0
  %6965 = vmatmul.mubr.bf16.gmra.mrb[0].mxu0 %v6682
  %v6966 = vpop.f32.mrb[0].mxu0
  %v6967 = vadd.f32 0.0, %v6966
  %v6968 = vpop.f32.mrb[0].mxu0
  %v6969 = vpop.f32.mrb[0].mxu0
  %v6970 = vadd.f32 0.0, %v6969
  %v6971 = vpop.f32.mrb[0].mxu0
  %6972 = vdwg.mxu0
  %v6973 = vadd.f32 %v6587, %v6719
  %v6974 = vadd.f32 %v6588, %v6722
  %v6975 = vadd.f32 %v6589, %v6727
  %v6976 = vadd.f32 %v6590, %v6730
  %v6977 = vadd.f32 %v6591, %v6735
  %v6978 = vadd.f32 %v6592, %v6738
  %v6979 = vadd.f32 %v6593, %v6743
  %v6980 = vadd.f32 %v6594, %v6746
  %v6981 = vadd.f32 %v6595, %v6751
  %v6982 = vadd.f32 %v6596, %v6754
  %v6983 = vadd.f32 %v6597, %v6759
  %v6984 = vadd.f32 %v6598, %v6762
  %v6985 = vadd.f32 %v6599, %v6767
  %v6986 = vadd.f32 %v6600, %v6770
  %v6987 = vadd.f32 %v6601, %v6775
  %v6988 = vadd.f32 %v6602, %v6778
  %v6989 = vadd.f32 %v6603, %v6783
  %v6990 = vadd.f32 %v6604, %v6786
  %v6991 = vadd.f32 %v6605, %v6791
  %v6992 = vadd.f32 %v6606, %v6794
  %v6993 = vadd.f32 %v6607, %v6799
  %v6994 = vadd.f32 %v6608, %v6802
  %v6995 = vadd.f32 %v6609, %v6807
  %v6996 = vadd.f32 %v6610, %v6810
  %v6997 = vadd.f32 %v6611, %v6815
  %v6998 = vadd.f32 %v6612, %v6818
  %v6999 = vadd.f32 %v6613, %v6823
  %v7000 = vadd.f32 %v6614, %v6826
  %v7001 = vadd.f32 %v6615, %v6831
  %v7002 = vadd.f32 %v6616, %v6834
  %v7003 = vadd.f32 %v6617, %v6839
  %v7004 = vadd.f32 %v6618, %v6842
  %v7005 = vadd.f32 %v6619, %v6847
  %v7006 = vadd.f32 %v6620, %v6850
  %v7007 = vadd.f32 %v6621, %v6855
  %v7008 = vadd.f32 %v6622, %v6858
  %v7009 = vadd.f32 %v6623, %v6863
  %v7010 = vadd.f32 %v6624, %v6866
  %v7011 = vadd.f32 %v6625, %v6871
  %v7012 = vadd.f32 %v6626, %v6874
  %v7013 = vadd.f32 %v6627, %v6879
  %v7014 = vadd.f32 %v6628, %v6882
  %v7015 = vadd.f32 %v6629, %v6887
  %v7016 = vadd.f32 %v6630, %v6890
  %v7017 = vadd.f32 %v6631, %v6895
  %v7018 = vadd.f32 %v6632, %v6898
  %v7019 = vadd.f32 %v6633, %v6903
  %v7020 = vadd.f32 %v6634, %v6906
  %v7021 = vadd.f32 %v6635, %v6911
  %v7022 = vadd.f32 %v6636, %v6914
  %v7023 = vadd.f32 %v6637, %v6919
  %v7024 = vadd.f32 %v6638, %v6922
  %v7025 = vadd.f32 %v6639, %v6927
  %v7026 = vadd.f32 %v6640, %v6930
  %v7027 = vadd.f32 %v6641, %v6935
  %v7028 = vadd.f32 %v6642, %v6938
  %v7029 = vadd.f32 %v6643, %v6943
  %v7030 = vadd.f32 %v6644, %v6946
  %v7031 = vadd.f32 %v6645, %v6951
  %v7032 = vadd.f32 %v6646, %v6954
  %v7033 = vadd.f32 %v6647, %v6959
  %v7034 = vadd.f32 %v6648, %v6962
  %v7035 = vadd.f32 %v6649, %v6967
  %v7036 = vadd.f32 %v6650, %v6970
  %v7038 = vshrl.u32 %v74, 16
  %v7040 = vrot.slane %v7038, 4
  %v7041 = vshll.u32 %v74, 16
  %v7043 = vrot.slane %v7041, 5
  %v7044 = vor.u32 %v7040, %v7043
  %v7045 = vrot.slane %v7044, 4
  %v7047 = vshll.u32 %v75, 16
  %v7049 = vrot.slane %v7047, 5
  %v7050 = vsel %vm149, %v7045, %v7049
  %v7051 = vshrl.u32 %v75, 16
  %v7053 = vrot.slane %v7051, 4
  %v7054 = vor.u32 %v7053, %v7049
  %v7055 = vrot.slane %v7054, 4
  %v7057 = vshll.u32 %v76, 16
  %v7059 = vrot.slane %v7057, 5
  %v7060 = vsel %vm149, %v7055, %v7059
  %v7062 = vshrl.u32 %v134, 16
  %v7064 = vrot.slane %v7062, 4
  %v7065 = vshll.u32 %v134, 16
  %v7067 = vrot.slane %v7065, 5
  %v7068 = vor.u32 %v7064, %v7067
  %v7069 = vrot.slane %v7068, 4
  %v7071 = vshll.u32 %v135, 16
  %v7073 = vrot.slane %v7071, 5
  %v7074 = vsel %vm149, %v7069, %v7073
  %v7075 = vshrl.u32 %v135, 16
  %v7077 = vrot.slane %v7075, 4
  %v7078 = vor.u32 %v7077, %v7073
  %v7079 = vrot.slane %v7078, 4
  %v7081 = vshll.u32 %v136, 16
  %v7083 = vrot.slane %v7081, 5
  %v7084 = vsel %vm149, %v7079, %v7083
  %s7085 = scalar_lea.vmem %s1, 176
  %v7086 = vld [vmem:[%s7085] sm:$0xf]
  %v7087 = vld [vmem:[%s7085 + $0x4] sm:$0xf]
  %v7088 = vld [vmem:[%s7085 + $0x8] sm:$0xf]
  %v7089 = vld [vmem:[%s7085 + $0xc] sm:$0xf]
  %v7090 = vunpack.c.l.b16 %v7050
  %v7091 = vunpack.c.l.b16 %v7060
  %v7092 = vunpack.c.l.b16 %v7074
  %v7093 = vunpack.c.l.b16 %v7084
  %v7094 = vpack.c.b16 %v7091, %v7090
  %v7095 = vpack.c.b16 %v7093, %v7092
  %v7100 = vunpack.c.l.b16 %v7086
  %v7101 = vunpack.c.l.b16 %v7087
  %v7102 = vunpack.c.l.b16 %v7088
  %v7103 = vunpack.c.l.b16 %v7089
  %v7104 = vpack.c.b16 %v7101, %v7100
  %v7105 = vpack.c.b16 %v7103, %v7102
  %v7109 = vsel %vm1031, %v7094, 0
  %v7112 = vsel %vm1031, %v7095, 0
  %7114 = vmatprep.subr.bf16.mxu0 0
  %7115 = vmatpush1.bf16.msra.mxu0 %v7104
  %7116 = vmatprep.subr.bf16.mxu0 0
  %7117 = vmatpush1.bf16.msra.mxu0 %v7105
  %7118 = vmatprep.subr.bf16.mxu0 0
  %7119 = vmatpush1.bf16.msra.mxu0 0
  %7120 = vmatprep.subr.bf16.mxu0 0
  %7121 = vmatpush1.bf16.msra.mxu0 0
  %7122 = vmatprep.subr.bf16.mxu0 0
  %7123 = vmatpush1.bf16.msra.mxu0 0
  %7124 = vmatprep.subr.bf16.mxu0 0
  %7125 = vmatpush1.bf16.msra.mxu0 0
  %7126 = vmatprep.subr.bf16.mxu0 0
  %7127 = vmatpush1.bf16.msra.mxu0 0
  %7128 = vmatprep.subr.bf16.mxu0 0
  %7129 = vmatpush1.bf16.msra.mxu0 0
  %7130 = vmatprep.subr.bf16.mxu0 0
  %7131 = vmatpush1.bf16.msra.mxu0 0
  %7132 = vmatprep.subr.bf16.mxu0 0
  %7133 = vmatpush1.bf16.msra.mxu0 0
  %7134 = vmatprep.subr.bf16.mxu0 0
  %7135 = vmatpush1.bf16.msra.mxu0 0
  %7136 = vmatprep.subr.bf16.mxu0 0
  %7137 = vmatpush1.bf16.msra.mxu0 0
  %7138 = vmatprep.subr.bf16.mxu0 0
  %7139 = vmatpush1.bf16.msra.mxu0 0
  %7140 = vmatprep.subr.bf16.mxu0 0
  %7141 = vmatpush1.bf16.msra.mxu0 0
  %7142 = vmatprep.subr.bf16.mxu0 0
  %7143 = vmatpush1.bf16.msra.mxu0 0
  %7144 = vmatprep.subr.bf16.mxu0 0
  %7145 = vmatpush1.bf16.msra.mxu0 0
  %7146 = vmatprep.mubr.bf16.mxu0 0
  %7147 = vmatmul.mubr.bf16.gmra.mrb[0].mxu0 %v1039
  %v7148 = vpop.f32.mrb[0].mxu0
  %v7149 = vadd.f32 0.0, %v7148
  %v7150 = vpop.f32.mrb[0].mxu0
  %v7151 = vpop.f32.mrb[0].mxu0
  %v7152 = vadd.f32 0.0, %v7151
  %v7153 = vpop.f32.mrb[0].mxu0
  %7154 = vmatprep.mubr.bf16.mxu0 0
  %7155 = vmatmul.mubr.bf16.gmra.mrb[0].mxu0 %v1042
  %v7156 = vpop.f32.mrb[0].mxu0
  %v7157 = vadd.f32 0.0, %v7156
  %v7158 = vpop.f32.mrb[0].mxu0
  %v7159 = vpop.f32.mrb[0].mxu0
  %v7160 = vadd.f32 0.0, %v7159
  %v7161 = vpop.f32.mrb[0].mxu0
  %7162 = vmatprep.mubr.bf16.mxu0 0
  %7163 = vmatmul.mubr.bf16.gmra.mrb[0].mxu0 %v1045
  %v7164 = vpop.f32.mrb[0].mxu0
  %v7165 = vadd.f32 0.0, %v7164
  %v7166 = vpop.f32.mrb[0].mxu0
  %v7167 = vpop.f32.mrb[0].mxu0
  %v7168 = vadd.f32 0.0, %v7167
  %v7169 = vpop.f32.mrb[0].mxu0
  %7170 = vmatprep.mubr.bf16.mxu0 0
  %7171 = vmatmul.mubr.bf16.gmra.mrb[0].mxu0 %v1048
  %v7172 = vpop.f32.mrb[0].mxu0
  %v7173 = vadd.f32 0.0, %v7172
  %v7174 = vpop.f32.mrb[0].mxu0
  %v7175 = vpop.f32.mrb[0].mxu0
  %v7176 = vadd.f32 0.0, %v7175
  %v7177 = vpop.f32.mrb[0].mxu0
  %7178 = vmatprep.mubr.bf16.mxu0 0
  %7179 = vmatmul.mubr.bf16.gmra.mrb[0].mxu0 %v1051
  %v7180 = vpop.f32.mrb[0].mxu0
  %v7181 = vadd.f32 0.0, %v7180
  %v7182 = vpop.f32.mrb[0].mxu0
  %v7183 = vpop.f32.mrb[0].mxu0
  %v7184 = vadd.f32 0.0, %v7183
  %v7185 = vpop.f32.mrb[0].mxu0
  %7186 = vmatprep.mubr.bf16.mxu0 0
  %7187 = vmatmul.mubr.bf16.gmra.mrb[0].mxu0 %v1054
  %v7188 = vpop.f32.mrb[0].mxu0
  %v7189 = vadd.f32 0.0, %v7188
  %v7190 = vpop.f32.mrb[0].mxu0
  %v7191 = vpop.f32.mrb[0].mxu0
  %v7192 = vadd.f32 0.0, %v7191
  %v7193 = vpop.f32.mrb[0].mxu0
  %7194 = vmatprep.mubr.bf16.mxu0 0
  %7195 = vmatmul.mubr.bf16.gmra.mrb[0].mxu0 %v1057
  %v7196 = vpop.f32.mrb[0].mxu0
  %v7197 = vadd.f32 0.0, %v7196
  %v7198 = vpop.f32.mrb[0].mxu0
  %v7199 = vpop.f32.mrb[0].mxu0
  %v7200 = vadd.f32 0.0, %v7199
  %v7201 = vpop.f32.mrb[0].mxu0
  %7202 = vmatprep.mubr.bf16.mxu0 0
  %7203 = vmatmul.mubr.bf16.gmra.mrb[0].mxu0 %v1060
  %v7204 = vpop.f32.mrb[0].mxu0
  %v7205 = vadd.f32 0.0, %v7204
  %v7206 = vpop.f32.mrb[0].mxu0
  %v7207 = vpop.f32.mrb[0].mxu0
  %v7208 = vadd.f32 0.0, %v7207
  %v7209 = vpop.f32.mrb[0].mxu0
  %7210 = vmatprep.mubr.bf16.mxu0 0
  %7211 = vmatmul.mubr.bf16.gmra.mrb[0].mxu0 %v1063
  %v7212 = vpop.f32.mrb[0].mxu0
  %v7213 = vadd.f32 0.0, %v7212
  %v7214 = vpop.f32.mrb[0].mxu0
  %v7215 = vpop.f32.mrb[0].mxu0
  %v7216 = vadd.f32 0.0, %v7215
  %v7217 = vpop.f32.mrb[0].mxu0
  %7218 = vmatprep.mubr.bf16.mxu0 0
  %7219 = vmatmul.mubr.bf16.gmra.mrb[0].mxu0 %v1066
  %v7220 = vpop.f32.mrb[0].mxu0
  %v7221 = vadd.f32 0.0, %v7220
  %v7222 = vpop.f32.mrb[0].mxu0
  %v7223 = vpop.f32.mrb[0].mxu0
  %v7224 = vadd.f32 0.0, %v7223
  %v7225 = vpop.f32.mrb[0].mxu0
  %7226 = vmatprep.mubr.bf16.mxu0 0
  %7227 = vmatmul.mubr.bf16.gmra.mrb[0].mxu0 %v1069
  %v7228 = vpop.f32.mrb[0].mxu0
  %v7229 = vadd.f32 0.0, %v7228
  %v7230 = vpop.f32.mrb[0].mxu0
  %v7231 = vpop.f32.mrb[0].mxu0
  %v7232 = vadd.f32 0.0, %v7231
  %v7233 = vpop.f32.mrb[0].mxu0
  %7234 = vmatprep.mubr.bf16.mxu0 0
  %7235 = vmatmul.mubr.bf16.gmra.mrb[0].mxu0 %v1072
  %v7236 = vpop.f32.mrb[0].mxu0
  %v7237 = vadd.f32 0.0, %v7236
  %v7238 = vpop.f32.mrb[0].mxu0
  %v7239 = vpop.f32.mrb[0].mxu0
  %v7240 = vadd.f32 0.0, %v7239
  %v7241 = vpop.f32.mrb[0].mxu0
  %7242 = vmatprep.mubr.bf16.mxu0 0
  %7243 = vmatmul.mubr.bf16.gmra.mrb[0].mxu0 %v1075
  %v7244 = vpop.f32.mrb[0].mxu0
  %v7245 = vadd.f32 0.0, %v7244
  %v7246 = vpop.f32.mrb[0].mxu0
  %v7247 = vpop.f32.mrb[0].mxu0
  %v7248 = vadd.f32 0.0, %v7247
  %v7249 = vpop.f32.mrb[0].mxu0
  %7250 = vmatprep.mubr.bf16.mxu0 0
  %7251 = vmatmul.mubr.bf16.gmra.mrb[0].mxu0 %v1078
  %v7252 = vpop.f32.mrb[0].mxu0
  %v7253 = vadd.f32 0.0, %v7252
  %v7254 = vpop.f32.mrb[0].mxu0
  %v7255 = vpop.f32.mrb[0].mxu0
  %v7256 = vadd.f32 0.0, %v7255
  %v7257 = vpop.f32.mrb[0].mxu0
  %7258 = vmatprep.mubr.bf16.mxu0 0
  %7259 = vmatmul.mubr.bf16.gmra.mrb[0].mxu0 %v5087
  %v7260 = vpop.f32.mrb[0].mxu0
  %v7261 = vadd.f32 0.0, %v7260
  %v7262 = vpop.f32.mrb[0].mxu0
  %v7263 = vpop.f32.mrb[0].mxu0
  %v7264 = vadd.f32 0.0, %v7263
  %v7265 = vpop.f32.mrb[0].mxu0
  %7266 = vmatprep.mubr.bf16.mxu0 0
  %7267 = vmatmul.mubr.bf16.gmra.mrb[0].mxu0 %v7109
  %v7268 = vpop.f32.mrb[0].mxu0
  %v7269 = vadd.f32 0.0, %v7268
  %v7270 = vpop.f32.mrb[0].mxu0
  %v7271 = vpop.f32.mrb[0].mxu0
  %v7272 = vadd.f32 0.0, %v7271
  %v7273 = vpop.f32.mrb[0].mxu0
  %7274 = vmatprep.mubr.bf16.mxu0 0
  %7275 = vmatmul.mubr.bf16.gmra.mrb[0].mxu0 %v1087
  %v7276 = vpop.f32.mrb[0].mxu0
  %v7277 = vadd.f32 0.0, %v7276
  %v7278 = vpop.f32.mrb[0].mxu0
  %v7279 = vpop.f32.mrb[0].mxu0
  %v7280 = vadd.f32 0.0, %v7279
  %v7281 = vpop.f32.mrb[0].mxu0
  %7282 = vmatprep.mubr.bf16.mxu0 0
  %7283 = vmatmul.mubr.bf16.gmra.mrb[0].mxu0 %v1090
  %v7284 = vpop.f32.mrb[0].mxu0
  %v7285 = vadd.f32 0.0, %v7284
  %v7286 = vpop.f32.mrb[0].mxu0
  %v7287 = vpop.f32.mrb[0].mxu0
  %v7288 = vadd.f32 0.0, %v7287
  %v7289 = vpop.f32.mrb[0].mxu0
  %7290 = vmatprep.mubr.bf16.mxu0 0
  %7291 = vmatmul.mubr.bf16.gmra.mrb[0].mxu0 %v1093
  %v7292 = vpop.f32.mrb[0].mxu0
  %v7293 = vadd.f32 0.0, %v7292
  %v7294 = vpop.f32.mrb[0].mxu0
  %v7295 = vpop.f32.mrb[0].mxu0
  %v7296 = vadd.f32 0.0, %v7295
  %v7297 = vpop.f32.mrb[0].mxu0
  %7298 = vmatprep.mubr.bf16.mxu0 0
  %7299 = vmatmul.mubr.bf16.gmra.mrb[0].mxu0 %v1096
  %v7300 = vpop.f32.mrb[0].mxu0
  %v7301 = vadd.f32 0.0, %v7300
  %v7302 = vpop.f32.mrb[0].mxu0
  %v7303 = vpop.f32.mrb[0].mxu0
  %v7304 = vadd.f32 0.0, %v7303
  %v7305 = vpop.f32.mrb[0].mxu0
  %7306 = vmatprep.mubr.bf16.mxu0 0
  %7307 = vmatmul.mubr.bf16.gmra.mrb[0].mxu0 %v1099
  %v7308 = vpop.f32.mrb[0].mxu0
  %v7309 = vadd.f32 0.0, %v7308
  %v7310 = vpop.f32.mrb[0].mxu0
  %v7311 = vpop.f32.mrb[0].mxu0
  %v7312 = vadd.f32 0.0, %v7311
  %v7313 = vpop.f32.mrb[0].mxu0
  %7314 = vmatprep.mubr.bf16.mxu0 0
  %7315 = vmatmul.mubr.bf16.gmra.mrb[0].mxu0 %v1102
  %v7316 = vpop.f32.mrb[0].mxu0
  %v7317 = vadd.f32 0.0, %v7316
  %v7318 = vpop.f32.mrb[0].mxu0
  %v7319 = vpop.f32.mrb[0].mxu0
  %v7320 = vadd.f32 0.0, %v7319
  %v7321 = vpop.f32.mrb[0].mxu0
  %7322 = vmatprep.mubr.bf16.mxu0 0
  %7323 = vmatmul.mubr.bf16.gmra.mrb[0].mxu0 %v1105
  %v7324 = vpop.f32.mrb[0].mxu0
  %v7325 = vadd.f32 0.0, %v7324
  %v7326 = vpop.f32.mrb[0].mxu0
  %v7327 = vpop.f32.mrb[0].mxu0
  %v7328 = vadd.f32 0.0, %v7327
  %v7329 = vpop.f32.mrb[0].mxu0
  %7330 = vmatprep.mubr.bf16.mxu0 0
  %7331 = vmatmul.mubr.bf16.gmra.mrb[0].mxu0 %v1108
  %v7332 = vpop.f32.mrb[0].mxu0
  %v7333 = vadd.f32 0.0, %v7332
  %v7334 = vpop.f32.mrb[0].mxu0
  %v7335 = vpop.f32.mrb[0].mxu0
  %v7336 = vadd.f32 0.0, %v7335
  %v7337 = vpop.f32.mrb[0].mxu0
  %7338 = vmatprep.mubr.bf16.mxu0 0
  %7339 = vmatmul.mubr.bf16.gmra.mrb[0].mxu0 %v1111
  %v7340 = vpop.f32.mrb[0].mxu0
  %v7341 = vadd.f32 0.0, %v7340
  %v7342 = vpop.f32.mrb[0].mxu0
  %v7343 = vpop.f32.mrb[0].mxu0
  %v7344 = vadd.f32 0.0, %v7343
  %v7345 = vpop.f32.mrb[0].mxu0
  %7346 = vmatprep.mubr.bf16.mxu0 0
  %7347 = vmatmul.mubr.bf16.gmra.mrb[0].mxu0 %v1114
  %v7348 = vpop.f32.mrb[0].mxu0
  %v7349 = vadd.f32 0.0, %v7348
  %v7350 = vpop.f32.mrb[0].mxu0
  %v7351 = vpop.f32.mrb[0].mxu0
  %v7352 = vadd.f32 0.0, %v7351
  %v7353 = vpop.f32.mrb[0].mxu0
  %7354 = vmatprep.mubr.bf16.mxu0 0
  %7355 = vmatmul.mubr.bf16.gmra.mrb[0].mxu0 %v1117
  %v7356 = vpop.f32.mrb[0].mxu0
  %v7357 = vadd.f32 0.0, %v7356
  %v7358 = vpop.f32.mrb[0].mxu0
  %v7359 = vpop.f32.mrb[0].mxu0
  %v7360 = vadd.f32 0.0, %v7359
  %v7361 = vpop.f32.mrb[0].mxu0
  %7362 = vmatprep.mubr.bf16.mxu0 0
  %7363 = vmatmul.mubr.bf16.gmra.mrb[0].mxu0 %v1120
  %v7364 = vpop.f32.mrb[0].mxu0
  %v7365 = vadd.f32 0.0, %v7364
  %v7366 = vpop.f32.mrb[0].mxu0
  %v7367 = vpop.f32.mrb[0].mxu0
  %v7368 = vadd.f32 0.0, %v7367
  %v7369 = vpop.f32.mrb[0].mxu0
  %7370 = vmatprep.mubr.bf16.mxu0 0
  %7371 = vmatmul.mubr.bf16.gmra.mrb[0].mxu0 %v1123
  %v7372 = vpop.f32.mrb[0].mxu0
  %v7373 = vadd.f32 0.0, %v7372
  %v7374 = vpop.f32.mrb[0].mxu0
  %v7375 = vpop.f32.mrb[0].mxu0
  %v7376 = vadd.f32 0.0, %v7375
  %v7377 = vpop.f32.mrb[0].mxu0
  %7378 = vmatprep.mubr.bf16.mxu0 0
  %7379 = vmatmul.mubr.bf16.gmra.mrb[0].mxu0 %v1126
  %v7380 = vpop.f32.mrb[0].mxu0
  %v7381 = vadd.f32 0.0, %v7380
  %v7382 = vpop.f32.mrb[0].mxu0
  %v7383 = vpop.f32.mrb[0].mxu0
  %v7384 = vadd.f32 0.0, %v7383
  %v7385 = vpop.f32.mrb[0].mxu0
  %7386 = vmatprep.mubr.bf16.mxu0 0
  %7387 = vmatmul.mubr.bf16.gmra.mrb[0].mxu0 %v5090
  %v7388 = vpop.f32.mrb[0].mxu0
  %v7389 = vadd.f32 0.0, %v7388
  %v7390 = vpop.f32.mrb[0].mxu0
  %v7391 = vpop.f32.mrb[0].mxu0
  %v7392 = vadd.f32 0.0, %v7391
  %v7393 = vpop.f32.mrb[0].mxu0
  %7394 = vmatprep.mubr.bf16.mxu0 0
  %7395 = vmatmul.mubr.bf16.gmra.mrb[0].mxu0 %v7112
  %v7396 = vpop.f32.mrb[0].mxu0
  %v7397 = vadd.f32 0.0, %v7396
  %v7398 = vpop.f32.mrb[0].mxu0
  %v7399 = vpop.f32.mrb[0].mxu0
  %v7400 = vadd.f32 0.0, %v7399
  %v7401 = vpop.f32.mrb[0].mxu0
  %7402 = vdwg.mxu0
  %v7403 = vadd.f32 %v6973, %v7149
  %v7404 = vadd.f32 %v6974, %v7152
  %v7405 = vadd.f32 %v6975, %v7157
  %v7406 = vadd.f32 %v6976, %v7160
  %v7407 = vadd.f32 %v6977, %v7165
  %v7408 = vadd.f32 %v6978, %v7168
  %v7409 = vadd.f32 %v6979, %v7173
  %v7410 = vadd.f32 %v6980, %v7176
  %v7411 = vadd.f32 %v6981, %v7181
  %v7412 = vadd.f32 %v6982, %v7184
  %v7413 = vadd.f32 %v6983, %v7189
  %v7414 = vadd.f32 %v6984, %v7192
  %v7415 = vadd.f32 %v6985, %v7197
  %v7416 = vadd.f32 %v6986, %v7200
  %v7417 = vadd.f32 %v6987, %v7205
  %v7418 = vadd.f32 %v6988, %v7208
  %v7419 = vadd.f32 %v6989, %v7213
  %v7420 = vadd.f32 %v6990, %v7216
  %v7421 = vadd.f32 %v6991, %v7221
  %v7422 = vadd.f32 %v6992, %v7224
  %v7423 = vadd.f32 %v6993, %v7229
  %v7424 = vadd.f32 %v6994, %v7232
  %v7425 = vadd.f32 %v6995, %v7237
  %v7426 = vadd.f32 %v6996, %v7240
  %v7427 = vadd.f32 %v6997, %v7245
  %v7428 = vadd.f32 %v6998, %v7248
  %v7429 = vadd.f32 %v6999, %v7253
  %v7430 = vadd.f32 %v7000, %v7256
  %v7431 = vadd.f32 %v7001, %v7261
  %v7432 = vadd.f32 %v7002, %v7264
  %v7433 = vadd.f32 %v7003, %v7269
  %v7434 = vadd.f32 %v7004, %v7272
  %v7435 = vadd.f32 %v7005, %v7277
  %v7436 = vadd.f32 %v7006, %v7280
  %v7437 = vadd.f32 %v7007, %v7285
  %v7438 = vadd.f32 %v7008, %v7288
  %v7439 = vadd.f32 %v7009, %v7293
  %v7440 = vadd.f32 %v7010, %v7296
  %v7441 = vadd.f32 %v7011, %v7301
  %v7442 = vadd.f32 %v7012, %v7304
  %v7443 = vadd.f32 %v7013, %v7309
  %v7444 = vadd.f32 %v7014, %v7312
  %v7445 = vadd.f32 %v7015, %v7317
  %v7446 = vadd.f32 %v7016, %v7320
  %v7447 = vadd.f32 %v7017, %v7325
  %v7448 = vadd.f32 %v7018, %v7328
  %v7449 = vadd.f32 %v7019, %v7333
  %v7450 = vadd.f32 %v7020, %v7336
  %v7451 = vadd.f32 %v7021, %v7341
  %v7452 = vadd.f32 %v7022, %v7344
  %v7453 = vadd.f32 %v7023, %v7349
  %v7454 = vadd.f32 %v7024, %v7352
  %v7455 = vadd.f32 %v7025, %v7357
  %v7456 = vadd.f32 %v7026, %v7360
  %v7457 = vadd.f32 %v7027, %v7365
  %v7458 = vadd.f32 %v7028, %v7368
  %v7459 = vadd.f32 %v7029, %v7373
  %v7460 = vadd.f32 %v7030, %v7376
  %v7461 = vadd.f32 %v7031, %v7381
  %v7462 = vadd.f32 %v7032, %v7384
  %v7463 = vadd.f32 %v7033, %v7389
  %v7464 = vadd.f32 %v7034, %v7392
  %v7465 = vadd.f32 %v7035, %v7397
  %v7466 = vadd.f32 %v7036, %v7400
  %v7469 = vrot.slane %v74, 5
  %v7470 = vrot.slane %v7469, 4
  %v7471 = vrot.slane %v75, 5
  %v7472 = vsel %vm2008, %v7470, %v7471
  %v7473 = vrot.slane %v7471, 4
  %v7474 = vrot.slane %v76, 5
  %v7475 = vsel %vm2008, %v7473, %v7474
  %v7476 = vrot.slane %v134, 5
  %v7477 = vrot.slane %v7476, 4
  %v7478 = vrot.slane %v135, 5
  %v7479 = vsel %vm2008, %v7477, %v7478
  %v7480 = vrot.slane %v7478, 4
  %v7481 = vrot.slane %v136, 5
  %v7482 = vsel %vm2008, %v7480, %v7481
  %s7483 = scalar_lea.vmem %s1, 192
  %v7484 = vld [vmem:[%s7483] sm:$0xf]
  %v7485 = vld [vmem:[%s7483 + $0x4] sm:$0xf]
  %v7486 = vld [vmem:[%s7483 + $0x8] sm:$0xf]
  %v7487 = vld [vmem:[%s7483 + $0xc] sm:$0xf]
  %v7488 = vunpack.c.l.b16 %v7472
  %v7489 = vunpack.c.l.b16 %v7475
  %v7490 = vunpack.c.l.b16 %v7479
  %v7491 = vunpack.c.l.b16 %v7482
  %v7492 = vpack.c.b16 %v7489, %v7488
  %v7493 = vpack.c.b16 %v7491, %v7490
  %v7498 = vunpack.c.l.b16 %v7484
  %v7499 = vunpack.c.l.b16 %v7485
  %v7500 = vunpack.c.l.b16 %v7486
  %v7501 = vunpack.c.l.b16 %v7487
  %v7502 = vpack.c.b16 %v7499, %v7498
  %v7503 = vpack.c.b16 %v7501, %v7500
  %v7507 = vsel %vm1031, %v7492, 0
  %v7510 = vsel %vm1031, %v7493, 0
  %7512 = vmatprep.subr.bf16.mxu0 0
  %7513 = vmatpush1.bf16.msra.mxu0 %v7502
  %7514 = vmatprep.subr.bf16.mxu0 0
  %7515 = vmatpush1.bf16.msra.mxu0 %v7503
  %7516 = vmatprep.subr.bf16.mxu0 0
  %7517 = vmatpush1.bf16.msra.mxu0 0
  %7518 = vmatprep.subr.bf16.mxu0 0
  %7519 = vmatpush1.bf16.msra.mxu0 0
  %7520 = vmatprep.subr.bf16.mxu0 0
  %7521 = vmatpush1.bf16.msra.mxu0 0
  %7522 = vmatprep.subr.bf16.mxu0 0
  %7523 = vmatpush1.bf16.msra.mxu0 0
  %7524 = vmatprep.subr.bf16.mxu0 0
  %7525 = vmatpush1.bf16.msra.mxu0 0
  %7526 = vmatprep.subr.bf16.mxu0 0
  %7527 = vmatpush1.bf16.msra.mxu0 0
  %7528 = vmatprep.subr.bf16.mxu0 0
  %7529 = vmatpush1.bf16.msra.mxu0 0
  %7530 = vmatprep.subr.bf16.mxu0 0
  %7531 = vmatpush1.bf16.msra.mxu0 0
  %7532 = vmatprep.subr.bf16.mxu0 0
  %7533 = vmatpush1.bf16.msra.mxu0 0
  %7534 = vmatprep.subr.bf16.mxu0 0
  %7535 = vmatpush1.bf16.msra.mxu0 0
  %7536 = vmatprep.subr.bf16.mxu0 0
  %7537 = vmatpush1.bf16.msra.mxu0 0
  %7538 = vmatprep.subr.bf16.mxu0 0
  %7539 = vmatpush1.bf16.msra.mxu0 0
  %7540 = vmatprep.subr.bf16.mxu0 0
  %7541 = vmatpush1.bf16.msra.mxu0 0
  %7542 = vmatprep.subr.bf16.mxu0 0
  %7543 = vmatpush1.bf16.msra.mxu0 0
  %7544 = vmatprep.mubr.bf16.mxu0 0
  %7545 = vmatmul.mubr.bf16.gmra.mrb[0].mxu0 %v2353
  %v7546 = vpop.f32.mrb[0].mxu0
  %v7547 = vadd.f32 0.0, %v7546
  %v7548 = vpop.f32.mrb[0].mxu0
  %v7549 = vpop.f32.mrb[0].mxu0
  %v7550 = vadd.f32 0.0, %v7549
  %v7551 = vpop.f32.mrb[0].mxu0
  %7552 = vmatprep.mubr.bf16.mxu0 0
  %7553 = vmatmul.mubr.bf16.gmra.mrb[0].mxu0 %v2356
  %v7554 = vpop.f32.mrb[0].mxu0
  %v7555 = vadd.f32 0.0, %v7554
  %v7556 = vpop.f32.mrb[0].mxu0
  %v7557 = vpop.f32.mrb[0].mxu0
  %v7558 = vadd.f32 0.0, %v7557
  %v7559 = vpop.f32.mrb[0].mxu0
  %7560 = vmatprep.mubr.bf16.mxu0 0
  %7561 = vmatmul.mubr.bf16.gmra.mrb[0].mxu0 %v2359
  %v7562 = vpop.f32.mrb[0].mxu0
  %v7563 = vadd.f32 0.0, %v7562
  %v7564 = vpop.f32.mrb[0].mxu0
  %v7565 = vpop.f32.mrb[0].mxu0
  %v7566 = vadd.f32 0.0, %v7565
  %v7567 = vpop.f32.mrb[0].mxu0
  %7568 = vmatprep.mubr.bf16.mxu0 0
  %7569 = vmatmul.mubr.bf16.gmra.mrb[0].mxu0 %v2362
  %v7570 = vpop.f32.mrb[0].mxu0
  %v7571 = vadd.f32 0.0, %v7570
  %v7572 = vpop.f32.mrb[0].mxu0
  %v7573 = vpop.f32.mrb[0].mxu0
  %v7574 = vadd.f32 0.0, %v7573
  %v7575 = vpop.f32.mrb[0].mxu0
  %7576 = vmatprep.mubr.bf16.mxu0 0
  %7577 = vmatmul.mubr.bf16.gmra.mrb[0].mxu0 %v2365
  %v7578 = vpop.f32.mrb[0].mxu0
  %v7579 = vadd.f32 0.0, %v7578
  %v7580 = vpop.f32.mrb[0].mxu0
  %v7581 = vpop.f32.mrb[0].mxu0
  %v7582 = vadd.f32 0.0, %v7581
  %v7583 = vpop.f32.mrb[0].mxu0
  %7584 = vmatprep.mubr.bf16.mxu0 0
  %7585 = vmatmul.mubr.bf16.gmra.mrb[0].mxu0 %v2368
  %v7586 = vpop.f32.mrb[0].mxu0
  %v7587 = vadd.f32 0.0, %v7586
  %v7588 = vpop.f32.mrb[0].mxu0
  %v7589 = vpop.f32.mrb[0].mxu0
  %v7590 = vadd.f32 0.0, %v7589
  %v7591 = vpop.f32.mrb[0].mxu0
  %7592 = vmatprep.mubr.bf16.mxu0 0
  %7593 = vmatmul.mubr.bf16.gmra.mrb[0].mxu0 %v2371
  %v7594 = vpop.f32.mrb[0].mxu0
  %v7595 = vadd.f32 0.0, %v7594
  %v7596 = vpop.f32.mrb[0].mxu0
  %v7597 = vpop.f32.mrb[0].mxu0
  %v7598 = vadd.f32 0.0, %v7597
  %v7599 = vpop.f32.mrb[0].mxu0
  %7600 = vmatprep.mubr.bf16.mxu0 0
  %7601 = vmatmul.mubr.bf16.gmra.mrb[0].mxu0 %v2374
  %v7602 = vpop.f32.mrb[0].mxu0
  %v7603 = vadd.f32 0.0, %v7602
  %v7604 = vpop.f32.mrb[0].mxu0
  %v7605 = vpop.f32.mrb[0].mxu0
  %v7606 = vadd.f32 0.0, %v7605
  %v7607 = vpop.f32.mrb[0].mxu0
  %7608 = vmatprep.mubr.bf16.mxu0 0
  %7609 = vmatmul.mubr.bf16.gmra.mrb[0].mxu0 %v2377
  %v7610 = vpop.f32.mrb[0].mxu0
  %v7611 = vadd.f32 0.0, %v7610
  %v7612 = vpop.f32.mrb[0].mxu0
  %v7613 = vpop.f32.mrb[0].mxu0
  %v7614 = vadd.f32 0.0, %v7613
  %v7615 = vpop.f32.mrb[0].mxu0
  %7616 = vmatprep.mubr.bf16.mxu0 0
  %7617 = vmatmul.mubr.bf16.gmra.mrb[0].mxu0 %v2380
  %v7618 = vpop.f32.mrb[0].mxu0
  %v7619 = vadd.f32 0.0, %v7618
  %v7620 = vpop.f32.mrb[0].mxu0
  %v7621 = vpop.f32.mrb[0].mxu0
  %v7622 = vadd.f32 0.0, %v7621
  %v7623 = vpop.f32.mrb[0].mxu0
  %7624 = vmatprep.mubr.bf16.mxu0 0
  %7625 = vmatmul.mubr.bf16.gmra.mrb[0].mxu0 %v2383
  %v7626 = vpop.f32.mrb[0].mxu0
  %v7627 = vadd.f32 0.0, %v7626
  %v7628 = vpop.f32.mrb[0].mxu0
  %v7629 = vpop.f32.mrb[0].mxu0
  %v7630 = vadd.f32 0.0, %v7629
  %v7631 = vpop.f32.mrb[0].mxu0
  %7632 = vmatprep.mubr.bf16.mxu0 0
  %7633 = vmatmul.mubr.bf16.gmra.mrb[0].mxu0 %v2386
  %v7634 = vpop.f32.mrb[0].mxu0
  %v7635 = vadd.f32 0.0, %v7634
  %v7636 = vpop.f32.mrb[0].mxu0
  %v7637 = vpop.f32.mrb[0].mxu0
  %v7638 = vadd.f32 0.0, %v7637
  %v7639 = vpop.f32.mrb[0].mxu0
  %7640 = vmatprep.mubr.bf16.mxu0 0
  %7641 = vmatmul.mubr.bf16.gmra.mrb[0].mxu0 %v2389
  %v7642 = vpop.f32.mrb[0].mxu0
  %v7643 = vadd.f32 0.0, %v7642
  %v7644 = vpop.f32.mrb[0].mxu0
  %v7645 = vpop.f32.mrb[0].mxu0
  %v7646 = vadd.f32 0.0, %v7645
  %v7647 = vpop.f32.mrb[0].mxu0
  %7648 = vmatprep.mubr.bf16.mxu0 0
  %7649 = vmatmul.mubr.bf16.gmra.mrb[0].mxu0 %v2392
  %v7650 = vpop.f32.mrb[0].mxu0
  %v7651 = vadd.f32 0.0, %v7650
  %v7652 = vpop.f32.mrb[0].mxu0
  %v7653 = vpop.f32.mrb[0].mxu0
  %v7654 = vadd.f32 0.0, %v7653
  %v7655 = vpop.f32.mrb[0].mxu0
  %7656 = vmatprep.mubr.bf16.mxu0 0
  %7657 = vmatmul.mubr.bf16.gmra.mrb[0].mxu0 %v5485
  %v7658 = vpop.f32.mrb[0].mxu0
  %v7659 = vadd.f32 0.0, %v7658
  %v7660 = vpop.f32.mrb[0].mxu0
  %v7661 = vpop.f32.mrb[0].mxu0
  %v7662 = vadd.f32 0.0, %v7661
  %v7663 = vpop.f32.mrb[0].mxu0
  %7664 = vmatprep.mubr.bf16.mxu0 0
  %7665 = vmatmul.mubr.bf16.gmra.mrb[0].mxu0 %v7507
  %v7666 = vpop.f32.mrb[0].mxu0
  %v7667 = vadd.f32 0.0, %v7666
  %v7668 = vpop.f32.mrb[0].mxu0
  %v7669 = vpop.f32.mrb[0].mxu0
  %v7670 = vadd.f32 0.0, %v7669
  %v7671 = vpop.f32.mrb[0].mxu0
  %7672 = vmatprep.mubr.bf16.mxu0 0
  %7673 = vmatmul.mubr.bf16.gmra.mrb[0].mxu0 %v2401
  %v7674 = vpop.f32.mrb[0].mxu0
  %v7675 = vadd.f32 0.0, %v7674
  %v7676 = vpop.f32.mrb[0].mxu0
  %v7677 = vpop.f32.mrb[0].mxu0
  %v7678 = vadd.f32 0.0, %v7677
  %v7679 = vpop.f32.mrb[0].mxu0
  %7680 = vmatprep.mubr.bf16.mxu0 0
  %7681 = vmatmul.mubr.bf16.gmra.mrb[0].mxu0 %v2404
  %v7682 = vpop.f32.mrb[0].mxu0
  %v7683 = vadd.f32 0.0, %v7682
  %v7684 = vpop.f32.mrb[0].mxu0
  %v7685 = vpop.f32.mrb[0].mxu0
  %v7686 = vadd.f32 0.0, %v7685
  %v7687 = vpop.f32.mrb[0].mxu0
  %7688 = vmatprep.mubr.bf16.mxu0 0
  %7689 = vmatmul.mubr.bf16.gmra.mrb[0].mxu0 %v2407
  %v7690 = vpop.f32.mrb[0].mxu0
  %v7691 = vadd.f32 0.0, %v7690
  %v7692 = vpop.f32.mrb[0].mxu0
  %v7693 = vpop.f32.mrb[0].mxu0
  %v7694 = vadd.f32 0.0, %v7693
  %v7695 = vpop.f32.mrb[0].mxu0
  %7696 = vmatprep.mubr.bf16.mxu0 0
  %7697 = vmatmul.mubr.bf16.gmra.mrb[0].mxu0 %v2410
  %v7698 = vpop.f32.mrb[0].mxu0
  %v7699 = vadd.f32 0.0, %v7698
  %v7700 = vpop.f32.mrb[0].mxu0
  %v7701 = vpop.f32.mrb[0].mxu0
  %v7702 = vadd.f32 0.0, %v7701
  %v7703 = vpop.f32.mrb[0].mxu0
  %7704 = vmatprep.mubr.bf16.mxu0 0
  %7705 = vmatmul.mubr.bf16.gmra.mrb[0].mxu0 %v2413
  %v7706 = vpop.f32.mrb[0].mxu0
  %v7707 = vadd.f32 0.0, %v7706
  %v7708 = vpop.f32.mrb[0].mxu0
  %v7709 = vpop.f32.mrb[0].mxu0
  %v7710 = vadd.f32 0.0, %v7709
  %v7711 = vpop.f32.mrb[0].mxu0
  %7712 = vmatprep.mubr.bf16.mxu0 0
  %7713 = vmatmul.mubr.bf16.gmra.mrb[0].mxu0 %v2416
  %v7714 = vpop.f32.mrb[0].mxu0
  %v7715 = vadd.f32 0.0, %v7714
  %v7716 = vpop.f32.mrb[0].mxu0
  %v7717 = vpop.f32.mrb[0].mxu0
  %v7718 = vadd.f32 0.0, %v7717
  %v7719 = vpop.f32.mrb[0].mxu0
  %7720 = vmatprep.mubr.bf16.mxu0 0
  %7721 = vmatmul.mubr.bf16.gmra.mrb[0].mxu0 %v2419
  %v7722 = vpop.f32.mrb[0].mxu0
  %v7723 = vadd.f32 0.0, %v7722
  %v7724 = vpop.f32.mrb[0].mxu0
  %v7725 = vpop.f32.mrb[0].mxu0
  %v7726 = vadd.f32 0.0, %v7725
  %v7727 = vpop.f32.mrb[0].mxu0
  %7728 = vmatprep.mubr.bf16.mxu0 0
  %7729 = vmatmul.mubr.bf16.gmra.mrb[0].mxu0 %v2422
  %v7730 = vpop.f32.mrb[0].mxu0
  %v7731 = vadd.f32 0.0, %v7730
  %v7732 = vpop.f32.mrb[0].mxu0
  %v7733 = vpop.f32.mrb[0].mxu0
  %v7734 = vadd.f32 0.0, %v7733
  %v7735 = vpop.f32.mrb[0].mxu0
  %7736 = vmatprep.mubr.bf16.mxu0 0
  %7737 = vmatmul.mubr.bf16.gmra.mrb[0].mxu0 %v2425
  %v7738 = vpop.f32.mrb[0].mxu0
  %v7739 = vadd.f32 0.0, %v7738
  %v7740 = vpop.f32.mrb[0].mxu0
  %v7741 = vpop.f32.mrb[0].mxu0
  %v7742 = vadd.f32 0.0, %v7741
  %v7743 = vpop.f32.mrb[0].mxu0
  %7744 = vmatprep.mubr.bf16.mxu0 0
  %7745 = vmatmul.mubr.bf16.gmra.mrb[0].mxu0 %v2428
  %v7746 = vpop.f32.mrb[0].mxu0
  %v7747 = vadd.f32 0.0, %v7746
  %v7748 = vpop.f32.mrb[0].mxu0
  %v7749 = vpop.f32.mrb[0].mxu0
  %v7750 = vadd.f32 0.0, %v7749
  %v7751 = vpop.f32.mrb[0].mxu0
  %7752 = vmatprep.mubr.bf16.mxu0 0
  %7753 = vmatmul.mubr.bf16.gmra.mrb[0].mxu0 %v2431
  %v7754 = vpop.f32.mrb[0].mxu0
  %v7755 = vadd.f32 0.0, %v7754
  %v7756 = vpop.f32.mrb[0].mxu0
  %v7757 = vpop.f32.mrb[0].mxu0
  %v7758 = vadd.f32 0.0, %v7757
  %v7759 = vpop.f32.mrb[0].mxu0
  %7760 = vmatprep.mubr.bf16.mxu0 0
  %7761 = vmatmul.mubr.bf16.gmra.mrb[0].mxu0 %v2434
  %v7762 = vpop.f32.mrb[0].mxu0
  %v7763 = vadd.f32 0.0, %v7762
  %v7764 = vpop.f32.mrb[0].mxu0
  %v7765 = vpop.f32.mrb[0].mxu0
  %v7766 = vadd.f32 0.0, %v7765
  %v7767 = vpop.f32.mrb[0].mxu0
  %7768 = vmatprep.mubr.bf16.mxu0 0
  %7769 = vmatmul.mubr.bf16.gmra.mrb[0].mxu0 %v2437
  %v7770 = vpop.f32.mrb[0].mxu0
  %v7771 = vadd.f32 0.0, %v7770
  %v7772 = vpop.f32.mrb[0].mxu0
  %v7773 = vpop.f32.mrb[0].mxu0
  %v7774 = vadd.f32 0.0, %v7773
  %v7775 = vpop.f32.mrb[0].mxu0
  %7776 = vmatprep.mubr.bf16.mxu0 0
  %7777 = vmatmul.mubr.bf16.gmra.mrb[0].mxu0 %v2440
  %v7778 = vpop.f32.mrb[0].mxu0
  %v7779 = vadd.f32 0.0, %v7778
  %v7780 = vpop.f32.mrb[0].mxu0
  %v7781 = vpop.f32.mrb[0].mxu0
  %v7782 = vadd.f32 0.0, %v7781
  %v7783 = vpop.f32.mrb[0].mxu0
  %7784 = vmatprep.mubr.bf16.mxu0 0
  %7785 = vmatmul.mubr.bf16.gmra.mrb[0].mxu0 %v5488
  %v7786 = vpop.f32.mrb[0].mxu0
  %v7787 = vadd.f32 0.0, %v7786
  %v7788 = vpop.f32.mrb[0].mxu0
  %v7789 = vpop.f32.mrb[0].mxu0
  %v7790 = vadd.f32 0.0, %v7789
  %v7791 = vpop.f32.mrb[0].mxu0
  %7792 = vmatprep.mubr.bf16.mxu0 0
  %7793 = vmatmul.mubr.bf16.gmra.mrb[0].mxu0 %v7510
  %v7794 = vpop.f32.mrb[0].mxu0
  %v7795 = vadd.f32 0.0, %v7794
  %v7796 = vpop.f32.mrb[0].mxu0
  %v7797 = vpop.f32.mrb[0].mxu0
  %v7798 = vadd.f32 0.0, %v7797
  %v7799 = vpop.f32.mrb[0].mxu0
  %7800 = vdwg.mxu0
  %v7801 = vadd.f32 %v7403, %v7547
  %v7802 = vadd.f32 %v7404, %v7550
  %v7803 = vadd.f32 %v7405, %v7555
  %v7804 = vadd.f32 %v7406, %v7558
  %v7805 = vadd.f32 %v7407, %v7563
  %v7806 = vadd.f32 %v7408, %v7566
  %v7807 = vadd.f32 %v7409, %v7571
  %v7808 = vadd.f32 %v7410, %v7574
  %v7809 = vadd.f32 %v7411, %v7579
  %v7810 = vadd.f32 %v7412, %v7582
  %v7811 = vadd.f32 %v7413, %v7587
  %v7812 = vadd.f32 %v7414, %v7590
  %v7813 = vadd.f32 %v7415, %v7595
  %v7814 = vadd.f32 %v7416, %v7598
  %v7815 = vadd.f32 %v7417, %v7603
  %v7816 = vadd.f32 %v7418, %v7606
  %v7817 = vadd.f32 %v7419, %v7611
  %v7818 = vadd.f32 %v7420, %v7614
  %v7819 = vadd.f32 %v7421, %v7619
  %v7820 = vadd.f32 %v7422, %v7622
  %v7821 = vadd.f32 %v7423, %v7627
  %v7822 = vadd.f32 %v7424, %v7630
  %v7823 = vadd.f32 %v7425, %v7635
  %v7824 = vadd.f32 %v7426, %v7638
  %v7825 = vadd.f32 %v7427, %v7643
  %v7826 = vadd.f32 %v7428, %v7646
  %v7827 = vadd.f32 %v7429, %v7651
  %v7828 = vadd.f32 %v7430, %v7654
  %v7829 = vadd.f32 %v7431, %v7659
  %v7830 = vadd.f32 %v7432, %v7662
  %v7831 = vadd.f32 %v7433, %v7667
  %v7832 = vadd.f32 %v7434, %v7670
  %v7833 = vadd.f32 %v7435, %v7675
  %v7834 = vadd.f32 %v7436, %v7678
  %v7835 = vadd.f32 %v7437, %v7683
  %v7836 = vadd.f32 %v7438, %v7686
  %v7837 = vadd.f32 %v7439, %v7691
  %v7838 = vadd.f32 %v7440, %v7694
  %v7839 = vadd.f32 %v7441, %v7699
  %v7840 = vadd.f32 %v7442, %v7702
  %v7841 = vadd.f32 %v7443, %v7707
  %v7842 = vadd.f32 %v7444, %v7710
  %v7843 = vadd.f32 %v7445, %v7715
  %v7844 = vadd.f32 %v7446, %v7718
  %v7845 = vadd.f32 %v7447, %v7723
  %v7846 = vadd.f32 %v7448, %v7726
  %v7847 = vadd.f32 %v7449, %v7731
  %v7848 = vadd.f32 %v7450, %v7734
  %v7849 = vadd.f32 %v7451, %v7739
  %v7850 = vadd.f32 %v7452, %v7742
  %v7851 = vadd.f32 %v7453, %v7747
  %v7852 = vadd.f32 %v7454, %v7750
  %v7853 = vadd.f32 %v7455, %v7755
  %v7854 = vadd.f32 %v7456, %v7758
  %v7855 = vadd.f32 %v7457, %v7763
  %v7856 = vadd.f32 %v7458, %v7766
  %v7857 = vadd.f32 %v7459, %v7771
  %v7858 = vadd.f32 %v7460, %v7774
  %v7859 = vadd.f32 %v7461, %v7779
  %v7860 = vadd.f32 %v7462, %v7782
  %v7861 = vadd.f32 %v7463, %v7787
  %v7862 = vadd.f32 %v7464, %v7790
  %v7863 = vadd.f32 %v7465, %v7795
  %v7864 = vadd.f32 %v7466, %v7798
  %v7865 = vrot.slane %v7038, 5
  %v7866 = vrot.slane %v7041, 6
  %v7867 = vor.u32 %v7865, %v7866
  %v7868 = vrot.slane %v7867, 4
  %v7869 = vrot.slane %v7051, 5
  %v7870 = vrot.slane %v7047, 6
  %v7871 = vor.u32 %v7869, %v7870
  %v7872 = vsel %vm2797, %v7868, %v7871
  %v7873 = vrot.slane %v7871, 4
  %v7874 = vshrl.u32 %v76, 16
  %v7876 = vrot.slane %v7874, 5
  %v7877 = vrot.slane %v7057, 6
  %v7878 = vor.u32 %v7876, %v7877
  %v7879 = vsel %vm2797, %v7873, %v7878
  %v7880 = vrot.slane %v7062, 5
  %v7881 = vrot.slane %v7065, 6
  %v7882 = vor.u32 %v7880, %v7881
  %v7883 = vrot.slane %v7882, 4
  %v7884 = vrot.slane %v7075, 5
  %v7885 = vrot.slane %v7071, 6
  %v7886 = vor.u32 %v7884, %v7885
  %v7887 = vsel %vm2797, %v7883, %v7886
  %v7888 = vrot.slane %v7886, 4
  %v7889 = vshrl.u32 %v136, 16
  %v7891 = vrot.slane %v7889, 5
  %v7892 = vrot.slane %v7081, 6
  %v7893 = vor.u32 %v7891, %v7892
  %v7894 = vsel %vm2797, %v7888, %v7893
  %s7895 = scalar_lea.vmem %s1, 208
  %v7896 = vld [vmem:[%s7895] sm:$0xf]
  %v7897 = vld [vmem:[%s7895 + $0x4] sm:$0xf]
  %v7898 = vld [vmem:[%s7895 + $0x8] sm:$0xf]
  %v7899 = vld [vmem:[%s7895 + $0xc] sm:$0xf]
  %v7900 = vunpack.c.l.b16 %v7872
  %v7901 = vunpack.c.l.b16 %v7879
  %v7902 = vunpack.c.l.b16 %v7887
  %v7903 = vunpack.c.l.b16 %v7894
  %v7904 = vpack.c.b16 %v7901, %v7900
  %v7905 = vpack.c.b16 %v7903, %v7902
  %v7910 = vunpack.c.l.b16 %v7896
  %v7911 = vunpack.c.l.b16 %v7897
  %v7912 = vunpack.c.l.b16 %v7898
  %v7913 = vunpack.c.l.b16 %v7899
  %v7914 = vpack.c.b16 %v7911, %v7910
  %v7915 = vpack.c.b16 %v7913, %v7912
  %v7919 = vsel %vm1031, %v7904, 0
  %v7922 = vsel %vm1031, %v7905, 0
  %7924 = vmatprep.subr.bf16.mxu0 0
  %7925 = vmatpush1.bf16.msra.mxu0 %v7914
  %7926 = vmatprep.subr.bf16.mxu0 0
  %7927 = vmatpush1.bf16.msra.mxu0 %v7915
  %7928 = vmatprep.subr.bf16.mxu0 0
  %7929 = vmatpush1.bf16.msra.mxu0 0
  %7930 = vmatprep.subr.bf16.mxu0 0
  %7931 = vmatpush1.bf16.msra.mxu0 0
  %7932 = vmatprep.subr.bf16.mxu0 0
  %7933 = vmatpush1.bf16.msra.mxu0 0
  %7934 = vmatprep.subr.bf16.mxu0 0
  %7935 = vmatpush1.bf16.msra.mxu0 0
  %7936 = vmatprep.subr.bf16.mxu0 0
  %7937 = vmatpush1.bf16.msra.mxu0 0
  %7938 = vmatprep.subr.bf16.mxu0 0
  %7939 = vmatpush1.bf16.msra.mxu0 0
  %7940 = vmatprep.subr.bf16.mxu0 0
  %7941 = vmatpush1.bf16.msra.mxu0 0
  %7942 = vmatprep.subr.bf16.mxu0 0
  %7943 = vmatpush1.bf16.msra.mxu0 0
  %7944 = vmatprep.subr.bf16.mxu0 0
  %7945 = vmatpush1.bf16.msra.mxu0 0
  %7946 = vmatprep.subr.bf16.mxu0 0
  %7947 = vmatpush1.bf16.msra.mxu0 0
  %7948 = vmatprep.subr.bf16.mxu0 0
  %7949 = vmatpush1.bf16.msra.mxu0 0
  %7950 = vmatprep.subr.bf16.mxu0 0
  %7951 = vmatpush1.bf16.msra.mxu0 0
  %7952 = vmatprep.subr.bf16.mxu0 0
  %7953 = vmatpush1.bf16.msra.mxu0 0
  %7954 = vmatprep.subr.bf16.mxu0 0
  %7955 = vmatpush1.bf16.msra.mxu0 0
  %7956 = vmatprep.mubr.bf16.mxu0 0
  %7957 = vmatmul.mubr.bf16.gmra.mrb[0].mxu0 %v3398
  %v7958 = vpop.f32.mrb[0].mxu0
  %v7959 = vadd.f32 0.0, %v7958
  %v7960 = vpop.f32.mrb[0].mxu0
  %v7961 = vpop.f32.mrb[0].mxu0
  %v7962 = vadd.f32 0.0, %v7961
  %v7963 = vpop.f32.mrb[0].mxu0
  %7964 = vmatprep.mubr.bf16.mxu0 0
  %7965 = vmatmul.mubr.bf16.gmra.mrb[0].mxu0 %v3401
  %v7966 = vpop.f32.mrb[0].mxu0
  %v7967 = vadd.f32 0.0, %v7966
  %v7968 = vpop.f32.mrb[0].mxu0
  %v7969 = vpop.f32.mrb[0].mxu0
  %v7970 = vadd.f32 0.0, %v7969
  %v7971 = vpop.f32.mrb[0].mxu0
  %7972 = vmatprep.mubr.bf16.mxu0 0
  %7973 = vmatmul.mubr.bf16.gmra.mrb[0].mxu0 %v3404
  %v7974 = vpop.f32.mrb[0].mxu0
  %v7975 = vadd.f32 0.0, %v7974
  %v7976 = vpop.f32.mrb[0].mxu0
  %v7977 = vpop.f32.mrb[0].mxu0
  %v7978 = vadd.f32 0.0, %v7977
  %v7979 = vpop.f32.mrb[0].mxu0
  %7980 = vmatprep.mubr.bf16.mxu0 0
  %7981 = vmatmul.mubr.bf16.gmra.mrb[0].mxu0 %v3407
  %v7982 = vpop.f32.mrb[0].mxu0
  %v7983 = vadd.f32 0.0, %v7982
  %v7984 = vpop.f32.mrb[0].mxu0
  %v7985 = vpop.f32.mrb[0].mxu0
  %v7986 = vadd.f32 0.0, %v7985
  %v7987 = vpop.f32.mrb[0].mxu0
  %7988 = vmatprep.mubr.bf16.mxu0 0
  %7989 = vmatmul.mubr.bf16.gmra.mrb[0].mxu0 %v3410
  %v7990 = vpop.f32.mrb[0].mxu0
  %v7991 = vadd.f32 0.0, %v7990
  %v7992 = vpop.f32.mrb[0].mxu0
  %v7993 = vpop.f32.mrb[0].mxu0
  %v7994 = vadd.f32 0.0, %v7993
  %v7995 = vpop.f32.mrb[0].mxu0
  %7996 = vmatprep.mubr.bf16.mxu0 0
  %7997 = vmatmul.mubr.bf16.gmra.mrb[0].mxu0 %v3413
  %v7998 = vpop.f32.mrb[0].mxu0
  %v7999 = vadd.f32 0.0, %v7998
  %v8000 = vpop.f32.mrb[0].mxu0
  %v8001 = vpop.f32.mrb[0].mxu0
  %v8002 = vadd.f32 0.0, %v8001
  %v8003 = vpop.f32.mrb[0].mxu0
  %8004 = vmatprep.mubr.bf16.mxu0 0
  %8005 = vmatmul.mubr.bf16.gmra.mrb[0].mxu0 %v3416
  %v8006 = vpop.f32.mrb[0].mxu0
  %v8007 = vadd.f32 0.0, %v8006
  %v8008 = vpop.f32.mrb[0].mxu0
  %v8009 = vpop.f32.mrb[0].mxu0
  %v8010 = vadd.f32 0.0, %v8009
  %v8011 = vpop.f32.mrb[0].mxu0
  %8012 = vmatprep.mubr.bf16.mxu0 0
  %8013 = vmatmul.mubr.bf16.gmra.mrb[0].mxu0 %v3419
  %v8014 = vpop.f32.mrb[0].mxu0
  %v8015 = vadd.f32 0.0, %v8014
  %v8016 = vpop.f32.mrb[0].mxu0
  %v8017 = vpop.f32.mrb[0].mxu0
  %v8018 = vadd.f32 0.0, %v8017
  %v8019 = vpop.f32.mrb[0].mxu0
  %8020 = vmatprep.mubr.bf16.mxu0 0
  %8021 = vmatmul.mubr.bf16.gmra.mrb[0].mxu0 %v3422
  %v8022 = vpop.f32.mrb[0].mxu0
  %v8023 = vadd.f32 0.0, %v8022
  %v8024 = vpop.f32.mrb[0].mxu0
  %v8025 = vpop.f32.mrb[0].mxu0
  %v8026 = vadd.f32 0.0, %v8025
  %v8027 = vpop.f32.mrb[0].mxu0
  %8028 = vmatprep.mubr.bf16.mxu0 0
  %8029 = vmatmul.mubr.bf16.gmra.mrb[0].mxu0 %v3425
  %v8030 = vpop.f32.mrb[0].mxu0
  %v8031 = vadd.f32 0.0, %v8030
  %v8032 = vpop.f32.mrb[0].mxu0
  %v8033 = vpop.f32.mrb[0].mxu0
  %v8034 = vadd.f32 0.0, %v8033
  %v8035 = vpop.f32.mrb[0].mxu0
  %8036 = vmatprep.mubr.bf16.mxu0 0
  %8037 = vmatmul.mubr.bf16.gmra.mrb[0].mxu0 %v3428
  %v8038 = vpop.f32.mrb[0].mxu0
  %v8039 = vadd.f32 0.0, %v8038
  %v8040 = vpop.f32.mrb[0].mxu0
  %v8041 = vpop.f32.mrb[0].mxu0
  %v8042 = vadd.f32 0.0, %v8041
  %v8043 = vpop.f32.mrb[0].mxu0
  %8044 = vmatprep.mubr.bf16.mxu0 0
  %8045 = vmatmul.mubr.bf16.gmra.mrb[0].mxu0 %v3431
  %v8046 = vpop.f32.mrb[0].mxu0
  %v8047 = vadd.f32 0.0, %v8046
  %v8048 = vpop.f32.mrb[0].mxu0
  %v8049 = vpop.f32.mrb[0].mxu0
  %v8050 = vadd.f32 0.0, %v8049
  %v8051 = vpop.f32.mrb[0].mxu0
  %8052 = vmatprep.mubr.bf16.mxu0 0
  %8053 = vmatmul.mubr.bf16.gmra.mrb[0].mxu0 %v3434
  %v8054 = vpop.f32.mrb[0].mxu0
  %v8055 = vadd.f32 0.0, %v8054
  %v8056 = vpop.f32.mrb[0].mxu0
  %v8057 = vpop.f32.mrb[0].mxu0
  %v8058 = vadd.f32 0.0, %v8057
  %v8059 = vpop.f32.mrb[0].mxu0
  %8060 = vmatprep.mubr.bf16.mxu0 0
  %8061 = vmatmul.mubr.bf16.gmra.mrb[0].mxu0 %v3437
  %v8062 = vpop.f32.mrb[0].mxu0
  %v8063 = vadd.f32 0.0, %v8062
  %v8064 = vpop.f32.mrb[0].mxu0
  %v8065 = vpop.f32.mrb[0].mxu0
  %v8066 = vadd.f32 0.0, %v8065
  %v8067 = vpop.f32.mrb[0].mxu0
  %8068 = vmatprep.mubr.bf16.mxu0 0
  %8069 = vmatmul.mubr.bf16.gmra.mrb[0].mxu0 %v5897
  %v8070 = vpop.f32.mrb[0].mxu0
  %v8071 = vadd.f32 0.0, %v8070
  %v8072 = vpop.f32.mrb[0].mxu0
  %v8073 = vpop.f32.mrb[0].mxu0
  %v8074 = vadd.f32 0.0, %v8073
  %v8075 = vpop.f32.mrb[0].mxu0
  %8076 = vmatprep.mubr.bf16.mxu0 0
  %8077 = vmatmul.mubr.bf16.gmra.mrb[0].mxu0 %v7919
  %v8078 = vpop.f32.mrb[0].mxu0
  %v8079 = vadd.f32 0.0, %v8078
  %v8080 = vpop.f32.mrb[0].mxu0
  %v8081 = vpop.f32.mrb[0].mxu0
  %v8082 = vadd.f32 0.0, %v8081
  %v8083 = vpop.f32.mrb[0].mxu0
  %8084 = vmatprep.mubr.bf16.mxu0 0
  %8085 = vmatmul.mubr.bf16.gmra.mrb[0].mxu0 %v3446
  %v8086 = vpop.f32.mrb[0].mxu0
  %v8087 = vadd.f32 0.0, %v8086
  %v8088 = vpop.f32.mrb[0].mxu0
  %v8089 = vpop.f32.mrb[0].mxu0
  %v8090 = vadd.f32 0.0, %v8089
  %v8091 = vpop.f32.mrb[0].mxu0
  %8092 = vmatprep.mubr.bf16.mxu0 0
  %8093 = vmatmul.mubr.bf16.gmra.mrb[0].mxu0 %v3449
  %v8094 = vpop.f32.mrb[0].mxu0
  %v8095 = vadd.f32 0.0, %v8094
  %v8096 = vpop.f32.mrb[0].mxu0
  %v8097 = vpop.f32.mrb[0].mxu0
  %v8098 = vadd.f32 0.0, %v8097
  %v8099 = vpop.f32.mrb[0].mxu0
  %8100 = vmatprep.mubr.bf16.mxu0 0
  %8101 = vmatmul.mubr.bf16.gmra.mrb[0].mxu0 %v3452
  %v8102 = vpop.f32.mrb[0].mxu0
  %v8103 = vadd.f32 0.0, %v8102
  %v8104 = vpop.f32.mrb[0].mxu0
  %v8105 = vpop.f32.mrb[0].mxu0
  %v8106 = vadd.f32 0.0, %v8105
  %v8107 = vpop.f32.mrb[0].mxu0
  %8108 = vmatprep.mubr.bf16.mxu0 0
  %8109 = vmatmul.mubr.bf16.gmra.mrb[0].mxu0 %v3455
  %v8110 = vpop.f32.mrb[0].mxu0
  %v8111 = vadd.f32 0.0, %v8110
  %v8112 = vpop.f32.mrb[0].mxu0
  %v8113 = vpop.f32.mrb[0].mxu0
  %v8114 = vadd.f32 0.0, %v8113
  %v8115 = vpop.f32.mrb[0].mxu0
  %8116 = vmatprep.mubr.bf16.mxu0 0
  %8117 = vmatmul.mubr.bf16.gmra.mrb[0].mxu0 %v3458
  %v8118 = vpop.f32.mrb[0].mxu0
  %v8119 = vadd.f32 0.0, %v8118
  %v8120 = vpop.f32.mrb[0].mxu0
  %v8121 = vpop.f32.mrb[0].mxu0
  %v8122 = vadd.f32 0.0, %v8121
  %v8123 = vpop.f32.mrb[0].mxu0
  %8124 = vmatprep.mubr.bf16.mxu0 0
  %8125 = vmatmul.mubr.bf16.gmra.mrb[0].mxu0 %v3461
  %v8126 = vpop.f32.mrb[0].mxu0
  %v8127 = vadd.f32 0.0, %v8126
  %v8128 = vpop.f32.mrb[0].mxu0
  %v8129 = vpop.f32.mrb[0].mxu0
  %v8130 = vadd.f32 0.0, %v8129
  %v8131 = vpop.f32.mrb[0].mxu0
  %8132 = vmatprep.mubr.bf16.mxu0 0
  %8133 = vmatmul.mubr.bf16.gmra.mrb[0].mxu0 %v3464
  %v8134 = vpop.f32.mrb[0].mxu0
  %v8135 = vadd.f32 0.0, %v8134
  %v8136 = vpop.f32.mrb[0].mxu0
  %v8137 = vpop.f32.mrb[0].mxu0
  %v8138 = vadd.f32 0.0, %v8137
  %v8139 = vpop.f32.mrb[0].mxu0
  %8140 = vmatprep.mubr.bf16.mxu0 0
  %8141 = vmatmul.mubr.bf16.gmra.mrb[0].mxu0 %v3467
  %v8142 = vpop.f32.mrb[0].mxu0
  %v8143 = vadd.f32 0.0, %v8142
  %v8144 = vpop.f32.mrb[0].mxu0
  %v8145 = vpop.f32.mrb[0].mxu0
  %v8146 = vadd.f32 0.0, %v8145
  %v8147 = vpop.f32.mrb[0].mxu0
  %8148 = vmatprep.mubr.bf16.mxu0 0
  %8149 = vmatmul.mubr.bf16.gmra.mrb[0].mxu0 %v3470
  %v8150 = vpop.f32.mrb[0].mxu0
  %v8151 = vadd.f32 0.0, %v8150
  %v8152 = vpop.f32.mrb[0].mxu0
  %v8153 = vpop.f32.mrb[0].mxu0
  %v8154 = vadd.f32 0.0, %v8153
  %v8155 = vpop.f32.mrb[0].mxu0
  %8156 = vmatprep.mubr.bf16.mxu0 0
  %8157 = vmatmul.mubr.bf16.gmra.mrb[0].mxu0 %v3473
  %v8158 = vpop.f32.mrb[0].mxu0
  %v8159 = vadd.f32 0.0, %v8158
  %v8160 = vpop.f32.mrb[0].mxu0
  %v8161 = vpop.f32.mrb[0].mxu0
  %v8162 = vadd.f32 0.0, %v8161
  %v8163 = vpop.f32.mrb[0].mxu0
  %8164 = vmatprep.mubr.bf16.mxu0 0
  %8165 = vmatmul.mubr.bf16.gmra.mrb[0].mxu0 %v3476
  %v8166 = vpop.f32.mrb[0].mxu0
  %v8167 = vadd.f32 0.0, %v8166
  %v8168 = vpop.f32.mrb[0].mxu0
  %v8169 = vpop.f32.mrb[0].mxu0
  %v8170 = vadd.f32 0.0, %v8169
  %v8171 = vpop.f32.mrb[0].mxu0
  %8172 = vmatprep.mubr.bf16.mxu0 0
  %8173 = vmatmul.mubr.bf16.gmra.mrb[0].mxu0 %v3479
  %v8174 = vpop.f32.mrb[0].mxu0
  %v8175 = vadd.f32 0.0, %v8174
  %v8176 = vpop.f32.mrb[0].mxu0
  %v8177 = vpop.f32.mrb[0].mxu0
  %v8178 = vadd.f32 0.0, %v8177
  %v8179 = vpop.f32.mrb[0].mxu0
  %8180 = vmatprep.mubr.bf16.mxu0 0
  %8181 = vmatmul.mubr.bf16.gmra.mrb[0].mxu0 %v3482
  %v8182 = vpop.f32.mrb[0].mxu0
  %v8183 = vadd.f32 0.0, %v8182
  %v8184 = vpop.f32.mrb[0].mxu0
  %v8185 = vpop.f32.mrb[0].mxu0
  %v8186 = vadd.f32 0.0, %v8185
  %v8187 = vpop.f32.mrb[0].mxu0
  %8188 = vmatprep.mubr.bf16.mxu0 0
  %8189 = vmatmul.mubr.bf16.gmra.mrb[0].mxu0 %v3485
  %v8190 = vpop.f32.mrb[0].mxu0
  %v8191 = vadd.f32 0.0, %v8190
  %v8192 = vpop.f32.mrb[0].mxu0
  %v8193 = vpop.f32.mrb[0].mxu0
  %v8194 = vadd.f32 0.0, %v8193
  %v8195 = vpop.f32.mrb[0].mxu0
  %8196 = vmatprep.mubr.bf16.mxu0 0
  %8197 = vmatmul.mubr.bf16.gmra.mrb[0].mxu0 %v5900
  %v8198 = vpop.f32.mrb[0].mxu0
  %v8199 = vadd.f32 0.0, %v8198
  %v8200 = vpop.f32.mrb[0].mxu0
  %v8201 = vpop.f32.mrb[0].mxu0
  %v8202 = vadd.f32 0.0, %v8201
  %v8203 = vpop.f32.mrb[0].mxu0
  %8204 = vmatprep.mubr.bf16.mxu0 0
  %8205 = vmatmul.mubr.bf16.gmra.mrb[0].mxu0 %v7922
  %v8206 = vpop.f32.mrb[0].mxu0
  %v8207 = vadd.f32 0.0, %v8206
  %v8208 = vpop.f32.mrb[0].mxu0
  %v8209 = vpop.f32.mrb[0].mxu0
  %v8210 = vadd.f32 0.0, %v8209
  %v8211 = vpop.f32.mrb[0].mxu0
  %8212 = vdwg.mxu0
  %v8213 = vadd.f32 %v7801, %v7959
  %v8214 = vadd.f32 %v7802, %v7962
  %v8215 = vadd.f32 %v7803, %v7967
  %v8216 = vadd.f32 %v7804, %v7970
  %v8217 = vadd.f32 %v7805, %v7975
  %v8218 = vadd.f32 %v7806, %v7978
  %v8219 = vadd.f32 %v7807, %v7983
  %v8220 = vadd.f32 %v7808, %v7986
  %v8221 = vadd.f32 %v7809, %v7991
  %v8222 = vadd.f32 %v7810, %v7994
  %v8223 = vadd.f32 %v7811, %v7999
  %v8224 = vadd.f32 %v7812, %v8002
  %v8225 = vadd.f32 %v7813, %v8007
  %v8226 = vadd.f32 %v7814, %v8010
  %v8227 = vadd.f32 %v7815, %v8015
  %v8228 = vadd.f32 %v7816, %v8018
  %v8229 = vadd.f32 %v7817, %v8023
  %v8230 = vadd.f32 %v7818, %v8026
  %v8231 = vadd.f32 %v7819, %v8031
  %v8232 = vadd.f32 %v7820, %v8034
  %v8233 = vadd.f32 %v7821, %v8039
  %v8234 = vadd.f32 %v7822, %v8042
  %v8235 = vadd.f32 %v7823, %v8047
  %v8236 = vadd.f32 %v7824, %v8050
  %v8237 = vadd.f32 %v7825, %v8055
  %v8238 = vadd.f32 %v7826, %v8058
  %v8239 = vadd.f32 %v7827, %v8063
  %v8240 = vadd.f32 %v7828, %v8066
  %v8241 = vadd.f32 %v7829, %v8071
  %v8242 = vadd.f32 %v7830, %v8074
  %v8243 = vadd.f32 %v7831, %v8079
  %v8244 = vadd.f32 %v7832, %v8082
  %v8245 = vadd.f32 %v7833, %v8087
  %v8246 = vadd.f32 %v7834, %v8090
  %v8247 = vadd.f32 %v7835, %v8095
  %v8248 = vadd.f32 %v7836, %v8098
  %v8249 = vadd.f32 %v7837, %v8103
  %v8250 = vadd.f32 %v7838, %v8106
  %v8251 = vadd.f32 %v7839, %v8111
  %v8252 = vadd.f32 %v7840, %v8114
  %v8253 = vadd.f32 %v7841, %v8119
  %v8254 = vadd.f32 %v7842, %v8122
  %v8255 = vadd.f32 %v7843, %v8127
  %v8256 = vadd.f32 %v7844, %v8130
  %v8257 = vadd.f32 %v7845, %v8135
  %v8258 = vadd.f32 %v7846, %v8138
  %v8259 = vadd.f32 %v7847, %v8143
  %v8260 = vadd.f32 %v7848, %v8146
  %v8261 = vadd.f32 %v7849, %v8151
  %v8262 = vadd.f32 %v7850, %v8154
  %v8263 = vadd.f32 %v7851, %v8159
  %v8264 = vadd.f32 %v7852, %v8162
  %v8265 = vadd.f32 %v7853, %v8167
  %v8266 = vadd.f32 %v7854, %v8170
  %v8267 = vadd.f32 %v7855, %v8175
  %v8268 = vadd.f32 %v7856, %v8178
  %v8269 = vadd.f32 %v7857, %v8183
  %v8270 = vadd.f32 %v7858, %v8186
  %v8271 = vadd.f32 %v7859, %v8191
  %v8272 = vadd.f32 %v7860, %v8194
  %v8273 = vadd.f32 %v7861, %v8199
  %v8274 = vadd.f32 %v7862, %v8202
  %v8275 = vadd.f32 %v7863, %v8207
  %v8276 = vadd.f32 %v7864, %v8210
  %v8277 = vrot.slane %v74, 6
  %v8278 = vrot.slane %v8277, 4
  %v8279 = vrot.slane %v75, 6
  %v8280 = vsel %vm3842, %v8278, %v8279
  %v8281 = vrot.slane %v8279, 4
  %v8282 = vrot.slane %v76, 6
  %v8283 = vsel %vm3842, %v8281, %v8282
  %v8284 = vrot.slane %v134, 6
  %v8285 = vrot.slane %v8284, 4
  %v8286 = vrot.slane %v135, 6
  %v8287 = vsel %vm3842, %v8285, %v8286
  %v8288 = vrot.slane %v8286, 4
  %v8289 = vrot.slane %v136, 6
  %v8290 = vsel %vm3842, %v8288, %v8289
  %s8291 = scalar_lea.vmem %s1, 224
  %v8292 = vld [vmem:[%s8291] sm:$0xf]
  %v8293 = vld [vmem:[%s8291 + $0x4] sm:$0xf]
  %v8294 = vld [vmem:[%s8291 + $0x8] sm:$0xf]
  %v8295 = vld [vmem:[%s8291 + $0xc] sm:$0xf]
  %v8296 = vunpack.c.l.b16 %v8280
  %v8297 = vunpack.c.l.b16 %v8283
  %v8298 = vunpack.c.l.b16 %v8287
  %v8299 = vunpack.c.l.b16 %v8290
  %v8300 = vpack.c.b16 %v8297, %v8296
  %v8301 = vpack.c.b16 %v8299, %v8298
  %v8306 = vunpack.c.l.b16 %v8292
  %v8307 = vunpack.c.l.b16 %v8293
  %v8308 = vunpack.c.l.b16 %v8294
  %v8309 = vunpack.c.l.b16 %v8295
  %v8310 = vpack.c.b16 %v8307, %v8306
  %v8311 = vpack.c.b16 %v8309, %v8308
  %v8315 = vsel %vm1031, %v8300, 0
  %v8318 = vsel %vm1031, %v8301, 0
  %8320 = vmatprep.subr.bf16.mxu0 0
  %8321 = vmatpush1.bf16.msra.mxu0 %v8310
  %8322 = vmatprep.subr.bf16.mxu0 0
  %8323 = vmatpush1.bf16.msra.mxu0 %v8311
  %8324 = vmatprep.subr.bf16.mxu0 0
  %8325 = vmatpush1.bf16.msra.mxu0 0
  %8326 = vmatprep.subr.bf16.mxu0 0
  %8327 = vmatpush1.bf16.msra.mxu0 0
  %8328 = vmatprep.subr.bf16.mxu0 0
  %8329 = vmatpush1.bf16.msra.mxu0 0
  %8330 = vmatprep.subr.bf16.mxu0 0
  %8331 = vmatpush1.bf16.msra.mxu0 0
  %8332 = vmatprep.subr.bf16.mxu0 0
  %8333 = vmatpush1.bf16.msra.mxu0 0
  %8334 = vmatprep.subr.bf16.mxu0 0
  %8335 = vmatpush1.bf16.msra.mxu0 0
  %8336 = vmatprep.subr.bf16.mxu0 0
  %8337 = vmatpush1.bf16.msra.mxu0 0
  %8338 = vmatprep.subr.bf16.mxu0 0
  %8339 = vmatpush1.bf16.msra.mxu0 0
  %8340 = vmatprep.subr.bf16.mxu0 0
  %8341 = vmatpush1.bf16.msra.mxu0 0
  %8342 = vmatprep.subr.bf16.mxu0 0
  %8343 = vmatpush1.bf16.msra.mxu0 0
  %8344 = vmatprep.subr.bf16.mxu0 0
  %8345 = vmatpush1.bf16.msra.mxu0 0
  %8346 = vmatprep.subr.bf16.mxu0 0
  %8347 = vmatpush1.bf16.msra.mxu0 0
  %8348 = vmatprep.subr.bf16.mxu0 0
  %8349 = vmatpush1.bf16.msra.mxu0 0
  %8350 = vmatprep.subr.bf16.mxu0 0
  %8351 = vmatpush1.bf16.msra.mxu0 0
  %8352 = vmatprep.mubr.bf16.mxu0 0
  %8353 = vmatmul.mubr.bf16.gmra.mrb[0].mxu0 %v4187
  %v8354 = vpop.f32.mrb[0].mxu0
  %v8355 = vadd.f32 0.0, %v8354
  %v8356 = vpop.f32.mrb[0].mxu0
  %v8357 = vpop.f32.mrb[0].mxu0
  %v8358 = vadd.f32 0.0, %v8357
  %v8359 = vpop.f32.mrb[0].mxu0
  %8360 = vmatprep.mubr.bf16.mxu0 0
  %8361 = vmatmul.mubr.bf16.gmra.mrb[0].mxu0 %v4190
  %v8362 = vpop.f32.mrb[0].mxu0
  %v8363 = vadd.f32 0.0, %v8362
  %v8364 = vpop.f32.mrb[0].mxu0
  %v8365 = vpop.f32.mrb[0].mxu0
  %v8366 = vadd.f32 0.0, %v8365
  %v8367 = vpop.f32.mrb[0].mxu0
  %8368 = vmatprep.mubr.bf16.mxu0 0
  %8369 = vmatmul.mubr.bf16.gmra.mrb[0].mxu0 %v4193
  %v8370 = vpop.f32.mrb[0].mxu0
  %v8371 = vadd.f32 0.0, %v8370
  %v8372 = vpop.f32.mrb[0].mxu0
  %v8373 = vpop.f32.mrb[0].mxu0
  %v8374 = vadd.f32 0.0, %v8373
  %v8375 = vpop.f32.mrb[0].mxu0
  %8376 = vmatprep.mubr.bf16.mxu0 0
  %8377 = vmatmul.mubr.bf16.gmra.mrb[0].mxu0 %v4196
  %v8378 = vpop.f32.mrb[0].mxu0
  %v8379 = vadd.f32 0.0, %v8378
  %v8380 = vpop.f32.mrb[0].mxu0
  %v8381 = vpop.f32.mrb[0].mxu0
  %v8382 = vadd.f32 0.0, %v8381
  %v8383 = vpop.f32.mrb[0].mxu0
  %8384 = vmatprep.mubr.bf16.mxu0 0
  %8385 = vmatmul.mubr.bf16.gmra.mrb[0].mxu0 %v4199
  %v8386 = vpop.f32.mrb[0].mxu0
  %v8387 = vadd.f32 0.0, %v8386
  %v8388 = vpop.f32.mrb[0].mxu0
  %v8389 = vpop.f32.mrb[0].mxu0
  %v8390 = vadd.f32 0.0, %v8389
  %v8391 = vpop.f32.mrb[0].mxu0
  %8392 = vmatprep.mubr.bf16.mxu0 0
  %8393 = vmatmul.mubr.bf16.gmra.mrb[0].mxu0 %v4202
  %v8394 = vpop.f32.mrb[0].mxu0
  %v8395 = vadd.f32 0.0, %v8394
  %v8396 = vpop.f32.mrb[0].mxu0
  %v8397 = vpop.f32.mrb[0].mxu0
  %v8398 = vadd.f32 0.0, %v8397
  %v8399 = vpop.f32.mrb[0].mxu0
  %8400 = vmatprep.mubr.bf16.mxu0 0
  %8401 = vmatmul.mubr.bf16.gmra.mrb[0].mxu0 %v4205
  %v8402 = vpop.f32.mrb[0].mxu0
  %v8403 = vadd.f32 0.0, %v8402
  %v8404 = vpop.f32.mrb[0].mxu0
  %v8405 = vpop.f32.mrb[0].mxu0
  %v8406 = vadd.f32 0.0, %v8405
  %v8407 = vpop.f32.mrb[0].mxu0
  %8408 = vmatprep.mubr.bf16.mxu0 0
  %8409 = vmatmul.mubr.bf16.gmra.mrb[0].mxu0 %v4208
  %v8410 = vpop.f32.mrb[0].mxu0
  %v8411 = vadd.f32 0.0, %v8410
  %v8412 = vpop.f32.mrb[0].mxu0
  %v8413 = vpop.f32.mrb[0].mxu0
  %v8414 = vadd.f32 0.0, %v8413
  %v8415 = vpop.f32.mrb[0].mxu0
  %8416 = vmatprep.mubr.bf16.mxu0 0
  %8417 = vmatmul.mubr.bf16.gmra.mrb[0].mxu0 %v4211
  %v8418 = vpop.f32.mrb[0].mxu0
  %v8419 = vadd.f32 0.0, %v8418
  %v8420 = vpop.f32.mrb[0].mxu0
  %v8421 = vpop.f32.mrb[0].mxu0
  %v8422 = vadd.f32 0.0, %v8421
  %v8423 = vpop.f32.mrb[0].mxu0
  %8424 = vmatprep.mubr.bf16.mxu0 0
  %8425 = vmatmul.mubr.bf16.gmra.mrb[0].mxu0 %v4214
  %v8426 = vpop.f32.mrb[0].mxu0
  %v8427 = vadd.f32 0.0, %v8426
  %v8428 = vpop.f32.mrb[0].mxu0
  %v8429 = vpop.f32.mrb[0].mxu0
  %v8430 = vadd.f32 0.0, %v8429
  %v8431 = vpop.f32.mrb[0].mxu0
  %8432 = vmatprep.mubr.bf16.mxu0 0
  %8433 = vmatmul.mubr.bf16.gmra.mrb[0].mxu0 %v4217
  %v8434 = vpop.f32.mrb[0].mxu0
  %v8435 = vadd.f32 0.0, %v8434
  %v8436 = vpop.f32.mrb[0].mxu0
  %v8437 = vpop.f32.mrb[0].mxu0
  %v8438 = vadd.f32 0.0, %v8437
  %v8439 = vpop.f32.mrb[0].mxu0
  %8440 = vmatprep.mubr.bf16.mxu0 0
  %8441 = vmatmul.mubr.bf16.gmra.mrb[0].mxu0 %v4220
  %v8442 = vpop.f32.mrb[0].mxu0
  %v8443 = vadd.f32 0.0, %v8442
  %v8444 = vpop.f32.mrb[0].mxu0
  %v8445 = vpop.f32.mrb[0].mxu0
  %v8446 = vadd.f32 0.0, %v8445
  %v8447 = vpop.f32.mrb[0].mxu0
  %8448 = vmatprep.mubr.bf16.mxu0 0
  %8449 = vmatmul.mubr.bf16.gmra.mrb[0].mxu0 %v4223
  %v8450 = vpop.f32.mrb[0].mxu0
  %v8451 = vadd.f32 0.0, %v8450
  %v8452 = vpop.f32.mrb[0].mxu0
  %v8453 = vpop.f32.mrb[0].mxu0
  %v8454 = vadd.f32 0.0, %v8453
  %v8455 = vpop.f32.mrb[0].mxu0
  %8456 = vmatprep.mubr.bf16.mxu0 0
  %8457 = vmatmul.mubr.bf16.gmra.mrb[0].mxu0 %v4226
  %v8458 = vpop.f32.mrb[0].mxu0
  %v8459 = vadd.f32 0.0, %v8458
  %v8460 = vpop.f32.mrb[0].mxu0
  %v8461 = vpop.f32.mrb[0].mxu0
  %v8462 = vadd.f32 0.0, %v8461
  %v8463 = vpop.f32.mrb[0].mxu0
  %8464 = vmatprep.mubr.bf16.mxu0 0
  %8465 = vmatmul.mubr.bf16.gmra.mrb[0].mxu0 %v6293
  %v8466 = vpop.f32.mrb[0].mxu0
  %v8467 = vadd.f32 0.0, %v8466
  %v8468 = vpop.f32.mrb[0].mxu0
  %v8469 = vpop.f32.mrb[0].mxu0
  %v8470 = vadd.f32 0.0, %v8469
  %v8471 = vpop.f32.mrb[0].mxu0
  %8472 = vmatprep.mubr.bf16.mxu0 0
  %8473 = vmatmul.mubr.bf16.gmra.mrb[0].mxu0 %v8315
  %v8474 = vpop.f32.mrb[0].mxu0
  %v8475 = vadd.f32 0.0, %v8474
  %v8476 = vpop.f32.mrb[0].mxu0
  %v8477 = vpop.f32.mrb[0].mxu0
  %v8478 = vadd.f32 0.0, %v8477
  %v8479 = vpop.f32.mrb[0].mxu0
  %8480 = vmatprep.mubr.bf16.mxu0 0
  %8481 = vmatmul.mubr.bf16.gmra.mrb[0].mxu0 %v4235
  %v8482 = vpop.f32.mrb[0].mxu0
  %v8483 = vadd.f32 0.0, %v8482
  %v8484 = vpop.f32.mrb[0].mxu0
  %v8485 = vpop.f32.mrb[0].mxu0
  %v8486 = vadd.f32 0.0, %v8485
  %v8487 = vpop.f32.mrb[0].mxu0
  %8488 = vmatprep.mubr.bf16.mxu0 0
  %8489 = vmatmul.mubr.bf16.gmra.mrb[0].mxu0 %v4238
  %v8490 = vpop.f32.mrb[0].mxu0
  %v8491 = vadd.f32 0.0, %v8490
  %v8492 = vpop.f32.mrb[0].mxu0
  %v8493 = vpop.f32.mrb[0].mxu0
  %v8494 = vadd.f32 0.0, %v8493
  %v8495 = vpop.f32.mrb[0].mxu0
  %8496 = vmatprep.mubr.bf16.mxu0 0
  %8497 = vmatmul.mubr.bf16.gmra.mrb[0].mxu0 %v4241
  %v8498 = vpop.f32.mrb[0].mxu0
  %v8499 = vadd.f32 0.0, %v8498
  %v8500 = vpop.f32.mrb[0].mxu0
  %v8501 = vpop.f32.mrb[0].mxu0
  %v8502 = vadd.f32 0.0, %v8501
  %v8503 = vpop.f32.mrb[0].mxu0
  %8504 = vmatprep.mubr.bf16.mxu0 0
  %8505 = vmatmul.mubr.bf16.gmra.mrb[0].mxu0 %v4244
  %v8506 = vpop.f32.mrb[0].mxu0
  %v8507 = vadd.f32 0.0, %v8506
  %v8508 = vpop.f32.mrb[0].mxu0
  %v8509 = vpop.f32.mrb[0].mxu0
  %v8510 = vadd.f32 0.0, %v8509
  %v8511 = vpop.f32.mrb[0].mxu0
  %8512 = vmatprep.mubr.bf16.mxu0 0
  %8513 = vmatmul.mubr.bf16.gmra.mrb[0].mxu0 %v4247
  %v8514 = vpop.f32.mrb[0].mxu0
  %v8515 = vadd.f32 0.0, %v8514
  %v8516 = vpop.f32.mrb[0].mxu0
  %v8517 = vpop.f32.mrb[0].mxu0
  %v8518 = vadd.f32 0.0, %v8517
  %v8519 = vpop.f32.mrb[0].mxu0
  %8520 = vmatprep.mubr.bf16.mxu0 0
  %8521 = vmatmul.mubr.bf16.gmra.mrb[0].mxu0 %v4250
  %v8522 = vpop.f32.mrb[0].mxu0
  %v8523 = vadd.f32 0.0, %v8522
  %v8524 = vpop.f32.mrb[0].mxu0
  %v8525 = vpop.f32.mrb[0].mxu0
  %v8526 = vadd.f32 0.0, %v8525
  %v8527 = vpop.f32.mrb[0].mxu0
  %8528 = vmatprep.mubr.bf16.mxu0 0
  %8529 = vmatmul.mubr.bf16.gmra.mrb[0].mxu0 %v4253
  %v8530 = vpop.f32.mrb[0].mxu0
  %v8531 = vadd.f32 0.0, %v8530
  %v8532 = vpop.f32.mrb[0].mxu0
  %v8533 = vpop.f32.mrb[0].mxu0
  %v8534 = vadd.f32 0.0, %v8533
  %v8535 = vpop.f32.mrb[0].mxu0
  %8536 = vmatprep.mubr.bf16.mxu0 0
  %8537 = vmatmul.mubr.bf16.gmra.mrb[0].mxu0 %v4256
  %v8538 = vpop.f32.mrb[0].mxu0
  %v8539 = vadd.f32 0.0, %v8538
  %v8540 = vpop.f32.mrb[0].mxu0
  %v8541 = vpop.f32.mrb[0].mxu0
  %v8542 = vadd.f32 0.0, %v8541
  %v8543 = vpop.f32.mrb[0].mxu0
  %8544 = vmatprep.mubr.bf16.mxu0 0
  %8545 = vmatmul.mubr.bf16.gmra.mrb[0].mxu0 %v4259
  %v8546 = vpop.f32.mrb[0].mxu0
  %v8547 = vadd.f32 0.0, %v8546
  %v8548 = vpop.f32.mrb[0].mxu0
  %v8549 = vpop.f32.mrb[0].mxu0
  %v8550 = vadd.f32 0.0, %v8549
  %v8551 = vpop.f32.mrb[0].mxu0
  %8552 = vmatprep.mubr.bf16.mxu0 0
  %8553 = vmatmul.mubr.bf16.gmra.mrb[0].mxu0 %v4262
  %v8554 = vpop.f32.mrb[0].mxu0
  %v8555 = vadd.f32 0.0, %v8554
  %v8556 = vpop.f32.mrb[0].mxu0
  %v8557 = vpop.f32.mrb[0].mxu0
  %v8558 = vadd.f32 0.0, %v8557
  %v8559 = vpop.f32.mrb[0].mxu0
  %8560 = vmatprep.mubr.bf16.mxu0 0
  %8561 = vmatmul.mubr.bf16.gmra.mrb[0].mxu0 %v4265
  %v8562 = vpop.f32.mrb[0].mxu0
  %v8563 = vadd.f32 0.0, %v8562
  %v8564 = vpop.f32.mrb[0].mxu0
  %v8565 = vpop.f32.mrb[0].mxu0
  %v8566 = vadd.f32 0.0, %v8565
  %v8567 = vpop.f32.mrb[0].mxu0
  %8568 = vmatprep.mubr.bf16.mxu0 0
  %8569 = vmatmul.mubr.bf16.gmra.mrb[0].mxu0 %v4268
  %v8570 = vpop.f32.mrb[0].mxu0
  %v8571 = vadd.f32 0.0, %v8570
  %v8572 = vpop.f32.mrb[0].mxu0
  %v8573 = vpop.f32.mrb[0].mxu0
  %v8574 = vadd.f32 0.0, %v8573
  %v8575 = vpop.f32.mrb[0].mxu0
  %8576 = vmatprep.mubr.bf16.mxu0 0
  %8577 = vmatmul.mubr.bf16.gmra.mrb[0].mxu0 %v4271
  %v8578 = vpop.f32.mrb[0].mxu0
  %v8579 = vadd.f32 0.0, %v8578
  %v8580 = vpop.f32.mrb[0].mxu0
  %v8581 = vpop.f32.mrb[0].mxu0
  %v8582 = vadd.f32 0.0, %v8581
  %v8583 = vpop.f32.mrb[0].mxu0
  %8584 = vmatprep.mubr.bf16.mxu0 0
  %8585 = vmatmul.mubr.bf16.gmra.mrb[0].mxu0 %v4274
  %v8586 = vpop.f32.mrb[0].mxu0
  %v8587 = vadd.f32 0.0, %v8586
  %v8588 = vpop.f32.mrb[0].mxu0
  %v8589 = vpop.f32.mrb[0].mxu0
  %v8590 = vadd.f32 0.0, %v8589
  %v8591 = vpop.f32.mrb[0].mxu0
  %8592 = vmatprep.mubr.bf16.mxu0 0
  %8593 = vmatmul.mubr.bf16.gmra.mrb[0].mxu0 %v6296
  %v8594 = vpop.f32.mrb[0].mxu0
  %v8595 = vadd.f32 0.0, %v8594
  %v8596 = vpop.f32.mrb[0].mxu0
  %v8597 = vpop.f32.mrb[0].mxu0
  %v8598 = vadd.f32 0.0, %v8597
  %v8599 = vpop.f32.mrb[0].mxu0
  %8600 = vmatprep.mubr.bf16.mxu0 0
  %8601 = vmatmul.mubr.bf16.gmra.mrb[0].mxu0 %v8318
  %v8602 = vpop.f32.mrb[0].mxu0
  %v8603 = vadd.f32 0.0, %v8602
  %v8604 = vpop.f32.mrb[0].mxu0
  %v8605 = vpop.f32.mrb[0].mxu0
  %v8606 = vadd.f32 0.0, %v8605
  %v8607 = vpop.f32.mrb[0].mxu0
  %8608 = vdwg.mxu0
  %v8609 = vadd.f32 %v8213, %v8355
  %v8610 = vadd.f32 %v8214, %v8358
  %v8611 = vadd.f32 %v8215, %v8363
  %v8612 = vadd.f32 %v8216, %v8366
  %v8613 = vadd.f32 %v8217, %v8371
  %v8614 = vadd.f32 %v8218, %v8374
  %v8615 = vadd.f32 %v8219, %v8379
  %v8616 = vadd.f32 %v8220, %v8382
  %v8617 = vadd.f32 %v8221, %v8387
  %v8618 = vadd.f32 %v8222, %v8390
  %v8619 = vadd.f32 %v8223, %v8395
  %v8620 = vadd.f32 %v8224, %v8398
  %v8621 = vadd.f32 %v8225, %v8403
  %v8622 = vadd.f32 %v8226, %v8406
  %v8623 = vadd.f32 %v8227, %v8411
  %v8624 = vadd.f32 %v8228, %v8414
  %v8625 = vadd.f32 %v8229, %v8419
  %v8626 = vadd.f32 %v8230, %v8422
  %v8627 = vadd.f32 %v8231, %v8427
  %v8628 = vadd.f32 %v8232, %v8430
  %v8629 = vadd.f32 %v8233, %v8435
  %v8630 = vadd.f32 %v8234, %v8438
  %v8631 = vadd.f32 %v8235, %v8443
  %v8632 = vadd.f32 %v8236, %v8446
  %v8633 = vadd.f32 %v8237, %v8451
  %v8634 = vadd.f32 %v8238, %v8454
  %v8635 = vadd.f32 %v8239, %v8459
  %v8636 = vadd.f32 %v8240, %v8462
  %v8637 = vadd.f32 %v8241, %v8467
  %v8638 = vadd.f32 %v8242, %v8470
  %v8639 = vadd.f32 %v8243, %v8475
  %v8640 = vadd.f32 %v8244, %v8478
  %v8641 = vadd.f32 %v8245, %v8483
  %v8642 = vadd.f32 %v8246, %v8486
  %v8643 = vadd.f32 %v8247, %v8491
  %v8644 = vadd.f32 %v8248, %v8494
  %v8645 = vadd.f32 %v8249, %v8499
  %v8646 = vadd.f32 %v8250, %v8502
  %v8647 = vadd.f32 %v8251, %v8507
  %v8648 = vadd.f32 %v8252, %v8510
  %v8649 = vadd.f32 %v8253, %v8515
  %v8650 = vadd.f32 %v8254, %v8518
  %v8651 = vadd.f32 %v8255, %v8523
  %v8652 = vadd.f32 %v8256, %v8526
  %v8653 = vadd.f32 %v8257, %v8531
  %v8654 = vadd.f32 %v8258, %v8534
  %v8655 = vadd.f32 %v8259, %v8539
  %v8656 = vadd.f32 %v8260, %v8542
  %v8657 = vadd.f32 %v8261, %v8547
  %v8658 = vadd.f32 %v8262, %v8550
  %v8659 = vadd.f32 %v8263, %v8555
  %v8660 = vadd.f32 %v8264, %v8558
  %v8661 = vadd.f32 %v8265, %v8563
  %v8662 = vadd.f32 %v8266, %v8566
  %v8663 = vadd.f32 %v8267, %v8571
  %v8664 = vadd.f32 %v8268, %v8574
  %v8665 = vadd.f32 %v8269, %v8579
  %v8666 = vadd.f32 %v8270, %v8582
  %v8667 = vadd.f32 %v8271, %v8587
  %v8668 = vadd.f32 %v8272, %v8590
  %v8669 = vadd.f32 %v8273, %v8595
  %v8670 = vadd.f32 %v8274, %v8598
  %v8671 = vadd.f32 %v8275, %v8603
  %v8672 = vadd.f32 %v8276, %v8606
  %s8673 = scalar_lea.vmem %s1, 240
  %v8674 = vld [vmem:[%s8673] sm:$0xf]
  %v8675 = vld [vmem:[%s8673 + $0x4] sm:$0xf]
  %v8676 = vld [vmem:[%s8673 + $0x8] sm:$0xf]
  %v8677 = vld [vmem:[%s8673 + $0xc] sm:$0xf]
  %v8682 = vunpack.c.l.b16 %v77
  %v8683 = vunpack.c.l.b16 %v78
  %v8684 = vunpack.c.l.b16 %v137
  %v8685 = vunpack.c.l.b16 %v138
  %v8686 = vpack.c.b16 %v8683, %v8682
  %v8687 = vpack.c.b16 %v8685, %v8684
  %v8692 = vunpack.c.l.b16 %v8674
  %v8693 = vunpack.c.l.b16 %v8675
  %v8694 = vunpack.c.l.b16 %v8676
  %v8695 = vunpack.c.l.b16 %v8677
  %v8696 = vpack.c.b16 %v8693, %v8692
  %v8697 = vpack.c.b16 %v8695, %v8694
  %v8701 = vsel %vm1031, %v8686, 0
  %v8704 = vsel %vm1031, %v8687, 0
  %8706 = vmatprep.subr.bf16.mxu0 0
  %8707 = vmatpush1.bf16.msra.mxu0 %v8696
  %8708 = vmatprep.subr.bf16.mxu0 0
  %8709 = vmatpush1.bf16.msra.mxu0 %v8697
  %8710 = vmatprep.subr.bf16.mxu0 0
  %8711 = vmatpush1.bf16.msra.mxu0 0
  %8712 = vmatprep.subr.bf16.mxu0 0
  %8713 = vmatpush1.bf16.msra.mxu0 0
  %8714 = vmatprep.subr.bf16.mxu0 0
  %8715 = vmatpush1.bf16.msra.mxu0 0
  %8716 = vmatprep.subr.bf16.mxu0 0
  %8717 = vmatpush1.bf16.msra.mxu0 0
  %8718 = vmatprep.subr.bf16.mxu0 0
  %8719 = vmatpush1.bf16.msra.mxu0 0
  %8720 = vmatprep.subr.bf16.mxu0 0
  %8721 = vmatpush1.bf16.msra.mxu0 0
  %8722 = vmatprep.subr.bf16.mxu0 0
  %8723 = vmatpush1.bf16.msra.mxu0 0
  %8724 = vmatprep.subr.bf16.mxu0 0
  %8725 = vmatpush1.bf16.msra.mxu0 0
  %8726 = vmatprep.subr.bf16.mxu0 0
  %8727 = vmatpush1.bf16.msra.mxu0 0
  %8728 = vmatprep.subr.bf16.mxu0 0
  %8729 = vmatpush1.bf16.msra.mxu0 0
  %8730 = vmatprep.subr.bf16.mxu0 0
  %8731 = vmatpush1.bf16.msra.mxu0 0
  %8732 = vmatprep.subr.bf16.mxu0 0
  %8733 = vmatpush1.bf16.msra.mxu0 0
  %8734 = vmatprep.subr.bf16.mxu0 0
  %8735 = vmatpush1.bf16.msra.mxu0 0
  %8736 = vmatprep.subr.bf16.mxu0 0
  %8737 = vmatpush1.bf16.msra.mxu0 0
  %8738 = vmatprep.mubr.bf16.mxu0 0
  %8739 = vmatmul.mubr.bf16.gmra.mrb[0].mxu0 %v1599
  %v8740 = vpop.f32.mrb[0].mxu0
  %v8741 = vadd.f32 0.0, %v8740
  %v8742 = vpop.f32.mrb[0].mxu0
  %v8743 = vpop.f32.mrb[0].mxu0
  %v8744 = vadd.f32 0.0, %v8743
  %v8745 = vpop.f32.mrb[0].mxu0
  %8746 = vmatprep.mubr.bf16.mxu0 0
  %8747 = vmatmul.mubr.bf16.gmra.mrb[0].mxu0 %v1602
  %v8748 = vpop.f32.mrb[0].mxu0
  %v8749 = vadd.f32 0.0, %v8748
  %v8750 = vpop.f32.mrb[0].mxu0
  %v8751 = vpop.f32.mrb[0].mxu0
  %v8752 = vadd.f32 0.0, %v8751
  %v8753 = vpop.f32.mrb[0].mxu0
  %8754 = vmatprep.mubr.bf16.mxu0 0
  %8755 = vmatmul.mubr.bf16.gmra.mrb[0].mxu0 %v1605
  %v8756 = vpop.f32.mrb[0].mxu0
  %v8757 = vadd.f32 0.0, %v8756
  %v8758 = vpop.f32.mrb[0].mxu0
  %v8759 = vpop.f32.mrb[0].mxu0
  %v8760 = vadd.f32 0.0, %v8759
  %v8761 = vpop.f32.mrb[0].mxu0
  %8762 = vmatprep.mubr.bf16.mxu0 0
  %8763 = vmatmul.mubr.bf16.gmra.mrb[0].mxu0 %v1608
  %v8764 = vpop.f32.mrb[0].mxu0
  %v8765 = vadd.f32 0.0, %v8764
  %v8766 = vpop.f32.mrb[0].mxu0
  %v8767 = vpop.f32.mrb[0].mxu0
  %v8768 = vadd.f32 0.0, %v8767
  %v8769 = vpop.f32.mrb[0].mxu0
  %8770 = vmatprep.mubr.bf16.mxu0 0
  %8771 = vmatmul.mubr.bf16.gmra.mrb[0].mxu0 %v1611
  %v8772 = vpop.f32.mrb[0].mxu0
  %v8773 = vadd.f32 0.0, %v8772
  %v8774 = vpop.f32.mrb[0].mxu0
  %v8775 = vpop.f32.mrb[0].mxu0
  %v8776 = vadd.f32 0.0, %v8775
  %v8777 = vpop.f32.mrb[0].mxu0
  %8778 = vmatprep.mubr.bf16.mxu0 0
  %8779 = vmatmul.mubr.bf16.gmra.mrb[0].mxu0 %v1614
  %v8780 = vpop.f32.mrb[0].mxu0
  %v8781 = vadd.f32 0.0, %v8780
  %v8782 = vpop.f32.mrb[0].mxu0
  %v8783 = vpop.f32.mrb[0].mxu0
  %v8784 = vadd.f32 0.0, %v8783
  %v8785 = vpop.f32.mrb[0].mxu0
  %8786 = vmatprep.mubr.bf16.mxu0 0
  %8787 = vmatmul.mubr.bf16.gmra.mrb[0].mxu0 %v1617
  %v8788 = vpop.f32.mrb[0].mxu0
  %v8789 = vadd.f32 0.0, %v8788
  %v8790 = vpop.f32.mrb[0].mxu0
  %v8791 = vpop.f32.mrb[0].mxu0
  %v8792 = vadd.f32 0.0, %v8791
  %v8793 = vpop.f32.mrb[0].mxu0
  %8794 = vmatprep.mubr.bf16.mxu0 0
  %8795 = vmatmul.mubr.bf16.gmra.mrb[0].mxu0 %v1620
  %v8796 = vpop.f32.mrb[0].mxu0
  %v8797 = vadd.f32 0.0, %v8796
  %v8798 = vpop.f32.mrb[0].mxu0
  %v8799 = vpop.f32.mrb[0].mxu0
  %v8800 = vadd.f32 0.0, %v8799
  %v8801 = vpop.f32.mrb[0].mxu0
  %8802 = vmatprep.mubr.bf16.mxu0 0
  %8803 = vmatmul.mubr.bf16.gmra.mrb[0].mxu0 %v1623
  %v8804 = vpop.f32.mrb[0].mxu0
  %v8805 = vadd.f32 0.0, %v8804
  %v8806 = vpop.f32.mrb[0].mxu0
  %v8807 = vpop.f32.mrb[0].mxu0
  %v8808 = vadd.f32 0.0, %v8807
  %v8809 = vpop.f32.mrb[0].mxu0
  %8810 = vmatprep.mubr.bf16.mxu0 0
  %8811 = vmatmul.mubr.bf16.gmra.mrb[0].mxu0 %v1626
  %v8812 = vpop.f32.mrb[0].mxu0
  %v8813 = vadd.f32 0.0, %v8812
  %v8814 = vpop.f32.mrb[0].mxu0
  %v8815 = vpop.f32.mrb[0].mxu0
  %v8816 = vadd.f32 0.0, %v8815
  %v8817 = vpop.f32.mrb[0].mxu0
  %8818 = vmatprep.mubr.bf16.mxu0 0
  %8819 = vmatmul.mubr.bf16.gmra.mrb[0].mxu0 %v1629
  %v8820 = vpop.f32.mrb[0].mxu0
  %v8821 = vadd.f32 0.0, %v8820
  %v8822 = vpop.f32.mrb[0].mxu0
  %v8823 = vpop.f32.mrb[0].mxu0
  %v8824 = vadd.f32 0.0, %v8823
  %v8825 = vpop.f32.mrb[0].mxu0
  %8826 = vmatprep.mubr.bf16.mxu0 0
  %8827 = vmatmul.mubr.bf16.gmra.mrb[0].mxu0 %v1632
  %v8828 = vpop.f32.mrb[0].mxu0
  %v8829 = vadd.f32 0.0, %v8828
  %v8830 = vpop.f32.mrb[0].mxu0
  %v8831 = vpop.f32.mrb[0].mxu0
  %v8832 = vadd.f32 0.0, %v8831
  %v8833 = vpop.f32.mrb[0].mxu0
  %8834 = vmatprep.mubr.bf16.mxu0 0
  %8835 = vmatmul.mubr.bf16.gmra.mrb[0].mxu0 %v1635
  %v8836 = vpop.f32.mrb[0].mxu0
  %v8837 = vadd.f32 0.0, %v8836
  %v8838 = vpop.f32.mrb[0].mxu0
  %v8839 = vpop.f32.mrb[0].mxu0
  %v8840 = vadd.f32 0.0, %v8839
  %v8841 = vpop.f32.mrb[0].mxu0
  %8842 = vmatprep.mubr.bf16.mxu0 0
  %8843 = vmatmul.mubr.bf16.gmra.mrb[0].mxu0 %v4657
  %v8844 = vpop.f32.mrb[0].mxu0
  %v8845 = vadd.f32 0.0, %v8844
  %v8846 = vpop.f32.mrb[0].mxu0
  %v8847 = vpop.f32.mrb[0].mxu0
  %v8848 = vadd.f32 0.0, %v8847
  %v8849 = vpop.f32.mrb[0].mxu0
  %8850 = vmatprep.mubr.bf16.mxu0 0
  %8851 = vmatmul.mubr.bf16.gmra.mrb[0].mxu0 %v6679
  %v8852 = vpop.f32.mrb[0].mxu0
  %v8853 = vadd.f32 0.0, %v8852
  %v8854 = vpop.f32.mrb[0].mxu0
  %v8855 = vpop.f32.mrb[0].mxu0
  %v8856 = vadd.f32 0.0, %v8855
  %v8857 = vpop.f32.mrb[0].mxu0
  %8858 = vmatprep.mubr.bf16.mxu0 0
  %8859 = vmatmul.mubr.bf16.gmra.mrb[0].mxu0 %v8701
  %v8860 = vpop.f32.mrb[0].mxu0
  %v8861 = vadd.f32 0.0, %v8860
  %v8862 = vpop.f32.mrb[0].mxu0
  %v8863 = vpop.f32.mrb[0].mxu0
  %v8864 = vadd.f32 0.0, %v8863
  %v8865 = vpop.f32.mrb[0].mxu0
  %8866 = vmatprep.mubr.bf16.mxu0 0
  %8867 = vmatmul.mubr.bf16.gmra.mrb[0].mxu0 %v1647
  %v8868 = vpop.f32.mrb[0].mxu0
  %v8869 = vadd.f32 0.0, %v8868
  %v8870 = vpop.f32.mrb[0].mxu0
  %v8871 = vpop.f32.mrb[0].mxu0
  %v8872 = vadd.f32 0.0, %v8871
  %v8873 = vpop.f32.mrb[0].mxu0
  %8874 = vmatprep.mubr.bf16.mxu0 0
  %8875 = vmatmul.mubr.bf16.gmra.mrb[0].mxu0 %v1650
  %v8876 = vpop.f32.mrb[0].mxu0
  %v8877 = vadd.f32 0.0, %v8876
  %v8878 = vpop.f32.mrb[0].mxu0
  %v8879 = vpop.f32.mrb[0].mxu0
  %v8880 = vadd.f32 0.0, %v8879
  %v8881 = vpop.f32.mrb[0].mxu0
  %8882 = vmatprep.mubr.bf16.mxu0 0
  %8883 = vmatmul.mubr.bf16.gmra.mrb[0].mxu0 %v1653
  %v8884 = vpop.f32.mrb[0].mxu0
  %v8885 = vadd.f32 0.0, %v8884
  %v8886 = vpop.f32.mrb[0].mxu0
  %v8887 = vpop.f32.mrb[0].mxu0
  %v8888 = vadd.f32 0.0, %v8887
  %v8889 = vpop.f32.mrb[0].mxu0
  %8890 = vmatprep.mubr.bf16.mxu0 0
  %8891 = vmatmul.mubr.bf16.gmra.mrb[0].mxu0 %v1656
  %v8892 = vpop.f32.mrb[0].mxu0
  %v8893 = vadd.f32 0.0, %v8892
  %v8894 = vpop.f32.mrb[0].mxu0
  %v8895 = vpop.f32.mrb[0].mxu0
  %v8896 = vadd.f32 0.0, %v8895
  %v8897 = vpop.f32.mrb[0].mxu0
  %8898 = vmatprep.mubr.bf16.mxu0 0
  %8899 = vmatmul.mubr.bf16.gmra.mrb[0].mxu0 %v1659
  %v8900 = vpop.f32.mrb[0].mxu0
  %v8901 = vadd.f32 0.0, %v8900
  %v8902 = vpop.f32.mrb[0].mxu0
  %v8903 = vpop.f32.mrb[0].mxu0
  %v8904 = vadd.f32 0.0, %v8903
  %v8905 = vpop.f32.mrb[0].mxu0
  %8906 = vmatprep.mubr.bf16.mxu0 0
  %8907 = vmatmul.mubr.bf16.gmra.mrb[0].mxu0 %v1662
  %v8908 = vpop.f32.mrb[0].mxu0
  %v8909 = vadd.f32 0.0, %v8908
  %v8910 = vpop.f32.mrb[0].mxu0
  %v8911 = vpop.f32.mrb[0].mxu0
  %v8912 = vadd.f32 0.0, %v8911
  %v8913 = vpop.f32.mrb[0].mxu0
  %8914 = vmatprep.mubr.bf16.mxu0 0
  %8915 = vmatmul.mubr.bf16.gmra.mrb[0].mxu0 %v1665
  %v8916 = vpop.f32.mrb[0].mxu0
  %v8917 = vadd.f32 0.0, %v8916
  %v8918 = vpop.f32.mrb[0].mxu0
  %v8919 = vpop.f32.mrb[0].mxu0
  %v8920 = vadd.f32 0.0, %v8919
  %v8921 = vpop.f32.mrb[0].mxu0
  %8922 = vmatprep.mubr.bf16.mxu0 0
  %8923 = vmatmul.mubr.bf16.gmra.mrb[0].mxu0 %v1668
  %v8924 = vpop.f32.mrb[0].mxu0
  %v8925 = vadd.f32 0.0, %v8924
  %v8926 = vpop.f32.mrb[0].mxu0
  %v8927 = vpop.f32.mrb[0].mxu0
  %v8928 = vadd.f32 0.0, %v8927
  %v8929 = vpop.f32.mrb[0].mxu0
  %8930 = vmatprep.mubr.bf16.mxu0 0
  %8931 = vmatmul.mubr.bf16.gmra.mrb[0].mxu0 %v1671
  %v8932 = vpop.f32.mrb[0].mxu0
  %v8933 = vadd.f32 0.0, %v8932
  %v8934 = vpop.f32.mrb[0].mxu0
  %v8935 = vpop.f32.mrb[0].mxu0
  %v8936 = vadd.f32 0.0, %v8935
  %v8937 = vpop.f32.mrb[0].mxu0
  %8938 = vmatprep.mubr.bf16.mxu0 0
  %8939 = vmatmul.mubr.bf16.gmra.mrb[0].mxu0 %v1674
  %v8940 = vpop.f32.mrb[0].mxu0
  %v8941 = vadd.f32 0.0, %v8940
  %v8942 = vpop.f32.mrb[0].mxu0
  %v8943 = vpop.f32.mrb[0].mxu0
  %v8944 = vadd.f32 0.0, %v8943
  %v8945 = vpop.f32.mrb[0].mxu0
  %8946 = vmatprep.mubr.bf16.mxu0 0
  %8947 = vmatmul.mubr.bf16.gmra.mrb[0].mxu0 %v1677
  %v8948 = vpop.f32.mrb[0].mxu0
  %v8949 = vadd.f32 0.0, %v8948
  %v8950 = vpop.f32.mrb[0].mxu0
  %v8951 = vpop.f32.mrb[0].mxu0
  %v8952 = vadd.f32 0.0, %v8951
  %v8953 = vpop.f32.mrb[0].mxu0
  %8954 = vmatprep.mubr.bf16.mxu0 0
  %8955 = vmatmul.mubr.bf16.gmra.mrb[0].mxu0 %v1680
  %v8956 = vpop.f32.mrb[0].mxu0
  %v8957 = vadd.f32 0.0, %v8956
  %v8958 = vpop.f32.mrb[0].mxu0
  %v8959 = vpop.f32.mrb[0].mxu0
  %v8960 = vadd.f32 0.0, %v8959
  %v8961 = vpop.f32.mrb[0].mxu0
  %8962 = vmatprep.mubr.bf16.mxu0 0
  %8963 = vmatmul.mubr.bf16.gmra.mrb[0].mxu0 %v1683
  %v8964 = vpop.f32.mrb[0].mxu0
  %v8965 = vadd.f32 0.0, %v8964
  %v8966 = vpop.f32.mrb[0].mxu0
  %v8967 = vpop.f32.mrb[0].mxu0
  %v8968 = vadd.f32 0.0, %v8967
  %v8969 = vpop.f32.mrb[0].mxu0
  %8970 = vmatprep.mubr.bf16.mxu0 0
  %8971 = vmatmul.mubr.bf16.gmra.mrb[0].mxu0 %v4660
  %v8972 = vpop.f32.mrb[0].mxu0
  %v8973 = vadd.f32 0.0, %v8972
  %v8974 = vpop.f32.mrb[0].mxu0
  %v8975 = vpop.f32.mrb[0].mxu0
  %v8976 = vadd.f32 0.0, %v8975
  %v8977 = vpop.f32.mrb[0].mxu0
  %8978 = vmatprep.mubr.bf16.mxu0 0
  %8979 = vmatmul.mubr.bf16.gmra.mrb[0].mxu0 %v6682
  %v8980 = vpop.f32.mrb[0].mxu0
  %v8981 = vadd.f32 0.0, %v8980
  %v8982 = vpop.f32.mrb[0].mxu0
  %v8983 = vpop.f32.mrb[0].mxu0
  %v8984 = vadd.f32 0.0, %v8983
  %v8985 = vpop.f32.mrb[0].mxu0
  %8986 = vmatprep.mubr.bf16.mxu0 0
  %8987 = vmatmul.mubr.bf16.gmra.mrb[0].mxu0 %v8704
  %v8988 = vpop.f32.mrb[0].mxu0
  %v8989 = vadd.f32 0.0, %v8988
  %v8990 = vpop.f32.mrb[0].mxu0
  %v8991 = vpop.f32.mrb[0].mxu0
  %v8992 = vadd.f32 0.0, %v8991
  %v8993 = vpop.f32.mrb[0].mxu0
  %8994 = vdwg.mxu0
  %v8995 = vadd.f32 %v8609, %v8741
  %v8996 = vadd.f32 %v8610, %v8744
  %v8997 = vadd.f32 %v8611, %v8749
  %v8998 = vadd.f32 %v8612, %v8752
  %v8999 = vadd.f32 %v8613, %v8757
  %v9000 = vadd.f32 %v8614, %v8760
  %v9001 = vadd.f32 %v8615, %v8765
  %v9002 = vadd.f32 %v8616, %v8768
  %v9003 = vadd.f32 %v8617, %v8773
  %v9004 = vadd.f32 %v8618, %v8776
  %v9005 = vadd.f32 %v8619, %v8781
  %v9006 = vadd.f32 %v8620, %v8784
  %v9007 = vadd.f32 %v8621, %v8789
  %v9008 = vadd.f32 %v8622, %v8792
  %v9009 = vadd.f32 %v8623, %v8797
  %v9010 = vadd.f32 %v8624, %v8800
  %v9011 = vadd.f32 %v8625, %v8805
  %v9012 = vadd.f32 %v8626, %v8808
  %v9013 = vadd.f32 %v8627, %v8813
  %v9014 = vadd.f32 %v8628, %v8816
  %v9015 = vadd.f32 %v8629, %v8821
  %v9016 = vadd.f32 %v8630, %v8824
  %v9017 = vadd.f32 %v8631, %v8829
  %v9018 = vadd.f32 %v8632, %v8832
  %v9019 = vadd.f32 %v8633, %v8837
  %v9020 = vadd.f32 %v8634, %v8840
  %v9021 = vadd.f32 %v8635, %v8845
  %v9022 = vadd.f32 %v8636, %v8848
  %v9023 = vadd.f32 %v8637, %v8853
  %v9024 = vadd.f32 %v8638, %v8856
  %v9025 = vadd.f32 %v8639, %v8861
  %v9026 = vadd.f32 %v8640, %v8864
  %v9027 = vadd.f32 %v8641, %v8869
  %v9028 = vadd.f32 %v8642, %v8872
  %v9029 = vadd.f32 %v8643, %v8877
  %v9030 = vadd.f32 %v8644, %v8880
  %v9031 = vadd.f32 %v8645, %v8885
  %v9032 = vadd.f32 %v8646, %v8888
  %v9033 = vadd.f32 %v8647, %v8893
  %v9034 = vadd.f32 %v8648, %v8896
  %v9035 = vadd.f32 %v8649, %v8901
  %v9036 = vadd.f32 %v8650, %v8904
  %v9037 = vadd.f32 %v8651, %v8909
  %v9038 = vadd.f32 %v8652, %v8912
  %v9039 = vadd.f32 %v8653, %v8917
  %v9040 = vadd.f32 %v8654, %v8920
  %v9041 = vadd.f32 %v8655, %v8925
  %v9042 = vadd.f32 %v8656, %v8928
  %v9043 = vadd.f32 %v8657, %v8933
  %v9044 = vadd.f32 %v8658, %v8936
  %v9045 = vadd.f32 %v8659, %v8941
  %v9046 = vadd.f32 %v8660, %v8944
  %v9047 = vadd.f32 %v8661, %v8949
  %v9048 = vadd.f32 %v8662, %v8952
  %v9049 = vadd.f32 %v8663, %v8957
  %v9050 = vadd.f32 %v8664, %v8960
  %v9051 = vadd.f32 %v8665, %v8965
  %v9052 = vadd.f32 %v8666, %v8968
  %v9053 = vadd.f32 %v8667, %v8973
  %v9054 = vadd.f32 %v8668, %v8976
  %v9055 = vadd.f32 %v8669, %v8981
  %v9056 = vadd.f32 %v8670, %v8984
  %v9057 = vadd.f32 %v8671, %v8989
  %v9058 = vadd.f32 %v8672, %v8992
  %v9060 = vshrl.u32 %v77, 16
  %v9062 = vrot.slane %v9060, 4
  %v9063 = vshll.u32 %v77, 16
  %v9065 = vrot.slane %v9063, 5
  %v9066 = vor.u32 %v9062, %v9065
  %v9067 = vrot.slane %v9066, 4
  %v9069 = vshll.u32 %v78, 16
  %v9071 = vrot.slane %v9069, 5
  %v9072 = vsel %vm149, %v9067, %v9071
  %v9073 = vshrl.u32 %v78, 16
  %v9075 = vrot.slane %v9073, 4
  %v9076 = vor.u32 %v9075, %v9071
  %v9077 = vrot.slane %v9076, 4
  %v9079 = vshll.u32 %v79, 16
  %v9081 = vrot.slane %v9079, 5
  %v9082 = vsel %vm149, %v9077, %v9081
  %v9084 = vshrl.u32 %v137, 16
  %v9086 = vrot.slane %v9084, 4
  %v9087 = vshll.u32 %v137, 16
  %v9089 = vrot.slane %v9087, 5
  %v9090 = vor.u32 %v9086, %v9089
  %v9091 = vrot.slane %v9090, 4
  %v9093 = vshll.u32 %v138, 16
  %v9095 = vrot.slane %v9093, 5
  %v9096 = vsel %vm149, %v9091, %v9095
  %v9097 = vshrl.u32 %v138, 16
  %v9099 = vrot.slane %v9097, 4
  %v9100 = vor.u32 %v9099, %v9095
  %v9101 = vrot.slane %v9100, 4
  %v9103 = vshll.u32 %v139, 16
  %v9105 = vrot.slane %v9103, 5
  %v9106 = vsel %vm149, %v9101, %v9105
  %s9107 = scalar_lea.vmem %s1, 256
  %v9108 = vld [vmem:[%s9107] sm:$0xf]
  %v9109 = vld [vmem:[%s9107 + $0x4] sm:$0xf]
  %v9110 = vld [vmem:[%s9107 + $0x8] sm:$0xf]
  %v9111 = vld [vmem:[%s9107 + $0xc] sm:$0xf]
  %v9112 = vunpack.c.l.b16 %v9072
  %v9113 = vunpack.c.l.b16 %v9082
  %v9114 = vunpack.c.l.b16 %v9096
  %v9115 = vunpack.c.l.b16 %v9106
  %v9116 = vpack.c.b16 %v9113, %v9112
  %v9117 = vpack.c.b16 %v9115, %v9114
  %v9122 = vunpack.c.l.b16 %v9108
  %v9123 = vunpack.c.l.b16 %v9109
  %v9124 = vunpack.c.l.b16 %v9110
  %v9125 = vunpack.c.l.b16 %v9111
  %v9126 = vpack.c.b16 %v9123, %v9122
  %v9127 = vpack.c.b16 %v9125, %v9124
  %v9131 = vsel %vm1031, %v9116, 0
  %v9134 = vsel %vm1031, %v9117, 0
  %9136 = vmatprep.subr.bf16.mxu0 0
  %9137 = vmatpush1.bf16.msra.mxu0 %v9126
  %9138 = vmatprep.subr.bf16.mxu0 0
  %9139 = vmatpush1.bf16.msra.mxu0 %v9127
  %9140 = vmatprep.subr.bf16.mxu0 0
  %9141 = vmatpush1.bf16.msra.mxu0 0
  %9142 = vmatprep.subr.bf16.mxu0 0
  %9143 = vmatpush1.bf16.msra.mxu0 0
  %9144 = vmatprep.subr.bf16.mxu0 0
  %9145 = vmatpush1.bf16.msra.mxu0 0
  %9146 = vmatprep.subr.bf16.mxu0 0
  %9147 = vmatpush1.bf16.msra.mxu0 0
  %9148 = vmatprep.subr.bf16.mxu0 0
  %9149 = vmatpush1.bf16.msra.mxu0 0
  %9150 = vmatprep.subr.bf16.mxu0 0
  %9151 = vmatpush1.bf16.msra.mxu0 0
  %9152 = vmatprep.subr.bf16.mxu0 0
  %9153 = vmatpush1.bf16.msra.mxu0 0
  %9154 = vmatprep.subr.bf16.mxu0 0
  %9155 = vmatpush1.bf16.msra.mxu0 0
  %9156 = vmatprep.subr.bf16.mxu0 0
  %9157 = vmatpush1.bf16.msra.mxu0 0
  %9158 = vmatprep.subr.bf16.mxu0 0
  %9159 = vmatpush1.bf16.msra.mxu0 0
  %9160 = vmatprep.subr.bf16.mxu0 0
  %9161 = vmatpush1.bf16.msra.mxu0 0
  %9162 = vmatprep.subr.bf16.mxu0 0
  %9163 = vmatpush1.bf16.msra.mxu0 0
  %9164 = vmatprep.subr.bf16.mxu0 0
  %9165 = vmatpush1.bf16.msra.mxu0 0
  %9166 = vmatprep.subr.bf16.mxu0 0
  %9167 = vmatpush1.bf16.msra.mxu0 0
  %9168 = vmatprep.mubr.bf16.mxu0 0
  %9169 = vmatmul.mubr.bf16.gmra.mrb[0].mxu0 %v1042
  %v9170 = vpop.f32.mrb[0].mxu0
  %v9171 = vadd.f32 0.0, %v9170
  %v9172 = vpop.f32.mrb[0].mxu0
  %v9173 = vpop.f32.mrb[0].mxu0
  %v9174 = vadd.f32 0.0, %v9173
  %v9175 = vpop.f32.mrb[0].mxu0
  %9176 = vmatprep.mubr.bf16.mxu0 0
  %9177 = vmatmul.mubr.bf16.gmra.mrb[0].mxu0 %v1045
  %v9178 = vpop.f32.mrb[0].mxu0
  %v9179 = vadd.f32 0.0, %v9178
  %v9180 = vpop.f32.mrb[0].mxu0
  %v9181 = vpop.f32.mrb[0].mxu0
  %v9182 = vadd.f32 0.0, %v9181
  %v9183 = vpop.f32.mrb[0].mxu0
  %9184 = vmatprep.mubr.bf16.mxu0 0
  %9185 = vmatmul.mubr.bf16.gmra.mrb[0].mxu0 %v1048
  %v9186 = vpop.f32.mrb[0].mxu0
  %v9187 = vadd.f32 0.0, %v9186
  %v9188 = vpop.f32.mrb[0].mxu0
  %v9189 = vpop.f32.mrb[0].mxu0
  %v9190 = vadd.f32 0.0, %v9189
  %v9191 = vpop.f32.mrb[0].mxu0
  %9192 = vmatprep.mubr.bf16.mxu0 0
  %9193 = vmatmul.mubr.bf16.gmra.mrb[0].mxu0 %v1051
  %v9194 = vpop.f32.mrb[0].mxu0
  %v9195 = vadd.f32 0.0, %v9194
  %v9196 = vpop.f32.mrb[0].mxu0
  %v9197 = vpop.f32.mrb[0].mxu0
  %v9198 = vadd.f32 0.0, %v9197
  %v9199 = vpop.f32.mrb[0].mxu0
  %9200 = vmatprep.mubr.bf16.mxu0 0
  %9201 = vmatmul.mubr.bf16.gmra.mrb[0].mxu0 %v1054
  %v9202 = vpop.f32.mrb[0].mxu0
  %v9203 = vadd.f32 0.0, %v9202
  %v9204 = vpop.f32.mrb[0].mxu0
  %v9205 = vpop.f32.mrb[0].mxu0
  %v9206 = vadd.f32 0.0, %v9205
  %v9207 = vpop.f32.mrb[0].mxu0
  %9208 = vmatprep.mubr.bf16.mxu0 0
  %9209 = vmatmul.mubr.bf16.gmra.mrb[0].mxu0 %v1057
  %v9210 = vpop.f32.mrb[0].mxu0
  %v9211 = vadd.f32 0.0, %v9210
  %v9212 = vpop.f32.mrb[0].mxu0
  %v9213 = vpop.f32.mrb[0].mxu0
  %v9214 = vadd.f32 0.0, %v9213
  %v9215 = vpop.f32.mrb[0].mxu0
  %9216 = vmatprep.mubr.bf16.mxu0 0
  %9217 = vmatmul.mubr.bf16.gmra.mrb[0].mxu0 %v1060
  %v9218 = vpop.f32.mrb[0].mxu0
  %v9219 = vadd.f32 0.0, %v9218
  %v9220 = vpop.f32.mrb[0].mxu0
  %v9221 = vpop.f32.mrb[0].mxu0
  %v9222 = vadd.f32 0.0, %v9221
  %v9223 = vpop.f32.mrb[0].mxu0
  %9224 = vmatprep.mubr.bf16.mxu0 0
  %9225 = vmatmul.mubr.bf16.gmra.mrb[0].mxu0 %v1063
  %v9226 = vpop.f32.mrb[0].mxu0
  %v9227 = vadd.f32 0.0, %v9226
  %v9228 = vpop.f32.mrb[0].mxu0
  %v9229 = vpop.f32.mrb[0].mxu0
  %v9230 = vadd.f32 0.0, %v9229
  %v9231 = vpop.f32.mrb[0].mxu0
  %9232 = vmatprep.mubr.bf16.mxu0 0
  %9233 = vmatmul.mubr.bf16.gmra.mrb[0].mxu0 %v1066
  %v9234 = vpop.f32.mrb[0].mxu0
  %v9235 = vadd.f32 0.0, %v9234
  %v9236 = vpop.f32.mrb[0].mxu0
  %v9237 = vpop.f32.mrb[0].mxu0
  %v9238 = vadd.f32 0.0, %v9237
  %v9239 = vpop.f32.mrb[0].mxu0
  %9240 = vmatprep.mubr.bf16.mxu0 0
  %9241 = vmatmul.mubr.bf16.gmra.mrb[0].mxu0 %v1069
  %v9242 = vpop.f32.mrb[0].mxu0
  %v9243 = vadd.f32 0.0, %v9242
  %v9244 = vpop.f32.mrb[0].mxu0
  %v9245 = vpop.f32.mrb[0].mxu0
  %v9246 = vadd.f32 0.0, %v9245
  %v9247 = vpop.f32.mrb[0].mxu0
  %9248 = vmatprep.mubr.bf16.mxu0 0
  %9249 = vmatmul.mubr.bf16.gmra.mrb[0].mxu0 %v1072
  %v9250 = vpop.f32.mrb[0].mxu0
  %v9251 = vadd.f32 0.0, %v9250
  %v9252 = vpop.f32.mrb[0].mxu0
  %v9253 = vpop.f32.mrb[0].mxu0
  %v9254 = vadd.f32 0.0, %v9253
  %v9255 = vpop.f32.mrb[0].mxu0
  %9256 = vmatprep.mubr.bf16.mxu0 0
  %9257 = vmatmul.mubr.bf16.gmra.mrb[0].mxu0 %v1075
  %v9258 = vpop.f32.mrb[0].mxu0
  %v9259 = vadd.f32 0.0, %v9258
  %v9260 = vpop.f32.mrb[0].mxu0
  %v9261 = vpop.f32.mrb[0].mxu0
  %v9262 = vadd.f32 0.0, %v9261
  %v9263 = vpop.f32.mrb[0].mxu0
  %9264 = vmatprep.mubr.bf16.mxu0 0
  %9265 = vmatmul.mubr.bf16.gmra.mrb[0].mxu0 %v1078
  %v9266 = vpop.f32.mrb[0].mxu0
  %v9267 = vadd.f32 0.0, %v9266
  %v9268 = vpop.f32.mrb[0].mxu0
  %v9269 = vpop.f32.mrb[0].mxu0
  %v9270 = vadd.f32 0.0, %v9269
  %v9271 = vpop.f32.mrb[0].mxu0
  %9272 = vmatprep.mubr.bf16.mxu0 0
  %9273 = vmatmul.mubr.bf16.gmra.mrb[0].mxu0 %v5087
  %v9274 = vpop.f32.mrb[0].mxu0
  %v9275 = vadd.f32 0.0, %v9274
  %v9276 = vpop.f32.mrb[0].mxu0
  %v9277 = vpop.f32.mrb[0].mxu0
  %v9278 = vadd.f32 0.0, %v9277
  %v9279 = vpop.f32.mrb[0].mxu0
  %9280 = vmatprep.mubr.bf16.mxu0 0
  %9281 = vmatmul.mubr.bf16.gmra.mrb[0].mxu0 %v7109
  %v9282 = vpop.f32.mrb[0].mxu0
  %v9283 = vadd.f32 0.0, %v9282
  %v9284 = vpop.f32.mrb[0].mxu0
  %v9285 = vpop.f32.mrb[0].mxu0
  %v9286 = vadd.f32 0.0, %v9285
  %v9287 = vpop.f32.mrb[0].mxu0
  %9288 = vmatprep.mubr.bf16.mxu0 0
  %9289 = vmatmul.mubr.bf16.gmra.mrb[0].mxu0 %v9131
  %v9290 = vpop.f32.mrb[0].mxu0
  %v9291 = vadd.f32 0.0, %v9290
  %v9292 = vpop.f32.mrb[0].mxu0
  %v9293 = vpop.f32.mrb[0].mxu0
  %v9294 = vadd.f32 0.0, %v9293
  %v9295 = vpop.f32.mrb[0].mxu0
  %9296 = vmatprep.mubr.bf16.mxu0 0
  %9297 = vmatmul.mubr.bf16.gmra.mrb[0].mxu0 %v1090
  %v9298 = vpop.f32.mrb[0].mxu0
  %v9299 = vadd.f32 0.0, %v9298
  %v9300 = vpop.f32.mrb[0].mxu0
  %v9301 = vpop.f32.mrb[0].mxu0
  %v9302 = vadd.f32 0.0, %v9301
  %v9303 = vpop.f32.mrb[0].mxu0
  %9304 = vmatprep.mubr.bf16.mxu0 0
  %9305 = vmatmul.mubr.bf16.gmra.mrb[0].mxu0 %v1093
  %v9306 = vpop.f32.mrb[0].mxu0
  %v9307 = vadd.f32 0.0, %v9306
  %v9308 = vpop.f32.mrb[0].mxu0
  %v9309 = vpop.f32.mrb[0].mxu0
  %v9310 = vadd.f32 0.0, %v9309
  %v9311 = vpop.f32.mrb[0].mxu0
  %9312 = vmatprep.mubr.bf16.mxu0 0
  %9313 = vmatmul.mubr.bf16.gmra.mrb[0].mxu0 %v1096
  %v9314 = vpop.f32.mrb[0].mxu0
  %v9315 = vadd.f32 0.0, %v9314
  %v9316 = vpop.f32.mrb[0].mxu0
  %v9317 = vpop.f32.mrb[0].mxu0
  %v9318 = vadd.f32 0.0, %v9317
  %v9319 = vpop.f32.mrb[0].mxu0
  %9320 = vmatprep.mubr.bf16.mxu0 0
  %9321 = vmatmul.mubr.bf16.gmra.mrb[0].mxu0 %v1099
  %v9322 = vpop.f32.mrb[0].mxu0
  %v9323 = vadd.f32 0.0, %v9322
  %v9324 = vpop.f32.mrb[0].mxu0
  %v9325 = vpop.f32.mrb[0].mxu0
  %v9326 = vadd.f32 0.0, %v9325
  %v9327 = vpop.f32.mrb[0].mxu0
  %9328 = vmatprep.mubr.bf16.mxu0 0
  %9329 = vmatmul.mubr.bf16.gmra.mrb[0].mxu0 %v1102
  %v9330 = vpop.f32.mrb[0].mxu0
  %v9331 = vadd.f32 0.0, %v9330
  %v9332 = vpop.f32.mrb[0].mxu0
  %v9333 = vpop.f32.mrb[0].mxu0
  %v9334 = vadd.f32 0.0, %v9333
  %v9335 = vpop.f32.mrb[0].mxu0
  %9336 = vmatprep.mubr.bf16.mxu0 0
  %9337 = vmatmul.mubr.bf16.gmra.mrb[0].mxu0 %v1105
  %v9338 = vpop.f32.mrb[0].mxu0
  %v9339 = vadd.f32 0.0, %v9338
  %v9340 = vpop.f32.mrb[0].mxu0
  %v9341 = vpop.f32.mrb[0].mxu0
  %v9342 = vadd.f32 0.0, %v9341
  %v9343 = vpop.f32.mrb[0].mxu0
  %9344 = vmatprep.mubr.bf16.mxu0 0
  %9345 = vmatmul.mubr.bf16.gmra.mrb[0].mxu0 %v1108
  %v9346 = vpop.f32.mrb[0].mxu0
  %v9347 = vadd.f32 0.0, %v9346
  %v9348 = vpop.f32.mrb[0].mxu0
  %v9349 = vpop.f32.mrb[0].mxu0
  %v9350 = vadd.f32 0.0, %v9349
  %v9351 = vpop.f32.mrb[0].mxu0
  %9352 = vmatprep.mubr.bf16.mxu0 0
  %9353 = vmatmul.mubr.bf16.gmra.mrb[0].mxu0 %v1111
  %v9354 = vpop.f32.mrb[0].mxu0
  %v9355 = vadd.f32 0.0, %v9354
  %v9356 = vpop.f32.mrb[0].mxu0
  %v9357 = vpop.f32.mrb[0].mxu0
  %v9358 = vadd.f32 0.0, %v9357
  %v9359 = vpop.f32.mrb[0].mxu0
  %9360 = vmatprep.mubr.bf16.mxu0 0
  %9361 = vmatmul.mubr.bf16.gmra.mrb[0].mxu0 %v1114
  %v9362 = vpop.f32.mrb[0].mxu0
  %v9363 = vadd.f32 0.0, %v9362
  %v9364 = vpop.f32.mrb[0].mxu0
  %v9365 = vpop.f32.mrb[0].mxu0
  %v9366 = vadd.f32 0.0, %v9365
  %v9367 = vpop.f32.mrb[0].mxu0
  %9368 = vmatprep.mubr.bf16.mxu0 0
  %9369 = vmatmul.mubr.bf16.gmra.mrb[0].mxu0 %v1117
  %v9370 = vpop.f32.mrb[0].mxu0
  %v9371 = vadd.f32 0.0, %v9370
  %v9372 = vpop.f32.mrb[0].mxu0
  %v9373 = vpop.f32.mrb[0].mxu0
  %v9374 = vadd.f32 0.0, %v9373
  %v9375 = vpop.f32.mrb[0].mxu0
  %9376 = vmatprep.mubr.bf16.mxu0 0
  %9377 = vmatmul.mubr.bf16.gmra.mrb[0].mxu0 %v1120
  %v9378 = vpop.f32.mrb[0].mxu0
  %v9379 = vadd.f32 0.0, %v9378
  %v9380 = vpop.f32.mrb[0].mxu0
  %v9381 = vpop.f32.mrb[0].mxu0
  %v9382 = vadd.f32 0.0, %v9381
  %v9383 = vpop.f32.mrb[0].mxu0
  %9384 = vmatprep.mubr.bf16.mxu0 0
  %9385 = vmatmul.mubr.bf16.gmra.mrb[0].mxu0 %v1123
  %v9386 = vpop.f32.mrb[0].mxu0
  %v9387 = vadd.f32 0.0, %v9386
  %v9388 = vpop.f32.mrb[0].mxu0
  %v9389 = vpop.f32.mrb[0].mxu0
  %v9390 = vadd.f32 0.0, %v9389
  %v9391 = vpop.f32.mrb[0].mxu0
  %9392 = vmatprep.mubr.bf16.mxu0 0
  %9393 = vmatmul.mubr.bf16.gmra.mrb[0].mxu0 %v1126
  %v9394 = vpop.f32.mrb[0].mxu0
  %v9395 = vadd.f32 0.0, %v9394
  %v9396 = vpop.f32.mrb[0].mxu0
  %v9397 = vpop.f32.mrb[0].mxu0
  %v9398 = vadd.f32 0.0, %v9397
  %v9399 = vpop.f32.mrb[0].mxu0
  %9400 = vmatprep.mubr.bf16.mxu0 0
  %9401 = vmatmul.mubr.bf16.gmra.mrb[0].mxu0 %v5090
  %v9402 = vpop.f32.mrb[0].mxu0
  %v9403 = vadd.f32 0.0, %v9402
  %v9404 = vpop.f32.mrb[0].mxu0
  %v9405 = vpop.f32.mrb[0].mxu0
  %v9406 = vadd.f32 0.0, %v9405
  %v9407 = vpop.f32.mrb[0].mxu0
  %9408 = vmatprep.mubr.bf16.mxu0 0
  %9409 = vmatmul.mubr.bf16.gmra.mrb[0].mxu0 %v7112
  %v9410 = vpop.f32.mrb[0].mxu0
  %v9411 = vadd.f32 0.0, %v9410
  %v9412 = vpop.f32.mrb[0].mxu0
  %v9413 = vpop.f32.mrb[0].mxu0
  %v9414 = vadd.f32 0.0, %v9413
  %v9415 = vpop.f32.mrb[0].mxu0
  %9416 = vmatprep.mubr.bf16.mxu0 0
  %9417 = vmatmul.mubr.bf16.gmra.mrb[0].mxu0 %v9134
  %v9418 = vpop.f32.mrb[0].mxu0
  %v9419 = vadd.f32 0.0, %v9418
  %v9420 = vpop.f32.mrb[0].mxu0
  %v9421 = vpop.f32.mrb[0].mxu0
  %v9422 = vadd.f32 0.0, %v9421
  %v9423 = vpop.f32.mrb[0].mxu0
  %9424 = vdwg.mxu0
  %v9425 = vadd.f32 %v8995, %v9171
  %v9426 = vadd.f32 %v8996, %v9174
  %v9427 = vadd.f32 %v8997, %v9179
  %v9428 = vadd.f32 %v8998, %v9182
  %v9429 = vadd.f32 %v8999, %v9187
  %v9430 = vadd.f32 %v9000, %v9190
  %v9431 = vadd.f32 %v9001, %v9195
  %v9432 = vadd.f32 %v9002, %v9198
  %v9433 = vadd.f32 %v9003, %v9203
  %v9434 = vadd.f32 %v9004, %v9206
  %v9435 = vadd.f32 %v9005, %v9211
  %v9436 = vadd.f32 %v9006, %v9214
  %v9437 = vadd.f32 %v9007, %v9219
  %v9438 = vadd.f32 %v9008, %v9222
  %v9439 = vadd.f32 %v9009, %v9227
  %v9440 = vadd.f32 %v9010, %v9230
  %v9441 = vadd.f32 %v9011, %v9235
  %v9442 = vadd.f32 %v9012, %v9238
  %v9443 = vadd.f32 %v9013, %v9243
  %v9444 = vadd.f32 %v9014, %v9246
  %v9445 = vadd.f32 %v9015, %v9251
  %v9446 = vadd.f32 %v9016, %v9254
  %v9447 = vadd.f32 %v9017, %v9259
  %v9448 = vadd.f32 %v9018, %v9262
  %v9449 = vadd.f32 %v9019, %v9267
  %v9450 = vadd.f32 %v9020, %v9270
  %v9451 = vadd.f32 %v9021, %v9275
  %v9452 = vadd.f32 %v9022, %v9278
  %v9453 = vadd.f32 %v9023, %v9283
  %v9454 = vadd.f32 %v9024, %v9286
  %v9455 = vadd.f32 %v9025, %v9291
  %v9456 = vadd.f32 %v9026, %v9294
  %v9457 = vadd.f32 %v9027, %v9299
  %v9458 = vadd.f32 %v9028, %v9302
  %v9459 = vadd.f32 %v9029, %v9307
  %v9460 = vadd.f32 %v9030, %v9310
  %v9461 = vadd.f32 %v9031, %v9315
  %v9462 = vadd.f32 %v9032, %v9318
  %v9463 = vadd.f32 %v9033, %v9323
  %v9464 = vadd.f32 %v9034, %v9326
  %v9465 = vadd.f32 %v9035, %v9331
  %v9466 = vadd.f32 %v9036, %v9334
  %v9467 = vadd.f32 %v9037, %v9339
  %v9468 = vadd.f32 %v9038, %v9342
  %v9469 = vadd.f32 %v9039, %v9347
  %v9470 = vadd.f32 %v9040, %v9350
  %v9471 = vadd.f32 %v9041, %v9355
  %v9472 = vadd.f32 %v9042, %v9358
  %v9473 = vadd.f32 %v9043, %v9363
  %v9474 = vadd.f32 %v9044, %v9366
  %v9475 = vadd.f32 %v9045, %v9371
  %v9476 = vadd.f32 %v9046, %v9374
  %v9477 = vadd.f32 %v9047, %v9379
  %v9478 = vadd.f32 %v9048, %v9382
  %v9479 = vadd.f32 %v9049, %v9387
  %v9480 = vadd.f32 %v9050, %v9390
  %v9481 = vadd.f32 %v9051, %v9395
  %v9482 = vadd.f32 %v9052, %v9398
  %v9483 = vadd.f32 %v9053, %v9403
  %v9484 = vadd.f32 %v9054, %v9406
  %v9485 = vadd.f32 %v9055, %v9411
  %v9486 = vadd.f32 %v9056, %v9414
  %v9487 = vadd.f32 %v9057, %v9419
  %v9488 = vadd.f32 %v9058, %v9422
  %v9491 = vrot.slane %v77, 5
  %v9492 = vrot.slane %v9491, 4
  %v9493 = vrot.slane %v78, 5
  %v9494 = vsel %vm2008, %v9492, %v9493
  %v9495 = vrot.slane %v9493, 4
  %v9496 = vrot.slane %v79, 5
  %v9497 = vsel %vm2008, %v9495, %v9496
  %v9498 = vrot.slane %v137, 5
  %v9499 = vrot.slane %v9498, 4
  %v9500 = vrot.slane %v138, 5
  %v9501 = vsel %vm2008, %v9499, %v9500
  %v9502 = vrot.slane %v9500, 4
  %v9503 = vrot.slane %v139, 5
  %v9504 = vsel %vm2008, %v9502, %v9503
  %s9505 = scalar_lea.vmem %s1, 272
  %v9506 = vld [vmem:[%s9505] sm:$0xf]
  %v9507 = vld [vmem:[%s9505 + $0x4] sm:$0xf]
  %v9508 = vld [vmem:[%s9505 + $0x8] sm:$0xf]
  %v9509 = vld [vmem:[%s9505 + $0xc] sm:$0xf]
  %v9510 = vunpack.c.l.b16 %v9494
  %v9511 = vunpack.c.l.b16 %v9497
  %v9512 = vunpack.c.l.b16 %v9501
  %v9513 = vunpack.c.l.b16 %v9504
  %v9514 = vpack.c.b16 %v9511, %v9510
  %v9515 = vpack.c.b16 %v9513, %v9512
  %v9520 = vunpack.c.l.b16 %v9506
  %v9521 = vunpack.c.l.b16 %v9507
  %v9522 = vunpack.c.l.b16 %v9508
  %v9523 = vunpack.c.l.b16 %v9509
  %v9524 = vpack.c.b16 %v9521, %v9520
  %v9525 = vpack.c.b16 %v9523, %v9522
  %v9529 = vsel %vm1031, %v9514, 0
  %v9532 = vsel %vm1031, %v9515, 0
  %9534 = vmatprep.subr.bf16.mxu0 0
  %9535 = vmatpush1.bf16.msra.mxu0 %v9524
  %9536 = vmatprep.subr.bf16.mxu0 0
  %9537 = vmatpush1.bf16.msra.mxu0 %v9525
  %9538 = vmatprep.subr.bf16.mxu0 0
  %9539 = vmatpush1.bf16.msra.mxu0 0
  %9540 = vmatprep.subr.bf16.mxu0 0
  %9541 = vmatpush1.bf16.msra.mxu0 0
  %9542 = vmatprep.subr.bf16.mxu0 0
  %9543 = vmatpush1.bf16.msra.mxu0 0
  %9544 = vmatprep.subr.bf16.mxu0 0
  %9545 = vmatpush1.bf16.msra.mxu0 0
  %9546 = vmatprep.subr.bf16.mxu0 0
  %9547 = vmatpush1.bf16.msra.mxu0 0
  %9548 = vmatprep.subr.bf16.mxu0 0
  %9549 = vmatpush1.bf16.msra.mxu0 0
  %9550 = vmatprep.subr.bf16.mxu0 0
  %9551 = vmatpush1.bf16.msra.mxu0 0
  %9552 = vmatprep.subr.bf16.mxu0 0
  %9553 = vmatpush1.bf16.msra.mxu0 0
  %9554 = vmatprep.subr.bf16.mxu0 0
  %9555 = vmatpush1.bf16.msra.mxu0 0
  %9556 = vmatprep.subr.bf16.mxu0 0
  %9557 = vmatpush1.bf16.msra.mxu0 0
  %9558 = vmatprep.subr.bf16.mxu0 0
  %9559 = vmatpush1.bf16.msra.mxu0 0
  %9560 = vmatprep.subr.bf16.mxu0 0
  %9561 = vmatpush1.bf16.msra.mxu0 0
  %9562 = vmatprep.subr.bf16.mxu0 0
  %9563 = vmatpush1.bf16.msra.mxu0 0
  %9564 = vmatprep.subr.bf16.mxu0 0
  %9565 = vmatpush1.bf16.msra.mxu0 0
  %9566 = vmatprep.mubr.bf16.mxu0 0
  %9567 = vmatmul.mubr.bf16.gmra.mrb[0].mxu0 %v2356
  %v9568 = vpop.f32.mrb[0].mxu0
  %v9569 = vadd.f32 0.0, %v9568
  %v9570 = vpop.f32.mrb[0].mxu0
  %v9571 = vpop.f32.mrb[0].mxu0
  %v9572 = vadd.f32 0.0, %v9571
  %v9573 = vpop.f32.mrb[0].mxu0
  %9574 = vmatprep.mubr.bf16.mxu0 0
  %9575 = vmatmul.mubr.bf16.gmra.mrb[0].mxu0 %v2359
  %v9576 = vpop.f32.mrb[0].mxu0
  %v9577 = vadd.f32 0.0, %v9576
  %v9578 = vpop.f32.mrb[0].mxu0
  %v9579 = vpop.f32.mrb[0].mxu0
  %v9580 = vadd.f32 0.0, %v9579
  %v9581 = vpop.f32.mrb[0].mxu0
  %9582 = vmatprep.mubr.bf16.mxu0 0
  %9583 = vmatmul.mubr.bf16.gmra.mrb[0].mxu0 %v2362
  %v9584 = vpop.f32.mrb[0].mxu0
  %v9585 = vadd.f32 0.0, %v9584
  %v9586 = vpop.f32.mrb[0].mxu0
  %v9587 = vpop.f32.mrb[0].mxu0
  %v9588 = vadd.f32 0.0, %v9587
  %v9589 = vpop.f32.mrb[0].mxu0
  %9590 = vmatprep.mubr.bf16.mxu0 0
  %9591 = vmatmul.mubr.bf16.gmra.mrb[0].mxu0 %v2365
  %v9592 = vpop.f32.mrb[0].mxu0
  %v9593 = vadd.f32 0.0, %v9592
  %v9594 = vpop.f32.mrb[0].mxu0
  %v9595 = vpop.f32.mrb[0].mxu0
  %v9596 = vadd.f32 0.0, %v9595
  %v9597 = vpop.f32.mrb[0].mxu0
  %9598 = vmatprep.mubr.bf16.mxu0 0
  %9599 = vmatmul.mubr.bf16.gmra.mrb[0].mxu0 %v2368
  %v9600 = vpop.f32.mrb[0].mxu0
  %v9601 = vadd.f32 0.0, %v9600
  %v9602 = vpop.f32.mrb[0].mxu0
  %v9603 = vpop.f32.mrb[0].mxu0
  %v9604 = vadd.f32 0.0, %v9603
  %v9605 = vpop.f32.mrb[0].mxu0
  %9606 = vmatprep.mubr.bf16.mxu0 0
  %9607 = vmatmul.mubr.bf16.gmra.mrb[0].mxu0 %v2371
  %v9608 = vpop.f32.mrb[0].mxu0
  %v9609 = vadd.f32 0.0, %v9608
  %v9610 = vpop.f32.mrb[0].mxu0
  %v9611 = vpop.f32.mrb[0].mxu0
  %v9612 = vadd.f32 0.0, %v9611
  %v9613 = vpop.f32.mrb[0].mxu0
  %9614 = vmatprep.mubr.bf16.mxu0 0
  %9615 = vmatmul.mubr.bf16.gmra.mrb[0].mxu0 %v2374
  %v9616 = vpop.f32.mrb[0].mxu0
  %v9617 = vadd.f32 0.0, %v9616
  %v9618 = vpop.f32.mrb[0].mxu0
  %v9619 = vpop.f32.mrb[0].mxu0
  %v9620 = vadd.f32 0.0, %v9619
  %v9621 = vpop.f32.mrb[0].mxu0
  %9622 = vmatprep.mubr.bf16.mxu0 0
  %9623 = vmatmul.mubr.bf16.gmra.mrb[0].mxu0 %v2377
  %v9624 = vpop.f32.mrb[0].mxu0
  %v9625 = vadd.f32 0.0, %v9624
  %v9626 = vpop.f32.mrb[0].mxu0
  %v9627 = vpop.f32.mrb[0].mxu0
  %v9628 = vadd.f32 0.0, %v9627
  %v9629 = vpop.f32.mrb[0].mxu0
  %9630 = vmatprep.mubr.bf16.mxu0 0
  %9631 = vmatmul.mubr.bf16.gmra.mrb[0].mxu0 %v2380
  %v9632 = vpop.f32.mrb[0].mxu0
  %v9633 = vadd.f32 0.0, %v9632
  %v9634 = vpop.f32.mrb[0].mxu0
  %v9635 = vpop.f32.mrb[0].mxu0
  %v9636 = vadd.f32 0.0, %v9635
  %v9637 = vpop.f32.mrb[0].mxu0
  %9638 = vmatprep.mubr.bf16.mxu0 0
  %9639 = vmatmul.mubr.bf16.gmra.mrb[0].mxu0 %v2383
  %v9640 = vpop.f32.mrb[0].mxu0
  %v9641 = vadd.f32 0.0, %v9640
  %v9642 = vpop.f32.mrb[0].mxu0
  %v9643 = vpop.f32.mrb[0].mxu0
  %v9644 = vadd.f32 0.0, %v9643
  %v9645 = vpop.f32.mrb[0].mxu0
  %9646 = vmatprep.mubr.bf16.mxu0 0
  %9647 = vmatmul.mubr.bf16.gmra.mrb[0].mxu0 %v2386
  %v9648 = vpop.f32.mrb[0].mxu0
  %v9649 = vadd.f32 0.0, %v9648
  %v9650 = vpop.f32.mrb[0].mxu0
  %v9651 = vpop.f32.mrb[0].mxu0
  %v9652 = vadd.f32 0.0, %v9651
  %v9653 = vpop.f32.mrb[0].mxu0
  %9654 = vmatprep.mubr.bf16.mxu0 0
  %9655 = vmatmul.mubr.bf16.gmra.mrb[0].mxu0 %v2389
  %v9656 = vpop.f32.mrb[0].mxu0
  %v9657 = vadd.f32 0.0, %v9656
  %v9658 = vpop.f32.mrb[0].mxu0
  %v9659 = vpop.f32.mrb[0].mxu0
  %v9660 = vadd.f32 0.0, %v9659
  %v9661 = vpop.f32.mrb[0].mxu0
  %9662 = vmatprep.mubr.bf16.mxu0 0
  %9663 = vmatmul.mubr.bf16.gmra.mrb[0].mxu0 %v2392
  %v9664 = vpop.f32.mrb[0].mxu0
  %v9665 = vadd.f32 0.0, %v9664
  %v9666 = vpop.f32.mrb[0].mxu0
  %v9667 = vpop.f32.mrb[0].mxu0
  %v9668 = vadd.f32 0.0, %v9667
  %v9669 = vpop.f32.mrb[0].mxu0
  %9670 = vmatprep.mubr.bf16.mxu0 0
  %9671 = vmatmul.mubr.bf16.gmra.mrb[0].mxu0 %v5485
  %v9672 = vpop.f32.mrb[0].mxu0
  %v9673 = vadd.f32 0.0, %v9672
  %v9674 = vpop.f32.mrb[0].mxu0
  %v9675 = vpop.f32.mrb[0].mxu0
  %v9676 = vadd.f32 0.0, %v9675
  %v9677 = vpop.f32.mrb[0].mxu0
  %9678 = vmatprep.mubr.bf16.mxu0 0
  %9679 = vmatmul.mubr.bf16.gmra.mrb[0].mxu0 %v7507
  %v9680 = vpop.f32.mrb[0].mxu0
  %v9681 = vadd.f32 0.0, %v9680
  %v9682 = vpop.f32.mrb[0].mxu0
  %v9683 = vpop.f32.mrb[0].mxu0
  %v9684 = vadd.f32 0.0, %v9683
  %v9685 = vpop.f32.mrb[0].mxu0
  %9686 = vmatprep.mubr.bf16.mxu0 0
  %9687 = vmatmul.mubr.bf16.gmra.mrb[0].mxu0 %v9529
  %v9688 = vpop.f32.mrb[0].mxu0
  %v9689 = vadd.f32 0.0, %v9688
  %v9690 = vpop.f32.mrb[0].mxu0
  %v9691 = vpop.f32.mrb[0].mxu0
  %v9692 = vadd.f32 0.0, %v9691
  %v9693 = vpop.f32.mrb[0].mxu0
  %9694 = vmatprep.mubr.bf16.mxu0 0
  %9695 = vmatmul.mubr.bf16.gmra.mrb[0].mxu0 %v2404
  %v9696 = vpop.f32.mrb[0].mxu0
  %v9697 = vadd.f32 0.0, %v9696
  %v9698 = vpop.f32.mrb[0].mxu0
  %v9699 = vpop.f32.mrb[0].mxu0
  %v9700 = vadd.f32 0.0, %v9699
  %v9701 = vpop.f32.mrb[0].mxu0
  %9702 = vmatprep.mubr.bf16.mxu0 0
  %9703 = vmatmul.mubr.bf16.gmra.mrb[0].mxu0 %v2407
  %v9704 = vpop.f32.mrb[0].mxu0
  %v9705 = vadd.f32 0.0, %v9704
  %v9706 = vpop.f32.mrb[0].mxu0
  %v9707 = vpop.f32.mrb[0].mxu0
  %v9708 = vadd.f32 0.0, %v9707
  %v9709 = vpop.f32.mrb[0].mxu0
  %9710 = vmatprep.mubr.bf16.mxu0 0
  %9711 = vmatmul.mubr.bf16.gmra.mrb[0].mxu0 %v2410
  %v9712 = vpop.f32.mrb[0].mxu0
  %v9713 = vadd.f32 0.0, %v9712
  %v9714 = vpop.f32.mrb[0].mxu0
  %v9715 = vpop.f32.mrb[0].mxu0
  %v9716 = vadd.f32 0.0, %v9715
  %v9717 = vpop.f32.mrb[0].mxu0
  %9718 = vmatprep.mubr.bf16.mxu0 0
  %9719 = vmatmul.mubr.bf16.gmra.mrb[0].mxu0 %v2413
  %v9720 = vpop.f32.mrb[0].mxu0
  %v9721 = vadd.f32 0.0, %v9720
  %v9722 = vpop.f32.mrb[0].mxu0
  %v9723 = vpop.f32.mrb[0].mxu0
  %v9724 = vadd.f32 0.0, %v9723
  %v9725 = vpop.f32.mrb[0].mxu0
  %9726 = vmatprep.mubr.bf16.mxu0 0
  %9727 = vmatmul.mubr.bf16.gmra.mrb[0].mxu0 %v2416
  %v9728 = vpop.f32.mrb[0].mxu0
  %v9729 = vadd.f32 0.0, %v9728
  %v9730 = vpop.f32.mrb[0].mxu0
  %v9731 = vpop.f32.mrb[0].mxu0
  %v9732 = vadd.f32 0.0, %v9731
  %v9733 = vpop.f32.mrb[0].mxu0
  %9734 = vmatprep.mubr.bf16.mxu0 0
  %9735 = vmatmul.mubr.bf16.gmra.mrb[0].mxu0 %v2419
  %v9736 = vpop.f32.mrb[0].mxu0
  %v9737 = vadd.f32 0.0, %v9736
  %v9738 = vpop.f32.mrb[0].mxu0
  %v9739 = vpop.f32.mrb[0].mxu0
  %v9740 = vadd.f32 0.0, %v9739
  %v9741 = vpop.f32.mrb[0].mxu0
  %9742 = vmatprep.mubr.bf16.mxu0 0
  %9743 = vmatmul.mubr.bf16.gmra.mrb[0].mxu0 %v2422
  %v9744 = vpop.f32.mrb[0].mxu0
  %v9745 = vadd.f32 0.0, %v9744
  %v9746 = vpop.f32.mrb[0].mxu0
  %v9747 = vpop.f32.mrb[0].mxu0
  %v9748 = vadd.f32 0.0, %v9747
  %v9749 = vpop.f32.mrb[0].mxu0
  %9750 = vmatprep.mubr.bf16.mxu0 0
  %9751 = vmatmul.mubr.bf16.gmra.mrb[0].mxu0 %v2425
  %v9752 = vpop.f32.mrb[0].mxu0
  %v9753 = vadd.f32 0.0, %v9752
  %v9754 = vpop.f32.mrb[0].mxu0
  %v9755 = vpop.f32.mrb[0].mxu0
  %v9756 = vadd.f32 0.0, %v9755
  %v9757 = vpop.f32.mrb[0].mxu0
  %9758 = vmatprep.mubr.bf16.mxu0 0
  %9759 = vmatmul.mubr.bf16.gmra.mrb[0].mxu0 %v2428
  %v9760 = vpop.f32.mrb[0].mxu0
  %v9761 = vadd.f32 0.0, %v9760
  %v9762 = vpop.f32.mrb[0].mxu0
  %v9763 = vpop.f32.mrb[0].mxu0
  %v9764 = vadd.f32 0.0, %v9763
  %v9765 = vpop.f32.mrb[0].mxu0
  %9766 = vmatprep.mubr.bf16.mxu0 0
  %9767 = vmatmul.mubr.bf16.gmra.mrb[0].mxu0 %v2431
  %v9768 = vpop.f32.mrb[0].mxu0
  %v9769 = vadd.f32 0.0, %v9768
  %v9770 = vpop.f32.mrb[0].mxu0
  %v9771 = vpop.f32.mrb[0].mxu0
  %v9772 = vadd.f32 0.0, %v9771
  %v9773 = vpop.f32.mrb[0].mxu0
  %9774 = vmatprep.mubr.bf16.mxu0 0
  %9775 = vmatmul.mubr.bf16.gmra.mrb[0].mxu0 %v2434
  %v9776 = vpop.f32.mrb[0].mxu0
  %v9777 = vadd.f32 0.0, %v9776
  %v9778 = vpop.f32.mrb[0].mxu0
  %v9779 = vpop.f32.mrb[0].mxu0
  %v9780 = vadd.f32 0.0, %v9779
  %v9781 = vpop.f32.mrb[0].mxu0
  %9782 = vmatprep.mubr.bf16.mxu0 0
  %9783 = vmatmul.mubr.bf16.gmra.mrb[0].mxu0 %v2437
  %v9784 = vpop.f32.mrb[0].mxu0
  %v9785 = vadd.f32 0.0, %v9784
  %v9786 = vpop.f32.mrb[0].mxu0
  %v9787 = vpop.f32.mrb[0].mxu0
  %v9788 = vadd.f32 0.0, %v9787
  %v9789 = vpop.f32.mrb[0].mxu0
  %9790 = vmatprep.mubr.bf16.mxu0 0
  %9791 = vmatmul.mubr.bf16.gmra.mrb[0].mxu0 %v2440
  %v9792 = vpop.f32.mrb[0].mxu0
  %v9793 = vadd.f32 0.0, %v9792
  %v9794 = vpop.f32.mrb[0].mxu0
  %v9795 = vpop.f32.mrb[0].mxu0
  %v9796 = vadd.f32 0.0, %v9795
  %v9797 = vpop.f32.mrb[0].mxu0
  %9798 = vmatprep.mubr.bf16.mxu0 0
  %9799 = vmatmul.mubr.bf16.gmra.mrb[0].mxu0 %v5488
  %v9800 = vpop.f32.mrb[0].mxu0
  %v9801 = vadd.f32 0.0, %v9800
  %v9802 = vpop.f32.mrb[0].mxu0
  %v9803 = vpop.f32.mrb[0].mxu0
  %v9804 = vadd.f32 0.0, %v9803
  %v9805 = vpop.f32.mrb[0].mxu0
  %9806 = vmatprep.mubr.bf16.mxu0 0
  %9807 = vmatmul.mubr.bf16.gmra.mrb[0].mxu0 %v7510
  %v9808 = vpop.f32.mrb[0].mxu0
  %v9809 = vadd.f32 0.0, %v9808
  %v9810 = vpop.f32.mrb[0].mxu0
  %v9811 = vpop.f32.mrb[0].mxu0
  %v9812 = vadd.f32 0.0, %v9811
  %v9813 = vpop.f32.mrb[0].mxu0
  %9814 = vmatprep.mubr.bf16.mxu0 0
  %9815 = vmatmul.mubr.bf16.gmra.mrb[0].mxu0 %v9532
  %v9816 = vpop.f32.mrb[0].mxu0
  %v9817 = vadd.f32 0.0, %v9816
  %v9818 = vpop.f32.mrb[0].mxu0
  %v9819 = vpop.f32.mrb[0].mxu0
  %v9820 = vadd.f32 0.0, %v9819
  %v9821 = vpop.f32.mrb[0].mxu0
  %9822 = vdwg.mxu0
  %v9823 = vadd.f32 %v9425, %v9569
  %v9824 = vadd.f32 %v9426, %v9572
  %v9825 = vadd.f32 %v9427, %v9577
  %v9826 = vadd.f32 %v9428, %v9580
  %v9827 = vadd.f32 %v9429, %v9585
  %v9828 = vadd.f32 %v9430, %v9588
  %v9829 = vadd.f32 %v9431, %v9593
  %v9830 = vadd.f32 %v9432, %v9596
  %v9831 = vadd.f32 %v9433, %v9601
  %v9832 = vadd.f32 %v9434, %v9604
  %v9833 = vadd.f32 %v9435, %v9609
  %v9834 = vadd.f32 %v9436, %v9612
  %v9835 = vadd.f32 %v9437, %v9617
  %v9836 = vadd.f32 %v9438, %v9620
  %v9837 = vadd.f32 %v9439, %v9625
  %v9838 = vadd.f32 %v9440, %v9628
  %v9839 = vadd.f32 %v9441, %v9633
  %v9840 = vadd.f32 %v9442, %v9636
  %v9841 = vadd.f32 %v9443, %v9641
  %v9842 = vadd.f32 %v9444, %v9644
  %v9843 = vadd.f32 %v9445, %v9649
  %v9844 = vadd.f32 %v9446, %v9652
  %v9845 = vadd.f32 %v9447, %v9657
  %v9846 = vadd.f32 %v9448, %v9660
  %v9847 = vadd.f32 %v9449, %v9665
  %v9848 = vadd.f32 %v9450, %v9668
  %v9849 = vadd.f32 %v9451, %v9673
  %v9850 = vadd.f32 %v9452, %v9676
  %v9851 = vadd.f32 %v9453, %v9681
  %v9852 = vadd.f32 %v9454, %v9684
  %v9853 = vadd.f32 %v9455, %v9689
  %v9854 = vadd.f32 %v9456, %v9692
  %v9855 = vadd.f32 %v9457, %v9697
  %v9856 = vadd.f32 %v9458, %v9700
  %v9857 = vadd.f32 %v9459, %v9705
  %v9858 = vadd.f32 %v9460, %v9708
  %v9859 = vadd.f32 %v9461, %v9713
  %v9860 = vadd.f32 %v9462, %v9716
  %v9861 = vadd.f32 %v9463, %v9721
  %v9862 = vadd.f32 %v9464, %v9724
  %v9863 = vadd.f32 %v9465, %v9729
  %v9864 = vadd.f32 %v9466, %v9732
  %v9865 = vadd.f32 %v9467, %v9737
  %v9866 = vadd.f32 %v9468, %v9740
  %v9867 = vadd.f32 %v9469, %v9745
  %v9868 = vadd.f32 %v9470, %v9748
  %v9869 = vadd.f32 %v9471, %v9753
  %v9870 = vadd.f32 %v9472, %v9756
  %v9871 = vadd.f32 %v9473, %v9761
  %v9872 = vadd.f32 %v9474, %v9764
  %v9873 = vadd.f32 %v9475, %v9769
  %v9874 = vadd.f32 %v9476, %v9772
  %v9875 = vadd.f32 %v9477, %v9777
  %v9876 = vadd.f32 %v9478, %v9780
  %v9877 = vadd.f32 %v9479, %v9785
  %v9878 = vadd.f32 %v9480, %v9788
  %v9879 = vadd.f32 %v9481, %v9793
  %v9880 = vadd.f32 %v9482, %v9796
  %v9881 = vadd.f32 %v9483, %v9801
  %v9882 = vadd.f32 %v9484, %v9804
  %v9883 = vadd.f32 %v9485, %v9809
  %v9884 = vadd.f32 %v9486, %v9812
  %v9885 = vadd.f32 %v9487, %v9817
  %v9886 = vadd.f32 %v9488, %v9820
  %v9887 = vrot.slane %v9060, 5
  %v9888 = vrot.slane %v9063, 6
  %v9889 = vor.u32 %v9887, %v9888
  %v9890 = vrot.slane %v9889, 4
  %v9891 = vrot.slane %v9073, 5
  %v9892 = vrot.slane %v9069, 6
  %v9893 = vor.u32 %v9891, %v9892
  %v9894 = vsel %vm2797, %v9890, %v9893
  %v9895 = vrot.slane %v9893, 4
  %v9896 = vshrl.u32 %v79, 16
  %v9898 = vrot.slane %v9896, 5
  %v9899 = vrot.slane %v9079, 6
  %v9900 = vor.u32 %v9898, %v9899
  %v9901 = vsel %vm2797, %v9895, %v9900
  %v9902 = vrot.slane %v9084, 5
  %v9903 = vrot.slane %v9087, 6
  %v9904 = vor.u32 %v9902, %v9903
  %v9905 = vrot.slane %v9904, 4
  %v9906 = vrot.slane %v9097, 5
  %v9907 = vrot.slane %v9093, 6
  %v9908 = vor.u32 %v9906, %v9907
  %v9909 = vsel %vm2797, %v9905, %v9908
  %v9910 = vrot.slane %v9908, 4
  %v9911 = vshrl.u32 %v139, 16
  %v9913 = vrot.slane %v9911, 5
  %v9914 = vrot.slane %v9103, 6
  %v9915 = vor.u32 %v9913, %v9914
  %v9916 = vsel %vm2797, %v9910, %v9915
  %s9917 = scalar_lea.vmem %s1, 288
  %v9918 = vld [vmem:[%s9917] sm:$0xf]
  %v9919 = vld [vmem:[%s9917 + $0x4] sm:$0xf]
  %v9920 = vld [vmem:[%s9917 + $0x8] sm:$0xf]
  %v9921 = vld [vmem:[%s9917 + $0xc] sm:$0xf]
  %v9922 = vunpack.c.l.b16 %v9894
  %v9923 = vunpack.c.l.b16 %v9901
  %v9924 = vunpack.c.l.b16 %v9909
  %v9925 = vunpack.c.l.b16 %v9916
  %v9926 = vpack.c.b16 %v9923, %v9922
  %v9927 = vpack.c.b16 %v9925, %v9924
  %v9932 = vunpack.c.l.b16 %v9918
  %v9933 = vunpack.c.l.b16 %v9919
  %v9934 = vunpack.c.l.b16 %v9920
  %v9935 = vunpack.c.l.b16 %v9921
  %v9936 = vpack.c.b16 %v9933, %v9932
  %v9937 = vpack.c.b16 %v9935, %v9934
  %v9941 = vsel %vm1031, %v9926, 0
  %v9944 = vsel %vm1031, %v9927, 0
  %9946 = vmatprep.subr.bf16.mxu0 0
  %9947 = vmatpush1.bf16.msra.mxu0 %v9936
  %9948 = vmatprep.subr.bf16.mxu0 0
  %9949 = vmatpush1.bf16.msra.mxu0 %v9937
  %9950 = vmatprep.subr.bf16.mxu0 0
  %9951 = vmatpush1.bf16.msra.mxu0 0
  %9952 = vmatprep.subr.bf16.mxu0 0
  %9953 = vmatpush1.bf16.msra.mxu0 0
  %9954 = vmatprep.subr.bf16.mxu0 0
  %9955 = vmatpush1.bf16.msra.mxu0 0
  %9956 = vmatprep.subr.bf16.mxu0 0
  %9957 = vmatpush1.bf16.msra.mxu0 0
  %9958 = vmatprep.subr.bf16.mxu0 0
  %9959 = vmatpush1.bf16.msra.mxu0 0
  %9960 = vmatprep.subr.bf16.mxu0 0
  %9961 = vmatpush1.bf16.msra.mxu0 0
  %9962 = vmatprep.subr.bf16.mxu0 0
  %9963 = vmatpush1.bf16.msra.mxu0 0
  %9964 = vmatprep.subr.bf16.mxu0 0
  %9965 = vmatpush1.bf16.msra.mxu0 0
  %9966 = vmatprep.subr.bf16.mxu0 0
  %9967 = vmatpush1.bf16.msra.mxu0 0
  %9968 = vmatprep.subr.bf16.mxu0 0
  %9969 = vmatpush1.bf16.msra.mxu0 0
  %9970 = vmatprep.subr.bf16.mxu0 0
  %9971 = vmatpush1.bf16.msra.mxu0 0
  %9972 = vmatprep.subr.bf16.mxu0 0
  %9973 = vmatpush1.bf16.msra.mxu0 0
  %9974 = vmatprep.subr.bf16.mxu0 0
  %9975 = vmatpush1.bf16.msra.mxu0 0
  %9976 = vmatprep.subr.bf16.mxu0 0
  %9977 = vmatpush1.bf16.msra.mxu0 0
  %9978 = vmatprep.mubr.bf16.mxu0 0
  %9979 = vmatmul.mubr.bf16.gmra.mrb[0].mxu0 %v3401
  %v9980 = vpop.f32.mrb[0].mxu0
  %v9981 = vadd.f32 0.0, %v9980
  %v9982 = vpop.f32.mrb[0].mxu0
  %v9983 = vpop.f32.mrb[0].mxu0
  %v9984 = vadd.f32 0.0, %v9983
  %v9985 = vpop.f32.mrb[0].mxu0
  %9986 = vmatprep.mubr.bf16.mxu0 0
  %9987 = vmatmul.mubr.bf16.gmra.mrb[0].mxu0 %v3404
  %v9988 = vpop.f32.mrb[0].mxu0
  %v9989 = vadd.f32 0.0, %v9988
  %v9990 = vpop.f32.mrb[0].mxu0
  %v9991 = vpop.f32.mrb[0].mxu0
  %v9992 = vadd.f32 0.0, %v9991
  %v9993 = vpop.f32.mrb[0].mxu0
  %9994 = vmatprep.mubr.bf16.mxu0 0
  %9995 = vmatmul.mubr.bf16.gmra.mrb[0].mxu0 %v3407
  %v9996 = vpop.f32.mrb[0].mxu0
  %v9997 = vadd.f32 0.0, %v9996
  %v9998 = vpop.f32.mrb[0].mxu0
  %v9999 = vpop.f32.mrb[0].mxu0
  %v10000 = vadd.f32 0.0, %v9999
  %v10001 = vpop.f32.mrb[0].mxu0
  %10002 = vmatprep.mubr.bf16.mxu0 0
  %10003 = vmatmul.mubr.bf16.gmra.mrb[0].mxu0 %v3410
  %v10004 = vpop.f32.mrb[0].mxu0
  %v10005 = vadd.f32 0.0, %v10004
  %v10006 = vpop.f32.mrb[0].mxu0
  %v10007 = vpop.f32.mrb[0].mxu0
  %v10008 = vadd.f32 0.0, %v10007
  %v10009 = vpop.f32.mrb[0].mxu0
  %10010 = vmatprep.mubr.bf16.mxu0 0
  %10011 = vmatmul.mubr.bf16.gmra.mrb[0].mxu0 %v3413
  %v10012 = vpop.f32.mrb[0].mxu0
  %v10013 = vadd.f32 0.0, %v10012
  %v10014 = vpop.f32.mrb[0].mxu0
  %v10015 = vpop.f32.mrb[0].mxu0
  %v10016 = vadd.f32 0.0, %v10015
  %v10017 = vpop.f32.mrb[0].mxu0
  %10018 = vmatprep.mubr.bf16.mxu0 0
  %10019 = vmatmul.mubr.bf16.gmra.mrb[0].mxu0 %v3416
  %v10020 = vpop.f32.mrb[0].mxu0
  %v10021 = vadd.f32 0.0, %v10020
  %v10022 = vpop.f32.mrb[0].mxu0
  %v10023 = vpop.f32.mrb[0].mxu0
  %v10024 = vadd.f32 0.0, %v10023
  %v10025 = vpop.f32.mrb[0].mxu0
  %10026 = vmatprep.mubr.bf16.mxu0 0
  %10027 = vmatmul.mubr.bf16.gmra.mrb[0].mxu0 %v3419
  %v10028 = vpop.f32.mrb[0].mxu0
  %v10029 = vadd.f32 0.0, %v10028
  %v10030 = vpop.f32.mrb[0].mxu0
  %v10031 = vpop.f32.mrb[0].mxu0
  %v10032 = vadd.f32 0.0, %v10031
  %v10033 = vpop.f32.mrb[0].mxu0
  %10034 = vmatprep.mubr.bf16.mxu0 0
  %10035 = vmatmul.mubr.bf16.gmra.mrb[0].mxu0 %v3422
  %v10036 = vpop.f32.mrb[0].mxu0
  %v10037 = vadd.f32 0.0, %v10036
  %v10038 = vpop.f32.mrb[0].mxu0
  %v10039 = vpop.f32.mrb[0].mxu0
  %v10040 = vadd.f32 0.0, %v10039
  %v10041 = vpop.f32.mrb[0].mxu0
  %10042 = vmatprep.mubr.bf16.mxu0 0
  %10043 = vmatmul.mubr.bf16.gmra.mrb[0].mxu0 %v3425
  %v10044 = vpop.f32.mrb[0].mxu0
  %v10045 = vadd.f32 0.0, %v10044
  %v10046 = vpop.f32.mrb[0].mxu0
  %v10047 = vpop.f32.mrb[0].mxu0
  %v10048 = vadd.f32 0.0, %v10047
  %v10049 = vpop.f32.mrb[0].mxu0
  %10050 = vmatprep.mubr.bf16.mxu0 0
  %10051 = vmatmul.mubr.bf16.gmra.mrb[0].mxu0 %v3428
  %v10052 = vpop.f32.mrb[0].mxu0
  %v10053 = vadd.f32 0.0, %v10052
  %v10054 = vpop.f32.mrb[0].mxu0
  %v10055 = vpop.f32.mrb[0].mxu0
  %v10056 = vadd.f32 0.0, %v10055
  %v10057 = vpop.f32.mrb[0].mxu0
  %10058 = vmatprep.mubr.bf16.mxu0 0
  %10059 = vmatmul.mubr.bf16.gmra.mrb[0].mxu0 %v3431
  %v10060 = vpop.f32.mrb[0].mxu0
  %v10061 = vadd.f32 0.0, %v10060
  %v10062 = vpop.f32.mrb[0].mxu0
  %v10063 = vpop.f32.mrb[0].mxu0
  %v10064 = vadd.f32 0.0, %v10063
  %v10065 = vpop.f32.mrb[0].mxu0
  %10066 = vmatprep.mubr.bf16.mxu0 0
  %10067 = vmatmul.mubr.bf16.gmra.mrb[0].mxu0 %v3434
  %v10068 = vpop.f32.mrb[0].mxu0
  %v10069 = vadd.f32 0.0, %v10068
  %v10070 = vpop.f32.mrb[0].mxu0
  %v10071 = vpop.f32.mrb[0].mxu0
  %v10072 = vadd.f32 0.0, %v10071
  %v10073 = vpop.f32.mrb[0].mxu0
  %10074 = vmatprep.mubr.bf16.mxu0 0
  %10075 = vmatmul.mubr.bf16.gmra.mrb[0].mxu0 %v3437
  %v10076 = vpop.f32.mrb[0].mxu0
  %v10077 = vadd.f32 0.0, %v10076
  %v10078 = vpop.f32.mrb[0].mxu0
  %v10079 = vpop.f32.mrb[0].mxu0
  %v10080 = vadd.f32 0.0, %v10079
  %v10081 = vpop.f32.mrb[0].mxu0
  %10082 = vmatprep.mubr.bf16.mxu0 0
  %10083 = vmatmul.mubr.bf16.gmra.mrb[0].mxu0 %v5897
  %v10084 = vpop.f32.mrb[0].mxu0
  %v10085 = vadd.f32 0.0, %v10084
  %v10086 = vpop.f32.mrb[0].mxu0
  %v10087 = vpop.f32.mrb[0].mxu0
  %v10088 = vadd.f32 0.0, %v10087
  %v10089 = vpop.f32.mrb[0].mxu0
  %10090 = vmatprep.mubr.bf16.mxu0 0
  %10091 = vmatmul.mubr.bf16.gmra.mrb[0].mxu0 %v7919
  %v10092 = vpop.f32.mrb[0].mxu0
  %v10093 = vadd.f32 0.0, %v10092
  %v10094 = vpop.f32.mrb[0].mxu0
  %v10095 = vpop.f32.mrb[0].mxu0
  %v10096 = vadd.f32 0.0, %v10095
  %v10097 = vpop.f32.mrb[0].mxu0
  %10098 = vmatprep.mubr.bf16.mxu0 0
  %10099 = vmatmul.mubr.bf16.gmra.mrb[0].mxu0 %v9941
  %v10100 = vpop.f32.mrb[0].mxu0
  %v10101 = vadd.f32 0.0, %v10100
  %v10102 = vpop.f32.mrb[0].mxu0
  %v10103 = vpop.f32.mrb[0].mxu0
  %v10104 = vadd.f32 0.0, %v10103
  %v10105 = vpop.f32.mrb[0].mxu0
  %10106 = vmatprep.mubr.bf16.mxu0 0
  %10107 = vmatmul.mubr.bf16.gmra.mrb[0].mxu0 %v3449
  %v10108 = vpop.f32.mrb[0].mxu0
  %v10109 = vadd.f32 0.0, %v10108
  %v10110 = vpop.f32.mrb[0].mxu0
  %v10111 = vpop.f32.mrb[0].mxu0
  %v10112 = vadd.f32 0.0, %v10111
  %v10113 = vpop.f32.mrb[0].mxu0
  %10114 = vmatprep.mubr.bf16.mxu0 0
  %10115 = vmatmul.mubr.bf16.gmra.mrb[0].mxu0 %v3452
  %v10116 = vpop.f32.mrb[0].mxu0
  %v10117 = vadd.f32 0.0, %v10116
  %v10118 = vpop.f32.mrb[0].mxu0
  %v10119 = vpop.f32.mrb[0].mxu0
  %v10120 = vadd.f32 0.0, %v10119
  %v10121 = vpop.f32.mrb[0].mxu0
  %10122 = vmatprep.mubr.bf16.mxu0 0
  %10123 = vmatmul.mubr.bf16.gmra.mrb[0].mxu0 %v3455
  %v10124 = vpop.f32.mrb[0].mxu0
  %v10125 = vadd.f32 0.0, %v10124
  %v10126 = vpop.f32.mrb[0].mxu0
  %v10127 = vpop.f32.mrb[0].mxu0
  %v10128 = vadd.f32 0.0, %v10127
  %v10129 = vpop.f32.mrb[0].mxu0
  %10130 = vmatprep.mubr.bf16.mxu0 0
  %10131 = vmatmul.mubr.bf16.gmra.mrb[0].mxu0 %v3458
  %v10132 = vpop.f32.mrb[0].mxu0
  %v10133 = vadd.f32 0.0, %v10132
  %v10134 = vpop.f32.mrb[0].mxu0
  %v10135 = vpop.f32.mrb[0].mxu0
  %v10136 = vadd.f32 0.0, %v10135
  %v10137 = vpop.f32.mrb[0].mxu0
  %10138 = vmatprep.mubr.bf16.mxu0 0
  %10139 = vmatmul.mubr.bf16.gmra.mrb[0].mxu0 %v3461
  %v10140 = vpop.f32.mrb[0].mxu0
  %v10141 = vadd.f32 0.0, %v10140
  %v10142 = vpop.f32.mrb[0].mxu0
  %v10143 = vpop.f32.mrb[0].mxu0
  %v10144 = vadd.f32 0.0, %v10143
  %v10145 = vpop.f32.mrb[0].mxu0
  %10146 = vmatprep.mubr.bf16.mxu0 0
  %10147 = vmatmul.mubr.bf16.gmra.mrb[0].mxu0 %v3464
  %v10148 = vpop.f32.mrb[0].mxu0
  %v10149 = vadd.f32 0.0, %v10148
  %v10150 = vpop.f32.mrb[0].mxu0
  %v10151 = vpop.f32.mrb[0].mxu0
  %v10152 = vadd.f32 0.0, %v10151
  %v10153 = vpop.f32.mrb[0].mxu0
  %10154 = vmatprep.mubr.bf16.mxu0 0
  %10155 = vmatmul.mubr.bf16.gmra.mrb[0].mxu0 %v3467
  %v10156 = vpop.f32.mrb[0].mxu0
  %v10157 = vadd.f32 0.0, %v10156
  %v10158 = vpop.f32.mrb[0].mxu0
  %v10159 = vpop.f32.mrb[0].mxu0
  %v10160 = vadd.f32 0.0, %v10159
  %v10161 = vpop.f32.mrb[0].mxu0
  %10162 = vmatprep.mubr.bf16.mxu0 0
  %10163 = vmatmul.mubr.bf16.gmra.mrb[0].mxu0 %v3470
  %v10164 = vpop.f32.mrb[0].mxu0
  %v10165 = vadd.f32 0.0, %v10164
  %v10166 = vpop.f32.mrb[0].mxu0
  %v10167 = vpop.f32.mrb[0].mxu0
  %v10168 = vadd.f32 0.0, %v10167
  %v10169 = vpop.f32.mrb[0].mxu0
  %10170 = vmatprep.mubr.bf16.mxu0 0
  %10171 = vmatmul.mubr.bf16.gmra.mrb[0].mxu0 %v3473
  %v10172 = vpop.f32.mrb[0].mxu0
  %v10173 = vadd.f32 0.0, %v10172
  %v10174 = vpop.f32.mrb[0].mxu0
  %v10175 = vpop.f32.mrb[0].mxu0
  %v10176 = vadd.f32 0.0, %v10175
  %v10177 = vpop.f32.mrb[0].mxu0
  %10178 = vmatprep.mubr.bf16.mxu0 0
  %10179 = vmatmul.mubr.bf16.gmra.mrb[0].mxu0 %v3476
  %v10180 = vpop.f32.mrb[0].mxu0
  %v10181 = vadd.f32 0.0, %v10180
  %v10182 = vpop.f32.mrb[0].mxu0
  %v10183 = vpop.f32.mrb[0].mxu0
  %v10184 = vadd.f32 0.0, %v10183
  %v10185 = vpop.f32.mrb[0].mxu0
  %10186 = vmatprep.mubr.bf16.mxu0 0
  %10187 = vmatmul.mubr.bf16.gmra.mrb[0].mxu0 %v3479
  %v10188 = vpop.f32.mrb[0].mxu0
  %v10189 = vadd.f32 0.0, %v10188
  %v10190 = vpop.f32.mrb[0].mxu0
  %v10191 = vpop.f32.mrb[0].mxu0
  %v10192 = vadd.f32 0.0, %v10191
  %v10193 = vpop.f32.mrb[0].mxu0
  %10194 = vmatprep.mubr.bf16.mxu0 0
  %10195 = vmatmul.mubr.bf16.gmra.mrb[0].mxu0 %v3482
  %v10196 = vpop.f32.mrb[0].mxu0
  %v10197 = vadd.f32 0.0, %v10196
  %v10198 = vpop.f32.mrb[0].mxu0
  %v10199 = vpop.f32.mrb[0].mxu0
  %v10200 = vadd.f32 0.0, %v10199
  %v10201 = vpop.f32.mrb[0].mxu0
  %10202 = vmatprep.mubr.bf16.mxu0 0
  %10203 = vmatmul.mubr.bf16.gmra.mrb[0].mxu0 %v3485
  %v10204 = vpop.f32.mrb[0].mxu0
  %v10205 = vadd.f32 0.0, %v10204
  %v10206 = vpop.f32.mrb[0].mxu0
  %v10207 = vpop.f32.mrb[0].mxu0
  %v10208 = vadd.f32 0.0, %v10207
  %v10209 = vpop.f32.mrb[0].mxu0
  %10210 = vmatprep.mubr.bf16.mxu0 0
  %10211 = vmatmul.mubr.bf16.gmra.mrb[0].mxu0 %v5900
  %v10212 = vpop.f32.mrb[0].mxu0
  %v10213 = vadd.f32 0.0, %v10212
  %v10214 = vpop.f32.mrb[0].mxu0
  %v10215 = vpop.f32.mrb[0].mxu0
  %v10216 = vadd.f32 0.0, %v10215
  %v10217 = vpop.f32.mrb[0].mxu0
  %10218 = vmatprep.mubr.bf16.mxu0 0
  %10219 = vmatmul.mubr.bf16.gmra.mrb[0].mxu0 %v7922
  %v10220 = vpop.f32.mrb[0].mxu0
  %v10221 = vadd.f32 0.0, %v10220
  %v10222 = vpop.f32.mrb[0].mxu0
  %v10223 = vpop.f32.mrb[0].mxu0
  %v10224 = vadd.f32 0.0, %v10223
  %v10225 = vpop.f32.mrb[0].mxu0
  %10226 = vmatprep.mubr.bf16.mxu0 0
  %10227 = vmatmul.mubr.bf16.gmra.mrb[0].mxu0 %v9944
  %v10228 = vpop.f32.mrb[0].mxu0
  %v10229 = vadd.f32 0.0, %v10228
  %v10230 = vpop.f32.mrb[0].mxu0
  %v10231 = vpop.f32.mrb[0].mxu0
  %v10232 = vadd.f32 0.0, %v10231
  %v10233 = vpop.f32.mrb[0].mxu0
  %10234 = vdwg.mxu0
  %v10235 = vadd.f32 %v9823, %v9981
  %v10236 = vadd.f32 %v9824, %v9984
  %v10237 = vadd.f32 %v9825, %v9989
  %v10238 = vadd.f32 %v9826, %v9992
  %v10239 = vadd.f32 %v9827, %v9997
  %v10240 = vadd.f32 %v9828, %v10000
  %v10241 = vadd.f32 %v9829, %v10005
  %v10242 = vadd.f32 %v9830, %v10008
  %v10243 = vadd.f32 %v9831, %v10013
  %v10244 = vadd.f32 %v9832, %v10016
  %v10245 = vadd.f32 %v9833, %v10021
  %v10246 = vadd.f32 %v9834, %v10024
  %v10247 = vadd.f32 %v9835, %v10029
  %v10248 = vadd.f32 %v9836, %v10032
  %v10249 = vadd.f32 %v9837, %v10037
  %v10250 = vadd.f32 %v9838, %v10040
  %v10251 = vadd.f32 %v9839, %v10045
  %v10252 = vadd.f32 %v9840, %v10048
  %v10253 = vadd.f32 %v9841, %v10053
  %v10254 = vadd.f32 %v9842, %v10056
  %v10255 = vadd.f32 %v9843, %v10061
  %v10256 = vadd.f32 %v9844, %v10064
  %v10257 = vadd.f32 %v9845, %v10069
  %v10258 = vadd.f32 %v9846, %v10072
  %v10259 = vadd.f32 %v9847, %v10077
  %v10260 = vadd.f32 %v9848, %v10080
  %v10261 = vadd.f32 %v9849, %v10085
  %v10262 = vadd.f32 %v9850, %v10088
  %v10263 = vadd.f32 %v9851, %v10093
  %v10264 = vadd.f32 %v9852, %v10096
  %v10265 = vadd.f32 %v9853, %v10101
  %v10266 = vadd.f32 %v9854, %v10104
  %v10267 = vadd.f32 %v9855, %v10109
  %v10268 = vadd.f32 %v9856, %v10112
  %v10269 = vadd.f32 %v9857, %v10117
  %v10270 = vadd.f32 %v9858, %v10120
  %v10271 = vadd.f32 %v9859, %v10125
  %v10272 = vadd.f32 %v9860, %v10128
  %v10273 = vadd.f32 %v9861, %v10133
  %v10274 = vadd.f32 %v9862, %v10136
  %v10275 = vadd.f32 %v9863, %v10141
  %v10276 = vadd.f32 %v9864, %v10144
  %v10277 = vadd.f32 %v9865, %v10149
  %v10278 = vadd.f32 %v9866, %v10152
  %v10279 = vadd.f32 %v9867, %v10157
  %v10280 = vadd.f32 %v9868, %v10160
  %v10281 = vadd.f32 %v9869, %v10165
  %v10282 = vadd.f32 %v9870, %v10168
  %v10283 = vadd.f32 %v9871, %v10173
  %v10284 = vadd.f32 %v9872, %v10176
  %v10285 = vadd.f32 %v9873, %v10181
  %v10286 = vadd.f32 %v9874, %v10184
  %v10287 = vadd.f32 %v9875, %v10189
  %v10288 = vadd.f32 %v9876, %v10192
  %v10289 = vadd.f32 %v9877, %v10197
  %v10290 = vadd.f32 %v9878, %v10200
  %v10291 = vadd.f32 %v9879, %v10205
  %v10292 = vadd.f32 %v9880, %v10208
  %v10293 = vadd.f32 %v9881, %v10213
  %v10294 = vadd.f32 %v9882, %v10216
  %v10295 = vadd.f32 %v9883, %v10221
  %v10296 = vadd.f32 %v9884, %v10224
  %v10297 = vadd.f32 %v9885, %v10229
  %v10298 = vadd.f32 %v9886, %v10232
  %v10299 = vrot.slane %v77, 6
  %v10300 = vrot.slane %v10299, 4
  %v10301 = vrot.slane %v78, 6
  %v10302 = vsel %vm3842, %v10300, %v10301
  %v10303 = vrot.slane %v10301, 4
  %v10304 = vrot.slane %v79, 6
  %v10305 = vsel %vm3842, %v10303, %v10304
  %v10306 = vrot.slane %v137, 6
  %v10307 = vrot.slane %v10306, 4
  %v10308 = vrot.slane %v138, 6
  %v10309 = vsel %vm3842, %v10307, %v10308
  %v10310 = vrot.slane %v10308, 4
  %v10311 = vrot.slane %v139, 6
  %v10312 = vsel %vm3842, %v10310, %v10311
  %s10313 = scalar_lea.vmem %s1, 304
  %v10314 = vld [vmem:[%s10313] sm:$0xf]
  %v10315 = vld [vmem:[%s10313 + $0x4] sm:$0xf]
  %v10316 = vld [vmem:[%s10313 + $0x8] sm:$0xf]
  %v10317 = vld [vmem:[%s10313 + $0xc] sm:$0xf]
  %v10318 = vunpack.c.l.b16 %v10302
  %v10319 = vunpack.c.l.b16 %v10305
  %v10320 = vunpack.c.l.b16 %v10309
  %v10321 = vunpack.c.l.b16 %v10312
  %v10322 = vpack.c.b16 %v10319, %v10318
  %v10323 = vpack.c.b16 %v10321, %v10320
  %v10328 = vunpack.c.l.b16 %v10314
  %v10329 = vunpack.c.l.b16 %v10315
  %v10330 = vunpack.c.l.b16 %v10316
  %v10331 = vunpack.c.l.b16 %v10317
  %v10332 = vpack.c.b16 %v10329, %v10328
  %v10333 = vpack.c.b16 %v10331, %v10330
  %v10337 = vsel %vm1031, %v10322, 0
  %v10340 = vsel %vm1031, %v10323, 0
  %10342 = vmatprep.subr.bf16.mxu0 0
  %10343 = vmatpush1.bf16.msra.mxu0 %v10332
  %10344 = vmatprep.subr.bf16.mxu0 0
  %10345 = vmatpush1.bf16.msra.mxu0 %v10333
  %10346 = vmatprep.subr.bf16.mxu0 0
  %10347 = vmatpush1.bf16.msra.mxu0 0
  %10348 = vmatprep.subr.bf16.mxu0 0
  %10349 = vmatpush1.bf16.msra.mxu0 0
  %10350 = vmatprep.subr.bf16.mxu0 0
  %10351 = vmatpush1.bf16.msra.mxu0 0
  %10352 = vmatprep.subr.bf16.mxu0 0
  %10353 = vmatpush1.bf16.msra.mxu0 0
  %10354 = vmatprep.subr.bf16.mxu0 0
  %10355 = vmatpush1.bf16.msra.mxu0 0
  %10356 = vmatprep.subr.bf16.mxu0 0
  %10357 = vmatpush1.bf16.msra.mxu0 0
  %10358 = vmatprep.subr.bf16.mxu0 0
  %10359 = vmatpush1.bf16.msra.mxu0 0
  %10360 = vmatprep.subr.bf16.mxu0 0
  %10361 = vmatpush1.bf16.msra.mxu0 0
  %10362 = vmatprep.subr.bf16.mxu0 0
  %10363 = vmatpush1.bf16.msra.mxu0 0
  %10364 = vmatprep.subr.bf16.mxu0 0
  %10365 = vmatpush1.bf16.msra.mxu0 0
  %10366 = vmatprep.subr.bf16.mxu0 0
  %10367 = vmatpush1.bf16.msra.mxu0 0
  %10368 = vmatprep.subr.bf16.mxu0 0
  %10369 = vmatpush1.bf16.msra.mxu0 0
  %10370 = vmatprep.subr.bf16.mxu0 0
  %10371 = vmatpush1.bf16.msra.mxu0 0
  %10372 = vmatprep.subr.bf16.mxu0 0
  %10373 = vmatpush1.bf16.msra.mxu0 0
  %10374 = vmatprep.mubr.bf16.mxu0 0
  %10375 = vmatmul.mubr.bf16.gmra.mrb[0].mxu0 %v4190
  %v10376 = vpop.f32.mrb[0].mxu0
  %v10377 = vadd.f32 0.0, %v10376
  %v10378 = vpop.f32.mrb[0].mxu0
  %v10379 = vpop.f32.mrb[0].mxu0
  %v10380 = vadd.f32 0.0, %v10379
  %v10381 = vpop.f32.mrb[0].mxu0
  %10382 = vmatprep.mubr.bf16.mxu0 0
  %10383 = vmatmul.mubr.bf16.gmra.mrb[0].mxu0 %v4193
  %v10384 = vpop.f32.mrb[0].mxu0
  %v10385 = vadd.f32 0.0, %v10384
  %v10386 = vpop.f32.mrb[0].mxu0
  %v10387 = vpop.f32.mrb[0].mxu0
  %v10388 = vadd.f32 0.0, %v10387
  %v10389 = vpop.f32.mrb[0].mxu0
  %10390 = vmatprep.mubr.bf16.mxu0 0
  %10391 = vmatmul.mubr.bf16.gmra.mrb[0].mxu0 %v4196
  %v10392 = vpop.f32.mrb[0].mxu0
  %v10393 = vadd.f32 0.0, %v10392
  %v10394 = vpop.f32.mrb[0].mxu0
  %v10395 = vpop.f32.mrb[0].mxu0
  %v10396 = vadd.f32 0.0, %v10395
  %v10397 = vpop.f32.mrb[0].mxu0
  %10398 = vmatprep.mubr.bf16.mxu0 0
  %10399 = vmatmul.mubr.bf16.gmra.mrb[0].mxu0 %v4199
  %v10400 = vpop.f32.mrb[0].mxu0
  %v10401 = vadd.f32 0.0, %v10400
  %v10402 = vpop.f32.mrb[0].mxu0
  %v10403 = vpop.f32.mrb[0].mxu0
  %v10404 = vadd.f32 0.0, %v10403
  %v10405 = vpop.f32.mrb[0].mxu0
  %10406 = vmatprep.mubr.bf16.mxu0 0
  %10407 = vmatmul.mubr.bf16.gmra.mrb[0].mxu0 %v4202
  %v10408 = vpop.f32.mrb[0].mxu0
  %v10409 = vadd.f32 0.0, %v10408
  %v10410 = vpop.f32.mrb[0].mxu0
  %v10411 = vpop.f32.mrb[0].mxu0
  %v10412 = vadd.f32 0.0, %v10411
  %v10413 = vpop.f32.mrb[0].mxu0
  %10414 = vmatprep.mubr.bf16.mxu0 0
  %10415 = vmatmul.mubr.bf16.gmra.mrb[0].mxu0 %v4205
  %v10416 = vpop.f32.mrb[0].mxu0
  %v10417 = vadd.f32 0.0, %v10416
  %v10418 = vpop.f32.mrb[0].mxu0
  %v10419 = vpop.f32.mrb[0].mxu0
  %v10420 = vadd.f32 0.0, %v10419
  %v10421 = vpop.f32.mrb[0].mxu0
  %10422 = vmatprep.mubr.bf16.mxu0 0
  %10423 = vmatmul.mubr.bf16.gmra.mrb[0].mxu0 %v4208
  %v10424 = vpop.f32.mrb[0].mxu0
  %v10425 = vadd.f32 0.0, %v10424
  %v10426 = vpop.f32.mrb[0].mxu0
  %v10427 = vpop.f32.mrb[0].mxu0
  %v10428 = vadd.f32 0.0, %v10427
  %v10429 = vpop.f32.mrb[0].mxu0
  %10430 = vmatprep.mubr.bf16.mxu0 0
  %10431 = vmatmul.mubr.bf16.gmra.mrb[0].mxu0 %v4211
  %v10432 = vpop.f32.mrb[0].mxu0
  %v10433 = vadd.f32 0.0, %v10432
  %v10434 = vpop.f32.mrb[0].mxu0
  %v10435 = vpop.f32.mrb[0].mxu0
  %v10436 = vadd.f32 0.0, %v10435
  %v10437 = vpop.f32.mrb[0].mxu0
  %10438 = vmatprep.mubr.bf16.mxu0 0
  %10439 = vmatmul.mubr.bf16.gmra.mrb[0].mxu0 %v4214
  %v10440 = vpop.f32.mrb[0].mxu0
  %v10441 = vadd.f32 0.0, %v10440
  %v10442 = vpop.f32.mrb[0].mxu0
  %v10443 = vpop.f32.mrb[0].mxu0
  %v10444 = vadd.f32 0.0, %v10443
  %v10445 = vpop.f32.mrb[0].mxu0
  %10446 = vmatprep.mubr.bf16.mxu0 0
  %10447 = vmatmul.mubr.bf16.gmra.mrb[0].mxu0 %v4217
  %v10448 = vpop.f32.mrb[0].mxu0
  %v10449 = vadd.f32 0.0, %v10448
  %v10450 = vpop.f32.mrb[0].mxu0
  %v10451 = vpop.f32.mrb[0].mxu0
  %v10452 = vadd.f32 0.0, %v10451
  %v10453 = vpop.f32.mrb[0].mxu0
  %10454 = vmatprep.mubr.bf16.mxu0 0
  %10455 = vmatmul.mubr.bf16.gmra.mrb[0].mxu0 %v4220
  %v10456 = vpop.f32.mrb[0].mxu0
  %v10457 = vadd.f32 0.0, %v10456
  %v10458 = vpop.f32.mrb[0].mxu0
  %v10459 = vpop.f32.mrb[0].mxu0
  %v10460 = vadd.f32 0.0, %v10459
  %v10461 = vpop.f32.mrb[0].mxu0
  %10462 = vmatprep.mubr.bf16.mxu0 0
  %10463 = vmatmul.mubr.bf16.gmra.mrb[0].mxu0 %v4223
  %v10464 = vpop.f32.mrb[0].mxu0
  %v10465 = vadd.f32 0.0, %v10464
  %v10466 = vpop.f32.mrb[0].mxu0
  %v10467 = vpop.f32.mrb[0].mxu0
  %v10468 = vadd.f32 0.0, %v10467
  %v10469 = vpop.f32.mrb[0].mxu0
  %10470 = vmatprep.mubr.bf16.mxu0 0
  %10471 = vmatmul.mubr.bf16.gmra.mrb[0].mxu0 %v4226
  %v10472 = vpop.f32.mrb[0].mxu0
  %v10473 = vadd.f32 0.0, %v10472
  %v10474 = vpop.f32.mrb[0].mxu0
  %v10475 = vpop.f32.mrb[0].mxu0
  %v10476 = vadd.f32 0.0, %v10475
  %v10477 = vpop.f32.mrb[0].mxu0
  %10478 = vmatprep.mubr.bf16.mxu0 0
  %10479 = vmatmul.mubr.bf16.gmra.mrb[0].mxu0 %v6293
  %v10480 = vpop.f32.mrb[0].mxu0
  %v10481 = vadd.f32 0.0, %v10480
  %v10482 = vpop.f32.mrb[0].mxu0
  %v10483 = vpop.f32.mrb[0].mxu0
  %v10484 = vadd.f32 0.0, %v10483
  %v10485 = vpop.f32.mrb[0].mxu0
  %10486 = vmatprep.mubr.bf16.mxu0 0
  %10487 = vmatmul.mubr.bf16.gmra.mrb[0].mxu0 %v8315
  %v10488 = vpop.f32.mrb[0].mxu0
  %v10489 = vadd.f32 0.0, %v10488
  %v10490 = vpop.f32.mrb[0].mxu0
  %v10491 = vpop.f32.mrb[0].mxu0
  %v10492 = vadd.f32 0.0, %v10491
  %v10493 = vpop.f32.mrb[0].mxu0
  %10494 = vmatprep.mubr.bf16.mxu0 0
  %10495 = vmatmul.mubr.bf16.gmra.mrb[0].mxu0 %v10337
  %v10496 = vpop.f32.mrb[0].mxu0
  %v10497 = vadd.f32 0.0, %v10496
  %v10498 = vpop.f32.mrb[0].mxu0
  %v10499 = vpop.f32.mrb[0].mxu0
  %v10500 = vadd.f32 0.0, %v10499
  %v10501 = vpop.f32.mrb[0].mxu0
  %10502 = vmatprep.mubr.bf16.mxu0 0
  %10503 = vmatmul.mubr.bf16.gmra.mrb[0].mxu0 %v4238
  %v10504 = vpop.f32.mrb[0].mxu0
  %v10505 = vadd.f32 0.0, %v10504
  %v10506 = vpop.f32.mrb[0].mxu0
  %v10507 = vpop.f32.mrb[0].mxu0
  %v10508 = vadd.f32 0.0, %v10507
  %v10509 = vpop.f32.mrb[0].mxu0
  %10510 = vmatprep.mubr.bf16.mxu0 0
  %10511 = vmatmul.mubr.bf16.gmra.mrb[0].mxu0 %v4241
  %v10512 = vpop.f32.mrb[0].mxu0
  %v10513 = vadd.f32 0.0, %v10512
  %v10514 = vpop.f32.mrb[0].mxu0
  %v10515 = vpop.f32.mrb[0].mxu0
  %v10516 = vadd.f32 0.0, %v10515
  %v10517 = vpop.f32.mrb[0].mxu0
  %10518 = vmatprep.mubr.bf16.mxu0 0
  %10519 = vmatmul.mubr.bf16.gmra.mrb[0].mxu0 %v4244
  %v10520 = vpop.f32.mrb[0].mxu0
  %v10521 = vadd.f32 0.0, %v10520
  %v10522 = vpop.f32.mrb[0].mxu0
  %v10523 = vpop.f32.mrb[0].mxu0
  %v10524 = vadd.f32 0.0, %v10523
  %v10525 = vpop.f32.mrb[0].mxu0
  %10526 = vmatprep.mubr.bf16.mxu0 0
  %10527 = vmatmul.mubr.bf16.gmra.mrb[0].mxu0 %v4247
  %v10528 = vpop.f32.mrb[0].mxu0
  %v10529 = vadd.f32 0.0, %v10528
  %v10530 = vpop.f32.mrb[0].mxu0
  %v10531 = vpop.f32.mrb[0].mxu0
  %v10532 = vadd.f32 0.0, %v10531
  %v10533 = vpop.f32.mrb[0].mxu0
  %10534 = vmatprep.mubr.bf16.mxu0 0
  %10535 = vmatmul.mubr.bf16.gmra.mrb[0].mxu0 %v4250
  %v10536 = vpop.f32.mrb[0].mxu0
  %v10537 = vadd.f32 0.0, %v10536
  %v10538 = vpop.f32.mrb[0].mxu0
  %v10539 = vpop.f32.mrb[0].mxu0
  %v10540 = vadd.f32 0.0, %v10539
  %v10541 = vpop.f32.mrb[0].mxu0
  %10542 = vmatprep.mubr.bf16.mxu0 0
  %10543 = vmatmul.mubr.bf16.gmra.mrb[0].mxu0 %v4253
  %v10544 = vpop.f32.mrb[0].mxu0
  %v10545 = vadd.f32 0.0, %v10544
  %v10546 = vpop.f32.mrb[0].mxu0
  %v10547 = vpop.f32.mrb[0].mxu0
  %v10548 = vadd.f32 0.0, %v10547
  %v10549 = vpop.f32.mrb[0].mxu0
  %10550 = vmatprep.mubr.bf16.mxu0 0
  %10551 = vmatmul.mubr.bf16.gmra.mrb[0].mxu0 %v4256
  %v10552 = vpop.f32.mrb[0].mxu0
  %v10553 = vadd.f32 0.0, %v10552
  %v10554 = vpop.f32.mrb[0].mxu0
  %v10555 = vpop.f32.mrb[0].mxu0
  %v10556 = vadd.f32 0.0, %v10555
  %v10557 = vpop.f32.mrb[0].mxu0
  %10558 = vmatprep.mubr.bf16.mxu0 0
  %10559 = vmatmul.mubr.bf16.gmra.mrb[0].mxu0 %v4259
  %v10560 = vpop.f32.mrb[0].mxu0
  %v10561 = vadd.f32 0.0, %v10560
  %v10562 = vpop.f32.mrb[0].mxu0
  %v10563 = vpop.f32.mrb[0].mxu0
  %v10564 = vadd.f32 0.0, %v10563
  %v10565 = vpop.f32.mrb[0].mxu0
  %10566 = vmatprep.mubr.bf16.mxu0 0
  %10567 = vmatmul.mubr.bf16.gmra.mrb[0].mxu0 %v4262
  %v10568 = vpop.f32.mrb[0].mxu0
  %v10569 = vadd.f32 0.0, %v10568
  %v10570 = vpop.f32.mrb[0].mxu0
  %v10571 = vpop.f32.mrb[0].mxu0
  %v10572 = vadd.f32 0.0, %v10571
  %v10573 = vpop.f32.mrb[0].mxu0
  %10574 = vmatprep.mubr.bf16.mxu0 0
  %10575 = vmatmul.mubr.bf16.gmra.mrb[0].mxu0 %v4265
  %v10576 = vpop.f32.mrb[0].mxu0
  %v10577 = vadd.f32 0.0, %v10576
  %v10578 = vpop.f32.mrb[0].mxu0
  %v10579 = vpop.f32.mrb[0].mxu0
  %v10580 = vadd.f32 0.0, %v10579
  %v10581 = vpop.f32.mrb[0].mxu0
  %10582 = vmatprep.mubr.bf16.mxu0 0
  %10583 = vmatmul.mubr.bf16.gmra.mrb[0].mxu0 %v4268
  %v10584 = vpop.f32.mrb[0].mxu0
  %v10585 = vadd.f32 0.0, %v10584
  %v10586 = vpop.f32.mrb[0].mxu0
  %v10587 = vpop.f32.mrb[0].mxu0
  %v10588 = vadd.f32 0.0, %v10587
  %v10589 = vpop.f32.mrb[0].mxu0
  %10590 = vmatprep.mubr.bf16.mxu0 0
  %10591 = vmatmul.mubr.bf16.gmra.mrb[0].mxu0 %v4271
  %v10592 = vpop.f32.mrb[0].mxu0
  %v10593 = vadd.f32 0.0, %v10592
  %v10594 = vpop.f32.mrb[0].mxu0
  %v10595 = vpop.f32.mrb[0].mxu0
  %v10596 = vadd.f32 0.0, %v10595
  %v10597 = vpop.f32.mrb[0].mxu0
  %10598 = vmatprep.mubr.bf16.mxu0 0
  %10599 = vmatmul.mubr.bf16.gmra.mrb[0].mxu0 %v4274
  %v10600 = vpop.f32.mrb[0].mxu0
  %v10601 = vadd.f32 0.0, %v10600
  %v10602 = vpop.f32.mrb[0].mxu0
  %v10603 = vpop.f32.mrb[0].mxu0
  %v10604 = vadd.f32 0.0, %v10603
  %v10605 = vpop.f32.mrb[0].mxu0
  %10606 = vmatprep.mubr.bf16.mxu0 0
  %10607 = vmatmul.mubr.bf16.gmra.mrb[0].mxu0 %v6296
  %v10608 = vpop.f32.mrb[0].mxu0
  %v10609 = vadd.f32 0.0, %v10608
  %v10610 = vpop.f32.mrb[0].mxu0
  %v10611 = vpop.f32.mrb[0].mxu0
  %v10612 = vadd.f32 0.0, %v10611
  %v10613 = vpop.f32.mrb[0].mxu0
  %10614 = vmatprep.mubr.bf16.mxu0 0
  %10615 = vmatmul.mubr.bf16.gmra.mrb[0].mxu0 %v8318
  %v10616 = vpop.f32.mrb[0].mxu0
  %v10617 = vadd.f32 0.0, %v10616
  %v10618 = vpop.f32.mrb[0].mxu0
  %v10619 = vpop.f32.mrb[0].mxu0
  %v10620 = vadd.f32 0.0, %v10619
  %v10621 = vpop.f32.mrb[0].mxu0
  %10622 = vmatprep.mubr.bf16.mxu0 0
  %10623 = vmatmul.mubr.bf16.gmra.mrb[0].mxu0 %v10340
  %v10624 = vpop.f32.mrb[0].mxu0
  %v10625 = vadd.f32 0.0, %v10624
  %v10626 = vpop.f32.mrb[0].mxu0
  %v10627 = vpop.f32.mrb[0].mxu0
  %v10628 = vadd.f32 0.0, %v10627
  %v10629 = vpop.f32.mrb[0].mxu0
  %10630 = vdwg.mxu0
  %v10631 = vadd.f32 %v10235, %v10377
  %v10632 = vadd.f32 %v10236, %v10380
  %v10633 = vadd.f32 %v10237, %v10385
  %v10634 = vadd.f32 %v10238, %v10388
  %v10635 = vadd.f32 %v10239, %v10393
  %v10636 = vadd.f32 %v10240, %v10396
  %v10637 = vadd.f32 %v10241, %v10401
  %v10638 = vadd.f32 %v10242, %v10404
  %v10639 = vadd.f32 %v10243, %v10409
  %v10640 = vadd.f32 %v10244, %v10412
  %v10641 = vadd.f32 %v10245, %v10417
  %v10642 = vadd.f32 %v10246, %v10420
  %v10643 = vadd.f32 %v10247, %v10425
  %v10644 = vadd.f32 %v10248, %v10428
  %v10645 = vadd.f32 %v10249, %v10433
  %v10646 = vadd.f32 %v10250, %v10436
  %v10647 = vadd.f32 %v10251, %v10441
  %v10648 = vadd.f32 %v10252, %v10444
  %v10649 = vadd.f32 %v10253, %v10449
  %v10650 = vadd.f32 %v10254, %v10452
  %v10651 = vadd.f32 %v10255, %v10457
  %v10652 = vadd.f32 %v10256, %v10460
  %v10653 = vadd.f32 %v10257, %v10465
  %v10654 = vadd.f32 %v10258, %v10468
  %v10655 = vadd.f32 %v10259, %v10473
  %v10656 = vadd.f32 %v10260, %v10476
  %v10657 = vadd.f32 %v10261, %v10481
  %v10658 = vadd.f32 %v10262, %v10484
  %v10659 = vadd.f32 %v10263, %v10489
  %v10660 = vadd.f32 %v10264, %v10492
  %v10661 = vadd.f32 %v10265, %v10497
  %v10662 = vadd.f32 %v10266, %v10500
  %v10663 = vadd.f32 %v10267, %v10505
  %v10664 = vadd.f32 %v10268, %v10508
  %v10665 = vadd.f32 %v10269, %v10513
  %v10666 = vadd.f32 %v10270, %v10516
  %v10667 = vadd.f32 %v10271, %v10521
  %v10668 = vadd.f32 %v10272, %v10524
  %v10669 = vadd.f32 %v10273, %v10529
  %v10670 = vadd.f32 %v10274, %v10532
  %v10671 = vadd.f32 %v10275, %v10537
  %v10672 = vadd.f32 %v10276, %v10540
  %v10673 = vadd.f32 %v10277, %v10545
  %v10674 = vadd.f32 %v10278, %v10548
  %v10675 = vadd.f32 %v10279, %v10553
  %v10676 = vadd.f32 %v10280, %v10556
  %v10677 = vadd.f32 %v10281, %v10561
  %v10678 = vadd.f32 %v10282, %v10564
  %v10679 = vadd.f32 %v10283, %v10569
  %v10680 = vadd.f32 %v10284, %v10572
  %v10681 = vadd.f32 %v10285, %v10577
  %v10682 = vadd.f32 %v10286, %v10580
  %v10683 = vadd.f32 %v10287, %v10585
  %v10684 = vadd.f32 %v10288, %v10588
  %v10685 = vadd.f32 %v10289, %v10593
  %v10686 = vadd.f32 %v10290, %v10596
  %v10687 = vadd.f32 %v10291, %v10601
  %v10688 = vadd.f32 %v10292, %v10604
  %v10689 = vadd.f32 %v10293, %v10609
  %v10690 = vadd.f32 %v10294, %v10612
  %v10691 = vadd.f32 %v10295, %v10617
  %v10692 = vadd.f32 %v10296, %v10620
  %v10693 = vadd.f32 %v10297, %v10625
  %v10694 = vadd.f32 %v10298, %v10628
  %s10695 = scalar_lea.vmem %s1, 320
  %v10696 = vld [vmem:[%s10695] sm:$0xf]
  %v10697 = vld [vmem:[%s10695 + $0x4] sm:$0xf]
  %v10698 = vld [vmem:[%s10695 + $0x8] sm:$0xf]
  %v10699 = vld [vmem:[%s10695 + $0xc] sm:$0xf]
  %v10704 = vunpack.c.l.b16 %v80
  %v10705 = vunpack.c.l.b16 %v81
  %v10706 = vunpack.c.l.b16 %v140
  %v10707 = vunpack.c.l.b16 %v141
  %v10708 = vpack.c.b16 %v10705, %v10704
  %v10709 = vpack.c.b16 %v10707, %v10706
  %v10714 = vunpack.c.l.b16 %v10696
  %v10715 = vunpack.c.l.b16 %v10697
  %v10716 = vunpack.c.l.b16 %v10698
  %v10717 = vunpack.c.l.b16 %v10699
  %v10718 = vpack.c.b16 %v10715, %v10714
  %v10719 = vpack.c.b16 %v10717, %v10716
  %v10723 = vsel %vm1031, %v10708, 0
  %v10726 = vsel %vm1031, %v10709, 0
  %10728 = vmatprep.subr.bf16.mxu0 0
  %10729 = vmatpush1.bf16.msra.mxu0 %v10718
  %10730 = vmatprep.subr.bf16.mxu0 0
  %10731 = vmatpush1.bf16.msra.mxu0 %v10719
  %10732 = vmatprep.subr.bf16.mxu0 0
  %10733 = vmatpush1.bf16.msra.mxu0 0
  %10734 = vmatprep.subr.bf16.mxu0 0
  %10735 = vmatpush1.bf16.msra.mxu0 0
  %10736 = vmatprep.subr.bf16.mxu0 0
  %10737 = vmatpush1.bf16.msra.mxu0 0
  %10738 = vmatprep.subr.bf16.mxu0 0
  %10739 = vmatpush1.bf16.msra.mxu0 0
  %10740 = vmatprep.subr.bf16.mxu0 0
  %10741 = vmatpush1.bf16.msra.mxu0 0
  %10742 = vmatprep.subr.bf16.mxu0 0
  %10743 = vmatpush1.bf16.msra.mxu0 0
  %10744 = vmatprep.subr.bf16.mxu0 0
  %10745 = vmatpush1.bf16.msra.mxu0 0
  %10746 = vmatprep.subr.bf16.mxu0 0
  %10747 = vmatpush1.bf16.msra.mxu0 0
  %10748 = vmatprep.subr.bf16.mxu0 0
  %10749 = vmatpush1.bf16.msra.mxu0 0
  %10750 = vmatprep.subr.bf16.mxu0 0
  %10751 = vmatpush1.bf16.msra.mxu0 0
  %10752 = vmatprep.subr.bf16.mxu0 0
  %10753 = vmatpush1.bf16.msra.mxu0 0
  %10754 = vmatprep.subr.bf16.mxu0 0
  %10755 = vmatpush1.bf16.msra.mxu0 0
  %10756 = vmatprep.subr.bf16.mxu0 0
  %10757 = vmatpush1.bf16.msra.mxu0 0
  %10758 = vmatprep.subr.bf16.mxu0 0
  %10759 = vmatpush1.bf16.msra.mxu0 0
  %10760 = vmatprep.mubr.bf16.mxu0 0
  %10761 = vmatmul.mubr.bf16.gmra.mrb[0].mxu0 %v1602
  %v10762 = vpop.f32.mrb[0].mxu0
  %v10763 = vadd.f32 0.0, %v10762
  %v10764 = vpop.f32.mrb[0].mxu0
  %v10765 = vpop.f32.mrb[0].mxu0
  %v10766 = vadd.f32 0.0, %v10765
  %v10767 = vpop.f32.mrb[0].mxu0
  %10768 = vmatprep.mubr.bf16.mxu0 0
  %10769 = vmatmul.mubr.bf16.gmra.mrb[0].mxu0 %v1605
  %v10770 = vpop.f32.mrb[0].mxu0
  %v10771 = vadd.f32 0.0, %v10770
  %v10772 = vpop.f32.mrb[0].mxu0
  %v10773 = vpop.f32.mrb[0].mxu0
  %v10774 = vadd.f32 0.0, %v10773
  %v10775 = vpop.f32.mrb[0].mxu0
  %10776 = vmatprep.mubr.bf16.mxu0 0
  %10777 = vmatmul.mubr.bf16.gmra.mrb[0].mxu0 %v1608
  %v10778 = vpop.f32.mrb[0].mxu0
  %v10779 = vadd.f32 0.0, %v10778
  %v10780 = vpop.f32.mrb[0].mxu0
  %v10781 = vpop.f32.mrb[0].mxu0
  %v10782 = vadd.f32 0.0, %v10781
  %v10783 = vpop.f32.mrb[0].mxu0
  %10784 = vmatprep.mubr.bf16.mxu0 0
  %10785 = vmatmul.mubr.bf16.gmra.mrb[0].mxu0 %v1611
  %v10786 = vpop.f32.mrb[0].mxu0
  %v10787 = vadd.f32 0.0, %v10786
  %v10788 = vpop.f32.mrb[0].mxu0
  %v10789 = vpop.f32.mrb[0].mxu0
  %v10790 = vadd.f32 0.0, %v10789
  %v10791 = vpop.f32.mrb[0].mxu0
  %10792 = vmatprep.mubr.bf16.mxu0 0
  %10793 = vmatmul.mubr.bf16.gmra.mrb[0].mxu0 %v1614
  %v10794 = vpop.f32.mrb[0].mxu0
  %v10795 = vadd.f32 0.0, %v10794
  %v10796 = vpop.f32.mrb[0].mxu0
  %v10797 = vpop.f32.mrb[0].mxu0
  %v10798 = vadd.f32 0.0, %v10797
  %v10799 = vpop.f32.mrb[0].mxu0
  %10800 = vmatprep.mubr.bf16.mxu0 0
  %10801 = vmatmul.mubr.bf16.gmra.mrb[0].mxu0 %v1617
  %v10802 = vpop.f32.mrb[0].mxu0
  %v10803 = vadd.f32 0.0, %v10802
  %v10804 = vpop.f32.mrb[0].mxu0
  %v10805 = vpop.f32.mrb[0].mxu0
  %v10806 = vadd.f32 0.0, %v10805
  %v10807 = vpop.f32.mrb[0].mxu0
  %10808 = vmatprep.mubr.bf16.mxu0 0
  %10809 = vmatmul.mubr.bf16.gmra.mrb[0].mxu0 %v1620
  %v10810 = vpop.f32.mrb[0].mxu0
  %v10811 = vadd.f32 0.0, %v10810
  %v10812 = vpop.f32.mrb[0].mxu0
  %v10813 = vpop.f32.mrb[0].mxu0
  %v10814 = vadd.f32 0.0, %v10813
  %v10815 = vpop.f32.mrb[0].mxu0
  %10816 = vmatprep.mubr.bf16.mxu0 0
  %10817 = vmatmul.mubr.bf16.gmra.mrb[0].mxu0 %v1623
  %v10818 = vpop.f32.mrb[0].mxu0
  %v10819 = vadd.f32 0.0, %v10818
  %v10820 = vpop.f32.mrb[0].mxu0
  %v10821 = vpop.f32.mrb[0].mxu0
  %v10822 = vadd.f32 0.0, %v10821
  %v10823 = vpop.f32.mrb[0].mxu0
  %10824 = vmatprep.mubr.bf16.mxu0 0
  %10825 = vmatmul.mubr.bf16.gmra.mrb[0].mxu0 %v1626
  %v10826 = vpop.f32.mrb[0].mxu0
  %v10827 = vadd.f32 0.0, %v10826
  %v10828 = vpop.f32.mrb[0].mxu0
  %v10829 = vpop.f32.mrb[0].mxu0
  %v10830 = vadd.f32 0.0, %v10829
  %v10831 = vpop.f32.mrb[0].mxu0
  %10832 = vmatprep.mubr.bf16.mxu0 0
  %10833 = vmatmul.mubr.bf16.gmra.mrb[0].mxu0 %v1629
  %v10834 = vpop.f32.mrb[0].mxu0
  %v10835 = vadd.f32 0.0, %v10834
  %v10836 = vpop.f32.mrb[0].mxu0
  %v10837 = vpop.f32.mrb[0].mxu0
  %v10838 = vadd.f32 0.0, %v10837
  %v10839 = vpop.f32.mrb[0].mxu0
  %10840 = vmatprep.mubr.bf16.mxu0 0
  %10841 = vmatmul.mubr.bf16.gmra.mrb[0].mxu0 %v1632
  %v10842 = vpop.f32.mrb[0].mxu0
  %v10843 = vadd.f32 0.0, %v10842
  %v10844 = vpop.f32.mrb[0].mxu0
  %v10845 = vpop.f32.mrb[0].mxu0
  %v10846 = vadd.f32 0.0, %v10845
  %v10847 = vpop.f32.mrb[0].mxu0
  %10848 = vmatprep.mubr.bf16.mxu0 0
  %10849 = vmatmul.mubr.bf16.gmra.mrb[0].mxu0 %v1635
  %v10850 = vpop.f32.mrb[0].mxu0
  %v10851 = vadd.f32 0.0, %v10850
  %v10852 = vpop.f32.mrb[0].mxu0
  %v10853 = vpop.f32.mrb[0].mxu0
  %v10854 = vadd.f32 0.0, %v10853
  %v10855 = vpop.f32.mrb[0].mxu0
  %10856 = vmatprep.mubr.bf16.mxu0 0
  %10857 = vmatmul.mubr.bf16.gmra.mrb[0].mxu0 %v4657
  %v10858 = vpop.f32.mrb[0].mxu0
  %v10859 = vadd.f32 0.0, %v10858
  %v10860 = vpop.f32.mrb[0].mxu0
  %v10861 = vpop.f32.mrb[0].mxu0
  %v10862 = vadd.f32 0.0, %v10861
  %v10863 = vpop.f32.mrb[0].mxu0
  %10864 = vmatprep.mubr.bf16.mxu0 0
  %10865 = vmatmul.mubr.bf16.gmra.mrb[0].mxu0 %v6679
  %v10866 = vpop.f32.mrb[0].mxu0
  %v10867 = vadd.f32 0.0, %v10866
  %v10868 = vpop.f32.mrb[0].mxu0
  %v10869 = vpop.f32.mrb[0].mxu0
  %v10870 = vadd.f32 0.0, %v10869
  %v10871 = vpop.f32.mrb[0].mxu0
  %10872 = vmatprep.mubr.bf16.mxu0 0
  %10873 = vmatmul.mubr.bf16.gmra.mrb[0].mxu0 %v8701
  %v10874 = vpop.f32.mrb[0].mxu0
  %v10875 = vadd.f32 0.0, %v10874
  %v10876 = vpop.f32.mrb[0].mxu0
  %v10877 = vpop.f32.mrb[0].mxu0
  %v10878 = vadd.f32 0.0, %v10877
  %v10879 = vpop.f32.mrb[0].mxu0
  %10880 = vmatprep.mubr.bf16.mxu0 0
  %10881 = vmatmul.mubr.bf16.gmra.mrb[0].mxu0 %v10723
  %v10882 = vpop.f32.mrb[0].mxu0
  %v10883 = vadd.f32 0.0, %v10882
  %v10884 = vpop.f32.mrb[0].mxu0
  %v10885 = vpop.f32.mrb[0].mxu0
  %v10886 = vadd.f32 0.0, %v10885
  %v10887 = vpop.f32.mrb[0].mxu0
  %10888 = vmatprep.mubr.bf16.mxu0 0
  %10889 = vmatmul.mubr.bf16.gmra.mrb[0].mxu0 %v1650
  %v10890 = vpop.f32.mrb[0].mxu0
  %v10891 = vadd.f32 0.0, %v10890
  %v10892 = vpop.f32.mrb[0].mxu0
  %v10893 = vpop.f32.mrb[0].mxu0
  %v10894 = vadd.f32 0.0, %v10893
  %v10895 = vpop.f32.mrb[0].mxu0
  %10896 = vmatprep.mubr.bf16.mxu0 0
  %10897 = vmatmul.mubr.bf16.gmra.mrb[0].mxu0 %v1653
  %v10898 = vpop.f32.mrb[0].mxu0
  %v10899 = vadd.f32 0.0, %v10898
  %v10900 = vpop.f32.mrb[0].mxu0
  %v10901 = vpop.f32.mrb[0].mxu0
  %v10902 = vadd.f32 0.0, %v10901
  %v10903 = vpop.f32.mrb[0].mxu0
  %10904 = vmatprep.mubr.bf16.mxu0 0
  %10905 = vmatmul.mubr.bf16.gmra.mrb[0].mxu0 %v1656
  %v10906 = vpop.f32.mrb[0].mxu0
  %v10907 = vadd.f32 0.0, %v10906
  %v10908 = vpop.f32.mrb[0].mxu0
  %v10909 = vpop.f32.mrb[0].mxu0
  %v10910 = vadd.f32 0.0, %v10909
  %v10911 = vpop.f32.mrb[0].mxu0
  %10912 = vmatprep.mubr.bf16.mxu0 0
  %10913 = vmatmul.mubr.bf16.gmra.mrb[0].mxu0 %v1659
  %v10914 = vpop.f32.mrb[0].mxu0
  %v10915 = vadd.f32 0.0, %v10914
  %v10916 = vpop.f32.mrb[0].mxu0
  %v10917 = vpop.f32.mrb[0].mxu0
  %v10918 = vadd.f32 0.0, %v10917
  %v10919 = vpop.f32.mrb[0].mxu0
  %10920 = vmatprep.mubr.bf16.mxu0 0
  %10921 = vmatmul.mubr.bf16.gmra.mrb[0].mxu0 %v1662
  %v10922 = vpop.f32.mrb[0].mxu0
  %v10923 = vadd.f32 0.0, %v10922
  %v10924 = vpop.f32.mrb[0].mxu0
  %v10925 = vpop.f32.mrb[0].mxu0
  %v10926 = vadd.f32 0.0, %v10925
  %v10927 = vpop.f32.mrb[0].mxu0
  %10928 = vmatprep.mubr.bf16.mxu0 0
  %10929 = vmatmul.mubr.bf16.gmra.mrb[0].mxu0 %v1665
  %v10930 = vpop.f32.mrb[0].mxu0
  %v10931 = vadd.f32 0.0, %v10930
  %v10932 = vpop.f32.mrb[0].mxu0
  %v10933 = vpop.f32.mrb[0].mxu0
  %v10934 = vadd.f32 0.0, %v10933
  %v10935 = vpop.f32.mrb[0].mxu0
  %10936 = vmatprep.mubr.bf16.mxu0 0
  %10937 = vmatmul.mubr.bf16.gmra.mrb[0].mxu0 %v1668
  %v10938 = vpop.f32.mrb[0].mxu0
  %v10939 = vadd.f32 0.0, %v10938
  %v10940 = vpop.f32.mrb[0].mxu0
  %v10941 = vpop.f32.mrb[0].mxu0
  %v10942 = vadd.f32 0.0, %v10941
  %v10943 = vpop.f32.mrb[0].mxu0
  %10944 = vmatprep.mubr.bf16.mxu0 0
  %10945 = vmatmul.mubr.bf16.gmra.mrb[0].mxu0 %v1671
  %v10946 = vpop.f32.mrb[0].mxu0
  %v10947 = vadd.f32 0.0, %v10946
  %v10948 = vpop.f32.mrb[0].mxu0
  %v10949 = vpop.f32.mrb[0].mxu0
  %v10950 = vadd.f32 0.0, %v10949
  %v10951 = vpop.f32.mrb[0].mxu0
  %10952 = vmatprep.mubr.bf16.mxu0 0
  %10953 = vmatmul.mubr.bf16.gmra.mrb[0].mxu0 %v1674
  %v10954 = vpop.f32.mrb[0].mxu0
  %v10955 = vadd.f32 0.0, %v10954
  %v10956 = vpop.f32.mrb[0].mxu0
  %v10957 = vpop.f32.mrb[0].mxu0
  %v10958 = vadd.f32 0.0, %v10957
  %v10959 = vpop.f32.mrb[0].mxu0
  %10960 = vmatprep.mubr.bf16.mxu0 0
  %10961 = vmatmul.mubr.bf16.gmra.mrb[0].mxu0 %v1677
  %v10962 = vpop.f32.mrb[0].mxu0
  %v10963 = vadd.f32 0.0, %v10962
  %v10964 = vpop.f32.mrb[0].mxu0
  %v10965 = vpop.f32.mrb[0].mxu0
  %v10966 = vadd.f32 0.0, %v10965
  %v10967 = vpop.f32.mrb[0].mxu0
  %10968 = vmatprep.mubr.bf16.mxu0 0
  %10969 = vmatmul.mubr.bf16.gmra.mrb[0].mxu0 %v1680
  %v10970 = vpop.f32.mrb[0].mxu0
  %v10971 = vadd.f32 0.0, %v10970
  %v10972 = vpop.f32.mrb[0].mxu0
  %v10973 = vpop.f32.mrb[0].mxu0
  %v10974 = vadd.f32 0.0, %v10973
  %v10975 = vpop.f32.mrb[0].mxu0
  %10976 = vmatprep.mubr.bf16.mxu0 0
  %10977 = vmatmul.mubr.bf16.gmra.mrb[0].mxu0 %v1683
  %v10978 = vpop.f32.mrb[0].mxu0
  %v10979 = vadd.f32 0.0, %v10978
  %v10980 = vpop.f32.mrb[0].mxu0
  %v10981 = vpop.f32.mrb[0].mxu0
  %v10982 = vadd.f32 0.0, %v10981
  %v10983 = vpop.f32.mrb[0].mxu0
  %10984 = vmatprep.mubr.bf16.mxu0 0
  %10985 = vmatmul.mubr.bf16.gmra.mrb[0].mxu0 %v4660
  %v10986 = vpop.f32.mrb[0].mxu0
  %v10987 = vadd.f32 0.0, %v10986
  %v10988 = vpop.f32.mrb[0].mxu0
  %v10989 = vpop.f32.mrb[0].mxu0
  %v10990 = vadd.f32 0.0, %v10989
  %v10991 = vpop.f32.mrb[0].mxu0
  %10992 = vmatprep.mubr.bf16.mxu0 0
  %10993 = vmatmul.mubr.bf16.gmra.mrb[0].mxu0 %v6682
  %v10994 = vpop.f32.mrb[0].mxu0
  %v10995 = vadd.f32 0.0, %v10994
  %v10996 = vpop.f32.mrb[0].mxu0
  %v10997 = vpop.f32.mrb[0].mxu0
  %v10998 = vadd.f32 0.0, %v10997
  %v10999 = vpop.f32.mrb[0].mxu0
  %11000 = vmatprep.mubr.bf16.mxu0 0
  %11001 = vmatmul.mubr.bf16.gmra.mrb[0].mxu0 %v8704
  %v11002 = vpop.f32.mrb[0].mxu0
  %v11003 = vadd.f32 0.0, %v11002
  %v11004 = vpop.f32.mrb[0].mxu0
  %v11005 = vpop.f32.mrb[0].mxu0
  %v11006 = vadd.f32 0.0, %v11005
  %v11007 = vpop.f32.mrb[0].mxu0
  %11008 = vmatprep.mubr.bf16.mxu0 0
  %11009 = vmatmul.mubr.bf16.gmra.mrb[0].mxu0 %v10726
  %v11010 = vpop.f32.mrb[0].mxu0
  %v11011 = vadd.f32 0.0, %v11010
  %v11012 = vpop.f32.mrb[0].mxu0
  %v11013 = vpop.f32.mrb[0].mxu0
  %v11014 = vadd.f32 0.0, %v11013
  %v11015 = vpop.f32.mrb[0].mxu0
  %11016 = vdwg.mxu0
  %v11017 = vadd.f32 %v10631, %v10763
  %v11018 = vadd.f32 %v10632, %v10766
  %v11019 = vadd.f32 %v10633, %v10771
  %v11020 = vadd.f32 %v10634, %v10774
  %v11021 = vadd.f32 %v10635, %v10779
  %v11022 = vadd.f32 %v10636, %v10782
  %v11023 = vadd.f32 %v10637, %v10787
  %v11024 = vadd.f32 %v10638, %v10790
  %v11025 = vadd.f32 %v10639, %v10795
  %v11026 = vadd.f32 %v10640, %v10798
  %v11027 = vadd.f32 %v10641, %v10803
  %v11028 = vadd.f32 %v10642, %v10806
  %v11029 = vadd.f32 %v10643, %v10811
  %v11030 = vadd.f32 %v10644, %v10814
  %v11031 = vadd.f32 %v10645, %v10819
  %v11032 = vadd.f32 %v10646, %v10822
  %v11033 = vadd.f32 %v10647, %v10827
  %v11034 = vadd.f32 %v10648, %v10830
  %v11035 = vadd.f32 %v10649, %v10835
  %v11036 = vadd.f32 %v10650, %v10838
  %v11037 = vadd.f32 %v10651, %v10843
  %v11038 = vadd.f32 %v10652, %v10846
  %v11039 = vadd.f32 %v10653, %v10851
  %v11040 = vadd.f32 %v10654, %v10854
  %v11041 = vadd.f32 %v10655, %v10859
  %v11042 = vadd.f32 %v10656, %v10862
  %v11043 = vadd.f32 %v10657, %v10867
  %v11044 = vadd.f32 %v10658, %v10870
  %v11045 = vadd.f32 %v10659, %v10875
  %v11046 = vadd.f32 %v10660, %v10878
  %v11047 = vadd.f32 %v10661, %v10883
  %v11048 = vadd.f32 %v10662, %v10886
  %v11049 = vadd.f32 %v10663, %v10891
  %v11050 = vadd.f32 %v10664, %v10894
  %v11051 = vadd.f32 %v10665, %v10899
  %v11052 = vadd.f32 %v10666, %v10902
  %v11053 = vadd.f32 %v10667, %v10907
  %v11054 = vadd.f32 %v10668, %v10910
  %v11055 = vadd.f32 %v10669, %v10915
  %v11056 = vadd.f32 %v10670, %v10918
  %v11057 = vadd.f32 %v10671, %v10923
  %v11058 = vadd.f32 %v10672, %v10926
  %v11059 = vadd.f32 %v10673, %v10931
  %v11060 = vadd.f32 %v10674, %v10934
  %v11061 = vadd.f32 %v10675, %v10939
  %v11062 = vadd.f32 %v10676, %v10942
  %v11063 = vadd.f32 %v10677, %v10947
  %v11064 = vadd.f32 %v10678, %v10950
  %v11065 = vadd.f32 %v10679, %v10955
  %v11066 = vadd.f32 %v10680, %v10958
  %v11067 = vadd.f32 %v10681, %v10963
  %v11068 = vadd.f32 %v10682, %v10966
  %v11069 = vadd.f32 %v10683, %v10971
  %v11070 = vadd.f32 %v10684, %v10974
  %v11071 = vadd.f32 %v10685, %v10979
  %v11072 = vadd.f32 %v10686, %v10982
  %v11073 = vadd.f32 %v10687, %v10987
  %v11074 = vadd.f32 %v10688, %v10990
  %v11075 = vadd.f32 %v10689, %v10995
  %v11076 = vadd.f32 %v10690, %v10998
  %v11077 = vadd.f32 %v10691, %v11003
  %v11078 = vadd.f32 %v10692, %v11006
  %v11079 = vadd.f32 %v10693, %v11011
  %v11080 = vadd.f32 %v10694, %v11014
  %v11082 = vshrl.u32 %v80, 16
  %v11084 = vrot.slane %v11082, 4
  %v11085 = vshll.u32 %v80, 16
  %v11087 = vrot.slane %v11085, 5
  %v11088 = vor.u32 %v11084, %v11087
  %v11089 = vrot.slane %v11088, 4
  %v11091 = vshll.u32 %v81, 16
  %v11093 = vrot.slane %v11091, 5
  %v11094 = vsel %vm149, %v11089, %v11093
  %v11095 = vshrl.u32 %v81, 16
  %v11097 = vrot.slane %v11095, 4
  %v11098 = vor.u32 %v11097, %v11093
  %v11099 = vrot.slane %v11098, 4
  %v11101 = vshll.u32 %v82, 16
  %v11103 = vrot.slane %v11101, 5
  %v11104 = vsel %vm149, %v11099, %v11103
  %v11106 = vshrl.u32 %v140, 16
  %v11108 = vrot.slane %v11106, 4
  %v11109 = vshll.u32 %v140, 16
  %v11111 = vrot.slane %v11109, 5
  %v11112 = vor.u32 %v11108, %v11111
  %v11113 = vrot.slane %v11112, 4
  %v11115 = vshll.u32 %v141, 16
  %v11117 = vrot.slane %v11115, 5
  %v11118 = vsel %vm149, %v11113, %v11117
  %v11119 = vshrl.u32 %v141, 16
  %v11121 = vrot.slane %v11119, 4
  %v11122 = vor.u32 %v11121, %v11117
  %v11123 = vrot.slane %v11122, 4
  %v11125 = vshll.u32 %v142, 16
  %v11127 = vrot.slane %v11125, 5
  %v11128 = vsel %vm149, %v11123, %v11127
  %s11129 = scalar_lea.vmem %s1, 336
  %v11130 = vld [vmem:[%s11129] sm:$0xf]
  %v11131 = vld [vmem:[%s11129 + $0x4] sm:$0xf]
  %v11132 = vld [vmem:[%s11129 + $0x8] sm:$0xf]
  %v11133 = vld [vmem:[%s11129 + $0xc] sm:$0xf]
  %v11134 = vunpack.c.l.b16 %v11094
  %v11135 = vunpack.c.l.b16 %v11104
  %v11136 = vunpack.c.l.b16 %v11118
  %v11137 = vunpack.c.l.b16 %v11128
  %v11138 = vpack.c.b16 %v11135, %v11134
  %v11139 = vpack.c.b16 %v11137, %v11136
  %v11144 = vunpack.c.l.b16 %v11130
  %v11145 = vunpack.c.l.b16 %v11131
  %v11146 = vunpack.c.l.b16 %v11132
  %v11147 = vunpack.c.l.b16 %v11133
  %v11148 = vpack.c.b16 %v11145, %v11144
  %v11149 = vpack.c.b16 %v11147, %v11146
  %v11153 = vsel %vm1031, %v11138, 0
  %v11156 = vsel %vm1031, %v11139, 0
  %11158 = vmatprep.subr.bf16.mxu0 0
  %11159 = vmatpush1.bf16.msra.mxu0 %v11148
  %11160 = vmatprep.subr.bf16.mxu0 0
  %11161 = vmatpush1.bf16.msra.mxu0 %v11149
  %11162 = vmatprep.subr.bf16.mxu0 0
  %11163 = vmatpush1.bf16.msra.mxu0 0
  %11164 = vmatprep.subr.bf16.mxu0 0
  %11165 = vmatpush1.bf16.msra.mxu0 0
  %11166 = vmatprep.subr.bf16.mxu0 0
  %11167 = vmatpush1.bf16.msra.mxu0 0
  %11168 = vmatprep.subr.bf16.mxu0 0
  %11169 = vmatpush1.bf16.msra.mxu0 0
  %11170 = vmatprep.subr.bf16.mxu0 0
  %11171 = vmatpush1.bf16.msra.mxu0 0
  %11172 = vmatprep.subr.bf16.mxu0 0
  %11173 = vmatpush1.bf16.msra.mxu0 0
  %11174 = vmatprep.subr.bf16.mxu0 0
  %11175 = vmatpush1.bf16.msra.mxu0 0
  %11176 = vmatprep.subr.bf16.mxu0 0
  %11177 = vmatpush1.bf16.msra.mxu0 0
  %11178 = vmatprep.subr.bf16.mxu0 0
  %11179 = vmatpush1.bf16.msra.mxu0 0
  %11180 = vmatprep.subr.bf16.mxu0 0
  %11181 = vmatpush1.bf16.msra.mxu0 0
  %11182 = vmatprep.subr.bf16.mxu0 0
  %11183 = vmatpush1.bf16.msra.mxu0 0
  %11184 = vmatprep.subr.bf16.mxu0 0
  %11185 = vmatpush1.bf16.msra.mxu0 0
  %11186 = vmatprep.subr.bf16.mxu0 0
  %11187 = vmatpush1.bf16.msra.mxu0 0
  %11188 = vmatprep.subr.bf16.mxu0 0
  %11189 = vmatpush1.bf16.msra.mxu0 0
  %11190 = vmatprep.mubr.bf16.mxu0 0
  %11191 = vmatmul.mubr.bf16.gmra.mrb[0].mxu0 %v1045
  %v11192 = vpop.f32.mrb[0].mxu0
  %v11193 = vadd.f32 0.0, %v11192
  %v11194 = vpop.f32.mrb[0].mxu0
  %v11195 = vpop.f32.mrb[0].mxu0
  %v11196 = vadd.f32 0.0, %v11195
  %v11197 = vpop.f32.mrb[0].mxu0
  %11198 = vmatprep.mubr.bf16.mxu0 0
  %11199 = vmatmul.mubr.bf16.gmra.mrb[0].mxu0 %v1048
  %v11200 = vpop.f32.mrb[0].mxu0
  %v11201 = vadd.f32 0.0, %v11200
  %v11202 = vpop.f32.mrb[0].mxu0
  %v11203 = vpop.f32.mrb[0].mxu0
  %v11204 = vadd.f32 0.0, %v11203
  %v11205 = vpop.f32.mrb[0].mxu0
  %11206 = vmatprep.mubr.bf16.mxu0 0
  %11207 = vmatmul.mubr.bf16.gmra.mrb[0].mxu0 %v1051
  %v11208 = vpop.f32.mrb[0].mxu0
  %v11209 = vadd.f32 0.0, %v11208
  %v11210 = vpop.f32.mrb[0].mxu0
  %v11211 = vpop.f32.mrb[0].mxu0
  %v11212 = vadd.f32 0.0, %v11211
  %v11213 = vpop.f32.mrb[0].mxu0
  %11214 = vmatprep.mubr.bf16.mxu0 0
  %11215 = vmatmul.mubr.bf16.gmra.mrb[0].mxu0 %v1054
  %v11216 = vpop.f32.mrb[0].mxu0
  %v11217 = vadd.f32 0.0, %v11216
  %v11218 = vpop.f32.mrb[0].mxu0
  %v11219 = vpop.f32.mrb[0].mxu0
  %v11220 = vadd.f32 0.0, %v11219
  %v11221 = vpop.f32.mrb[0].mxu0
  %11222 = vmatprep.mubr.bf16.mxu0 0
  %11223 = vmatmul.mubr.bf16.gmra.mrb[0].mxu0 %v1057
  %v11224 = vpop.f32.mrb[0].mxu0
  %v11225 = vadd.f32 0.0, %v11224
  %v11226 = vpop.f32.mrb[0].mxu0
  %v11227 = vpop.f32.mrb[0].mxu0
  %v11228 = vadd.f32 0.0, %v11227
  %v11229 = vpop.f32.mrb[0].mxu0
  %11230 = vmatprep.mubr.bf16.mxu0 0
  %11231 = vmatmul.mubr.bf16.gmra.mrb[0].mxu0 %v1060
  %v11232 = vpop.f32.mrb[0].mxu0
  %v11233 = vadd.f32 0.0, %v11232
  %v11234 = vpop.f32.mrb[0].mxu0
  %v11235 = vpop.f32.mrb[0].mxu0
  %v11236 = vadd.f32 0.0, %v11235
  %v11237 = vpop.f32.mrb[0].mxu0
  %11238 = vmatprep.mubr.bf16.mxu0 0
  %11239 = vmatmul.mubr.bf16.gmra.mrb[0].mxu0 %v1063
  %v11240 = vpop.f32.mrb[0].mxu0
  %v11241 = vadd.f32 0.0, %v11240
  %v11242 = vpop.f32.mrb[0].mxu0
  %v11243 = vpop.f32.mrb[0].mxu0
  %v11244 = vadd.f32 0.0, %v11243
  %v11245 = vpop.f32.mrb[0].mxu0
  %11246 = vmatprep.mubr.bf16.mxu0 0
  %11247 = vmatmul.mubr.bf16.gmra.mrb[0].mxu0 %v1066
  %v11248 = vpop.f32.mrb[0].mxu0
  %v11249 = vadd.f32 0.0, %v11248
  %v11250 = vpop.f32.mrb[0].mxu0
  %v11251 = vpop.f32.mrb[0].mxu0
  %v11252 = vadd.f32 0.0, %v11251
  %v11253 = vpop.f32.mrb[0].mxu0
  %11254 = vmatprep.mubr.bf16.mxu0 0
  %11255 = vmatmul.mubr.bf16.gmra.mrb[0].mxu0 %v1069
  %v11256 = vpop.f32.mrb[0].mxu0
  %v11257 = vadd.f32 0.0, %v11256
  %v11258 = vpop.f32.mrb[0].mxu0
  %v11259 = vpop.f32.mrb[0].mxu0
  %v11260 = vadd.f32 0.0, %v11259
  %v11261 = vpop.f32.mrb[0].mxu0
  %11262 = vmatprep.mubr.bf16.mxu0 0
  %11263 = vmatmul.mubr.bf16.gmra.mrb[0].mxu0 %v1072
  %v11264 = vpop.f32.mrb[0].mxu0
  %v11265 = vadd.f32 0.0, %v11264
  %v11266 = vpop.f32.mrb[0].mxu0
  %v11267 = vpop.f32.mrb[0].mxu0
  %v11268 = vadd.f32 0.0, %v11267
  %v11269 = vpop.f32.mrb[0].mxu0
  %11270 = vmatprep.mubr.bf16.mxu0 0
  %11271 = vmatmul.mubr.bf16.gmra.mrb[0].mxu0 %v1075
  %v11272 = vpop.f32.mrb[0].mxu0
  %v11273 = vadd.f32 0.0, %v11272
  %v11274 = vpop.f32.mrb[0].mxu0
  %v11275 = vpop.f32.mrb[0].mxu0
  %v11276 = vadd.f32 0.0, %v11275
  %v11277 = vpop.f32.mrb[0].mxu0
  %11278 = vmatprep.mubr.bf16.mxu0 0
  %11279 = vmatmul.mubr.bf16.gmra.mrb[0].mxu0 %v1078
  %v11280 = vpop.f32.mrb[0].mxu0
  %v11281 = vadd.f32 0.0, %v11280
  %v11282 = vpop.f32.mrb[0].mxu0
  %v11283 = vpop.f32.mrb[0].mxu0
  %v11284 = vadd.f32 0.0, %v11283
  %v11285 = vpop.f32.mrb[0].mxu0
  %11286 = vmatprep.mubr.bf16.mxu0 0
  %11287 = vmatmul.mubr.bf16.gmra.mrb[0].mxu0 %v5087
  %v11288 = vpop.f32.mrb[0].mxu0
  %v11289 = vadd.f32 0.0, %v11288
  %v11290 = vpop.f32.mrb[0].mxu0
  %v11291 = vpop.f32.mrb[0].mxu0
  %v11292 = vadd.f32 0.0, %v11291
  %v11293 = vpop.f32.mrb[0].mxu0
  %11294 = vmatprep.mubr.bf16.mxu0 0
  %11295 = vmatmul.mubr.bf16.gmra.mrb[0].mxu0 %v7109
  %v11296 = vpop.f32.mrb[0].mxu0
  %v11297 = vadd.f32 0.0, %v11296
  %v11298 = vpop.f32.mrb[0].mxu0
  %v11299 = vpop.f32.mrb[0].mxu0
  %v11300 = vadd.f32 0.0, %v11299
  %v11301 = vpop.f32.mrb[0].mxu0
  %11302 = vmatprep.mubr.bf16.mxu0 0
  %11303 = vmatmul.mubr.bf16.gmra.mrb[0].mxu0 %v9131
  %v11304 = vpop.f32.mrb[0].mxu0
  %v11305 = vadd.f32 0.0, %v11304
  %v11306 = vpop.f32.mrb[0].mxu0
  %v11307 = vpop.f32.mrb[0].mxu0
  %v11308 = vadd.f32 0.0, %v11307
  %v11309 = vpop.f32.mrb[0].mxu0
  %11310 = vmatprep.mubr.bf16.mxu0 0
  %11311 = vmatmul.mubr.bf16.gmra.mrb[0].mxu0 %v11153
  %v11312 = vpop.f32.mrb[0].mxu0
  %v11313 = vadd.f32 0.0, %v11312
  %v11314 = vpop.f32.mrb[0].mxu0
  %v11315 = vpop.f32.mrb[0].mxu0
  %v11316 = vadd.f32 0.0, %v11315
  %v11317 = vpop.f32.mrb[0].mxu0
  %11318 = vmatprep.mubr.bf16.mxu0 0
  %11319 = vmatmul.mubr.bf16.gmra.mrb[0].mxu0 %v1093
  %v11320 = vpop.f32.mrb[0].mxu0
  %v11321 = vadd.f32 0.0, %v11320
  %v11322 = vpop.f32.mrb[0].mxu0
  %v11323 = vpop.f32.mrb[0].mxu0
  %v11324 = vadd.f32 0.0, %v11323
  %v11325 = vpop.f32.mrb[0].mxu0
  %11326 = vmatprep.mubr.bf16.mxu0 0
  %11327 = vmatmul.mubr.bf16.gmra.mrb[0].mxu0 %v1096
  %v11328 = vpop.f32.mrb[0].mxu0
  %v11329 = vadd.f32 0.0, %v11328
  %v11330 = vpop.f32.mrb[0].mxu0
  %v11331 = vpop.f32.mrb[0].mxu0
  %v11332 = vadd.f32 0.0, %v11331
  %v11333 = vpop.f32.mrb[0].mxu0
  %11334 = vmatprep.mubr.bf16.mxu0 0
  %11335 = vmatmul.mubr.bf16.gmra.mrb[0].mxu0 %v1099
  %v11336 = vpop.f32.mrb[0].mxu0
  %v11337 = vadd.f32 0.0, %v11336
  %v11338 = vpop.f32.mrb[0].mxu0
  %v11339 = vpop.f32.mrb[0].mxu0
  %v11340 = vadd.f32 0.0, %v11339
  %v11341 = vpop.f32.mrb[0].mxu0
  %11342 = vmatprep.mubr.bf16.mxu0 0
  %11343 = vmatmul.mubr.bf16.gmra.mrb[0].mxu0 %v1102
  %v11344 = vpop.f32.mrb[0].mxu0
  %v11345 = vadd.f32 0.0, %v11344
  %v11346 = vpop.f32.mrb[0].mxu0
  %v11347 = vpop.f32.mrb[0].mxu0
  %v11348 = vadd.f32 0.0, %v11347
  %v11349 = vpop.f32.mrb[0].mxu0
  %11350 = vmatprep.mubr.bf16.mxu0 0
  %11351 = vmatmul.mubr.bf16.gmra.mrb[0].mxu0 %v1105
  %v11352 = vpop.f32.mrb[0].mxu0
  %v11353 = vadd.f32 0.0, %v11352
  %v11354 = vpop.f32.mrb[0].mxu0
  %v11355 = vpop.f32.mrb[0].mxu0
  %v11356 = vadd.f32 0.0, %v11355
  %v11357 = vpop.f32.mrb[0].mxu0
  %11358 = vmatprep.mubr.bf16.mxu0 0
  %11359 = vmatmul.mubr.bf16.gmra.mrb[0].mxu0 %v1108
  %v11360 = vpop.f32.mrb[0].mxu0
  %v11361 = vadd.f32 0.0, %v11360
  %v11362 = vpop.f32.mrb[0].mxu0
  %v11363 = vpop.f32.mrb[0].mxu0
  %v11364 = vadd.f32 0.0, %v11363
  %v11365 = vpop.f32.mrb[0].mxu0
  %11366 = vmatprep.mubr.bf16.mxu0 0
  %11367 = vmatmul.mubr.bf16.gmra.mrb[0].mxu0 %v1111
  %v11368 = vpop.f32.mrb[0].mxu0
  %v11369 = vadd.f32 0.0, %v11368
  %v11370 = vpop.f32.mrb[0].mxu0
  %v11371 = vpop.f32.mrb[0].mxu0
  %v11372 = vadd.f32 0.0, %v11371
  %v11373 = vpop.f32.mrb[0].mxu0
  %11374 = vmatprep.mubr.bf16.mxu0 0
  %11375 = vmatmul.mubr.bf16.gmra.mrb[0].mxu0 %v1114
  %v11376 = vpop.f32.mrb[0].mxu0
  %v11377 = vadd.f32 0.0, %v11376
  %v11378 = vpop.f32.mrb[0].mxu0
  %v11379 = vpop.f32.mrb[0].mxu0
  %v11380 = vadd.f32 0.0, %v11379
  %v11381 = vpop.f32.mrb[0].mxu0
  %11382 = vmatprep.mubr.bf16.mxu0 0
  %11383 = vmatmul.mubr.bf16.gmra.mrb[0].mxu0 %v1117
  %v11384 = vpop.f32.mrb[0].mxu0
  %v11385 = vadd.f32 0.0, %v11384
  %v11386 = vpop.f32.mrb[0].mxu0
  %v11387 = vpop.f32.mrb[0].mxu0
  %v11388 = vadd.f32 0.0, %v11387
  %v11389 = vpop.f32.mrb[0].mxu0
  %11390 = vmatprep.mubr.bf16.mxu0 0
  %11391 = vmatmul.mubr.bf16.gmra.mrb[0].mxu0 %v1120
  %v11392 = vpop.f32.mrb[0].mxu0
  %v11393 = vadd.f32 0.0, %v11392
  %v11394 = vpop.f32.mrb[0].mxu0
  %v11395 = vpop.f32.mrb[0].mxu0
  %v11396 = vadd.f32 0.0, %v11395
  %v11397 = vpop.f32.mrb[0].mxu0
  %11398 = vmatprep.mubr.bf16.mxu0 0
  %11399 = vmatmul.mubr.bf16.gmra.mrb[0].mxu0 %v1123
  %v11400 = vpop.f32.mrb[0].mxu0
  %v11401 = vadd.f32 0.0, %v11400
  %v11402 = vpop.f32.mrb[0].mxu0
  %v11403 = vpop.f32.mrb[0].mxu0
  %v11404 = vadd.f32 0.0, %v11403
  %v11405 = vpop.f32.mrb[0].mxu0
  %11406 = vmatprep.mubr.bf16.mxu0 0
  %11407 = vmatmul.mubr.bf16.gmra.mrb[0].mxu0 %v1126
  %v11408 = vpop.f32.mrb[0].mxu0
  %v11409 = vadd.f32 0.0, %v11408
  %v11410 = vpop.f32.mrb[0].mxu0
  %v11411 = vpop.f32.mrb[0].mxu0
  %v11412 = vadd.f32 0.0, %v11411
  %v11413 = vpop.f32.mrb[0].mxu0
  %11414 = vmatprep.mubr.bf16.mxu0 0
  %11415 = vmatmul.mubr.bf16.gmra.mrb[0].mxu0 %v5090
  %v11416 = vpop.f32.mrb[0].mxu0
  %v11417 = vadd.f32 0.0, %v11416
  %v11418 = vpop.f32.mrb[0].mxu0
  %v11419 = vpop.f32.mrb[0].mxu0
  %v11420 = vadd.f32 0.0, %v11419
  %v11421 = vpop.f32.mrb[0].mxu0
  %11422 = vmatprep.mubr.bf16.mxu0 0
  %11423 = vmatmul.mubr.bf16.gmra.mrb[0].mxu0 %v7112
  %v11424 = vpop.f32.mrb[0].mxu0
  %v11425 = vadd.f32 0.0, %v11424
  %v11426 = vpop.f32.mrb[0].mxu0
  %v11427 = vpop.f32.mrb[0].mxu0
  %v11428 = vadd.f32 0.0, %v11427
  %v11429 = vpop.f32.mrb[0].mxu0
  %11430 = vmatprep.mubr.bf16.mxu0 0
  %11431 = vmatmul.mubr.bf16.gmra.mrb[0].mxu0 %v9134
  %v11432 = vpop.f32.mrb[0].mxu0
  %v11433 = vadd.f32 0.0, %v11432
  %v11434 = vpop.f32.mrb[0].mxu0
  %v11435 = vpop.f32.mrb[0].mxu0
  %v11436 = vadd.f32 0.0, %v11435
  %v11437 = vpop.f32.mrb[0].mxu0
  %11438 = vmatprep.mubr.bf16.mxu0 0
  %11439 = vmatmul.mubr.bf16.gmra.mrb[0].mxu0 %v11156
  %v11440 = vpop.f32.mrb[0].mxu0
  %v11441 = vadd.f32 0.0, %v11440
  %v11442 = vpop.f32.mrb[0].mxu0
  %v11443 = vpop.f32.mrb[0].mxu0
  %v11444 = vadd.f32 0.0, %v11443
  %v11445 = vpop.f32.mrb[0].mxu0
  %11446 = vdwg.mxu0
  %v11447 = vadd.f32 %v11017, %v11193
  %v11448 = vadd.f32 %v11018, %v11196
  %v11449 = vadd.f32 %v11019, %v11201
  %v11450 = vadd.f32 %v11020, %v11204
  %v11451 = vadd.f32 %v11021, %v11209
  %v11452 = vadd.f32 %v11022, %v11212
  %v11453 = vadd.f32 %v11023, %v11217
  %v11454 = vadd.f32 %v11024, %v11220
  %v11455 = vadd.f32 %v11025, %v11225
  %v11456 = vadd.f32 %v11026, %v11228
  %v11457 = vadd.f32 %v11027, %v11233
  %v11458 = vadd.f32 %v11028, %v11236
  %v11459 = vadd.f32 %v11029, %v11241
  %v11460 = vadd.f32 %v11030, %v11244
  %v11461 = vadd.f32 %v11031, %v11249
  %v11462 = vadd.f32 %v11032, %v11252
  %v11463 = vadd.f32 %v11033, %v11257
  %v11464 = vadd.f32 %v11034, %v11260
  %v11465 = vadd.f32 %v11035, %v11265
  %v11466 = vadd.f32 %v11036, %v11268
  %v11467 = vadd.f32 %v11037, %v11273
  %v11468 = vadd.f32 %v11038, %v11276
  %v11469 = vadd.f32 %v11039, %v11281
  %v11470 = vadd.f32 %v11040, %v11284
  %v11471 = vadd.f32 %v11041, %v11289
  %v11472 = vadd.f32 %v11042, %v11292
  %v11473 = vadd.f32 %v11043, %v11297
  %v11474 = vadd.f32 %v11044, %v11300
  %v11475 = vadd.f32 %v11045, %v11305
  %v11476 = vadd.f32 %v11046, %v11308
  %v11477 = vadd.f32 %v11047, %v11313
  %v11478 = vadd.f32 %v11048, %v11316
  %v11479 = vadd.f32 %v11049, %v11321
  %v11480 = vadd.f32 %v11050, %v11324
  %v11481 = vadd.f32 %v11051, %v11329
  %v11482 = vadd.f32 %v11052, %v11332
  %v11483 = vadd.f32 %v11053, %v11337
  %v11484 = vadd.f32 %v11054, %v11340
  %v11485 = vadd.f32 %v11055, %v11345
  %v11486 = vadd.f32 %v11056, %v11348
  %v11487 = vadd.f32 %v11057, %v11353
  %v11488 = vadd.f32 %v11058, %v11356
  %v11489 = vadd.f32 %v11059, %v11361
  %v11490 = vadd.f32 %v11060, %v11364
  %v11491 = vadd.f32 %v11061, %v11369
  %v11492 = vadd.f32 %v11062, %v11372
  %v11493 = vadd.f32 %v11063, %v11377
  %v11494 = vadd.f32 %v11064, %v11380
  %v11495 = vadd.f32 %v11065, %v11385
  %v11496 = vadd.f32 %v11066, %v11388
  %v11497 = vadd.f32 %v11067, %v11393
  %v11498 = vadd.f32 %v11068, %v11396
  %v11499 = vadd.f32 %v11069, %v11401
  %v11500 = vadd.f32 %v11070, %v11404
  %v11501 = vadd.f32 %v11071, %v11409
  %v11502 = vadd.f32 %v11072, %v11412
  %v11503 = vadd.f32 %v11073, %v11417
  %v11504 = vadd.f32 %v11074, %v11420
  %v11505 = vadd.f32 %v11075, %v11425
  %v11506 = vadd.f32 %v11076, %v11428
  %v11507 = vadd.f32 %v11077, %v11433
  %v11508 = vadd.f32 %v11078, %v11436
  %v11509 = vadd.f32 %v11079, %v11441
  %v11510 = vadd.f32 %v11080, %v11444
  %v11513 = vrot.slane %v80, 5
  %v11514 = vrot.slane %v11513, 4
  %v11515 = vrot.slane %v81, 5
  %v11516 = vsel %vm2008, %v11514, %v11515
  %v11517 = vrot.slane %v11515, 4
  %v11518 = vrot.slane %v82, 5
  %v11519 = vsel %vm2008, %v11517, %v11518
  %v11520 = vrot.slane %v140, 5
  %v11521 = vrot.slane %v11520, 4
  %v11522 = vrot.slane %v141, 5
  %v11523 = vsel %vm2008, %v11521, %v11522
  %v11524 = vrot.slane %v11522, 4
  %v11525 = vrot.slane %v142, 5
  %v11526 = vsel %vm2008, %v11524, %v11525
  %s11527 = scalar_lea.vmem %s1, 352
  %v11528 = vld [vmem:[%s11527] sm:$0xf]
  %v11529 = vld [vmem:[%s11527 + $0x4] sm:$0xf]
  %v11530 = vld [vmem:[%s11527 + $0x8] sm:$0xf]
  %v11531 = vld [vmem:[%s11527 + $0xc] sm:$0xf]
  %v11532 = vunpack.c.l.b16 %v11516
  %v11533 = vunpack.c.l.b16 %v11519
  %v11534 = vunpack.c.l.b16 %v11523
  %v11535 = vunpack.c.l.b16 %v11526
  %v11536 = vpack.c.b16 %v11533, %v11532
  %v11537 = vpack.c.b16 %v11535, %v11534
  %v11542 = vunpack.c.l.b16 %v11528
  %v11543 = vunpack.c.l.b16 %v11529
  %v11544 = vunpack.c.l.b16 %v11530
  %v11545 = vunpack.c.l.b16 %v11531
  %v11546 = vpack.c.b16 %v11543, %v11542
  %v11547 = vpack.c.b16 %v11545, %v11544
  %v11551 = vsel %vm1031, %v11536, 0
  %v11554 = vsel %vm1031, %v11537, 0
  %11556 = vmatprep.subr.bf16.mxu0 0
  %11557 = vmatpush1.bf16.msra.mxu0 %v11546
  %11558 = vmatprep.subr.bf16.mxu0 0
  %11559 = vmatpush1.bf16.msra.mxu0 %v11547
  %11560 = vmatprep.subr.bf16.mxu0 0
  %11561 = vmatpush1.bf16.msra.mxu0 0
  %11562 = vmatprep.subr.bf16.mxu0 0
  %11563 = vmatpush1.bf16.msra.mxu0 0
  %11564 = vmatprep.subr.bf16.mxu0 0
  %11565 = vmatpush1.bf16.msra.mxu0 0
  %11566 = vmatprep.subr.bf16.mxu0 0
  %11567 = vmatpush1.bf16.msra.mxu0 0
  %11568 = vmatprep.subr.bf16.mxu0 0
  %11569 = vmatpush1.bf16.msra.mxu0 0
  %11570 = vmatprep.subr.bf16.mxu0 0
  %11571 = vmatpush1.bf16.msra.mxu0 0
  %11572 = vmatprep.subr.bf16.mxu0 0
  %11573 = vmatpush1.bf16.msra.mxu0 0
  %11574 = vmatprep.subr.bf16.mxu0 0
  %11575 = vmatpush1.bf16.msra.mxu0 0
  %11576 = vmatprep.subr.bf16.mxu0 0
  %11577 = vmatpush1.bf16.msra.mxu0 0
  %11578 = vmatprep.subr.bf16.mxu0 0
  %11579 = vmatpush1.bf16.msra.mxu0 0
  %11580 = vmatprep.subr.bf16.mxu0 0
  %11581 = vmatpush1.bf16.msra.mxu0 0
  %11582 = vmatprep.subr.bf16.mxu0 0
  %11583 = vmatpush1.bf16.msra.mxu0 0
  %11584 = vmatprep.subr.bf16.mxu0 0
  %11585 = vmatpush1.bf16.msra.mxu0 0
  %11586 = vmatprep.subr.bf16.mxu0 0
  %11587 = vmatpush1.bf16.msra.mxu0 0
  %11588 = vmatprep.mubr.bf16.mxu0 0
  %11589 = vmatmul.mubr.bf16.gmra.mrb[0].mxu0 %v2359
  %v11590 = vpop.f32.mrb[0].mxu0
  %v11591 = vadd.f32 0.0, %v11590
  %v11592 = vpop.f32.mrb[0].mxu0
  %v11593 = vpop.f32.mrb[0].mxu0
  %v11594 = vadd.f32 0.0, %v11593
  %v11595 = vpop.f32.mrb[0].mxu0
  %11596 = vmatprep.mubr.bf16.mxu0 0
  %11597 = vmatmul.mubr.bf16.gmra.mrb[0].mxu0 %v2362
  %v11598 = vpop.f32.mrb[0].mxu0
  %v11599 = vadd.f32 0.0, %v11598
  %v11600 = vpop.f32.mrb[0].mxu0
  %v11601 = vpop.f32.mrb[0].mxu0
  %v11602 = vadd.f32 0.0, %v11601
  %v11603 = vpop.f32.mrb[0].mxu0
  %11604 = vmatprep.mubr.bf16.mxu0 0
  %11605 = vmatmul.mubr.bf16.gmra.mrb[0].mxu0 %v2365
  %v11606 = vpop.f32.mrb[0].mxu0
  %v11607 = vadd.f32 0.0, %v11606
  %v11608 = vpop.f32.mrb[0].mxu0
  %v11609 = vpop.f32.mrb[0].mxu0
  %v11610 = vadd.f32 0.0, %v11609
  %v11611 = vpop.f32.mrb[0].mxu0
  %11612 = vmatprep.mubr.bf16.mxu0 0
  %11613 = vmatmul.mubr.bf16.gmra.mrb[0].mxu0 %v2368
  %v11614 = vpop.f32.mrb[0].mxu0
  %v11615 = vadd.f32 0.0, %v11614
  %v11616 = vpop.f32.mrb[0].mxu0
  %v11617 = vpop.f32.mrb[0].mxu0
  %v11618 = vadd.f32 0.0, %v11617
  %v11619 = vpop.f32.mrb[0].mxu0
  %11620 = vmatprep.mubr.bf16.mxu0 0
  %11621 = vmatmul.mubr.bf16.gmra.mrb[0].mxu0 %v2371
  %v11622 = vpop.f32.mrb[0].mxu0
  %v11623 = vadd.f32 0.0, %v11622
  %v11624 = vpop.f32.mrb[0].mxu0
  %v11625 = vpop.f32.mrb[0].mxu0
  %v11626 = vadd.f32 0.0, %v11625
  %v11627 = vpop.f32.mrb[0].mxu0
  %11628 = vmatprep.mubr.bf16.mxu0 0
  %11629 = vmatmul.mubr.bf16.gmra.mrb[0].mxu0 %v2374
  %v11630 = vpop.f32.mrb[0].mxu0
  %v11631 = vadd.f32 0.0, %v11630
  %v11632 = vpop.f32.mrb[0].mxu0
  %v11633 = vpop.f32.mrb[0].mxu0
  %v11634 = vadd.f32 0.0, %v11633
  %v11635 = vpop.f32.mrb[0].mxu0
  %11636 = vmatprep.mubr.bf16.mxu0 0
  %11637 = vmatmul.mubr.bf16.gmra.mrb[0].mxu0 %v2377
  %v11638 = vpop.f32.mrb[0].mxu0
  %v11639 = vadd.f32 0.0, %v11638
  %v11640 = vpop.f32.mrb[0].mxu0
  %v11641 = vpop.f32.mrb[0].mxu0
  %v11642 = vadd.f32 0.0, %v11641
  %v11643 = vpop.f32.mrb[0].mxu0
  %11644 = vmatprep.mubr.bf16.mxu0 0
  %11645 = vmatmul.mubr.bf16.gmra.mrb[0].mxu0 %v2380
  %v11646 = vpop.f32.mrb[0].mxu0
  %v11647 = vadd.f32 0.0, %v11646
  %v11648 = vpop.f32.mrb[0].mxu0
  %v11649 = vpop.f32.mrb[0].mxu0
  %v11650 = vadd.f32 0.0, %v11649
  %v11651 = vpop.f32.mrb[0].mxu0
  %11652 = vmatprep.mubr.bf16.mxu0 0
  %11653 = vmatmul.mubr.bf16.gmra.mrb[0].mxu0 %v2383
  %v11654 = vpop.f32.mrb[0].mxu0
  %v11655 = vadd.f32 0.0, %v11654
  %v11656 = vpop.f32.mrb[0].mxu0
  %v11657 = vpop.f32.mrb[0].mxu0
  %v11658 = vadd.f32 0.0, %v11657
  %v11659 = vpop.f32.mrb[0].mxu0
  %11660 = vmatprep.mubr.bf16.mxu0 0
  %11661 = vmatmul.mubr.bf16.gmra.mrb[0].mxu0 %v2386
  %v11662 = vpop.f32.mrb[0].mxu0
  %v11663 = vadd.f32 0.0, %v11662
  %v11664 = vpop.f32.mrb[0].mxu0
  %v11665 = vpop.f32.mrb[0].mxu0
  %v11666 = vadd.f32 0.0, %v11665
  %v11667 = vpop.f32.mrb[0].mxu0
  %11668 = vmatprep.mubr.bf16.mxu0 0
  %11669 = vmatmul.mubr.bf16.gmra.mrb[0].mxu0 %v2389
  %v11670 = vpop.f32.mrb[0].mxu0
  %v11671 = vadd.f32 0.0, %v11670
  %v11672 = vpop.f32.mrb[0].mxu0
  %v11673 = vpop.f32.mrb[0].mxu0
  %v11674 = vadd.f32 0.0, %v11673
  %v11675 = vpop.f32.mrb[0].mxu0
  %11676 = vmatprep.mubr.bf16.mxu0 0
  %11677 = vmatmul.mubr.bf16.gmra.mrb[0].mxu0 %v2392
  %v11678 = vpop.f32.mrb[0].mxu0
  %v11679 = vadd.f32 0.0, %v11678
  %v11680 = vpop.f32.mrb[0].mxu0
  %v11681 = vpop.f32.mrb[0].mxu0
  %v11682 = vadd.f32 0.0, %v11681
  %v11683 = vpop.f32.mrb[0].mxu0
  %11684 = vmatprep.mubr.bf16.mxu0 0
  %11685 = vmatmul.mubr.bf16.gmra.mrb[0].mxu0 %v5485
  %v11686 = vpop.f32.mrb[0].mxu0
  %v11687 = vadd.f32 0.0, %v11686
  %v11688 = vpop.f32.mrb[0].mxu0
  %v11689 = vpop.f32.mrb[0].mxu0
  %v11690 = vadd.f32 0.0, %v11689
  %v11691 = vpop.f32.mrb[0].mxu0
  %11692 = vmatprep.mubr.bf16.mxu0 0
  %11693 = vmatmul.mubr.bf16.gmra.mrb[0].mxu0 %v7507
  %v11694 = vpop.f32.mrb[0].mxu0
  %v11695 = vadd.f32 0.0, %v11694
  %v11696 = vpop.f32.mrb[0].mxu0
  %v11697 = vpop.f32.mrb[0].mxu0
  %v11698 = vadd.f32 0.0, %v11697
  %v11699 = vpop.f32.mrb[0].mxu0
  %11700 = vmatprep.mubr.bf16.mxu0 0
  %11701 = vmatmul.mubr.bf16.gmra.mrb[0].mxu0 %v9529
  %v11702 = vpop.f32.mrb[0].mxu0
  %v11703 = vadd.f32 0.0, %v11702
  %v11704 = vpop.f32.mrb[0].mxu0
  %v11705 = vpop.f32.mrb[0].mxu0
  %v11706 = vadd.f32 0.0, %v11705
  %v11707 = vpop.f32.mrb[0].mxu0
  %11708 = vmatprep.mubr.bf16.mxu0 0
  %11709 = vmatmul.mubr.bf16.gmra.mrb[0].mxu0 %v11551
  %v11710 = vpop.f32.mrb[0].mxu0
  %v11711 = vadd.f32 0.0, %v11710
  %v11712 = vpop.f32.mrb[0].mxu0
  %v11713 = vpop.f32.mrb[0].mxu0
  %v11714 = vadd.f32 0.0, %v11713
  %v11715 = vpop.f32.mrb[0].mxu0
  %11716 = vmatprep.mubr.bf16.mxu0 0
  %11717 = vmatmul.mubr.bf16.gmra.mrb[0].mxu0 %v2407
  %v11718 = vpop.f32.mrb[0].mxu0
  %v11719 = vadd.f32 0.0, %v11718
  %v11720 = vpop.f32.mrb[0].mxu0
  %v11721 = vpop.f32.mrb[0].mxu0
  %v11722 = vadd.f32 0.0, %v11721
  %v11723 = vpop.f32.mrb[0].mxu0
  %11724 = vmatprep.mubr.bf16.mxu0 0
  %11725 = vmatmul.mubr.bf16.gmra.mrb[0].mxu0 %v2410
  %v11726 = vpop.f32.mrb[0].mxu0
  %v11727 = vadd.f32 0.0, %v11726
  %v11728 = vpop.f32.mrb[0].mxu0
  %v11729 = vpop.f32.mrb[0].mxu0
  %v11730 = vadd.f32 0.0, %v11729
  %v11731 = vpop.f32.mrb[0].mxu0
  %11732 = vmatprep.mubr.bf16.mxu0 0
  %11733 = vmatmul.mubr.bf16.gmra.mrb[0].mxu0 %v2413
  %v11734 = vpop.f32.mrb[0].mxu0
  %v11735 = vadd.f32 0.0, %v11734
  %v11736 = vpop.f32.mrb[0].mxu0
  %v11737 = vpop.f32.mrb[0].mxu0
  %v11738 = vadd.f32 0.0, %v11737
  %v11739 = vpop.f32.mrb[0].mxu0
  %11740 = vmatprep.mubr.bf16.mxu0 0
  %11741 = vmatmul.mubr.bf16.gmra.mrb[0].mxu0 %v2416
  %v11742 = vpop.f32.mrb[0].mxu0
  %v11743 = vadd.f32 0.0, %v11742
  %v11744 = vpop.f32.mrb[0].mxu0
  %v11745 = vpop.f32.mrb[0].mxu0
  %v11746 = vadd.f32 0.0, %v11745
  %v11747 = vpop.f32.mrb[0].mxu0
  %11748 = vmatprep.mubr.bf16.mxu0 0
  %11749 = vmatmul.mubr.bf16.gmra.mrb[0].mxu0 %v2419
  %v11750 = vpop.f32.mrb[0].mxu0
  %v11751 = vadd.f32 0.0, %v11750
  %v11752 = vpop.f32.mrb[0].mxu0
  %v11753 = vpop.f32.mrb[0].mxu0
  %v11754 = vadd.f32 0.0, %v11753
  %v11755 = vpop.f32.mrb[0].mxu0
  %11756 = vmatprep.mubr.bf16.mxu0 0
  %11757 = vmatmul.mubr.bf16.gmra.mrb[0].mxu0 %v2422
  %v11758 = vpop.f32.mrb[0].mxu0
  %v11759 = vadd.f32 0.0, %v11758
  %v11760 = vpop.f32.mrb[0].mxu0
  %v11761 = vpop.f32.mrb[0].mxu0
  %v11762 = vadd.f32 0.0, %v11761
  %v11763 = vpop.f32.mrb[0].mxu0
  %11764 = vmatprep.mubr.bf16.mxu0 0
  %11765 = vmatmul.mubr.bf16.gmra.mrb[0].mxu0 %v2425
  %v11766 = vpop.f32.mrb[0].mxu0
  %v11767 = vadd.f32 0.0, %v11766
  %v11768 = vpop.f32.mrb[0].mxu0
  %v11769 = vpop.f32.mrb[0].mxu0
  %v11770 = vadd.f32 0.0, %v11769
  %v11771 = vpop.f32.mrb[0].mxu0
  %11772 = vmatprep.mubr.bf16.mxu0 0
  %11773 = vmatmul.mubr.bf16.gmra.mrb[0].mxu0 %v2428
  %v11774 = vpop.f32.mrb[0].mxu0
  %v11775 = vadd.f32 0.0, %v11774
  %v11776 = vpop.f32.mrb[0].mxu0
  %v11777 = vpop.f32.mrb[0].mxu0
  %v11778 = vadd.f32 0.0, %v11777
  %v11779 = vpop.f32.mrb[0].mxu0
  %11780 = vmatprep.mubr.bf16.mxu0 0
  %11781 = vmatmul.mubr.bf16.gmra.mrb[0].mxu0 %v2431
  %v11782 = vpop.f32.mrb[0].mxu0
  %v11783 = vadd.f32 0.0, %v11782
  %v11784 = vpop.f32.mrb[0].mxu0
  %v11785 = vpop.f32.mrb[0].mxu0
  %v11786 = vadd.f32 0.0, %v11785
  %v11787 = vpop.f32.mrb[0].mxu0
  %11788 = vmatprep.mubr.bf16.mxu0 0
  %11789 = vmatmul.mubr.bf16.gmra.mrb[0].mxu0 %v2434
  %v11790 = vpop.f32.mrb[0].mxu0
  %v11791 = vadd.f32 0.0, %v11790
  %v11792 = vpop.f32.mrb[0].mxu0
  %v11793 = vpop.f32.mrb[0].mxu0
  %v11794 = vadd.f32 0.0, %v11793
  %v11795 = vpop.f32.mrb[0].mxu0
  %11796 = vmatprep.mubr.bf16.mxu0 0
  %11797 = vmatmul.mubr.bf16.gmra.mrb[0].mxu0 %v2437
  %v11798 = vpop.f32.mrb[0].mxu0
  %v11799 = vadd.f32 0.0, %v11798
  %v11800 = vpop.f32.mrb[0].mxu0
  %v11801 = vpop.f32.mrb[0].mxu0
  %v11802 = vadd.f32 0.0, %v11801
  %v11803 = vpop.f32.mrb[0].mxu0
  %11804 = vmatprep.mubr.bf16.mxu0 0
  %11805 = vmatmul.mubr.bf16.gmra.mrb[0].mxu0 %v2440
  %v11806 = vpop.f32.mrb[0].mxu0
  %v11807 = vadd.f32 0.0, %v11806
  %v11808 = vpop.f32.mrb[0].mxu0
  %v11809 = vpop.f32.mrb[0].mxu0
  %v11810 = vadd.f32 0.0, %v11809
  %v11811 = vpop.f32.mrb[0].mxu0
  %11812 = vmatprep.mubr.bf16.mxu0 0
  %11813 = vmatmul.mubr.bf16.gmra.mrb[0].mxu0 %v5488
  %v11814 = vpop.f32.mrb[0].mxu0
  %v11815 = vadd.f32 0.0, %v11814
  %v11816 = vpop.f32.mrb[0].mxu0
  %v11817 = vpop.f32.mrb[0].mxu0
  %v11818 = vadd.f32 0.0, %v11817
  %v11819 = vpop.f32.mrb[0].mxu0
  %11820 = vmatprep.mubr.bf16.mxu0 0
  %11821 = vmatmul.mubr.bf16.gmra.mrb[0].mxu0 %v7510
  %v11822 = vpop.f32.mrb[0].mxu0
  %v11823 = vadd.f32 0.0, %v11822
  %v11824 = vpop.f32.mrb[0].mxu0
  %v11825 = vpop.f32.mrb[0].mxu0
  %v11826 = vadd.f32 0.0, %v11825
  %v11827 = vpop.f32.mrb[0].mxu0
  %11828 = vmatprep.mubr.bf16.mxu0 0
  %11829 = vmatmul.mubr.bf16.gmra.mrb[0].mxu0 %v9532
  %v11830 = vpop.f32.mrb[0].mxu0
  %v11831 = vadd.f32 0.0, %v11830
  %v11832 = vpop.f32.mrb[0].mxu0
  %v11833 = vpop.f32.mrb[0].mxu0
  %v11834 = vadd.f32 0.0, %v11833
  %v11835 = vpop.f32.mrb[0].mxu0
  %11836 = vmatprep.mubr.bf16.mxu0 0
  %11837 = vmatmul.mubr.bf16.gmra.mrb[0].mxu0 %v11554
  %v11838 = vpop.f32.mrb[0].mxu0
  %v11839 = vadd.f32 0.0, %v11838
  %v11840 = vpop.f32.mrb[0].mxu0
  %v11841 = vpop.f32.mrb[0].mxu0
  %v11842 = vadd.f32 0.0, %v11841
  %v11843 = vpop.f32.mrb[0].mxu0
  %11844 = vdwg.mxu0
  %v11845 = vadd.f32 %v11447, %v11591
  %v11846 = vadd.f32 %v11448, %v11594
  %v11847 = vadd.f32 %v11449, %v11599
  %v11848 = vadd.f32 %v11450, %v11602
  %v11849 = vadd.f32 %v11451, %v11607
  %v11850 = vadd.f32 %v11452, %v11610
  %v11851 = vadd.f32 %v11453, %v11615
  %v11852 = vadd.f32 %v11454, %v11618
  %v11853 = vadd.f32 %v11455, %v11623
  %v11854 = vadd.f32 %v11456, %v11626
  %v11855 = vadd.f32 %v11457, %v11631
  %v11856 = vadd.f32 %v11458, %v11634
  %v11857 = vadd.f32 %v11459, %v11639
  %v11858 = vadd.f32 %v11460, %v11642
  %v11859 = vadd.f32 %v11461, %v11647
  %v11860 = vadd.f32 %v11462, %v11650
  %v11861 = vadd.f32 %v11463, %v11655
  %v11862 = vadd.f32 %v11464, %v11658
  %v11863 = vadd.f32 %v11465, %v11663
  %v11864 = vadd.f32 %v11466, %v11666
  %v11865 = vadd.f32 %v11467, %v11671
  %v11866 = vadd.f32 %v11468, %v11674
  %v11867 = vadd.f32 %v11469, %v11679
  %v11868 = vadd.f32 %v11470, %v11682
  %v11869 = vadd.f32 %v11471, %v11687
  %v11870 = vadd.f32 %v11472, %v11690
  %v11871 = vadd.f32 %v11473, %v11695
  %v11872 = vadd.f32 %v11474, %v11698
  %v11873 = vadd.f32 %v11475, %v11703
  %v11874 = vadd.f32 %v11476, %v11706
  %v11875 = vadd.f32 %v11477, %v11711
  %v11876 = vadd.f32 %v11478, %v11714
  %v11877 = vadd.f32 %v11479, %v11719
  %v11878 = vadd.f32 %v11480, %v11722
  %v11879 = vadd.f32 %v11481, %v11727
  %v11880 = vadd.f32 %v11482, %v11730
  %v11881 = vadd.f32 %v11483, %v11735
  %v11882 = vadd.f32 %v11484, %v11738
  %v11883 = vadd.f32 %v11485, %v11743
  %v11884 = vadd.f32 %v11486, %v11746
  %v11885 = vadd.f32 %v11487, %v11751
  %v11886 = vadd.f32 %v11488, %v11754
  %v11887 = vadd.f32 %v11489, %v11759
  %v11888 = vadd.f32 %v11490, %v11762
  %v11889 = vadd.f32 %v11491, %v11767
  %v11890 = vadd.f32 %v11492, %v11770
  %v11891 = vadd.f32 %v11493, %v11775
  %v11892 = vadd.f32 %v11494, %v11778
  %v11893 = vadd.f32 %v11495, %v11783
  %v11894 = vadd.f32 %v11496, %v11786
  %v11895 = vadd.f32 %v11497, %v11791
  %v11896 = vadd.f32 %v11498, %v11794
  %v11897 = vadd.f32 %v11499, %v11799
  %v11898 = vadd.f32 %v11500, %v11802
  %v11899 = vadd.f32 %v11501, %v11807
  %v11900 = vadd.f32 %v11502, %v11810
  %v11901 = vadd.f32 %v11503, %v11815
  %v11902 = vadd.f32 %v11504, %v11818
  %v11903 = vadd.f32 %v11505, %v11823
  %v11904 = vadd.f32 %v11506, %v11826
  %v11905 = vadd.f32 %v11507, %v11831
  %v11906 = vadd.f32 %v11508, %v11834
  %v11907 = vadd.f32 %v11509, %v11839
  %v11908 = vadd.f32 %v11510, %v11842
  %v11909 = vrot.slane %v11082, 5
  %v11910 = vrot.slane %v11085, 6
  %v11911 = vor.u32 %v11909, %v11910
  %v11912 = vrot.slane %v11911, 4
  %v11913 = vrot.slane %v11095, 5
  %v11914 = vrot.slane %v11091, 6
  %v11915 = vor.u32 %v11913, %v11914
  %v11916 = vsel %vm2797, %v11912, %v11915
  %v11917 = vrot.slane %v11915, 4
  %v11918 = vshrl.u32 %v82, 16
  %v11920 = vrot.slane %v11918, 5
  %v11921 = vrot.slane %v11101, 6
  %v11922 = vor.u32 %v11920, %v11921
  %v11923 = vsel %vm2797, %v11917, %v11922
  %v11924 = vrot.slane %v11106, 5
  %v11925 = vrot.slane %v11109, 6
  %v11926 = vor.u32 %v11924, %v11925
  %v11927 = vrot.slane %v11926, 4
  %v11928 = vrot.slane %v11119, 5
  %v11929 = vrot.slane %v11115, 6
  %v11930 = vor.u32 %v11928, %v11929
  %v11931 = vsel %vm2797, %v11927, %v11930
  %v11932 = vrot.slane %v11930, 4
  %v11933 = vshrl.u32 %v142, 16
  %v11935 = vrot.slane %v11933, 5
  %v11936 = vrot.slane %v11125, 6
  %v11937 = vor.u32 %v11935, %v11936
  %v11938 = vsel %vm2797, %v11932, %v11937
  %s11939 = scalar_lea.vmem %s1, 368
  %v11940 = vld [vmem:[%s11939] sm:$0xf]
  %v11941 = vld [vmem:[%s11939 + $0x4] sm:$0xf]
  %v11942 = vld [vmem:[%s11939 + $0x8] sm:$0xf]
  %v11943 = vld [vmem:[%s11939 + $0xc] sm:$0xf]
  %v11944 = vunpack.c.l.b16 %v11916
  %v11945 = vunpack.c.l.b16 %v11923
  %v11946 = vunpack.c.l.b16 %v11931
  %v11947 = vunpack.c.l.b16 %v11938
  %v11948 = vpack.c.b16 %v11945, %v11944
  %v11949 = vpack.c.b16 %v11947, %v11946
  %v11954 = vunpack.c.l.b16 %v11940
  %v11955 = vunpack.c.l.b16 %v11941
  %v11956 = vunpack.c.l.b16 %v11942
  %v11957 = vunpack.c.l.b16 %v11943
  %v11958 = vpack.c.b16 %v11955, %v11954
  %v11959 = vpack.c.b16 %v11957, %v11956
  %v11963 = vsel %vm1031, %v11948, 0
  %v11966 = vsel %vm1031, %v11949, 0
  %11968 = vmatprep.subr.bf16.mxu0 0
  %11969 = vmatpush1.bf16.msra.mxu0 %v11958
  %11970 = vmatprep.subr.bf16.mxu0 0
  %11971 = vmatpush1.bf16.msra.mxu0 %v11959
  %11972 = vmatprep.subr.bf16.mxu0 0
  %11973 = vmatpush1.bf16.msra.mxu0 0
  %11974 = vmatprep.subr.bf16.mxu0 0
  %11975 = vmatpush1.bf16.msra.mxu0 0
  %11976 = vmatprep.subr.bf16.mxu0 0
  %11977 = vmatpush1.bf16.msra.mxu0 0
  %11978 = vmatprep.subr.bf16.mxu0 0
  %11979 = vmatpush1.bf16.msra.mxu0 0
  %11980 = vmatprep.subr.bf16.mxu0 0
  %11981 = vmatpush1.bf16.msra.mxu0 0
  %11982 = vmatprep.subr.bf16.mxu0 0
  %11983 = vmatpush1.bf16.msra.mxu0 0
  %11984 = vmatprep.subr.bf16.mxu0 0
  %11985 = vmatpush1.bf16.msra.mxu0 0
  %11986 = vmatprep.subr.bf16.mxu0 0
  %11987 = vmatpush1.bf16.msra.mxu0 0
  %11988 = vmatprep.subr.bf16.mxu0 0
  %11989 = vmatpush1.bf16.msra.mxu0 0
  %11990 = vmatprep.subr.bf16.mxu0 0
  %11991 = vmatpush1.bf16.msra.mxu0 0
  %11992 = vmatprep.subr.bf16.mxu0 0
  %11993 = vmatpush1.bf16.msra.mxu0 0
  %11994 = vmatprep.subr.bf16.mxu0 0
  %11995 = vmatpush1.bf16.msra.mxu0 0
  %11996 = vmatprep.subr.bf16.mxu0 0
  %11997 = vmatpush1.bf16.msra.mxu0 0
  %11998 = vmatprep.subr.bf16.mxu0 0
  %11999 = vmatpush1.bf16.msra.mxu0 0
  %12000 = vmatprep.mubr.bf16.mxu0 0
  %12001 = vmatmul.mubr.bf16.gmra.mrb[0].mxu0 %v3404
  %v12002 = vpop.f32.mrb[0].mxu0
  %v12003 = vadd.f32 0.0, %v12002
  %v12004 = vpop.f32.mrb[0].mxu0
  %v12005 = vpop.f32.mrb[0].mxu0
  %v12006 = vadd.f32 0.0, %v12005
  %v12007 = vpop.f32.mrb[0].mxu0
  %12008 = vmatprep.mubr.bf16.mxu0 0
  %12009 = vmatmul.mubr.bf16.gmra.mrb[0].mxu0 %v3407
  %v12010 = vpop.f32.mrb[0].mxu0
  %v12011 = vadd.f32 0.0, %v12010
  %v12012 = vpop.f32.mrb[0].mxu0
  %v12013 = vpop.f32.mrb[0].mxu0
  %v12014 = vadd.f32 0.0, %v12013
  %v12015 = vpop.f32.mrb[0].mxu0
  %12016 = vmatprep.mubr.bf16.mxu0 0
  %12017 = vmatmul.mubr.bf16.gmra.mrb[0].mxu0 %v3410
  %v12018 = vpop.f32.mrb[0].mxu0
  %v12019 = vadd.f32 0.0, %v12018
  %v12020 = vpop.f32.mrb[0].mxu0
  %v12021 = vpop.f32.mrb[0].mxu0
  %v12022 = vadd.f32 0.0, %v12021
  %v12023 = vpop.f32.mrb[0].mxu0
  %12024 = vmatprep.mubr.bf16.mxu0 0
  %12025 = vmatmul.mubr.bf16.gmra.mrb[0].mxu0 %v3413
  %v12026 = vpop.f32.mrb[0].mxu0
  %v12027 = vadd.f32 0.0, %v12026
  %v12028 = vpop.f32.mrb[0].mxu0
  %v12029 = vpop.f32.mrb[0].mxu0
  %v12030 = vadd.f32 0.0, %v12029
  %v12031 = vpop.f32.mrb[0].mxu0
  %12032 = vmatprep.mubr.bf16.mxu0 0
  %12033 = vmatmul.mubr.bf16.gmra.mrb[0].mxu0 %v3416
  %v12034 = vpop.f32.mrb[0].mxu0
  %v12035 = vadd.f32 0.0, %v12034
  %v12036 = vpop.f32.mrb[0].mxu0
  %v12037 = vpop.f32.mrb[0].mxu0
  %v12038 = vadd.f32 0.0, %v12037
  %v12039 = vpop.f32.mrb[0].mxu0
  %12040 = vmatprep.mubr.bf16.mxu0 0
  %12041 = vmatmul.mubr.bf16.gmra.mrb[0].mxu0 %v3419
  %v12042 = vpop.f32.mrb[0].mxu0
  %v12043 = vadd.f32 0.0, %v12042
  %v12044 = vpop.f32.mrb[0].mxu0
  %v12045 = vpop.f32.mrb[0].mxu0
  %v12046 = vadd.f32 0.0, %v12045
  %v12047 = vpop.f32.mrb[0].mxu0
  %12048 = vmatprep.mubr.bf16.mxu0 0
  %12049 = vmatmul.mubr.bf16.gmra.mrb[0].mxu0 %v3422
  %v12050 = vpop.f32.mrb[0].mxu0
  %v12051 = vadd.f32 0.0, %v12050
  %v12052 = vpop.f32.mrb[0].mxu0
  %v12053 = vpop.f32.mrb[0].mxu0
  %v12054 = vadd.f32 0.0, %v12053
  %v12055 = vpop.f32.mrb[0].mxu0
  %12056 = vmatprep.mubr.bf16.mxu0 0
  %12057 = vmatmul.mubr.bf16.gmra.mrb[0].mxu0 %v3425
  %v12058 = vpop.f32.mrb[0].mxu0
  %v12059 = vadd.f32 0.0, %v12058
  %v12060 = vpop.f32.mrb[0].mxu0
  %v12061 = vpop.f32.mrb[0].mxu0
  %v12062 = vadd.f32 0.0, %v12061
  %v12063 = vpop.f32.mrb[0].mxu0
  %12064 = vmatprep.mubr.bf16.mxu0 0
  %12065 = vmatmul.mubr.bf16.gmra.mrb[0].mxu0 %v3428
  %v12066 = vpop.f32.mrb[0].mxu0
  %v12067 = vadd.f32 0.0, %v12066
  %v12068 = vpop.f32.mrb[0].mxu0
  %v12069 = vpop.f32.mrb[0].mxu0
  %v12070 = vadd.f32 0.0, %v12069
  %v12071 = vpop.f32.mrb[0].mxu0
  %12072 = vmatprep.mubr.bf16.mxu0 0
  %12073 = vmatmul.mubr.bf16.gmra.mrb[0].mxu0 %v3431
  %v12074 = vpop.f32.mrb[0].mxu0
  %v12075 = vadd.f32 0.0, %v12074
  %v12076 = vpop.f32.mrb[0].mxu0
  %v12077 = vpop.f32.mrb[0].mxu0
  %v12078 = vadd.f32 0.0, %v12077
  %v12079 = vpop.f32.mrb[0].mxu0
  %12080 = vmatprep.mubr.bf16.mxu0 0
  %12081 = vmatmul.mubr.bf16.gmra.mrb[0].mxu0 %v3434
  %v12082 = vpop.f32.mrb[0].mxu0
  %v12083 = vadd.f32 0.0, %v12082
  %v12084 = vpop.f32.mrb[0].mxu0
  %v12085 = vpop.f32.mrb[0].mxu0
  %v12086 = vadd.f32 0.0, %v12085
  %v12087 = vpop.f32.mrb[0].mxu0
  %12088 = vmatprep.mubr.bf16.mxu0 0
  %12089 = vmatmul.mubr.bf16.gmra.mrb[0].mxu0 %v3437
  %v12090 = vpop.f32.mrb[0].mxu0
  %v12091 = vadd.f32 0.0, %v12090
  %v12092 = vpop.f32.mrb[0].mxu0
  %v12093 = vpop.f32.mrb[0].mxu0
  %v12094 = vadd.f32 0.0, %v12093
  %v12095 = vpop.f32.mrb[0].mxu0
  %12096 = vmatprep.mubr.bf16.mxu0 0
  %12097 = vmatmul.mubr.bf16.gmra.mrb[0].mxu0 %v5897
  %v12098 = vpop.f32.mrb[0].mxu0
  %v12099 = vadd.f32 0.0, %v12098
  %v12100 = vpop.f32.mrb[0].mxu0
  %v12101 = vpop.f32.mrb[0].mxu0
  %v12102 = vadd.f32 0.0, %v12101
  %v12103 = vpop.f32.mrb[0].mxu0
  %12104 = vmatprep.mubr.bf16.mxu0 0
  %12105 = vmatmul.mubr.bf16.gmra.mrb[0].mxu0 %v7919
  %v12106 = vpop.f32.mrb[0].mxu0
  %v12107 = vadd.f32 0.0, %v12106
  %v12108 = vpop.f32.mrb[0].mxu0
  %v12109 = vpop.f32.mrb[0].mxu0
  %v12110 = vadd.f32 0.0, %v12109
  %v12111 = vpop.f32.mrb[0].mxu0
  %12112 = vmatprep.mubr.bf16.mxu0 0
  %12113 = vmatmul.mubr.bf16.gmra.mrb[0].mxu0 %v9941
  %v12114 = vpop.f32.mrb[0].mxu0
  %v12115 = vadd.f32 0.0, %v12114
  %v12116 = vpop.f32.mrb[0].mxu0
  %v12117 = vpop.f32.mrb[0].mxu0
  %v12118 = vadd.f32 0.0, %v12117
  %v12119 = vpop.f32.mrb[0].mxu0
  %12120 = vmatprep.mubr.bf16.mxu0 0
  %12121 = vmatmul.mubr.bf16.gmra.mrb[0].mxu0 %v11963
  %v12122 = vpop.f32.mrb[0].mxu0
  %v12123 = vadd.f32 0.0, %v12122
  %v12124 = vpop.f32.mrb[0].mxu0
  %v12125 = vpop.f32.mrb[0].mxu0
  %v12126 = vadd.f32 0.0, %v12125
  %v12127 = vpop.f32.mrb[0].mxu0
  %12128 = vmatprep.mubr.bf16.mxu0 0
  %12129 = vmatmul.mubr.bf16.gmra.mrb[0].mxu0 %v3452
  %v12130 = vpop.f32.mrb[0].mxu0
  %v12131 = vadd.f32 0.0, %v12130
  %v12132 = vpop.f32.mrb[0].mxu0
  %v12133 = vpop.f32.mrb[0].mxu0
  %v12134 = vadd.f32 0.0, %v12133
  %v12135 = vpop.f32.mrb[0].mxu0
  %12136 = vmatprep.mubr.bf16.mxu0 0
  %12137 = vmatmul.mubr.bf16.gmra.mrb[0].mxu0 %v3455
  %v12138 = vpop.f32.mrb[0].mxu0
  %v12139 = vadd.f32 0.0, %v12138
  %v12140 = vpop.f32.mrb[0].mxu0
  %v12141 = vpop.f32.mrb[0].mxu0
  %v12142 = vadd.f32 0.0, %v12141
  %v12143 = vpop.f32.mrb[0].mxu0
  %12144 = vmatprep.mubr.bf16.mxu0 0
  %12145 = vmatmul.mubr.bf16.gmra.mrb[0].mxu0 %v3458
  %v12146 = vpop.f32.mrb[0].mxu0
  %v12147 = vadd.f32 0.0, %v12146
  %v12148 = vpop.f32.mrb[0].mxu0
  %v12149 = vpop.f32.mrb[0].mxu0
  %v12150 = vadd.f32 0.0, %v12149
  %v12151 = vpop.f32.mrb[0].mxu0
  %12152 = vmatprep.mubr.bf16.mxu0 0
  %12153 = vmatmul.mubr.bf16.gmra.mrb[0].mxu0 %v3461
  %v12154 = vpop.f32.mrb[0].mxu0
  %v12155 = vadd.f32 0.0, %v12154
  %v12156 = vpop.f32.mrb[0].mxu0
  %v12157 = vpop.f32.mrb[0].mxu0
  %v12158 = vadd.f32 0.0, %v12157
  %v12159 = vpop.f32.mrb[0].mxu0
  %12160 = vmatprep.mubr.bf16.mxu0 0
  %12161 = vmatmul.mubr.bf16.gmra.mrb[0].mxu0 %v3464
  %v12162 = vpop.f32.mrb[0].mxu0
  %v12163 = vadd.f32 0.0, %v12162
  %v12164 = vpop.f32.mrb[0].mxu0
  %v12165 = vpop.f32.mrb[0].mxu0
  %v12166 = vadd.f32 0.0, %v12165
  %v12167 = vpop.f32.mrb[0].mxu0
  %12168 = vmatprep.mubr.bf16.mxu0 0
  %12169 = vmatmul.mubr.bf16.gmra.mrb[0].mxu0 %v3467
  %v12170 = vpop.f32.mrb[0].mxu0
  %v12171 = vadd.f32 0.0, %v12170
  %v12172 = vpop.f32.mrb[0].mxu0
  %v12173 = vpop.f32.mrb[0].mxu0
  %v12174 = vadd.f32 0.0, %v12173
  %v12175 = vpop.f32.mrb[0].mxu0
  %12176 = vmatprep.mubr.bf16.mxu0 0
  %12177 = vmatmul.mubr.bf16.gmra.mrb[0].mxu0 %v3470
  %v12178 = vpop.f32.mrb[0].mxu0
  %v12179 = vadd.f32 0.0, %v12178
  %v12180 = vpop.f32.mrb[0].mxu0
  %v12181 = vpop.f32.mrb[0].mxu0
  %v12182 = vadd.f32 0.0, %v12181
  %v12183 = vpop.f32.mrb[0].mxu0
  %12184 = vmatprep.mubr.bf16.mxu0 0
  %12185 = vmatmul.mubr.bf16.gmra.mrb[0].mxu0 %v3473
  %v12186 = vpop.f32.mrb[0].mxu0
  %v12187 = vadd.f32 0.0, %v12186
  %v12188 = vpop.f32.mrb[0].mxu0
  %v12189 = vpop.f32.mrb[0].mxu0
  %v12190 = vadd.f32 0.0, %v12189
  %v12191 = vpop.f32.mrb[0].mxu0
  %12192 = vmatprep.mubr.bf16.mxu0 0
  %12193 = vmatmul.mubr.bf16.gmra.mrb[0].mxu0 %v3476
  %v12194 = vpop.f32.mrb[0].mxu0
  %v12195 = vadd.f32 0.0, %v12194
  %v12196 = vpop.f32.mrb[0].mxu0
  %v12197 = vpop.f32.mrb[0].mxu0
  %v12198 = vadd.f32 0.0, %v12197
  %v12199 = vpop.f32.mrb[0].mxu0
  %12200 = vmatprep.mubr.bf16.mxu0 0
  %12201 = vmatmul.mubr.bf16.gmra.mrb[0].mxu0 %v3479
  %v12202 = vpop.f32.mrb[0].mxu0
  %v12203 = vadd.f32 0.0, %v12202
  %v12204 = vpop.f32.mrb[0].mxu0
  %v12205 = vpop.f32.mrb[0].mxu0
  %v12206 = vadd.f32 0.0, %v12205
  %v12207 = vpop.f32.mrb[0].mxu0
  %12208 = vmatprep.mubr.bf16.mxu0 0
  %12209 = vmatmul.mubr.bf16.gmra.mrb[0].mxu0 %v3482
  %v12210 = vpop.f32.mrb[0].mxu0
  %v12211 = vadd.f32 0.0, %v12210
  %v12212 = vpop.f32.mrb[0].mxu0
  %v12213 = vpop.f32.mrb[0].mxu0
  %v12214 = vadd.f32 0.0, %v12213
  %v12215 = vpop.f32.mrb[0].mxu0
  %12216 = vmatprep.mubr.bf16.mxu0 0
  %12217 = vmatmul.mubr.bf16.gmra.mrb[0].mxu0 %v3485
  %v12218 = vpop.f32.mrb[0].mxu0
  %v12219 = vadd.f32 0.0, %v12218
  %v12220 = vpop.f32.mrb[0].mxu0
  %v12221 = vpop.f32.mrb[0].mxu0
  %v12222 = vadd.f32 0.0, %v12221
  %v12223 = vpop.f32.mrb[0].mxu0
  %12224 = vmatprep.mubr.bf16.mxu0 0
  %12225 = vmatmul.mubr.bf16.gmra.mrb[0].mxu0 %v5900
  %v12226 = vpop.f32.mrb[0].mxu0
  %v12227 = vadd.f32 0.0, %v12226
  %v12228 = vpop.f32.mrb[0].mxu0
  %v12229 = vpop.f32.mrb[0].mxu0
  %v12230 = vadd.f32 0.0, %v12229
  %v12231 = vpop.f32.mrb[0].mxu0
  %12232 = vmatprep.mubr.bf16.mxu0 0
  %12233 = vmatmul.mubr.bf16.gmra.mrb[0].mxu0 %v7922
  %v12234 = vpop.f32.mrb[0].mxu0
  %v12235 = vadd.f32 0.0, %v12234
  %v12236 = vpop.f32.mrb[0].mxu0
  %v12237 = vpop.f32.mrb[0].mxu0
  %v12238 = vadd.f32 0.0, %v12237
  %v12239 = vpop.f32.mrb[0].mxu0
  %12240 = vmatprep.mubr.bf16.mxu0 0
  %12241 = vmatmul.mubr.bf16.gmra.mrb[0].mxu0 %v9944
  %v12242 = vpop.f32.mrb[0].mxu0
  %v12243 = vadd.f32 0.0, %v12242
  %v12244 = vpop.f32.mrb[0].mxu0
  %v12245 = vpop.f32.mrb[0].mxu0
  %v12246 = vadd.f32 0.0, %v12245
  %v12247 = vpop.f32.mrb[0].mxu0
  %12248 = vmatprep.mubr.bf16.mxu0 0
  %12249 = vmatmul.mubr.bf16.gmra.mrb[0].mxu0 %v11966
  %v12250 = vpop.f32.mrb[0].mxu0
  %v12251 = vadd.f32 0.0, %v12250
  %v12252 = vpop.f32.mrb[0].mxu0
  %v12253 = vpop.f32.mrb[0].mxu0
  %v12254 = vadd.f32 0.0, %v12253
  %v12255 = vpop.f32.mrb[0].mxu0
  %12256 = vdwg.mxu0
  %v12257 = vadd.f32 %v11845, %v12003
  %v12258 = vadd.f32 %v11846, %v12006
  %v12259 = vadd.f32 %v11847, %v12011
  %v12260 = vadd.f32 %v11848, %v12014
  %v12261 = vadd.f32 %v11849, %v12019
  %v12262 = vadd.f32 %v11850, %v12022
  %v12263 = vadd.f32 %v11851, %v12027
  %v12264 = vadd.f32 %v11852, %v12030
  %v12265 = vadd.f32 %v11853, %v12035
  %v12266 = vadd.f32 %v11854, %v12038
  %v12267 = vadd.f32 %v11855, %v12043
  %v12268 = vadd.f32 %v11856, %v12046
  %v12269 = vadd.f32 %v11857, %v12051
  %v12270 = vadd.f32 %v11858, %v12054
  %v12271 = vadd.f32 %v11859, %v12059
  %v12272 = vadd.f32 %v11860, %v12062
  %v12273 = vadd.f32 %v11861, %v12067
  %v12274 = vadd.f32 %v11862, %v12070
  %v12275 = vadd.f32 %v11863, %v12075
  %v12276 = vadd.f32 %v11864, %v12078
  %v12277 = vadd.f32 %v11865, %v12083
  %v12278 = vadd.f32 %v11866, %v12086
  %v12279 = vadd.f32 %v11867, %v12091
  %v12280 = vadd.f32 %v11868, %v12094
  %v12281 = vadd.f32 %v11869, %v12099
  %v12282 = vadd.f32 %v11870, %v12102
  %v12283 = vadd.f32 %v11871, %v12107
  %v12284 = vadd.f32 %v11872, %v12110
  %v12285 = vadd.f32 %v11873, %v12115
  %v12286 = vadd.f32 %v11874, %v12118
  %v12287 = vadd.f32 %v11875, %v12123
  %v12288 = vadd.f32 %v11876, %v12126
  %v12289 = vadd.f32 %v11877, %v12131
  %v12290 = vadd.f32 %v11878, %v12134
  %v12291 = vadd.f32 %v11879, %v12139
  %v12292 = vadd.f32 %v11880, %v12142
  %v12293 = vadd.f32 %v11881, %v12147
  %v12294 = vadd.f32 %v11882, %v12150
  %v12295 = vadd.f32 %v11883, %v12155
  %v12296 = vadd.f32 %v11884, %v12158
  %v12297 = vadd.f32 %v11885, %v12163
  %v12298 = vadd.f32 %v11886, %v12166
  %v12299 = vadd.f32 %v11887, %v12171
  %v12300 = vadd.f32 %v11888, %v12174
  %v12301 = vadd.f32 %v11889, %v12179
  %v12302 = vadd.f32 %v11890, %v12182
  %v12303 = vadd.f32 %v11891, %v12187
  %v12304 = vadd.f32 %v11892, %v12190
  %v12305 = vadd.f32 %v11893, %v12195
  %v12306 = vadd.f32 %v11894, %v12198
  %v12307 = vadd.f32 %v11895, %v12203
  %v12308 = vadd.f32 %v11896, %v12206
  %v12309 = vadd.f32 %v11897, %v12211
  %v12310 = vadd.f32 %v11898, %v12214
  %v12311 = vadd.f32 %v11899, %v12219
  %v12312 = vadd.f32 %v11900, %v12222
  %v12313 = vadd.f32 %v11901, %v12227
  %v12314 = vadd.f32 %v11902, %v12230
  %v12315 = vadd.f32 %v11903, %v12235
  %v12316 = vadd.f32 %v11904, %v12238
  %v12317 = vadd.f32 %v11905, %v12243
  %v12318 = vadd.f32 %v11906, %v12246
  %v12319 = vadd.f32 %v11907, %v12251
  %v12320 = vadd.f32 %v11908, %v12254
  %v12321 = vrot.slane %v80, 6
  %v12322 = vrot.slane %v12321, 4
  %v12323 = vrot.slane %v81, 6
  %v12324 = vsel %vm3842, %v12322, %v12323
  %v12325 = vrot.slane %v12323, 4
  %v12326 = vrot.slane %v82, 6
  %v12327 = vsel %vm3842, %v12325, %v12326
  %v12328 = vrot.slane %v140, 6
  %v12329 = vrot.slane %v12328, 4
  %v12330 = vrot.slane %v141, 6
  %v12331 = vsel %vm3842, %v12329, %v12330
  %v12332 = vrot.slane %v12330, 4
  %v12333 = vrot.slane %v142, 6
  %v12334 = vsel %vm3842, %v12332, %v12333
  %s12335 = scalar_lea.vmem %s1, 384
  %v12336 = vld [vmem:[%s12335] sm:$0xf]
  %v12337 = vld [vmem:[%s12335 + $0x4] sm:$0xf]
  %v12338 = vld [vmem:[%s12335 + $0x8] sm:$0xf]
  %v12339 = vld [vmem:[%s12335 + $0xc] sm:$0xf]
  %v12340 = vunpack.c.l.b16 %v12324
  %v12341 = vunpack.c.l.b16 %v12327
  %v12342 = vunpack.c.l.b16 %v12331
  %v12343 = vunpack.c.l.b16 %v12334
  %v12344 = vpack.c.b16 %v12341, %v12340
  %v12345 = vpack.c.b16 %v12343, %v12342
  %v12350 = vunpack.c.l.b16 %v12336
  %v12351 = vunpack.c.l.b16 %v12337
  %v12352 = vunpack.c.l.b16 %v12338
  %v12353 = vunpack.c.l.b16 %v12339
  %v12354 = vpack.c.b16 %v12351, %v12350
  %v12355 = vpack.c.b16 %v12353, %v12352
  %v12359 = vsel %vm1031, %v12344, 0
  %v12362 = vsel %vm1031, %v12345, 0
  %12364 = vmatprep.subr.bf16.mxu0 0
  %12365 = vmatpush1.bf16.msra.mxu0 %v12354
  %12366 = vmatprep.subr.bf16.mxu0 0
  %12367 = vmatpush1.bf16.msra.mxu0 %v12355
  %12368 = vmatprep.subr.bf16.mxu0 0
  %12369 = vmatpush1.bf16.msra.mxu0 0
  %12370 = vmatprep.subr.bf16.mxu0 0
  %12371 = vmatpush1.bf16.msra.mxu0 0
  %12372 = vmatprep.subr.bf16.mxu0 0
  %12373 = vmatpush1.bf16.msra.mxu0 0
  %12374 = vmatprep.subr.bf16.mxu0 0
  %12375 = vmatpush1.bf16.msra.mxu0 0
  %12376 = vmatprep.subr.bf16.mxu0 0
  %12377 = vmatpush1.bf16.msra.mxu0 0
  %12378 = vmatprep.subr.bf16.mxu0 0
  %12379 = vmatpush1.bf16.msra.mxu0 0
  %12380 = vmatprep.subr.bf16.mxu0 0
  %12381 = vmatpush1.bf16.msra.mxu0 0
  %12382 = vmatprep.subr.bf16.mxu0 0
  %12383 = vmatpush1.bf16.msra.mxu0 0
  %12384 = vmatprep.subr.bf16.mxu0 0
  %12385 = vmatpush1.bf16.msra.mxu0 0
  %12386 = vmatprep.subr.bf16.mxu0 0
  %12387 = vmatpush1.bf16.msra.mxu0 0
  %12388 = vmatprep.subr.bf16.mxu0 0
  %12389 = vmatpush1.bf16.msra.mxu0 0
  %12390 = vmatprep.subr.bf16.mxu0 0
  %12391 = vmatpush1.bf16.msra.mxu0 0
  %12392 = vmatprep.subr.bf16.mxu0 0
  %12393 = vmatpush1.bf16.msra.mxu0 0
  %12394 = vmatprep.subr.bf16.mxu0 0
  %12395 = vmatpush1.bf16.msra.mxu0 0
  %12396 = vmatprep.mubr.bf16.mxu0 0
  %12397 = vmatmul.mubr.bf16.gmra.mrb[0].mxu0 %v4193
  %v12398 = vpop.f32.mrb[0].mxu0
  %v12399 = vadd.f32 0.0, %v12398
  %v12400 = vpop.f32.mrb[0].mxu0
  %v12401 = vpop.f32.mrb[0].mxu0
  %v12402 = vadd.f32 0.0, %v12401
  %v12403 = vpop.f32.mrb[0].mxu0
  %12404 = vmatprep.mubr.bf16.mxu0 0
  %12405 = vmatmul.mubr.bf16.gmra.mrb[0].mxu0 %v4196
  %v12406 = vpop.f32.mrb[0].mxu0
  %v12407 = vadd.f32 0.0, %v12406
  %v12408 = vpop.f32.mrb[0].mxu0
  %v12409 = vpop.f32.mrb[0].mxu0
  %v12410 = vadd.f32 0.0, %v12409
  %v12411 = vpop.f32.mrb[0].mxu0
  %12412 = vmatprep.mubr.bf16.mxu0 0
  %12413 = vmatmul.mubr.bf16.gmra.mrb[0].mxu0 %v4199
  %v12414 = vpop.f32.mrb[0].mxu0
  %v12415 = vadd.f32 0.0, %v12414
  %v12416 = vpop.f32.mrb[0].mxu0
  %v12417 = vpop.f32.mrb[0].mxu0
  %v12418 = vadd.f32 0.0, %v12417
  %v12419 = vpop.f32.mrb[0].mxu0
  %12420 = vmatprep.mubr.bf16.mxu0 0
  %12421 = vmatmul.mubr.bf16.gmra.mrb[0].mxu0 %v4202
  %v12422 = vpop.f32.mrb[0].mxu0
  %v12423 = vadd.f32 0.0, %v12422
  %v12424 = vpop.f32.mrb[0].mxu0
  %v12425 = vpop.f32.mrb[0].mxu0
  %v12426 = vadd.f32 0.0, %v12425
  %v12427 = vpop.f32.mrb[0].mxu0
  %12428 = vmatprep.mubr.bf16.mxu0 0
  %12429 = vmatmul.mubr.bf16.gmra.mrb[0].mxu0 %v4205
  %v12430 = vpop.f32.mrb[0].mxu0
  %v12431 = vadd.f32 0.0, %v12430
  %v12432 = vpop.f32.mrb[0].mxu0
  %v12433 = vpop.f32.mrb[0].mxu0
  %v12434 = vadd.f32 0.0, %v12433
  %v12435 = vpop.f32.mrb[0].mxu0
  %12436 = vmatprep.mubr.bf16.mxu0 0
  %12437 = vmatmul.mubr.bf16.gmra.mrb[0].mxu0 %v4208
  %v12438 = vpop.f32.mrb[0].mxu0
  %v12439 = vadd.f32 0.0, %v12438
  %v12440 = vpop.f32.mrb[0].mxu0
  %v12441 = vpop.f32.mrb[0].mxu0
  %v12442 = vadd.f32 0.0, %v12441
  %v12443 = vpop.f32.mrb[0].mxu0
  %12444 = vmatprep.mubr.bf16.mxu0 0
  %12445 = vmatmul.mubr.bf16.gmra.mrb[0].mxu0 %v4211
  %v12446 = vpop.f32.mrb[0].mxu0
  %v12447 = vadd.f32 0.0, %v12446
  %v12448 = vpop.f32.mrb[0].mxu0
  %v12449 = vpop.f32.mrb[0].mxu0
  %v12450 = vadd.f32 0.0, %v12449
  %v12451 = vpop.f32.mrb[0].mxu0
  %12452 = vmatprep.mubr.bf16.mxu0 0
  %12453 = vmatmul.mubr.bf16.gmra.mrb[0].mxu0 %v4214
  %v12454 = vpop.f32.mrb[0].mxu0
  %v12455 = vadd.f32 0.0, %v12454
  %v12456 = vpop.f32.mrb[0].mxu0
  %v12457 = vpop.f32.mrb[0].mxu0
  %v12458 = vadd.f32 0.0, %v12457
  %v12459 = vpop.f32.mrb[0].mxu0
  %12460 = vmatprep.mubr.bf16.mxu0 0
  %12461 = vmatmul.mubr.bf16.gmra.mrb[0].mxu0 %v4217
  %v12462 = vpop.f32.mrb[0].mxu0
  %v12463 = vadd.f32 0.0, %v12462
  %v12464 = vpop.f32.mrb[0].mxu0
  %v12465 = vpop.f32.mrb[0].mxu0
  %v12466 = vadd.f32 0.0, %v12465
  %v12467 = vpop.f32.mrb[0].mxu0
  %12468 = vmatprep.mubr.bf16.mxu0 0
  %12469 = vmatmul.mubr.bf16.gmra.mrb[0].mxu0 %v4220
  %v12470 = vpop.f32.mrb[0].mxu0
  %v12471 = vadd.f32 0.0, %v12470
  %v12472 = vpop.f32.mrb[0].mxu0
  %v12473 = vpop.f32.mrb[0].mxu0
  %v12474 = vadd.f32 0.0, %v12473
  %v12475 = vpop.f32.mrb[0].mxu0
  %12476 = vmatprep.mubr.bf16.mxu0 0
  %12477 = vmatmul.mubr.bf16.gmra.mrb[0].mxu0 %v4223
  %v12478 = vpop.f32.mrb[0].mxu0
  %v12479 = vadd.f32 0.0, %v12478
  %v12480 = vpop.f32.mrb[0].mxu0
  %v12481 = vpop.f32.mrb[0].mxu0
  %v12482 = vadd.f32 0.0, %v12481
  %v12483 = vpop.f32.mrb[0].mxu0
  %12484 = vmatprep.mubr.bf16.mxu0 0
  %12485 = vmatmul.mubr.bf16.gmra.mrb[0].mxu0 %v4226
  %v12486 = vpop.f32.mrb[0].mxu0
  %v12487 = vadd.f32 0.0, %v12486
  %v12488 = vpop.f32.mrb[0].mxu0
  %v12489 = vpop.f32.mrb[0].mxu0
  %v12490 = vadd.f32 0.0, %v12489
  %v12491 = vpop.f32.mrb[0].mxu0
  %12492 = vmatprep.mubr.bf16.mxu0 0
  %12493 = vmatmul.mubr.bf16.gmra.mrb[0].mxu0 %v6293
  %v12494 = vpop.f32.mrb[0].mxu0
  %v12495 = vadd.f32 0.0, %v12494
  %v12496 = vpop.f32.mrb[0].mxu0
  %v12497 = vpop.f32.mrb[0].mxu0
  %v12498 = vadd.f32 0.0, %v12497
  %v12499 = vpop.f32.mrb[0].mxu0
  %12500 = vmatprep.mubr.bf16.mxu0 0
  %12501 = vmatmul.mubr.bf16.gmra.mrb[0].mxu0 %v8315
  %v12502 = vpop.f32.mrb[0].mxu0
  %v12503 = vadd.f32 0.0, %v12502
  %v12504 = vpop.f32.mrb[0].mxu0
  %v12505 = vpop.f32.mrb[0].mxu0
  %v12506 = vadd.f32 0.0, %v12505
  %v12507 = vpop.f32.mrb[0].mxu0
  %12508 = vmatprep.mubr.bf16.mxu0 0
  %12509 = vmatmul.mubr.bf16.gmra.mrb[0].mxu0 %v10337
  %v12510 = vpop.f32.mrb[0].mxu0
  %v12511 = vadd.f32 0.0, %v12510
  %v12512 = vpop.f32.mrb[0].mxu0
  %v12513 = vpop.f32.mrb[0].mxu0
  %v12514 = vadd.f32 0.0, %v12513
  %v12515 = vpop.f32.mrb[0].mxu0
  %12516 = vmatprep.mubr.bf16.mxu0 0
  %12517 = vmatmul.mubr.bf16.gmra.mrb[0].mxu0 %v12359
  %v12518 = vpop.f32.mrb[0].mxu0
  %v12519 = vadd.f32 0.0, %v12518
  %v12520 = vpop.f32.mrb[0].mxu0
  %v12521 = vpop.f32.mrb[0].mxu0
  %v12522 = vadd.f32 0.0, %v12521
  %v12523 = vpop.f32.mrb[0].mxu0
  %12524 = vmatprep.mubr.bf16.mxu0 0
  %12525 = vmatmul.mubr.bf16.gmra.mrb[0].mxu0 %v4241
  %v12526 = vpop.f32.mrb[0].mxu0
  %v12527 = vadd.f32 0.0, %v12526
  %v12528 = vpop.f32.mrb[0].mxu0
  %v12529 = vpop.f32.mrb[0].mxu0
  %v12530 = vadd.f32 0.0, %v12529
  %v12531 = vpop.f32.mrb[0].mxu0
  %12532 = vmatprep.mubr.bf16.mxu0 0
  %12533 = vmatmul.mubr.bf16.gmra.mrb[0].mxu0 %v4244
  %v12534 = vpop.f32.mrb[0].mxu0
  %v12535 = vadd.f32 0.0, %v12534
  %v12536 = vpop.f32.mrb[0].mxu0
  %v12537 = vpop.f32.mrb[0].mxu0
  %v12538 = vadd.f32 0.0, %v12537
  %v12539 = vpop.f32.mrb[0].mxu0
  %12540 = vmatprep.mubr.bf16.mxu0 0
  %12541 = vmatmul.mubr.bf16.gmra.mrb[0].mxu0 %v4247
  %v12542 = vpop.f32.mrb[0].mxu0
  %v12543 = vadd.f32 0.0, %v12542
  %v12544 = vpop.f32.mrb[0].mxu0
  %v12545 = vpop.f32.mrb[0].mxu0
  %v12546 = vadd.f32 0.0, %v12545
  %v12547 = vpop.f32.mrb[0].mxu0
  %12548 = vmatprep.mubr.bf16.mxu0 0
  %12549 = vmatmul.mubr.bf16.gmra.mrb[0].mxu0 %v4250
  %v12550 = vpop.f32.mrb[0].mxu0
  %v12551 = vadd.f32 0.0, %v12550
  %v12552 = vpop.f32.mrb[0].mxu0
  %v12553 = vpop.f32.mrb[0].mxu0
  %v12554 = vadd.f32 0.0, %v12553
  %v12555 = vpop.f32.mrb[0].mxu0
  %12556 = vmatprep.mubr.bf16.mxu0 0
  %12557 = vmatmul.mubr.bf16.gmra.mrb[0].mxu0 %v4253
  %v12558 = vpop.f32.mrb[0].mxu0
  %v12559 = vadd.f32 0.0, %v12558
  %v12560 = vpop.f32.mrb[0].mxu0
  %v12561 = vpop.f32.mrb[0].mxu0
  %v12562 = vadd.f32 0.0, %v12561
  %v12563 = vpop.f32.mrb[0].mxu0
  %12564 = vmatprep.mubr.bf16.mxu0 0
  %12565 = vmatmul.mubr.bf16.gmra.mrb[0].mxu0 %v4256
  %v12566 = vpop.f32.mrb[0].mxu0
  %v12567 = vadd.f32 0.0, %v12566
  %v12568 = vpop.f32.mrb[0].mxu0
  %v12569 = vpop.f32.mrb[0].mxu0
  %v12570 = vadd.f32 0.0, %v12569
  %v12571 = vpop.f32.mrb[0].mxu0
  %12572 = vmatprep.mubr.bf16.mxu0 0
  %12573 = vmatmul.mubr.bf16.gmra.mrb[0].mxu0 %v4259
  %v12574 = vpop.f32.mrb[0].mxu0
  %v12575 = vadd.f32 0.0, %v12574
  %v12576 = vpop.f32.mrb[0].mxu0
  %v12577 = vpop.f32.mrb[0].mxu0
  %v12578 = vadd.f32 0.0, %v12577
  %v12579 = vpop.f32.mrb[0].mxu0
  %12580 = vmatprep.mubr.bf16.mxu0 0
  %12581 = vmatmul.mubr.bf16.gmra.mrb[0].mxu0 %v4262
  %v12582 = vpop.f32.mrb[0].mxu0
  %v12583 = vadd.f32 0.0, %v12582
  %v12584 = vpop.f32.mrb[0].mxu0
  %v12585 = vpop.f32.mrb[0].mxu0
  %v12586 = vadd.f32 0.0, %v12585
  %v12587 = vpop.f32.mrb[0].mxu0
  %12588 = vmatprep.mubr.bf16.mxu0 0
  %12589 = vmatmul.mubr.bf16.gmra.mrb[0].mxu0 %v4265
  %v12590 = vpop.f32.mrb[0].mxu0
  %v12591 = vadd.f32 0.0, %v12590
  %v12592 = vpop.f32.mrb[0].mxu0
  %v12593 = vpop.f32.mrb[0].mxu0
  %v12594 = vadd.f32 0.0, %v12593
  %v12595 = vpop.f32.mrb[0].mxu0
  %12596 = vmatprep.mubr.bf16.mxu0 0
  %12597 = vmatmul.mubr.bf16.gmra.mrb[0].mxu0 %v4268
  %v12598 = vpop.f32.mrb[0].mxu0
  %v12599 = vadd.f32 0.0, %v12598
  %v12600 = vpop.f32.mrb[0].mxu0
  %v12601 = vpop.f32.mrb[0].mxu0
  %v12602 = vadd.f32 0.0, %v12601
  %v12603 = vpop.f32.mrb[0].mxu0
  %12604 = vmatprep.mubr.bf16.mxu0 0
  %12605 = vmatmul.mubr.bf16.gmra.mrb[0].mxu0 %v4271
  %v12606 = vpop.f32.mrb[0].mxu0
  %v12607 = vadd.f32 0.0, %v12606
  %v12608 = vpop.f32.mrb[0].mxu0
  %v12609 = vpop.f32.mrb[0].mxu0
  %v12610 = vadd.f32 0.0, %v12609
  %v12611 = vpop.f32.mrb[0].mxu0
  %12612 = vmatprep.mubr.bf16.mxu0 0
  %12613 = vmatmul.mubr.bf16.gmra.mrb[0].mxu0 %v4274
  %v12614 = vpop.f32.mrb[0].mxu0
  %v12615 = vadd.f32 0.0, %v12614
  %v12616 = vpop.f32.mrb[0].mxu0
  %v12617 = vpop.f32.mrb[0].mxu0
  %v12618 = vadd.f32 0.0, %v12617
  %v12619 = vpop.f32.mrb[0].mxu0
  %12620 = vmatprep.mubr.bf16.mxu0 0
  %12621 = vmatmul.mubr.bf16.gmra.mrb[0].mxu0 %v6296
  %v12622 = vpop.f32.mrb[0].mxu0
  %v12623 = vadd.f32 0.0, %v12622
  %v12624 = vpop.f32.mrb[0].mxu0
  %v12625 = vpop.f32.mrb[0].mxu0
  %v12626 = vadd.f32 0.0, %v12625
  %v12627 = vpop.f32.mrb[0].mxu0
  %12628 = vmatprep.mubr.bf16.mxu0 0
  %12629 = vmatmul.mubr.bf16.gmra.mrb[0].mxu0 %v8318
  %v12630 = vpop.f32.mrb[0].mxu0
  %v12631 = vadd.f32 0.0, %v12630
  %v12632 = vpop.f32.mrb[0].mxu0
  %v12633 = vpop.f32.mrb[0].mxu0
  %v12634 = vadd.f32 0.0, %v12633
  %v12635 = vpop.f32.mrb[0].mxu0
  %12636 = vmatprep.mubr.bf16.mxu0 0
  %12637 = vmatmul.mubr.bf16.gmra.mrb[0].mxu0 %v10340
  %v12638 = vpop.f32.mrb[0].mxu0
  %v12639 = vadd.f32 0.0, %v12638
  %v12640 = vpop.f32.mrb[0].mxu0
  %v12641 = vpop.f32.mrb[0].mxu0
  %v12642 = vadd.f32 0.0, %v12641
  %v12643 = vpop.f32.mrb[0].mxu0
  %12644 = vmatprep.mubr.bf16.mxu0 0
  %12645 = vmatmul.mubr.bf16.gmra.mrb[0].mxu0 %v12362
  %v12646 = vpop.f32.mrb[0].mxu0
  %v12647 = vadd.f32 0.0, %v12646
  %v12648 = vpop.f32.mrb[0].mxu0
  %v12649 = vpop.f32.mrb[0].mxu0
  %v12650 = vadd.f32 0.0, %v12649
  %v12651 = vpop.f32.mrb[0].mxu0
  %12652 = vdwg.mxu0
  %v12653 = vadd.f32 %v12257, %v12399
  %v12654 = vadd.f32 %v12258, %v12402
  %v12655 = vadd.f32 %v12259, %v12407
  %v12656 = vadd.f32 %v12260, %v12410
  %v12657 = vadd.f32 %v12261, %v12415
  %v12658 = vadd.f32 %v12262, %v12418
  %v12659 = vadd.f32 %v12263, %v12423
  %v12660 = vadd.f32 %v12264, %v12426
  %v12661 = vadd.f32 %v12265, %v12431
  %v12662 = vadd.f32 %v12266, %v12434
  %v12663 = vadd.f32 %v12267, %v12439
  %v12664 = vadd.f32 %v12268, %v12442
  %v12665 = vadd.f32 %v12269, %v12447
  %v12666 = vadd.f32 %v12270, %v12450
  %v12667 = vadd.f32 %v12271, %v12455
  %v12668 = vadd.f32 %v12272, %v12458
  %v12669 = vadd.f32 %v12273, %v12463
  %v12670 = vadd.f32 %v12274, %v12466
  %v12671 = vadd.f32 %v12275, %v12471
  %v12672 = vadd.f32 %v12276, %v12474
  %v12673 = vadd.f32 %v12277, %v12479
  %v12674 = vadd.f32 %v12278, %v12482
  %v12675 = vadd.f32 %v12279, %v12487
  %v12676 = vadd.f32 %v12280, %v12490
  %v12677 = vadd.f32 %v12281, %v12495
  %v12678 = vadd.f32 %v12282, %v12498
  %v12679 = vadd.f32 %v12283, %v12503
  %v12680 = vadd.f32 %v12284, %v12506
  %v12681 = vadd.f32 %v12285, %v12511
  %v12682 = vadd.f32 %v12286, %v12514
  %v12683 = vadd.f32 %v12287, %v12519
  %v12684 = vadd.f32 %v12288, %v12522
  %v12685 = vadd.f32 %v12289, %v12527
  %v12686 = vadd.f32 %v12290, %v12530
  %v12687 = vadd.f32 %v12291, %v12535
  %v12688 = vadd.f32 %v12292, %v12538
  %v12689 = vadd.f32 %v12293, %v12543
  %v12690 = vadd.f32 %v12294, %v12546
  %v12691 = vadd.f32 %v12295, %v12551
  %v12692 = vadd.f32 %v12296, %v12554
  %v12693 = vadd.f32 %v12297, %v12559
  %v12694 = vadd.f32 %v12298, %v12562
  %v12695 = vadd.f32 %v12299, %v12567
  %v12696 = vadd.f32 %v12300, %v12570
  %v12697 = vadd.f32 %v12301, %v12575
  %v12698 = vadd.f32 %v12302, %v12578
  %v12699 = vadd.f32 %v12303, %v12583
  %v12700 = vadd.f32 %v12304, %v12586
  %v12701 = vadd.f32 %v12305, %v12591
  %v12702 = vadd.f32 %v12306, %v12594
  %v12703 = vadd.f32 %v12307, %v12599
  %v12704 = vadd.f32 %v12308, %v12602
  %v12705 = vadd.f32 %v12309, %v12607
  %v12706 = vadd.f32 %v12310, %v12610
  %v12707 = vadd.f32 %v12311, %v12615
  %v12708 = vadd.f32 %v12312, %v12618
  %v12709 = vadd.f32 %v12313, %v12623
  %v12710 = vadd.f32 %v12314, %v12626
  %v12711 = vadd.f32 %v12315, %v12631
  %v12712 = vadd.f32 %v12316, %v12634
  %v12713 = vadd.f32 %v12317, %v12639
  %v12714 = vadd.f32 %v12318, %v12642
  %v12715 = vadd.f32 %v12319, %v12647
  %v12716 = vadd.f32 %v12320, %v12650
  %v12717 = vld [vmem:[%s2] sm:$0x1]
  %v12719 = vlaneseq
  %v12720 = vshrl.u32 %v12719, 7
  %v12721 = vsub.s32 0, %v12720
  %v12722 = vrot.slane %v12717, %v12721
  %v12724 = vadd.f32 %v12653, %v12722
  %v12725 = vadd.f32 %v12654, %v12722
  %v12726 = vadd.f32 %v12655, %v12722
  %v12727 = vadd.f32 %v12656, %v12722
  %v12728 = vadd.f32 %v12657, %v12722
  %v12729 = vadd.f32 %v12658, %v12722
  %v12730 = vadd.f32 %v12659, %v12722
  %v12731 = vadd.f32 %v12660, %v12722
  %v12732 = vadd.f32 %v12661, %v12722
  %v12733 = vadd.f32 %v12662, %v12722
  %v12734 = vadd.f32 %v12663, %v12722
  %v12735 = vadd.f32 %v12664, %v12722
  %v12736 = vadd.f32 %v12665, %v12722
  %v12737 = vadd.f32 %v12666, %v12722
  %v12738 = vadd.f32 %v12667, %v12722
  %v12739 = vadd.f32 %v12668, %v12722
  %v12740 = vadd.f32 %v12669, %v12722
  %v12741 = vadd.f32 %v12670, %v12722
  %v12742 = vadd.f32 %v12671, %v12722
  %v12743 = vadd.f32 %v12672, %v12722
  %v12744 = vadd.f32 %v12673, %v12722
  %v12745 = vadd.f32 %v12674, %v12722
  %v12746 = vadd.f32 %v12675, %v12722
  %v12747 = vadd.f32 %v12676, %v12722
  %v12748 = vadd.f32 %v12677, %v12722
  %v12749 = vadd.f32 %v12678, %v12722
  %v12750 = vadd.f32 %v12679, %v12722
  %v12751 = vadd.f32 %v12680, %v12722
  %v12752 = vadd.f32 %v12681, %v12722
  %v12753 = vadd.f32 %v12682, %v12722
  %v12754 = vadd.f32 %v12683, %v12722
  %v12755 = vadd.f32 %v12684, %v12722
  %v12756 = vadd.f32 %v12685, %v12722
  %v12757 = vadd.f32 %v12686, %v12722
  %v12758 = vadd.f32 %v12687, %v12722
  %v12759 = vadd.f32 %v12688, %v12722
  %v12760 = vadd.f32 %v12689, %v12722
  %v12761 = vadd.f32 %v12690, %v12722
  %v12762 = vadd.f32 %v12691, %v12722
  %v12763 = vadd.f32 %v12692, %v12722
  %v12764 = vadd.f32 %v12693, %v12722
  %v12765 = vadd.f32 %v12694, %v12722
  %v12766 = vadd.f32 %v12695, %v12722
  %v12767 = vadd.f32 %v12696, %v12722
  %v12768 = vadd.f32 %v12697, %v12722
  %v12769 = vadd.f32 %v12698, %v12722
  %v12770 = vadd.f32 %v12699, %v12722
  %v12771 = vadd.f32 %v12700, %v12722
  %v12772 = vadd.f32 %v12701, %v12722
  %v12773 = vadd.f32 %v12702, %v12722
  %v12774 = vadd.f32 %v12703, %v12722
  %v12775 = vadd.f32 %v12704, %v12722
  %v12776 = vadd.f32 %v12705, %v12722
  %v12777 = vadd.f32 %v12706, %v12722
  %v12778 = vadd.f32 %v12707, %v12722
  %v12779 = vadd.f32 %v12708, %v12722
  %v12780 = vadd.f32 %v12709, %v12722
  %v12781 = vadd.f32 %v12710, %v12722
  %v12782 = vadd.f32 %v12711, %v12722
  %v12783 = vadd.f32 %v12712, %v12722
  %v12784 = vadd.f32 %v12713, %v12722
  %v12785 = vadd.f32 %v12714, %v12722
  %v12786 = vadd.f32 %v12715, %v12722
  %v12787 = vadd.f32 %v12716, %v12722
  %vm12788 = vcmp.gt.f32.partialorder %v12724, 0.0
  %vm12789 = vcmp.gt.f32.partialorder %v12725, 0.0
  %vm12790 = vcmp.gt.f32.partialorder %v12726, 0.0
  %vm12791 = vcmp.gt.f32.partialorder %v12727, 0.0
  %vm12792 = vcmp.gt.f32.partialorder %v12728, 0.0
  %vm12793 = vcmp.gt.f32.partialorder %v12729, 0.0
  %vm12794 = vcmp.gt.f32.partialorder %v12730, 0.0
  %vm12795 = vcmp.gt.f32.partialorder %v12731, 0.0
  %vm12796 = vcmp.gt.f32.partialorder %v12732, 0.0
  %vm12797 = vcmp.gt.f32.partialorder %v12733, 0.0
  %vm12798 = vcmp.gt.f32.partialorder %v12734, 0.0
  %vm12799 = vcmp.gt.f32.partialorder %v12735, 0.0
  %vm12800 = vcmp.gt.f32.partialorder %v12736, 0.0
  %vm12801 = vcmp.gt.f32.partialorder %v12737, 0.0
  %vm12802 = vcmp.gt.f32.partialorder %v12738, 0.0
  %vm12803 = vcmp.gt.f32.partialorder %v12739, 0.0
  %vm12804 = vcmp.gt.f32.partialorder %v12740, 0.0
  %vm12805 = vcmp.gt.f32.partialorder %v12741, 0.0
  %vm12806 = vcmp.gt.f32.partialorder %v12742, 0.0
  %vm12807 = vcmp.gt.f32.partialorder %v12743, 0.0
  %vm12808 = vcmp.gt.f32.partialorder %v12744, 0.0
  %vm12809 = vcmp.gt.f32.partialorder %v12745, 0.0
  %vm12810 = vcmp.gt.f32.partialorder %v12746, 0.0
  %vm12811 = vcmp.gt.f32.partialorder %v12747, 0.0
  %vm12812 = vcmp.gt.f32.partialorder %v12748, 0.0
  %vm12813 = vcmp.gt.f32.partialorder %v12749, 0.0
  %vm12814 = vcmp.gt.f32.partialorder %v12750, 0.0
  %vm12815 = vcmp.gt.f32.partialorder %v12751, 0.0
  %vm12816 = vcmp.gt.f32.partialorder %v12752, 0.0
  %vm12817 = vcmp.gt.f32.partialorder %v12753, 0.0
  %vm12818 = vcmp.gt.f32.partialorder %v12754, 0.0
  %vm12819 = vcmp.gt.f32.partialorder %v12755, 0.0
  %vm12820 = vcmp.gt.f32.partialorder %v12756, 0.0
  %vm12821 = vcmp.gt.f32.partialorder %v12757, 0.0
  %vm12822 = vcmp.gt.f32.partialorder %v12758, 0.0
  %vm12823 = vcmp.gt.f32.partialorder %v12759, 0.0
  %vm12824 = vcmp.gt.f32.partialorder %v12760, 0.0
  %vm12825 = vcmp.gt.f32.partialorder %v12761, 0.0
  %vm12826 = vcmp.gt.f32.partialorder %v12762, 0.0
  %vm12827 = vcmp.gt.f32.partialorder %v12763, 0.0
  %vm12828 = vcmp.gt.f32.partialorder %v12764, 0.0
  %vm12829 = vcmp.gt.f32.partialorder %v12765, 0.0
  %vm12830 = vcmp.gt.f32.partialorder %v12766, 0.0
  %vm12831 = vcmp.gt.f32.partialorder %v12767, 0.0
  %vm12832 = vcmp.gt.f32.partialorder %v12768, 0.0
  %vm12833 = vcmp.gt.f32.partialorder %v12769, 0.0
  %vm12834 = vcmp.gt.f32.partialorder %v12770, 0.0
  %vm12835 = vcmp.gt.f32.partialorder %v12771, 0.0
  %vm12836 = vcmp.gt.f32.partialorder %v12772, 0.0
  %vm12837 = vcmp.gt.f32.partialorder %v12773, 0.0
  %vm12838 = vcmp.gt.f32.partialorder %v12774, 0.0
  %vm12839 = vcmp.gt.f32.partialorder %v12775, 0.0
  %vm12840 = vcmp.gt.f32.partialorder %v12776, 0.0
  %vm12841 = vcmp.gt.f32.partialorder %v12777, 0.0
  %vm12842 = vcmp.gt.f32.partialorder %v12778, 0.0
  %vm12843 = vcmp.gt.f32.partialorder %v12779, 0.0
  %vm12844 = vcmp.gt.f32.partialorder %v12780, 0.0
  %vm12845 = vcmp.gt.f32.partialorder %v12781, 0.0
  %vm12846 = vcmp.gt.f32.partialorder %v12782, 0.0
  %vm12847 = vcmp.gt.f32.partialorder %v12783, 0.0
  %vm12848 = vcmp.gt.f32.partialorder %v12784, 0.0
  %vm12849 = vcmp.gt.f32.partialorder %v12785, 0.0
  %vm12850 = vcmp.gt.f32.partialorder %v12786, 0.0
  %vm12851 = vcmp.gt.f32.partialorder %v12787, 0.0
  %v12852 = vmul.f32 %v12724, 0.2
  %v12853 = vmul.f32 %v12725, 0.2
  %v12854 = vmul.f32 %v12726, 0.2
  %v12855 = vmul.f32 %v12727, 0.2
  %v12856 = vmul.f32 %v12728, 0.2
  %v12857 = vmul.f32 %v12729, 0.2
  %v12858 = vmul.f32 %v12730, 0.2
  %v12859 = vmul.f32 %v12731, 0.2
  %v12860 = vmul.f32 %v12732, 0.2
  %v12861 = vmul.f32 %v12733, 0.2
  %v12862 = vmul.f32 %v12734, 0.2
  %v12863 = vmul.f32 %v12735, 0.2
  %v12864 = vmul.f32 %v12736, 0.2
  %v12865 = vmul.f32 %v12737, 0.2
  %v12866 = vmul.f32 %v12738, 0.2
  %v12867 = vmul.f32 %v12739, 0.2
  %v12868 = vmul.f32 %v12740, 0.2
  %v12869 = vmul.f32 %v12741, 0.2
  %v12870 = vmul.f32 %v12742, 0.2
  %v12871 = vmul.f32 %v12743, 0.2
  %v12872 = vmul.f32 %v12744, 0.2
  %v12873 = vmul.f32 %v12745, 0.2
  %v12874 = vmul.f32 %v12746, 0.2
  %v12875 = vmul.f32 %v12747, 0.2
  %v12876 = vmul.f32 %v12748, 0.2
  %v12877 = vmul.f32 %v12749, 0.2
  %v12878 = vmul.f32 %v12750, 0.2
  %v12879 = vmul.f32 %v12751, 0.2
  %v12880 = vmul.f32 %v12752, 0.2
  %v12881 = vmul.f32 %v12753, 0.2
  %v12882 = vmul.f32 %v12754, 0.2
  %v12883 = vmul.f32 %v12755, 0.2
  %v12884 = vmul.f32 %v12756, 0.2
  %v12885 = vmul.f32 %v12757, 0.2
  %v12886 = vmul.f32 %v12758, 0.2
  %v12887 = vmul.f32 %v12759, 0.2
  %v12888 = vmul.f32 %v12760, 0.2
  %v12889 = vmul.f32 %v12761, 0.2
  %v12890 = vmul.f32 %v12762, 0.2
  %v12891 = vmul.f32 %v12763, 0.2
  %v12892 = vmul.f32 %v12764, 0.2
  %v12893 = vmul.f32 %v12765, 0.2
  %v12894 = vmul.f32 %v12766, 0.2
  %v12895 = vmul.f32 %v12767, 0.2
  %v12896 = vmul.f32 %v12768, 0.2
  %v12897 = vmul.f32 %v12769, 0.2
  %v12898 = vmul.f32 %v12770, 0.2
  %v12899 = vmul.f32 %v12771, 0.2
  %v12900 = vmul.f32 %v12772, 0.2
  %v12901 = vmul.f32 %v12773, 0.2
  %v12902 = vmul.f32 %v12774, 0.2
  %v12903 = vmul.f32 %v12775, 0.2
  %v12904 = vmul.f32 %v12776, 0.2
  %v12905 = vmul.f32 %v12777, 0.2
  %v12906 = vmul.f32 %v12778, 0.2
  %v12907 = vmul.f32 %v12779, 0.2
  %v12908 = vmul.f32 %v12780, 0.2
  %v12909 = vmul.f32 %v12781, 0.2
  %v12910 = vmul.f32 %v12782, 0.2
  %v12911 = vmul.f32 %v12783, 0.2
  %v12912 = vmul.f32 %v12784, 0.2
  %v12913 = vmul.f32 %v12785, 0.2
  %v12914 = vmul.f32 %v12786, 0.2
  %v12915 = vmul.f32 %v12787, 0.2
  %v12916 = vsel %vm12788, %v12724, %v12852
  %v12917 = vsel %vm12789, %v12725, %v12853
  %v12918 = vsel %vm12790, %v12726, %v12854
  %v12919 = vsel %vm12791, %v12727, %v12855
  %v12920 = vsel %vm12792, %v12728, %v12856
  %v12921 = vsel %vm12793, %v12729, %v12857
  %v12922 = vsel %vm12794, %v12730, %v12858
  %v12923 = vsel %vm12795, %v12731, %v12859
  %v12924 = vsel %vm12796, %v12732, %v12860
  %v12925 = vsel %vm12797, %v12733, %v12861
  %v12926 = vsel %vm12798, %v12734, %v12862
  %v12927 = vsel %vm12799, %v12735, %v12863
  %v12928 = vsel %vm12800, %v12736, %v12864
  %v12929 = vsel %vm12801, %v12737, %v12865
  %v12930 = vsel %vm12802, %v12738, %v12866
  %v12931 = vsel %vm12803, %v12739, %v12867
  %v12932 = vsel %vm12804, %v12740, %v12868
  %v12933 = vsel %vm12805, %v12741, %v12869
  %v12934 = vsel %vm12806, %v12742, %v12870
  %v12935 = vsel %vm12807, %v12743, %v12871
  %v12936 = vsel %vm12808, %v12744, %v12872
  %v12937 = vsel %vm12809, %v12745, %v12873
  %v12938 = vsel %vm12810, %v12746, %v12874
  %v12939 = vsel %vm12811, %v12747, %v12875
  %v12940 = vsel %vm12812, %v12748, %v12876
  %v12941 = vsel %vm12813, %v12749, %v12877
  %v12942 = vsel %vm12814, %v12750, %v12878
  %v12943 = vsel %vm12815, %v12751, %v12879
  %v12944 = vsel %vm12816, %v12752, %v12880
  %v12945 = vsel %vm12817, %v12753, %v12881
  %v12946 = vsel %vm12818, %v12754, %v12882
  %v12947 = vsel %vm12819, %v12755, %v12883
  %v12948 = vsel %vm12820, %v12756, %v12884
  %v12949 = vsel %vm12821, %v12757, %v12885
  %v12950 = vsel %vm12822, %v12758, %v12886
  %v12951 = vsel %vm12823, %v12759, %v12887
  %v12952 = vsel %vm12824, %v12760, %v12888
  %v12953 = vsel %vm12825, %v12761, %v12889
  %v12954 = vsel %vm12826, %v12762, %v12890
  %v12955 = vsel %vm12827, %v12763, %v12891
  %v12956 = vsel %vm12828, %v12764, %v12892
  %v12957 = vsel %vm12829, %v12765, %v12893
  %v12958 = vsel %vm12830, %v12766, %v12894
  %v12959 = vsel %vm12831, %v12767, %v12895
  %v12960 = vsel %vm12832, %v12768, %v12896
  %v12961 = vsel %vm12833, %v12769, %v12897
  %v12962 = vsel %vm12834, %v12770, %v12898
  %v12963 = vsel %vm12835, %v12771, %v12899
  %v12964 = vsel %vm12836, %v12772, %v12900
  %v12965 = vsel %vm12837, %v12773, %v12901
  %v12966 = vsel %vm12838, %v12774, %v12902
  %v12967 = vsel %vm12839, %v12775, %v12903
  %v12968 = vsel %vm12840, %v12776, %v12904
  %v12969 = vsel %vm12841, %v12777, %v12905
  %v12970 = vsel %vm12842, %v12778, %v12906
  %v12971 = vsel %vm12843, %v12779, %v12907
  %v12972 = vsel %vm12844, %v12780, %v12908
  %v12973 = vsel %vm12845, %v12781, %v12909
  %v12974 = vsel %vm12846, %v12782, %v12910
  %v12975 = vsel %vm12847, %v12783, %v12911
  %v12976 = vsel %vm12848, %v12784, %v12912
  %v12977 = vsel %vm12849, %v12785, %v12913
  %v12978 = vsel %vm12850, %v12786, %v12914
  %v12979 = vsel %vm12851, %v12787, %v12915
  %vm12980 = vcmask 130048
  %v12981 = vsel %vm12980, %v12916, 0.0
  %v12982 = vsel %vm12980, %v12917, 0.0
  %v12983 = vadd.f32 %v12981, %v12982
  %v12984 = vsel %vm12980, %v12918, 0.0
  %v12985 = vadd.f32 %v12983, %v12984
  %v12986 = vsel %vm12980, %v12919, 0.0
  %v12987 = vadd.f32 %v12985, %v12986
  %v12988 = vsel %vm12980, %v12920, 0.0
  %v12989 = vadd.f32 %v12987, %v12988
  %v12990 = vsel %vm12980, %v12921, 0.0
  %v12991 = vadd.f32 %v12989, %v12990
  %v12992 = vsel %vm12980, %v12922, 0.0
  %v12993 = vadd.f32 %v12991, %v12992
  %v12994 = vsel %vm12980, %v12923, 0.0
  %v12995 = vadd.f32 %v12993, %v12994
  %v12996 = vsel %vm12980, %v12924, 0.0
  %v12997 = vadd.f32 %v12995, %v12996
  %v12998 = vsel %vm12980, %v12925, 0.0
  %v12999 = vadd.f32 %v12997, %v12998
  %v13000 = vsel %vm12980, %v12926, 0.0
  %v13001 = vadd.f32 %v12999, %v13000
  %v13002 = vsel %vm12980, %v12927, 0.0
  %v13003 = vadd.f32 %v13001, %v13002
  %v13004 = vsel %vm12980, %v12928, 0.0
  %v13005 = vadd.f32 %v13003, %v13004
  %v13006 = vsel %vm12980, %v12929, 0.0
  %v13007 = vadd.f32 %v13005, %v13006
  %v13008 = vsel %vm12980, %v12930, 0.0
  %v13009 = vadd.f32 %v13007, %v13008
  %v13010 = vsel %vm12980, %v12931, 0.0
  %v13011 = vadd.f32 %v13009, %v13010
  %v13012 = vsel %vm12980, %v12932, 0.0
  %v13013 = vadd.f32 %v13011, %v13012
  %v13014 = vsel %vm12980, %v12933, 0.0
  %v13015 = vadd.f32 %v13013, %v13014
  %v13016 = vsel %vm12980, %v12934, 0.0
  %v13017 = vadd.f32 %v13015, %v13016
  %v13018 = vsel %vm12980, %v12935, 0.0
  %v13019 = vadd.f32 %v13017, %v13018
  %v13020 = vsel %vm12980, %v12936, 0.0
  %v13021 = vadd.f32 %v13019, %v13020
  %v13022 = vsel %vm12980, %v12937, 0.0
  %v13023 = vadd.f32 %v13021, %v13022
  %v13024 = vsel %vm12980, %v12938, 0.0
  %v13025 = vadd.f32 %v13023, %v13024
  %v13026 = vsel %vm12980, %v12939, 0.0
  %v13027 = vadd.f32 %v13025, %v13026
  %v13028 = vsel %vm12980, %v12940, 0.0
  %v13029 = vadd.f32 %v13027, %v13028
  %v13030 = vsel %vm12980, %v12941, 0.0
  %v13031 = vadd.f32 %v13029, %v13030
  %v13032 = vsel %vm12980, %v12942, 0.0
  %v13033 = vadd.f32 %v13031, %v13032
  %v13034 = vsel %vm12980, %v12943, 0.0
  %v13035 = vadd.f32 %v13033, %v13034
  %v13036 = vsel %vm12980, %v12944, 0.0
  %v13037 = vadd.f32 %v13035, %v13036
  %v13038 = vsel %vm12980, %v12945, 0.0
  %v13039 = vadd.f32 %v13037, %v13038
  %v13040 = vsel %vm12980, %v12946, 0.0
  %v13041 = vadd.f32 %v13039, %v13040
  %v13042 = vsel %vm12980, %v12947, 0.0
  %v13043 = vadd.f32 %v13041, %v13042
  %v13044 = vrot.slane %v13043, 4
  %v13045 = vadd.f32 %v13043, %v13044
  %v13046 = vrot.slane %v13045, 2
  %v13047 = vadd.f32 %v13045, %v13046
  %v13048 = vrot.slane %v13047, 1
  %v13049 = vadd.f32 %v13047, %v13048
  %v13050 = vsel %vm12980, %v12948, 0.0
  %v13051 = vsel %vm12980, %v12949, 0.0
  %v13052 = vadd.f32 %v13050, %v13051
  %v13053 = vsel %vm12980, %v12950, 0.0
  %v13054 = vadd.f32 %v13052, %v13053
  %v13055 = vsel %vm12980, %v12951, 0.0
  %v13056 = vadd.f32 %v13054, %v13055
  %v13057 = vsel %vm12980, %v12952, 0.0
  %v13058 = vadd.f32 %v13056, %v13057
  %v13059 = vsel %vm12980, %v12953, 0.0
  %v13060 = vadd.f32 %v13058, %v13059
  %v13061 = vsel %vm12980, %v12954, 0.0
  %v13062 = vadd.f32 %v13060, %v13061
  %v13063 = vsel %vm12980, %v12955, 0.0
  %v13064 = vadd.f32 %v13062, %v13063
  %v13065 = vsel %vm12980, %v12956, 0.0
  %v13066 = vadd.f32 %v13064, %v13065
  %v13067 = vsel %vm12980, %v12957, 0.0
  %v13068 = vadd.f32 %v13066, %v13067
  %v13069 = vsel %vm12980, %v12958, 0.0
  %v13070 = vadd.f32 %v13068, %v13069
  %v13071 = vsel %vm12980, %v12959, 0.0
  %v13072 = vadd.f32 %v13070, %v13071
  %v13073 = vsel %vm12980, %v12960, 0.0
  %v13074 = vadd.f32 %v13072, %v13073
  %v13075 = vsel %vm12980, %v12961, 0.0
  %v13076 = vadd.f32 %v13074, %v13075
  %v13077 = vsel %vm12980, %v12962, 0.0
  %v13078 = vadd.f32 %v13076, %v13077
  %v13079 = vsel %vm12980, %v12963, 0.0
  %v13080 = vadd.f32 %v13078, %v13079
  %v13081 = vsel %vm12980, %v12964, 0.0
  %v13082 = vadd.f32 %v13080, %v13081
  %v13083 = vsel %vm12980, %v12965, 0.0
  %v13084 = vadd.f32 %v13082, %v13083
  %v13085 = vsel %vm12980, %v12966, 0.0
  %v13086 = vadd.f32 %v13084, %v13085
  %v13087 = vsel %vm12980, %v12967, 0.0
  %v13088 = vadd.f32 %v13086, %v13087
  %v13089 = vsel %vm12980, %v12968, 0.0
  %v13090 = vadd.f32 %v13088, %v13089
  %v13091 = vsel %vm12980, %v12969, 0.0
  %v13092 = vadd.f32 %v13090, %v13091
  %v13093 = vsel %vm12980, %v12970, 0.0
  %v13094 = vadd.f32 %v13092, %v13093
  %v13095 = vsel %vm12980, %v12971, 0.0
  %v13096 = vadd.f32 %v13094, %v13095
  %v13097 = vsel %vm12980, %v12972, 0.0
  %v13098 = vadd.f32 %v13096, %v13097
  %v13099 = vsel %vm12980, %v12973, 0.0
  %v13100 = vadd.f32 %v13098, %v13099
  %v13101 = vsel %vm12980, %v12974, 0.0
  %v13102 = vadd.f32 %v13100, %v13101
  %v13103 = vsel %vm12980, %v12975, 0.0
  %v13104 = vadd.f32 %v13102, %v13103
  %v13105 = vsel %vm12980, %v12976, 0.0
  %v13106 = vadd.f32 %v13104, %v13105
  %v13107 = vsel %vm12980, %v12977, 0.0
  %v13108 = vadd.f32 %v13106, %v13107
  %v13109 = vsel %vm12980, %v12978, 0.0
  %v13110 = vadd.f32 %v13108, %v13109
  %v13111 = vsel %vm12980, %v12979, 0.0
  %v13112 = vadd.f32 %v13110, %v13111
  %v13113 = vrot.slane %v13112, 4
  %v13114 = vadd.f32 %v13112, %v13113
  %v13115 = vrot.slane %v13114, 2
  %v13116 = vadd.f32 %v13114, %v13115
  %v13117 = vrot.slane %v13116, 1
  %v13118 = vadd.f32 %v13116, %v13117
  %v13119 = vld [vmem:[%s3] sm:$0x1]
  %v13121 = vlaneseq
  %v13122 = vshrl.u32 %v13121, 7
  %v13123 = vsub.s32 0, %v13122
  %v13124 = vrot.slane %v13119, %v13123
  %v13126 = vmul.f32 %v13049, %v13124
  %v13127 = vmul.f32 %v13118, %v13124
  %v13130 = vrot.slane %v13127, 7
  %vm13131 = vcmask 1041409
  %v13132 = vsel %vm13131, %v13130, %v13126
  %vm13134 = vcmask 123904
  %v13135 = vsel %vm13134, %v13132, 0.0
  %13136 = vadd.xlane.f32.xlu0 %v13135
  %v13137 = vpop.xlane.xlu0 %13136
  %v13138 = vld [vmem:[#allocation2] sm:$0x1]
  %v13140 = vlaneseq
  %v13141 = vshrl.u32 %v13140, 7
  %v13142 = vsub.s32 0, %v13141
  %v13143 = vrot.slane %v13138, %v13142
  %v13145 = vadd.f32 %v13137, %v13143
  %vm13146 = vcmask 1024
  %13147 = vst.msk [vmem:[%s5] sm:$0x3] %vm13146, %v13145
  // Predicated region
  $region22: #{lbp_forward.1} parent=0 // pred_check
    _
  $region23: #{lbp_forward.1} parent=0 // pred_check_branch
    %13149 = sbr.rel (0) target = $region25
  $region24: #{lbp_forward.1} parent=0 // pred_region
    _
  $region25: #{lbp_forward.1} parent=0 // pred_fallthru
    _
  // Predicated region
  $region26: #{lbp_forward.1} parent=0 // pred_check
    _
  $region27: #{lbp_forward.1} parent=0 // pred_check_branch
    %13151 = sbr.rel (0) target = $region29
  $region28: #{lbp_forward.1} parent=0 // pred_region
    _
  $region29: #{lbp_forward.1} parent=0 // pred_fallthru
    _

</llo_original>
